<compile_context>
chip_gen: v7x
topology: tpu7x:2x2x1
jax: 0.10.0
libtpu: 0.0.40
codegen_flags: <defaults>
</compile_context>

<pallas_src>
import functools

import jax
import jax.numpy as jnp
import numpy as np
from jax.experimental import pallas as pl
from jax.experimental.pallas import tpu as pltpu


# ---------------------------------------------------------------------------
# Kernel 1: fused  conv(valid, stride 1) + bias + ReLU + vertical 2x2 max-pool
# ---------------------------------------------------------------------------
def _conv_relu_rowpool_kernel(x_ref, wT_ref, b_ref, o_ref, *, kh, kw, wo):
    """One image per grid step.

    x_ref : (H, Cp, W)        image, channels on sublanes (padded to mult of 8)
    wT_ref: (Cout, kh*kw*Cp)  transposed im2col weight matrix
    b_ref : (Cout, 1)
    o_ref : (PH, Cout, wo)    PH = (H - kh + 1) // 2 row-pooled conv rows;
                              columns are pooled outside (cheap strided max).
    """
    wT = wT_ref[...]
    b = b_ref[...]

    def conv_row(y):
        # Build the im2col patch for conv output row `y` from shifted slices of
        # the VMEM-resident image.  Pieces are (Cp, wo) with Cp a multiple of 8,
        # so the concatenation along sublanes is tile aligned (no masked moves).
        pieces = [
            x_ref[y + i, :, pl.ds(j, wo)]
            for i in range(kh)
            for j in range(kw)
        ]
        patch = jnp.concatenate(pieces, axis=0)                   # (K, wo)
        acc = jnp.dot(wT, patch, preferred_element_type=jnp.float32)
        return jnp.maximum(acc + b, 0.0)                          # (Cout, wo)

    def body(pr, carry):
        row = jnp.maximum(conv_row(2 * pr), conv_row(2 * pr + 1))
        o_ref[pr] = row.astype(o_ref.dtype)
        return carry

    jax.lax.fori_loop(0, o_ref.shape[0], body, 0)


def conv_relu_rowpool(x_hcw, w_hwio, bias):
    """x_hcw: (N, H, Cin, W) f32 -> (N, PH, Cout, Wout) f32 (rows already pooled)."""
    n, h, cin, w = x_hcw.shape
    kh, kw, wcin, cout = w_hwio.shape
    assert wcin == cin, (wcin, cin)

    # Pad channels (sublane axis) to a multiple of 8 so in-kernel patch
    # concatenation stays tile aligned; padded channels carry zero weights.
    cin_p = ((cin + 7) // 8) * 8
    if cin_p != cin:
        x_hcw = jnp.pad(x_hcw, ((0, 0), (0, 0), (0, cin_p - cin), (0, 0)))
        w_hwio = jnp.pad(w_hwio, ((0, 0), (0, 0), (0, cin_p - cin), (0, 0)))

    ho, wo = h - kh + 1, w - kw + 1
    ph = ho // 2                               # floor-mode 2x2 pool over rows
    k = kh * kw * cin_p

    wT = jnp.transpose(w_hwio.reshape(k, cout)).astype(jnp.float32)   # (Cout, K)
    b = bias.reshape(cout, 1).astype(jnp.float32)

    kern = functools.partial(_conv_relu_rowpool_kernel, kh=kh, kw=kw, wo=wo)
    return pl.pallas_call(
        kern,
        out_shape=jax.ShapeDtypeStruct((n, ph, cout, wo), jnp.float32),
        grid_spec=pltpu.PrefetchScalarGridSpec(
            num_scalar_prefetch=0,
            grid=(n,),
            in_specs=[
                pl.BlockSpec((None, h, cin_p, w), lambda i: (i, 0, 0, 0)),
                pl.BlockSpec((cout, k), lambda i: (0, 0)),
                pl.BlockSpec((cout, 1), lambda i: (0, 0)),
            ],
            out_specs=pl.BlockSpec((None, ph, cout, wo), lambda i: (i, 0, 0, 0)),
        ),
        compiler_params=pltpu.CompilerParams(
            dimension_semantics=("parallel",)),   # batch across TCs on v7x
    )(x_hcw, wT, b)


def _pool_cols(x):
    """Horizontal half of the 2x2 max-pool: (N, PH, C, W) -> (N, PH, C, W//2)."""
    pw = x.shape[-1] // 2
    return jnp.maximum(x[..., 0:2 * pw:2], x[..., 1:2 * pw:2])


# ---------------------------------------------------------------------------
# Kernel 2: fused head  linear(89888,24)+ReLU -> linear(24,12)+ReLU -> linear(12,2)
# ---------------------------------------------------------------------------
def _fc_head_kernel(a_ref, w1_ref, b1_ref, w2_ref, b2_ref, w3_ref, b3_ref,
                    o_ref, acc_ref):
    kk = pl.program_id(0)

    @pl.when(kk == 0)
    def _():
        acc_ref[...] = jnp.zeros_like(acc_ref)

    acc_ref[...] += jnp.dot(a_ref[...], w1_ref[...],
                            preferred_element_type=jnp.float32)

    @pl.when(kk == pl.num_programs(0) - 1)
    def _():
        h1 = jnp.maximum(acc_ref[...] + b1_ref[...], 0.0)                # (M, 24)
        h2 = jnp.maximum(
            jnp.dot(h1, w2_ref[...], preferred_element_type=jnp.float32)
            + b2_ref[...], 0.0)                                          # (M, 12)
        o_ref[...] = (jnp.dot(h2, w3_ref[...],
                              preferred_element_type=jnp.float32)
                      + b3_ref[...]).astype(o_ref.dtype)                 # (M, 2)


def fc_head(flat, wl1, bl1, wl2, bl2, wl3, bl3, *, tk=8192):
    """flat: (M, 89888) -> (M, 2); all three Linear layers fused in one kernel."""
    m, kdim = flat.shape
    n1, n2, n3 = wl1.shape[1], wl2.shape[1], wl3.shape[1]

    mp = ((max(m, 1) + 7) // 8) * 8          # pad batch only to a sublane multiple
    kp = ((kdim + tk - 1) // tk) * tk        # pad K to the reduction tile size

    a = jnp.pad(flat.astype(jnp.bfloat16), ((0, mp - m), (0, kp - kdim)))
    w1 = jnp.pad(wl1.astype(jnp.bfloat16), ((0, kp - kdim), (0, 0)))

    # TODO(synk): on v7x, split K across the 2 TensorCores (parallel axis of
    # size 2 with partial accumulators) to overlap the FC1 weight stream.
    out = pl.pallas_call(
        _fc_head_kernel,
        out_shape=jax.ShapeDtypeStruct((mp, n3), jnp.float32),
        grid_spec=pltpu.PrefetchScalarGridSpec(
            num_scalar_prefetch=0,
            grid=(kp // tk,),
            in_specs=[
                pl.BlockSpec((mp, tk), lambda kk: (0, kk)),
                pl.BlockSpec((tk, n1), lambda kk: (kk, 0)),
                pl.BlockSpec((1, n1), lambda kk: (0, 0)),
                pl.BlockSpec((n1, n2), lambda kk: (0, 0)),
                pl.BlockSpec((1, n2), lambda kk: (0, 0)),
                pl.BlockSpec((n2, n3), lambda kk: (0, 0)),
                pl.BlockSpec((1, n3), lambda kk: (0, 0)),
            ],
            out_specs=pl.BlockSpec((mp, n3), lambda kk: (0, 0)),
            scratch_shapes=[pltpu.VMEM((mp, n1), jnp.float32)],
        ),
        compiler_params=pltpu.CompilerParams(
            dimension_semantics=("arbitrary",)),   # K reduction axis
    )(a, w1,
      bl1.reshape(1, n1).astype(jnp.float32),
      wl2.astype(jnp.float32),
      bl2.reshape(1, n2).astype(jnp.float32),
      wl3.astype(jnp.float32),
      bl3.reshape(1, n3).astype(jnp.float32))
    return out[:m]


# ---------------------------------------------------------------------------
# Model
# ---------------------------------------------------------------------------
def init_params(key):
    """Deterministic init mimicking PyTorch defaults (U(-1/sqrt(fan_in), +))."""
    ks = jax.random.split(key, 10)

    def u(k, shape, fan_in, dtype=jnp.float32):
        bound = 1.0 / np.sqrt(fan_in)
        return jax.random.uniform(k, shape, jnp.float32, -bound, bound).astype(dtype)

    return dict(
        w1=u(ks[0], (6, 6, 3, 12), 3 * 6 * 6),           # conv(3, 12, 6), HWIO
        b1=u(ks[1], (12,), 3 * 6 * 6),
        w2=u(ks[2], (5, 5, 12, 32), 12 * 5 * 5),         # conv2(12, 32, 5), HWIO
        b2=u(ks[3], (32,), 12 * 5 * 5),
        # FC1 is purely weight-stream bound -> keep the big weight in bf16.
        wl1=u(ks[4], (89888, 24), 89888, jnp.bfloat16),  # linear(89888, 24)
        bl1=u(ks[5], (24,), 89888),
        wl2=u(ks[6], (24, 12), 24),                      # linear2(24, 12)
        bl2=u(ks[7], (12,), 24),
        wl3=u(ks[8], (12, 2), 12),                       # linear3(12, 2)
        bl3=u(ks[9], (2,), 12),
    )


def forward(params, x_nchw):
    n = x_nchw.shape[0]

    # NCHW -> (N, H, C, W): channels on sublanes, width on lanes.
    x = jnp.transpose(x_nchw, (0, 2, 1, 3)).astype(jnp.float32)    # (N, 227, 3, 227)

    # relu(conv(x)) + maxpool (vertical half fused in-kernel)
    c1 = conv_relu_rowpool(x, params["w1"], params["b1"])          # (N, 111, 12, 222)
    p1 = _pool_cols(c1)                                            # (N, 111, 12, 111)
    # Dropout2d(0.25): identity in inference mode.
    # TODO(synk): training-mode Dropout2d (per-channel RNG masking) not implemented.

    # relu(conv2(x)) + maxpool
    c2 = conv_relu_rowpool(p1, params["w2"], params["b2"])         # (N, 53, 32, 107)
    p2 = _pool_cols(c2)                                            # (N, 53, 32, 53)
    # Dropout2d(0.25): identity in inference mode.

    # flatten matching torch's x.view(N, -1) on an NCHW tensor
    flat = jnp.transpose(p2, (0, 2, 1, 3)).reshape(n, -1)          # (N, 89888)

    return fc_head(flat, params["wl1"], params["bl1"],
                   params["wl2"], params["bl2"],
                   params["wl3"], params["bl3"])


if __name__ == "__main__":
    key = jax.random.PRNGKey(0)
    pkey, xkey = jax.random.split(key)
    params = init_params(pkey)

    # Spatial size is pinned to 227x227 by nn.Linear(89888, 24); batch=2.
    x = jax.random.normal(xkey, (2, 3, 227, 227), dtype=jnp.float32)

    fwd = jax.jit(forward)
    out = jax.block_until_ready(fwd(params, x))

    assert out.shape == (2, 2), out.shape
    assert bool(jnp.all(jnp.isfinite(out)))
    print("KERNEL_OK")
</pallas_src>

<mosaic_0001>
module attributes {stable_mosaic.version = 11 : i64} {
  func.func @_conv_relu_rowpool_kernel(%arg0: i32, %arg1: memref<1x227x8x227xf32, #tpu.memory_space<vmem>>, %arg2: memref<12x288xf32, #tpu.memory_space<vmem>>, %arg3: memref<12x1xf32, #tpu.memory_space<vmem>>, %arg4: memref<1x111x12x222xf32, #tpu.memory_space<vmem>>) attributes {dimension_semantics = [#tpu.dimension_semantics<parallel>], iteration_bounds = array<i64: 2>, scalar_prefetch = 0 : i64, scratch_operands = 0 : i64, tpu.core_type = #tpu.core_type<tc>, window_params = [{transform_indices = @transform_0, window_bounds = array<i64: 1, 227, 8, 227>}, {pipeline_mode = #tpu.pipeline_mode<synchronous>, transform_indices = @transform_1, window_bounds = array<i64: 12, 288>}, {pipeline_mode = #tpu.pipeline_mode<synchronous>, transform_indices = @transform_2, window_bounds = array<i64: 12, 1>}, {transform_indices = @transform_3, window_bounds = array<i64: 1, 111, 12, 222>}]} {
    %c0 = arith.constant 0 : index
    %c0_0 = arith.constant 0 : index
    %0 = vector.load %arg2[%c0, %c0_0] : memref<12x288xf32, #tpu.memory_space<vmem>>, vector<12x288xf32>
    %c0_1 = arith.constant 0 : index
    %c0_2 = arith.constant 0 : index
    %1 = vector.load %arg3[%c0_1, %c0_2] : memref<12x1xf32, #tpu.memory_space<vmem>>, vector<12x1xf32>
    %c0_i32 = arith.constant 0 : i32
    %c111_i32 = arith.constant 111 : i32
    %2 = arith.addi %c0_i32, %c111_i32 : i32
    %c1_i32 = arith.constant 1 : i32
    scf.for %arg5 = %c0_i32 to %2 step %c1_i32  : i32 {
      %c2_i32 = arith.constant 2 : i32
      %3 = arith.muli %c2_i32, %arg5 : i32
      %c0_i32_4 = arith.constant 0 : i32
      %4 = arith.addi %3, %c0_i32_4 : i32
      %c0_5 = arith.constant 0 : index
      %5 = arith.index_cast %4 : i32 to index
      %c0_6 = arith.constant 0 : index
      %c0_7 = arith.constant 0 : index
      %6 = vector.load %arg1[%c0_5, %5, %c0_6, %c0_7] : memref<1x227x8x227xf32, #tpu.memory_space<vmem>>, vector<1x1x8x222xf32>
      %7 = vector.shape_cast %6 : vector<1x1x8x222xf32> to vector<8x222xf32>
      %c0_i32_8 = arith.constant 0 : i32
      %8 = arith.addi %3, %c0_i32_8 : i32
      %c0_9 = arith.constant 0 : index
      %9 = arith.index_cast %8 : i32 to index
      %c0_10 = arith.constant 0 : index
      %c1 = arith.constant 1 : index
      %10 = vector.load %arg1[%c0_9, %9, %c0_10, %c1] : memref<1x227x8x227xf32, #tpu.memory_space<vmem>>, vector<1x1x8x222xf32>
      %11 = vector.shape_cast %10 : vector<1x1x8x222xf32> to vector<8x222xf32>
      %c0_i32_11 = arith.constant 0 : i32
      %12 = arith.addi %3, %c0_i32_11 : i32
      %c0_12 = arith.constant 0 : index
      %13 = arith.index_cast %12 : i32 to index
      %c0_13 = arith.constant 0 : index
      %c2 = arith.constant 2 : index
      %14 = vector.load %arg1[%c0_12, %13, %c0_13, %c2] : memref<1x227x8x227xf32, #tpu.memory_space<vmem>>, vector<1x1x8x222xf32>
      %15 = vector.shape_cast %14 : vector<1x1x8x222xf32> to vector<8x222xf32>
      %c0_i32_14 = arith.constant 0 : i32
      %16 = arith.addi %3, %c0_i32_14 : i32
      %c0_15 = arith.constant 0 : index
      %17 = arith.index_cast %16 : i32 to index
      %c0_16 = arith.constant 0 : index
      %c3 = arith.constant 3 : index
      %18 = vector.load %arg1[%c0_15, %17, %c0_16, %c3] : memref<1x227x8x227xf32, #tpu.memory_space<vmem>>, vector<1x1x8x222xf32>
      %19 = vector.shape_cast %18 : vector<1x1x8x222xf32> to vector<8x222xf32>
      %c0_i32_17 = arith.constant 0 : i32
      %20 = arith.addi %3, %c0_i32_17 : i32
      %c0_18 = arith.constant 0 : index
      %21 = arith.index_cast %20 : i32 to index
      %c0_19 = arith.constant 0 : index
      %c4 = arith.constant 4 : index
      %22 = vector.load %arg1[%c0_18, %21, %c0_19, %c4] : memref<1x227x8x227xf32, #tpu.memory_space<vmem>>, vector<1x1x8x222xf32>
      %23 = vector.shape_cast %22 : vector<1x1x8x222xf32> to vector<8x222xf32>
      %c0_i32_20 = arith.constant 0 : i32
      %24 = arith.addi %3, %c0_i32_20 : i32
      %c0_21 = arith.constant 0 : index
      %25 = arith.index_cast %24 : i32 to index
      %c0_22 = arith.constant 0 : index
      %c5 = arith.constant 5 : index
      %26 = vector.load %arg1[%c0_21, %25, %c0_22, %c5] : memref<1x227x8x227xf32, #tpu.memory_space<vmem>>, vector<1x1x8x222xf32>
      %27 = vector.shape_cast %26 : vector<1x1x8x222xf32> to vector<8x222xf32>
      %c1_i32_23 = arith.constant 1 : i32
      %28 = arith.addi %3, %c1_i32_23 : i32
      %c0_24 = arith.constant 0 : index
      %29 = arith.index_cast %28 : i32 to index
      %c0_25 = arith.constant 0 : index
      %c0_26 = arith.constant 0 : index
      %30 = vector.load %arg1[%c0_24, %29, %c0_25, %c0_26] : memref<1x227x8x227xf32, #tpu.memory_space<vmem>>, vector<1x1x8x222xf32>
      %31 = vector.shape_cast %30 : vector<1x1x8x222xf32> to vector<8x222xf32>
      %c1_i32_27 = arith.constant 1 : i32
      %32 = arith.addi %3, %c1_i32_27 : i32
      %c0_28 = arith.constant 0 : index
      %33 = arith.index_cast %32 : i32 to index
      %c0_29 = arith.constant 0 : index
      %c1_30 = arith.constant 1 : index
      %34 = vector.load %arg1[%c0_28, %33, %c0_29, %c1_30] : memref<1x227x8x227xf32, #tpu.memory_space<vmem>>, vector<1x1x8x222xf32>
      %35 = vector.shape_cast %34 : vector<1x1x8x222xf32> to vector<8x222xf32>
      %c1_i32_31 = arith.constant 1 : i32
      %36 = arith.addi %3, %c1_i32_31 : i32
      %c0_32 = arith.constant 0 : index
      %37 = arith.index_cast %36 : i32 to index
      %c0_33 = arith.constant 0 : index
      %c2_34 = arith.constant 2 : index
      %38 = vector.load %arg1[%c0_32, %37, %c0_33, %c2_34] : memref<1x227x8x227xf32, #tpu.memory_space<vmem>>, vector<1x1x8x222xf32>
      %39 = vector.shape_cast %38 : vector<1x1x8x222xf32> to vector<8x222xf32>
      %c1_i32_35 = arith.constant 1 : i32
      %40 = arith.addi %3, %c1_i32_35 : i32
      %c0_36 = arith.constant 0 : index
      %41 = arith.index_cast %40 : i32 to index
      %c0_37 = arith.constant 0 : index
      %c3_38 = arith.constant 3 : index
      %42 = vector.load %arg1[%c0_36, %41, %c0_37, %c3_38] : memref<1x227x8x227xf32, #tpu.memory_space<vmem>>, vector<1x1x8x222xf32>
      %43 = vector.shape_cast %42 : vector<1x1x8x222xf32> to vector<8x222xf32>
      %c1_i32_39 = arith.constant 1 : i32
      %44 = arith.addi %3, %c1_i32_39 : i32
      %c0_40 = arith.constant 0 : index
      %45 = arith.index_cast %44 : i32 to index
      %c0_41 = arith.constant 0 : index
      %c4_42 = arith.constant 4 : index
      %46 = vector.load %arg1[%c0_40, %45, %c0_41, %c4_42] : memref<1x227x8x227xf32, #tpu.memory_space<vmem>>, vector<1x1x8x222xf32>
      %47 = vector.shape_cast %46 : vector<1x1x8x222xf32> to vector<8x222xf32>
      %c1_i32_43 = arith.constant 1 : i32
      %48 = arith.addi %3, %c1_i32_43 : i32
      %c0_44 = arith.constant 0 : index
      %49 = arith.index_cast %48 : i32 to index
      %c0_45 = arith.constant 0 : index
      %c5_46 = arith.constant 5 : index
      %50 = vector.load %arg1[%c0_44, %49, %c0_45, %c5_46] : memref<1x227x8x227xf32, #tpu.memory_space<vmem>>, vector<1x1x8x222xf32>
      %51 = vector.shape_cast %50 : vector<1x1x8x222xf32> to vector<8x222xf32>
      %c2_i32_47 = arith.constant 2 : i32
      %52 = arith.addi %3, %c2_i32_47 : i32
      %c0_48 = arith.constant 0 : index
      %53 = arith.index_cast %52 : i32 to index
      %c0_49 = arith.constant 0 : index
      %c0_50 = arith.constant 0 : index
      %54 = vector.load %arg1[%c0_48, %53, %c0_49, %c0_50] : memref<1x227x8x227xf32, #tpu.memory_space<vmem>>, vector<1x1x8x222xf32>
      %55 = vector.shape_cast %54 : vector<1x1x8x222xf32> to vector<8x222xf32>
      %c2_i32_51 = arith.constant 2 : i32
      %56 = arith.addi %3, %c2_i32_51 : i32
      %c0_52 = arith.constant 0 : index
      %57 = arith.index_cast %56 : i32 to index
      %c0_53 = arith.constant 0 : index
      %c1_54 = arith.constant 1 : index
      %58 = vector.load %arg1[%c0_52, %57, %c0_53, %c1_54] : memref<1x227x8x227xf32, #tpu.memory_space<vmem>>, vector<1x1x8x222xf32>
      %59 = vector.shape_cast %58 : vector<1x1x8x222xf32> to vector<8x222xf32>
      %c2_i32_55 = arith.constant 2 : i32
      %60 = arith.addi %3, %c2_i32_55 : i32
      %c0_56 = arith.constant 0 : index
      %61 = arith.index_cast %60 : i32 to index
      %c0_57 = arith.constant 0 : index
      %c2_58 = arith.constant 2 : index
      %62 = vector.load %arg1[%c0_56, %61, %c0_57, %c2_58] : memref<1x227x8x227xf32, #tpu.memory_space<vmem>>, vector<1x1x8x222xf32>
      %63 = vector.shape_cast %62 : vector<1x1x8x222xf32> to vector<8x222xf32>
      %c2_i32_59 = arith.constant 2 : i32
      %64 = arith.addi %3, %c2_i32_59 : i32
      %c0_60 = arith.constant 0 : index
      %65 = arith.index_cast %64 : i32 to index
      %c0_61 = arith.constant 0 : index
      %c3_62 = arith.constant 3 : index
      %66 = vector.load %arg1[%c0_60, %65, %c0_61, %c3_62] : memref<1x227x8x227xf32, #tpu.memory_space<vmem>>, vector<1x1x8x222xf32>
      %67 = vector.shape_cast %66 : vector<1x1x8x222xf32> to vector<8x222xf32>
      %c2_i32_63 = arith.constant 2 : i32
      %68 = arith.addi %3, %c2_i32_63 : i32
      %c0_64 = arith.constant 0 : index
      %69 = arith.index_cast %68 : i32 to index
      %c0_65 = arith.constant 0 : index
      %c4_66 = arith.constant 4 : index
      %70 = vector.load %arg1[%c0_64, %69, %c0_65, %c4_66] : memref<1x227x8x227xf32, #tpu.memory_space<vmem>>, vector<1x1x8x222xf32>
      %71 = vector.shape_cast %70 : vector<1x1x8x222xf32> to vector<8x222xf32>
      %c2_i32_67 = arith.constant 2 : i32
      %72 = arith.addi %3, %c2_i32_67 : i32
      %c0_68 = arith.constant 0 : index
      %73 = arith.index_cast %72 : i32 to index
      %c0_69 = arith.constant 0 : index
      %c5_70 = arith.constant 5 : index
      %74 = vector.load %arg1[%c0_68, %73, %c0_69, %c5_70] : memref<1x227x8x227xf32, #tpu.memory_space<vmem>>, vector<1x1x8x222xf32>
      %75 = vector.shape_cast %74 : vector<1x1x8x222xf32> to vector<8x222xf32>
      %c3_i32 = arith.constant 3 : i32
      %76 = arith.addi %3, %c3_i32 : i32
      %c0_71 = arith.constant 0 : index
      %77 = arith.index_cast %76 : i32 to index
      %c0_72 = arith.constant 0 : index
      %c0_73 = arith.constant 0 : index
      %78 = vector.load %arg1[%c0_71, %77, %c0_72, %c0_73] : memref<1x227x8x227xf32, #tpu.memory_space<vmem>>, vector<1x1x8x222xf32>
      %79 = vector.shape_cast %78 : vector<1x1x8x222xf32> to vector<8x222xf32>
      %c3_i32_74 = arith.constant 3 : i32
      %80 = arith.addi %3, %c3_i32_74 : i32
      %c0_75 = arith.constant 0 : index
      %81 = arith.index_cast %80 : i32 to index
      %c0_76 = arith.constant 0 : index
      %c1_77 = arith.constant 1 : index
      %82 = vector.load %arg1[%c0_75, %81, %c0_76, %c1_77] : memref<1x227x8x227xf32, #tpu.memory_space<vmem>>, vector<1x1x8x222xf32>
      %83 = vector.shape_cast %82 : vector<1x1x8x222xf32> to vector<8x222xf32>
      %c3_i32_78 = arith.constant 3 : i32
      %84 = arith.addi %3, %c3_i32_78 : i32
      %c0_79 = arith.constant 0 : index
      %85 = arith.index_cast %84 : i32 to index
      %c0_80 = arith.constant 0 : index
      %c2_81 = arith.constant 2 : index
      %86 = vector.load %arg1[%c0_79, %85, %c0_80, %c2_81] : memref<1x227x8x227xf32, #tpu.memory_space<vmem>>, vector<1x1x8x222xf32>
      %87 = vector.shape_cast %86 : vector<1x1x8x222xf32> to vector<8x222xf32>
      %c3_i32_82 = arith.constant 3 : i32
      %88 = arith.addi %3, %c3_i32_82 : i32
      %c0_83 = arith.constant 0 : index
      %89 = arith.index_cast %88 : i32 to index
      %c0_84 = arith.constant 0 : index
      %c3_85 = arith.constant 3 : index
      %90 = vector.load %arg1[%c0_83, %89, %c0_84, %c3_85] : memref<1x227x8x227xf32, #tpu.memory_space<vmem>>, vector<1x1x8x222xf32>
      %91 = vector.shape_cast %90 : vector<1x1x8x222xf32> to vector<8x222xf32>
      %c3_i32_86 = arith.constant 3 : i32
      %92 = arith.addi %3, %c3_i32_86 : i32
      %c0_87 = arith.constant 0 : index
      %93 = arith.index_cast %92 : i32 to index
      %c0_88 = arith.constant 0 : index
      %c4_89 = arith.constant 4 : index
      %94 = vector.load %arg1[%c0_87, %93, %c0_88, %c4_89] : memref<1x227x8x227xf32, #tpu.memory_space<vmem>>, vector<1x1x8x222xf32>
      %95 = vector.shape_cast %94 : vector<1x1x8x222xf32> to vector<8x222xf32>
      %c3_i32_90 = arith.constant 3 : i32
      %96 = arith.addi %3, %c3_i32_90 : i32
      %c0_91 = arith.constant 0 : index
      %97 = arith.index_cast %96 : i32 to index
      %c0_92 = arith.constant 0 : index
      %c5_93 = arith.constant 5 : index
      %98 = vector.load %arg1[%c0_91, %97, %c0_92, %c5_93] : memref<1x227x8x227xf32, #tpu.memory_space<vmem>>, vector<1x1x8x222xf32>
      %99 = vector.shape_cast %98 : vector<1x1x8x222xf32> to vector<8x222xf32>
      %c4_i32 = arith.constant 4 : i32
      %100 = arith.addi %3, %c4_i32 : i32
      %c0_94 = arith.constant 0 : index
      %101 = arith.index_cast %100 : i32 to index
      %c0_95 = arith.constant 0 : index
      %c0_96 = arith.constant 0 : index
      %102 = vector.load %arg1[%c0_94, %101, %c0_95, %c0_96] : memref<1x227x8x227xf32, #tpu.memory_space<vmem>>, vector<1x1x8x222xf32>
      %103 = vector.shape_cast %102 : vector<1x1x8x222xf32> to vector<8x222xf32>
      %c4_i32_97 = arith.constant 4 : i32
      %104 = arith.addi %3, %c4_i32_97 : i32
      %c0_98 = arith.constant 0 : index
      %105 = arith.index_cast %104 : i32 to index
      %c0_99 = arith.constant 0 : index
      %c1_100 = arith.constant 1 : index
      %106 = vector.load %arg1[%c0_98, %105, %c0_99, %c1_100] : memref<1x227x8x227xf32, #tpu.memory_space<vmem>>, vector<1x1x8x222xf32>
      %107 = vector.shape_cast %106 : vector<1x1x8x222xf32> to vector<8x222xf32>
      %c4_i32_101 = arith.constant 4 : i32
      %108 = arith.addi %3, %c4_i32_101 : i32
      %c0_102 = arith.constant 0 : index
      %109 = arith.index_cast %108 : i32 to index
      %c0_103 = arith.constant 0 : index
      %c2_104 = arith.constant 2 : index
      %110 = vector.load %arg1[%c0_102, %109, %c0_103, %c2_104] : memref<1x227x8x227xf32, #tpu.memory_space<vmem>>, vector<1x1x8x222xf32>
      %111 = vector.shape_cast %110 : vector<1x1x8x222xf32> to vector<8x222xf32>
      %c4_i32_105 = arith.constant 4 : i32
      %112 = arith.addi %3, %c4_i32_105 : i32
      %c0_106 = arith.constant 0 : index
      %113 = arith.index_cast %112 : i32 to index
      %c0_107 = arith.constant 0 : index
      %c3_108 = arith.constant 3 : index
      %114 = vector.load %arg1[%c0_106, %113, %c0_107, %c3_108] : memref<1x227x8x227xf32, #tpu.memory_space<vmem>>, vector<1x1x8x222xf32>
      %115 = vector.shape_cast %114 : vector<1x1x8x222xf32> to vector<8x222xf32>
      %c4_i32_109 = arith.constant 4 : i32
      %116 = arith.addi %3, %c4_i32_109 : i32
      %c0_110 = arith.constant 0 : index
      %117 = arith.index_cast %116 : i32 to index
      %c0_111 = arith.constant 0 : index
      %c4_112 = arith.constant 4 : index
      %118 = vector.load %arg1[%c0_110, %117, %c0_111, %c4_112] : memref<1x227x8x227xf32, #tpu.memory_space<vmem>>, vector<1x1x8x222xf32>
      %119 = vector.shape_cast %118 : vector<1x1x8x222xf32> to vector<8x222xf32>
      %c4_i32_113 = arith.constant 4 : i32
      %120 = arith.addi %3, %c4_i32_113 : i32
      %c0_114 = arith.constant 0 : index
      %121 = arith.index_cast %120 : i32 to index
      %c0_115 = arith.constant 0 : index
      %c5_116 = arith.constant 5 : index
      %122 = vector.load %arg1[%c0_114, %121, %c0_115, %c5_116] : memref<1x227x8x227xf32, #tpu.memory_space<vmem>>, vector<1x1x8x222xf32>
      %123 = vector.shape_cast %122 : vector<1x1x8x222xf32> to vector<8x222xf32>
      %c5_i32 = arith.constant 5 : i32
      %124 = arith.addi %3, %c5_i32 : i32
      %c0_117 = arith.constant 0 : index
      %125 = arith.index_cast %124 : i32 to index
      %c0_118 = arith.constant 0 : index
      %c0_119 = arith.constant 0 : index
      %126 = vector.load %arg1[%c0_117, %125, %c0_118, %c0_119] : memref<1x227x8x227xf32, #tpu.memory_space<vmem>>, vector<1x1x8x222xf32>
      %127 = vector.shape_cast %126 : vector<1x1x8x222xf32> to vector<8x222xf32>
      %c5_i32_120 = arith.constant 5 : i32
      %128 = arith.addi %3, %c5_i32_120 : i32
      %c0_121 = arith.constant 0 : index
      %129 = arith.index_cast %128 : i32 to index
      %c0_122 = arith.constant 0 : index
      %c1_123 = arith.constant 1 : index
      %130 = vector.load %arg1[%c0_121, %129, %c0_122, %c1_123] : memref<1x227x8x227xf32, #tpu.memory_space<vmem>>, vector<1x1x8x222xf32>
      %131 = vector.shape_cast %130 : vector<1x1x8x222xf32> to vector<8x222xf32>
      %c5_i32_124 = arith.constant 5 : i32
      %132 = arith.addi %3, %c5_i32_124 : i32
      %c0_125 = arith.constant 0 : index
      %133 = arith.index_cast %132 : i32 to index
      %c0_126 = arith.constant 0 : index
      %c2_127 = arith.constant 2 : index
      %134 = vector.load %arg1[%c0_125, %133, %c0_126, %c2_127] : memref<1x227x8x227xf32, #tpu.memory_space<vmem>>, vector<1x1x8x222xf32>
      %135 = vector.shape_cast %134 : vector<1x1x8x222xf32> to vector<8x222xf32>
      %c5_i32_128 = arith.constant 5 : i32
      %136 = arith.addi %3, %c5_i32_128 : i32
      %c0_129 = arith.constant 0 : index
      %137 = arith.index_cast %136 : i32 to index
      %c0_130 = arith.constant 0 : index
      %c3_131 = arith.constant 3 : index
      %138 = vector.load %arg1[%c0_129, %137, %c0_130, %c3_131] : memref<1x227x8x227xf32, #tpu.memory_space<vmem>>, vector<1x1x8x222xf32>
      %139 = vector.shape_cast %138 : vector<1x1x8x222xf32> to vector<8x222xf32>
      %c5_i32_132 = arith.constant 5 : i32
      %140 = arith.addi %3, %c5_i32_132 : i32
      %c0_133 = arith.constant 0 : index
      %141 = arith.index_cast %140 : i32 to index
      %c0_134 = arith.constant 0 : index
      %c4_135 = arith.constant 4 : index
      %142 = vector.load %arg1[%c0_133, %141, %c0_134, %c4_135] : memref<1x227x8x227xf32, #tpu.memory_space<vmem>>, vector<1x1x8x222xf32>
      %143 = vector.shape_cast %142 : vector<1x1x8x222xf32> to vector<8x222xf32>
      %c5_i32_136 = arith.constant 5 : i32
      %144 = arith.addi %3, %c5_i32_136 : i32
      %c0_137 = arith.constant 0 : index
      %145 = arith.index_cast %144 : i32 to index
      %c0_138 = arith.constant 0 : index
      %c5_139 = arith.constant 5 : index
      %146 = vector.load %arg1[%c0_137, %145, %c0_138, %c5_139] : memref<1x227x8x227xf32, #tpu.memory_space<vmem>>, vector<1x1x8x222xf32>
      %147 = vector.shape_cast %146 : vector<1x1x8x222xf32> to vector<8x222xf32>
      %148 = tpu.concatenate %7, %11, %15, %19, %23, %27, %31, %35, %39, %43, %47, %51, %55, %59, %63, %67 in 0 : vector<8x222xf32>, vector<8x222xf32>, vector<8x222xf32>, vector<8x222xf32>, vector<8x222xf32>, vector<8x222xf32>, vector<8x222xf32>, vector<8x222xf32>, vector<8x222xf32>, vector<8x222xf32>, vector<8x222xf32>, vector<8x222xf32>, vector<8x222xf32>, vector<8x222xf32>, vector<8x222xf32>, vector<8x222xf32> -> vector<128x222xf32>
      %149 = tpu.concatenate %71, %75, %79, %83, %87, %91, %95, %99, %103, %107, %111, %115, %119, %123, %127, %131 in 0 : vector<8x222xf32>, vector<8x222xf32>, vector<8x222xf32>, vector<8x222xf32>, vector<8x222xf32>, vector<8x222xf32>, vector<8x222xf32>, vector<8x222xf32>, vector<8x222xf32>, vector<8x222xf32>, vector<8x222xf32>, vector<8x222xf32>, vector<8x222xf32>, vector<8x222xf32>, vector<8x222xf32>, vector<8x222xf32> -> vector<128x222xf32>
      %150 = tpu.concatenate %135, %139, %143, %147 in 0 : vector<8x222xf32>, vector<8x222xf32>, vector<8x222xf32>, vector<8x222xf32> -> vector<32x222xf32>
      %151 = tpu.concatenate %148, %149, %150 in 0 : vector<128x222xf32>, vector<128x222xf32>, vector<32x222xf32> -> vector<288x222xf32>
      %cst = arith.constant dense<0.000000e+00> : vector<12x222xf32>
      %152 = tpu.matmul %0, %151, %cst {dimension_numbers = #tpu.dot_dimension_numbers<[1], [0], [0], [1], [0, 0, 1, 1], [], []>} : vector<12x288xf32>, vector<288x222xf32>, vector<12x222xf32> -> vector<12x222xf32>
      %153 = vector.broadcast %1 : vector<12x1xf32> to vector<12x222xf32>
      %154 = arith.addf %152, %153 : vector<12x222xf32>
      %cst_140 = arith.constant 0.000000e+00 : f32
      %155 = vector.broadcast %cst_140 : f32 to vector<12x222xf32>
      %156 = arith.maximumf %154, %155 : vector<12x222xf32>
      %c2_i32_141 = arith.constant 2 : i32
      %157 = arith.muli %c2_i32_141, %arg5 : i32
      %c1_i32_142 = arith.constant 1 : i32
      %158 = arith.addi %157, %c1_i32_142 : i32
      %c0_i32_143 = arith.constant 0 : i32
      %159 = arith.addi %158, %c0_i32_143 : i32
      %c0_144 = arith.constant 0 : index
      %160 = arith.index_cast %159 : i32 to index
      %c0_145 = arith.constant 0 : index
      %c0_146 = arith.constant 0 : index
      %161 = vector.load %arg1[%c0_144, %160, %c0_145, %c0_146] : memref<1x227x8x227xf32, #tpu.memory_space<vmem>>, vector<1x1x8x222xf32>
      %162 = vector.shape_cast %161 : vector<1x1x8x222xf32> to vector<8x222xf32>
      %c0_i32_147 = arith.constant 0 : i32
      %163 = arith.addi %158, %c0_i32_147 : i32
      %c0_148 = arith.constant 0 : index
      %164 = arith.index_cast %163 : i32 to index
      %c0_149 = arith.constant 0 : index
      %c1_150 = arith.constant 1 : index
      %165 = vector.load %arg1[%c0_148, %164, %c0_149, %c1_150] : memref<1x227x8x227xf32, #tpu.memory_space<vmem>>, vector<1x1x8x222xf32>
      %166 = vector.shape_cast %165 : vector<1x1x8x222xf32> to vector<8x222xf32>
      %c0_i32_151 = arith.constant 0 : i32
      %167 = arith.addi %158, %c0_i32_151 : i32
      %c0_152 = arith.constant 0 : index
      %168 = arith.index_cast %167 : i32 to index
      %c0_153 = arith.constant 0 : index
      %c2_154 = arith.constant 2 : index
      %169 = vector.load %arg1[%c0_152, %168, %c0_153, %c2_154] : memref<1x227x8x227xf32, #tpu.memory_space<vmem>>, vector<1x1x8x222xf32>
      %170 = vector.shape_cast %169 : vector<1x1x8x222xf32> to vector<8x222xf32>
      %c0_i32_155 = arith.constant 0 : i32
      %171 = arith.addi %158, %c0_i32_155 : i32
      %c0_156 = arith.constant 0 : index
      %172 = arith.index_cast %171 : i32 to index
      %c0_157 = arith.constant 0 : index
      %c3_158 = arith.constant 3 : index
      %173 = vector.load %arg1[%c0_156, %172, %c0_157, %c3_158] : memref<1x227x8x227xf32, #tpu.memory_space<vmem>>, vector<1x1x8x222xf32>
      %174 = vector.shape_cast %173 : vector<1x1x8x222xf32> to vector<8x222xf32>
      %c0_i32_159 = arith.constant 0 : i32
      %175 = arith.addi %158, %c0_i32_159 : i32
      %c0_160 = arith.constant 0 : index
      %176 = arith.index_cast %175 : i32 to index
      %c0_161 = arith.constant 0 : index
      %c4_162 = arith.constant 4 : index
      %177 = vector.load %arg1[%c0_160, %176, %c0_161, %c4_162] : memref<1x227x8x227xf32, #tpu.memory_space<vmem>>, vector<1x1x8x222xf32>
      %178 = vector.shape_cast %177 : vector<1x1x8x222xf32> to vector<8x222xf32>
      %c0_i32_163 = arith.constant 0 : i32
      %179 = arith.addi %158, %c0_i32_163 : i32
      %c0_164 = arith.constant 0 : index
      %180 = arith.index_cast %179 : i32 to index
      %c0_165 = arith.constant 0 : index
      %c5_166 = arith.constant 5 : index
      %181 = vector.load %arg1[%c0_164, %180, %c0_165, %c5_166] : memref<1x227x8x227xf32, #tpu.memory_space<vmem>>, vector<1x1x8x222xf32>
      %182 = vector.shape_cast %181 : vector<1x1x8x222xf32> to vector<8x222xf32>
      %c1_i32_167 = arith.constant 1 : i32
      %183 = arith.addi %158, %c1_i32_167 : i32
      %c0_168 = arith.constant 0 : index
      %184 = arith.index_cast %183 : i32 to index
      %c0_169 = arith.constant 0 : index
      %c0_170 = arith.constant 0 : index
      %185 = vector.load %arg1[%c0_168, %184, %c0_169, %c0_170] : memref<1x227x8x227xf32, #tpu.memory_space<vmem>>, vector<1x1x8x222xf32>
      %186 = vector.shape_cast %185 : vector<1x1x8x222xf32> to vector<8x222xf32>
      %c1_i32_171 = arith.constant 1 : i32
      %187 = arith.addi %158, %c1_i32_171 : i32
      %c0_172 = arith.constant 0 : index
      %188 = arith.index_cast %187 : i32 to index
      %c0_173 = arith.constant 0 : index
      %c1_174 = arith.constant 1 : index
      %189 = vector.load %arg1[%c0_172, %188, %c0_173, %c1_174] : memref<1x227x8x227xf32, #tpu.memory_space<vmem>>, vector<1x1x8x222xf32>
      %190 = vector.shape_cast %189 : vector<1x1x8x222xf32> to vector<8x222xf32>
      %c1_i32_175 = arith.constant 1 : i32
      %191 = arith.addi %158, %c1_i32_175 : i32
      %c0_176 = arith.constant 0 : index
      %192 = arith.index_cast %191 : i32 to index
      %c0_177 = arith.constant 0 : index
      %c2_178 = arith.constant 2 : index
      %193 = vector.load %arg1[%c0_176, %192, %c0_177, %c2_178] : memref<1x227x8x227xf32, #tpu.memory_space<vmem>>, vector<1x1x8x222xf32>
      %194 = vector.shape_cast %193 : vector<1x1x8x222xf32> to vector<8x222xf32>
      %c1_i32_179 = arith.constant 1 : i32
      %195 = arith.addi %158, %c1_i32_179 : i32
      %c0_180 = arith.constant 0 : index
      %196 = arith.index_cast %195 : i32 to index
      %c0_181 = arith.constant 0 : index
      %c3_182 = arith.constant 3 : index
      %197 = vector.load %arg1[%c0_180, %196, %c0_181, %c3_182] : memref<1x227x8x227xf32, #tpu.memory_space<vmem>>, vector<1x1x8x222xf32>
      %198 = vector.shape_cast %197 : vector<1x1x8x222xf32> to vector<8x222xf32>
      %c1_i32_183 = arith.constant 1 : i32
      %199 = arith.addi %158, %c1_i32_183 : i32
      %c0_184 = arith.constant 0 : index
      %200 = arith.index_cast %199 : i32 to index
      %c0_185 = arith.constant 0 : index
      %c4_186 = arith.constant 4 : index
      %201 = vector.load %arg1[%c0_184, %200, %c0_185, %c4_186] : memref<1x227x8x227xf32, #tpu.memory_space<vmem>>, vector<1x1x8x222xf32>
      %202 = vector.shape_cast %201 : vector<1x1x8x222xf32> to vector<8x222xf32>
      %c1_i32_187 = arith.constant 1 : i32
      %203 = arith.addi %158, %c1_i32_187 : i32
      %c0_188 = arith.constant 0 : index
      %204 = arith.index_cast %203 : i32 to index
      %c0_189 = arith.constant 0 : index
      %c5_190 = arith.constant 5 : index
      %205 = vector.load %arg1[%c0_188, %204, %c0_189, %c5_190] : memref<1x227x8x227xf32, #tpu.memory_space<vmem>>, vector<1x1x8x222xf32>
      %206 = vector.shape_cast %205 : vector<1x1x8x222xf32> to vector<8x222xf32>
      %c2_i32_191 = arith.constant 2 : i32
      %207 = arith.addi %158, %c2_i32_191 : i32
      %c0_192 = arith.constant 0 : index
      %208 = arith.index_cast %207 : i32 to index
      %c0_193 = arith.constant 0 : index
      %c0_194 = arith.constant 0 : index
      %209 = vector.load %arg1[%c0_192, %208, %c0_193, %c0_194] : memref<1x227x8x227xf32, #tpu.memory_space<vmem>>, vector<1x1x8x222xf32>
      %210 = vector.shape_cast %209 : vector<1x1x8x222xf32> to vector<8x222xf32>
      %c2_i32_195 = arith.constant 2 : i32
      %211 = arith.addi %158, %c2_i32_195 : i32
      %c0_196 = arith.constant 0 : index
      %212 = arith.index_cast %211 : i32 to index
      %c0_197 = arith.constant 0 : index
      %c1_198 = arith.constant 1 : index
      %213 = vector.load %arg1[%c0_196, %212, %c0_197, %c1_198] : memref<1x227x8x227xf32, #tpu.memory_space<vmem>>, vector<1x1x8x222xf32>
      %214 = vector.shape_cast %213 : vector<1x1x8x222xf32> to vector<8x222xf32>
      %c2_i32_199 = arith.constant 2 : i32
      %215 = arith.addi %158, %c2_i32_199 : i32
      %c0_200 = arith.constant 0 : index
      %216 = arith.index_cast %215 : i32 to index
      %c0_201 = arith.constant 0 : index
      %c2_202 = arith.constant 2 : index
      %217 = vector.load %arg1[%c0_200, %216, %c0_201, %c2_202] : memref<1x227x8x227xf32, #tpu.memory_space<vmem>>, vector<1x1x8x222xf32>
      %218 = vector.shape_cast %217 : vector<1x1x8x222xf32> to vector<8x222xf32>
      %c2_i32_203 = arith.constant 2 : i32
      %219 = arith.addi %158, %c2_i32_203 : i32
      %c0_204 = arith.constant 0 : index
      %220 = arith.index_cast %219 : i32 to index
      %c0_205 = arith.constant 0 : index
      %c3_206 = arith.constant 3 : index
      %221 = vector.load %arg1[%c0_204, %220, %c0_205, %c3_206] : memref<1x227x8x227xf32, #tpu.memory_space<vmem>>, vector<1x1x8x222xf32>
      %222 = vector.shape_cast %221 : vector<1x1x8x222xf32> to vector<8x222xf32>
      %c2_i32_207 = arith.constant 2 : i32
      %223 = arith.addi %158, %c2_i32_207 : i32
      %c0_208 = arith.constant 0 : index
      %224 = arith.index_cast %223 : i32 to index
      %c0_209 = arith.constant 0 : index
      %c4_210 = arith.constant 4 : index
      %225 = vector.load %arg1[%c0_208, %224, %c0_209, %c4_210] : memref<1x227x8x227xf32, #tpu.memory_space<vmem>>, vector<1x1x8x222xf32>
      %226 = vector.shape_cast %225 : vector<1x1x8x222xf32> to vector<8x222xf32>
      %c2_i32_211 = arith.constant 2 : i32
      %227 = arith.addi %158, %c2_i32_211 : i32
      %c0_212 = arith.constant 0 : index
      %228 = arith.index_cast %227 : i32 to index
      %c0_213 = arith.constant 0 : index
      %c5_214 = arith.constant 5 : index
      %229 = vector.load %arg1[%c0_212, %228, %c0_213, %c5_214] : memref<1x227x8x227xf32, #tpu.memory_space<vmem>>, vector<1x1x8x222xf32>
      %230 = vector.shape_cast %229 : vector<1x1x8x222xf32> to vector<8x222xf32>
      %c3_i32_215 = arith.constant 3 : i32
      %231 = arith.addi %158, %c3_i32_215 : i32
      %c0_216 = arith.constant 0 : index
      %232 = arith.index_cast %231 : i32 to index
      %c0_217 = arith.constant 0 : index
      %c0_218 = arith.constant 0 : index
      %233 = vector.load %arg1[%c0_216, %232, %c0_217, %c0_218] : memref<1x227x8x227xf32, #tpu.memory_space<vmem>>, vector<1x1x8x222xf32>
      %234 = vector.shape_cast %233 : vector<1x1x8x222xf32> to vector<8x222xf32>
      %c3_i32_219 = arith.constant 3 : i32
      %235 = arith.addi %158, %c3_i32_219 : i32
      %c0_220 = arith.constant 0 : index
      %236 = arith.index_cast %235 : i32 to index
      %c0_221 = arith.constant 0 : index
      %c1_222 = arith.constant 1 : index
      %237 = vector.load %arg1[%c0_220, %236, %c0_221, %c1_222] : memref<1x227x8x227xf32, #tpu.memory_space<vmem>>, vector<1x1x8x222xf32>
      %238 = vector.shape_cast %237 : vector<1x1x8x222xf32> to vector<8x222xf32>
      %c3_i32_223 = arith.constant 3 : i32
      %239 = arith.addi %158, %c3_i32_223 : i32
      %c0_224 = arith.constant 0 : index
      %240 = arith.index_cast %239 : i32 to index
      %c0_225 = arith.constant 0 : index
      %c2_226 = arith.constant 2 : index
      %241 = vector.load %arg1[%c0_224, %240, %c0_225, %c2_226] : memref<1x227x8x227xf32, #tpu.memory_space<vmem>>, vector<1x1x8x222xf32>
      %242 = vector.shape_cast %241 : vector<1x1x8x222xf32> to vector<8x222xf32>
      %c3_i32_227 = arith.constant 3 : i32
      %243 = arith.addi %158, %c3_i32_227 : i32
      %c0_228 = arith.constant 0 : index
      %244 = arith.index_cast %243 : i32 to index
      %c0_229 = arith.constant 0 : index
      %c3_230 = arith.constant 3 : index
      %245 = vector.load %arg1[%c0_228, %244, %c0_229, %c3_230] : memref<1x227x8x227xf32, #tpu.memory_space<vmem>>, vector<1x1x8x222xf32>
      %246 = vector.shape_cast %245 : vector<1x1x8x222xf32> to vector<8x222xf32>
      %c3_i32_231 = arith.constant 3 : i32
      %247 = arith.addi %158, %c3_i32_231 : i32
      %c0_232 = arith.constant 0 : index
      %248 = arith.index_cast %247 : i32 to index
      %c0_233 = arith.constant 0 : index
      %c4_234 = arith.constant 4 : index
      %249 = vector.load %arg1[%c0_232, %248, %c0_233, %c4_234] : memref<1x227x8x227xf32, #tpu.memory_space<vmem>>, vector<1x1x8x222xf32>
      %250 = vector.shape_cast %249 : vector<1x1x8x222xf32> to vector<8x222xf32>
      %c3_i32_235 = arith.constant 3 : i32
      %251 = arith.addi %158, %c3_i32_235 : i32
      %c0_236 = arith.constant 0 : index
      %252 = arith.index_cast %251 : i32 to index
      %c0_237 = arith.constant 0 : index
      %c5_238 = arith.constant 5 : index
      %253 = vector.load %arg1[%c0_236, %252, %c0_237, %c5_238] : memref<1x227x8x227xf32, #tpu.memory_space<vmem>>, vector<1x1x8x222xf32>
      %254 = vector.shape_cast %253 : vector<1x1x8x222xf32> to vector<8x222xf32>
      %c4_i32_239 = arith.constant 4 : i32
      %255 = arith.addi %158, %c4_i32_239 : i32
      %c0_240 = arith.constant 0 : index
      %256 = arith.index_cast %255 : i32 to index
      %c0_241 = arith.constant 0 : index
      %c0_242 = arith.constant 0 : index
      %257 = vector.load %arg1[%c0_240, %256, %c0_241, %c0_242] : memref<1x227x8x227xf32, #tpu.memory_space<vmem>>, vector<1x1x8x222xf32>
      %258 = vector.shape_cast %257 : vector<1x1x8x222xf32> to vector<8x222xf32>
      %c4_i32_243 = arith.constant 4 : i32
      %259 = arith.addi %158, %c4_i32_243 : i32
      %c0_244 = arith.constant 0 : index
      %260 = arith.index_cast %259 : i32 to index
      %c0_245 = arith.constant 0 : index
      %c1_246 = arith.constant 1 : index
      %261 = vector.load %arg1[%c0_244, %260, %c0_245, %c1_246] : memref<1x227x8x227xf32, #tpu.memory_space<vmem>>, vector<1x1x8x222xf32>
      %262 = vector.shape_cast %261 : vector<1x1x8x222xf32> to vector<8x222xf32>
      %c4_i32_247 = arith.constant 4 : i32
      %263 = arith.addi %158, %c4_i32_247 : i32
      %c0_248 = arith.constant 0 : index
      %264 = arith.index_cast %263 : i32 to index
      %c0_249 = arith.constant 0 : index
      %c2_250 = arith.constant 2 : index
      %265 = vector.load %arg1[%c0_248, %264, %c0_249, %c2_250] : memref<1x227x8x227xf32, #tpu.memory_space<vmem>>, vector<1x1x8x222xf32>
      %266 = vector.shape_cast %265 : vector<1x1x8x222xf32> to vector<8x222xf32>
      %c4_i32_251 = arith.constant 4 : i32
      %267 = arith.addi %158, %c4_i32_251 : i32
      %c0_252 = arith.constant 0 : index
      %268 = arith.index_cast %267 : i32 to index
      %c0_253 = arith.constant 0 : index
      %c3_254 = arith.constant 3 : index
      %269 = vector.load %arg1[%c0_252, %268, %c0_253, %c3_254] : memref<1x227x8x227xf32, #tpu.memory_space<vmem>>, vector<1x1x8x222xf32>
      %270 = vector.shape_cast %269 : vector<1x1x8x222xf32> to vector<8x222xf32>
      %c4_i32_255 = arith.constant 4 : i32
      %271 = arith.addi %158, %c4_i32_255 : i32
      %c0_256 = arith.constant 0 : index
      %272 = arith.index_cast %271 : i32 to index
      %c0_257 = arith.constant 0 : index
      %c4_258 = arith.constant 4 : index
      %273 = vector.load %arg1[%c0_256, %272, %c0_257, %c4_258] : memref<1x227x8x227xf32, #tpu.memory_space<vmem>>, vector<1x1x8x222xf32>
      %274 = vector.shape_cast %273 : vector<1x1x8x222xf32> to vector<8x222xf32>
      %c4_i32_259 = arith.constant 4 : i32
      %275 = arith.addi %158, %c4_i32_259 : i32
      %c0_260 = arith.constant 0 : index
      %276 = arith.index_cast %275 : i32 to index
      %c0_261 = arith.constant 0 : index
      %c5_262 = arith.constant 5 : index
      %277 = vector.load %arg1[%c0_260, %276, %c0_261, %c5_262] : memref<1x227x8x227xf32, #tpu.memory_space<vmem>>, vector<1x1x8x222xf32>
      %278 = vector.shape_cast %277 : vector<1x1x8x222xf32> to vector<8x222xf32>
      %c5_i32_263 = arith.constant 5 : i32
      %279 = arith.addi %158, %c5_i32_263 : i32
      %c0_264 = arith.constant 0 : index
      %280 = arith.index_cast %279 : i32 to index
      %c0_265 = arith.constant 0 : index
      %c0_266 = arith.constant 0 : index
      %281 = vector.load %arg1[%c0_264, %280, %c0_265, %c0_266] : memref<1x227x8x227xf32, #tpu.memory_space<vmem>>, vector<1x1x8x222xf32>
      %282 = vector.shape_cast %281 : vector<1x1x8x222xf32> to vector<8x222xf32>
      %c5_i32_267 = arith.constant 5 : i32
      %283 = arith.addi %158, %c5_i32_267 : i32
      %c0_268 = arith.constant 0 : index
      %284 = arith.index_cast %283 : i32 to index
      %c0_269 = arith.constant 0 : index
      %c1_270 = arith.constant 1 : index
      %285 = vector.load %arg1[%c0_268, %284, %c0_269, %c1_270] : memref<1x227x8x227xf32, #tpu.memory_space<vmem>>, vector<1x1x8x222xf32>
      %286 = vector.shape_cast %285 : vector<1x1x8x222xf32> to vector<8x222xf32>
      %c5_i32_271 = arith.constant 5 : i32
      %287 = arith.addi %158, %c5_i32_271 : i32
      %c0_272 = arith.constant 0 : index
      %288 = arith.index_cast %287 : i32 to index
      %c0_273 = arith.constant 0 : index
      %c2_274 = arith.constant 2 : index
      %289 = vector.load %arg1[%c0_272, %288, %c0_273, %c2_274] : memref<1x227x8x227xf32, #tpu.memory_space<vmem>>, vector<1x1x8x222xf32>
      %290 = vector.shape_cast %289 : vector<1x1x8x222xf32> to vector<8x222xf32>
      %c5_i32_275 = arith.constant 5 : i32
      %291 = arith.addi %158, %c5_i32_275 : i32
      %c0_276 = arith.constant 0 : index
      %292 = arith.index_cast %291 : i32 to index
      %c0_277 = arith.constant 0 : index
      %c3_278 = arith.constant 3 : index
      %293 = vector.load %arg1[%c0_276, %292, %c0_277, %c3_278] : memref<1x227x8x227xf32, #tpu.memory_space<vmem>>, vector<1x1x8x222xf32>
      %294 = vector.shape_cast %293 : vector<1x1x8x222xf32> to vector<8x222xf32>
      %c5_i32_279 = arith.constant 5 : i32
      %295 = arith.addi %158, %c5_i32_279 : i32
      %c0_280 = arith.constant 0 : index
      %296 = arith.index_cast %295 : i32 to index
      %c0_281 = arith.constant 0 : index
      %c4_282 = arith.constant 4 : index
      %297 = vector.load %arg1[%c0_280, %296, %c0_281, %c4_282] : memref<1x227x8x227xf32, #tpu.memory_space<vmem>>, vector<1x1x8x222xf32>
      %298 = vector.shape_cast %297 : vector<1x1x8x222xf32> to vector<8x222xf32>
      %c5_i32_283 = arith.constant 5 : i32
      %299 = arith.addi %158, %c5_i32_283 : i32
      %c0_284 = arith.constant 0 : index
      %300 = arith.index_cast %299 : i32 to index
      %c0_285 = arith.constant 0 : index
      %c5_286 = arith.constant 5 : index
      %301 = vector.load %arg1[%c0_284, %300, %c0_285, %c5_286] : memref<1x227x8x227xf32, #tpu.memory_space<vmem>>, vector<1x1x8x222xf32>
      %302 = vector.shape_cast %301 : vector<1x1x8x222xf32> to vector<8x222xf32>
      %303 = tpu.concatenate %162, %166, %170, %174, %178, %182, %186, %190, %194, %198, %202, %206, %210, %214, %218, %222 in 0 : vector<8x222xf32>, vector<8x222xf32>, vector<8x222xf32>, vector<8x222xf32>, vector<8x222xf32>, vector<8x222xf32>, vector<8x222xf32>, vector<8x222xf32>, vector<8x222xf32>, vector<8x222xf32>, vector<8x222xf32>, vector<8x222xf32>, vector<8x222xf32>, vector<8x222xf32>, vector<8x222xf32>, vector<8x222xf32> -> vector<128x222xf32>
      %304 = tpu.concatenate %226, %230, %234, %238, %242, %246, %250, %254, %258, %262, %266, %270, %274, %278, %282, %286 in 0 : vector<8x222xf32>, vector<8x222xf32>, vector<8x222xf32>, vector<8x222xf32>, vector<8x222xf32>, vector<8x222xf32>, vector<8x222xf32>, vector<8x222xf32>, vector<8x222xf32>, vector<8x222xf32>, vector<8x222xf32>, vector<8x222xf32>, vector<8x222xf32>, vector<8x222xf32>, vector<8x222xf32>, vector<8x222xf32> -> vector<128x222xf32>
      %305 = tpu.concatenate %290, %294, %298, %302 in 0 : vector<8x222xf32>, vector<8x222xf32>, vector<8x222xf32>, vector<8x222xf32> -> vector<32x222xf32>
      %306 = tpu.concatenate %303, %304, %305 in 0 : vector<128x222xf32>, vector<128x222xf32>, vector<32x222xf32> -> vector<288x222xf32>
      %cst_287 = arith.constant dense<0.000000e+00> : vector<12x222xf32>
      %307 = tpu.matmul %0, %306, %cst_287 {dimension_numbers = #tpu.dot_dimension_numbers<[1], [0], [0], [1], [0, 0, 1, 1], [], []>} : vector<12x288xf32>, vector<288x222xf32>, vector<12x222xf32> -> vector<12x222xf32>
      %308 = vector.broadcast %1 : vector<12x1xf32> to vector<12x222xf32>
      %309 = arith.addf %307, %308 : vector<12x222xf32>
      %cst_288 = arith.constant 0.000000e+00 : f32
      %310 = vector.broadcast %cst_288 : f32 to vector<12x222xf32>
      %311 = arith.maximumf %309, %310 : vector<12x222xf32>
      %312 = arith.maximumf %156, %311 : vector<12x222xf32>
      %c0_289 = arith.constant 0 : index
      %313 = arith.index_cast %arg5 : i32 to index
      %c0_290 = arith.constant 0 : index
      %c0_291 = arith.constant 0 : index
      %314 = vector.load %arg4[%c0_289, %313, %c0_290, %c0_291] : memref<1x111x12x222xf32, #tpu.memory_space<vmem>>, vector<1x1x12x222xf32>
      %315 = vector.shape_cast %314 : vector<1x1x12x222xf32> to vector<12x222xf32>
      %316 = vector.shape_cast %312 : vector<12x222xf32> to vector<1x1x12x222xf32>
      tpu.vector_store %arg4[%c0_289, %313, %c0_290, %c0_291], %316 {strides = array<i32>} : memref<1x111x12x222xf32, #tpu.memory_space<vmem>>, vector<1x1x12x222xf32>,
    }
    %c111_i32_3 = arith.constant 111 : i32
    return
  }
  func.func @transform_0(%arg0: i32) -> (i32, i32, i32, i32) {
    %c0_i32 = arith.constant 0 : i32
    %c0_i32_0 = arith.constant 0 : i32
    %c0_i32_1 = arith.constant 0 : i32
    %c0_i32_2 = arith.constant 0 : i32
    return %arg0, %c0_i32, %c0_i32_0, %c0_i32_1 : i32, i32, i32, i32
  }
  func.func @transform_1(%arg0: i32) -> (i32, i32) {
    %c0_i32 = arith.constant 0 : i32
    %c0_i32_0 = arith.constant 0 : i32
    %c0_i32_1 = arith.constant 0 : i32
    return %c0_i32, %c0_i32_0 : i32, i32
  }
  func.func @transform_2(%arg0: i32) -> (i32, i32) {
    %c0_i32 = arith.constant 0 : i32
    %c0_i32_0 = arith.constant 0 : i32
    %c0_i32_1 = arith.constant 0 : i32
    return %c0_i32, %c0_i32_0 : i32, i32
  }
  func.func @transform_3(%arg0: i32) -> (i32, i32, i32, i32) {
    %c0_i32 = arith.constant 0 : i32
    %c0_i32_0 = arith.constant 0 : i32
    %c0_i32_1 = arith.constant 0 : i32
    %c0_i32_2 = arith.constant 0 : i32
    return %arg0, %c0_i32, %c0_i32_0, %c0_i32_1 : i32, i32, i32, i32
  }
}

module attributes {stable_mosaic.version = 11 : i64} {
  func.func @_conv_relu_rowpool_kernel(%arg0: i32, %arg1: memref<1x111x16x111xf32, #tpu.memory_space<vmem>>, %arg2: memref<32x400xf32, #tpu.memory_space<vmem>>, %arg3: memref<32x1xf32, #tpu.memory_space<vmem>>, %arg4: memref<1x53x32x107xf32, #tpu.memory_space<vmem>>) attributes {dimension_semantics = [#tpu.dimension_semantics<parallel>], iteration_bounds = array<i64: 2>, scalar_prefetch = 0 : i64, scratch_operands = 0 : i64, tpu.core_type = #tpu.core_type<tc>, window_params = [{transform_indices = @transform_0, window_bounds = array<i64: 1, 111, 16, 111>}, {pipeline_mode = #tpu.pipeline_mode<synchronous>, transform_indices = @transform_1, window_bounds = array<i64: 32, 400>}, {pipeline_mode = #tpu.pipeline_mode<synchronous>, transform_indices = @transform_2, window_bounds = array<i64: 32, 1>}, {transform_indices = @transform_3, window_bounds = array<i64: 1, 53, 32, 107>}]} {
    %c0 = arith.constant 0 : index
    %c0_0 = arith.constant 0 : index
    %0 = vector.load %arg2[%c0, %c0_0] : memref<32x400xf32, #tpu.memory_space<vmem>>, vector<32x400xf32>
    %c0_1 = arith.constant 0 : index
    %c0_2 = arith.constant 0 : index
    %1 = vector.load %arg3[%c0_1, %c0_2] : memref<32x1xf32, #tpu.memory_space<vmem>>, vector<32x1xf32>
    %c0_i32 = arith.constant 0 : i32
    %c53_i32 = arith.constant 53 : i32
    %2 = arith.addi %c0_i32, %c53_i32 : i32
    %c1_i32 = arith.constant 1 : i32
    scf.for %arg5 = %c0_i32 to %2 step %c1_i32  : i32 {
      %c2_i32 = arith.constant 2 : i32
      %3 = arith.muli %c2_i32, %arg5 : i32
      %c0_i32_4 = arith.constant 0 : i32
      %4 = arith.addi %3, %c0_i32_4 : i32
      %c0_5 = arith.constant 0 : index
      %5 = arith.index_cast %4 : i32 to index
      %c0_6 = arith.constant 0 : index
      %c0_7 = arith.constant 0 : index
      %6 = vector.load %arg1[%c0_5, %5, %c0_6, %c0_7] : memref<1x111x16x111xf32, #tpu.memory_space<vmem>>, vector<1x1x16x107xf32>
      %7 = vector.shape_cast %6 : vector<1x1x16x107xf32> to vector<16x107xf32>
      %c0_i32_8 = arith.constant 0 : i32
      %8 = arith.addi %3, %c0_i32_8 : i32
      %c0_9 = arith.constant 0 : index
      %9 = arith.index_cast %8 : i32 to index
      %c0_10 = arith.constant 0 : index
      %c1 = arith.constant 1 : index
      %10 = vector.load %arg1[%c0_9, %9, %c0_10, %c1] : memref<1x111x16x111xf32, #tpu.memory_space<vmem>>, vector<1x1x16x107xf32>
      %11 = vector.shape_cast %10 : vector<1x1x16x107xf32> to vector<16x107xf32>
      %c0_i32_11 = arith.constant 0 : i32
      %12 = arith.addi %3, %c0_i32_11 : i32
      %c0_12 = arith.constant 0 : index
      %13 = arith.index_cast %12 : i32 to index
      %c0_13 = arith.constant 0 : index
      %c2 = arith.constant 2 : index
      %14 = vector.load %arg1[%c0_12, %13, %c0_13, %c2] : memref<1x111x16x111xf32, #tpu.memory_space<vmem>>, vector<1x1x16x107xf32>
      %15 = vector.shape_cast %14 : vector<1x1x16x107xf32> to vector<16x107xf32>
      %c0_i32_14 = arith.constant 0 : i32
      %16 = arith.addi %3, %c0_i32_14 : i32
      %c0_15 = arith.constant 0 : index
      %17 = arith.index_cast %16 : i32 to index
      %c0_16 = arith.constant 0 : index
      %c3 = arith.constant 3 : index
      %18 = vector.load %arg1[%c0_15, %17, %c0_16, %c3] : memref<1x111x16x111xf32, #tpu.memory_space<vmem>>, vector<1x1x16x107xf32>
      %19 = vector.shape_cast %18 : vector<1x1x16x107xf32> to vector<16x107xf32>
      %c0_i32_17 = arith.constant 0 : i32
      %20 = arith.addi %3, %c0_i32_17 : i32
      %c0_18 = arith.constant 0 : index
      %21 = arith.index_cast %20 : i32 to index
      %c0_19 = arith.constant 0 : index
      %c4 = arith.constant 4 : index
      %22 = vector.load %arg1[%c0_18, %21, %c0_19, %c4] : memref<1x111x16x111xf32, #tpu.memory_space<vmem>>, vector<1x1x16x107xf32>
      %23 = vector.shape_cast %22 : vector<1x1x16x107xf32> to vector<16x107xf32>
      %c1_i32_20 = arith.constant 1 : i32
      %24 = arith.addi %3, %c1_i32_20 : i32
      %c0_21 = arith.constant 0 : index
      %25 = arith.index_cast %24 : i32 to index
      %c0_22 = arith.constant 0 : index
      %c0_23 = arith.constant 0 : index
      %26 = vector.load %arg1[%c0_21, %25, %c0_22, %c0_23] : memref<1x111x16x111xf32, #tpu.memory_space<vmem>>, vector<1x1x16x107xf32>
      %27 = vector.shape_cast %26 : vector<1x1x16x107xf32> to vector<16x107xf32>
      %c1_i32_24 = arith.constant 1 : i32
      %28 = arith.addi %3, %c1_i32_24 : i32
      %c0_25 = arith.constant 0 : index
      %29 = arith.index_cast %28 : i32 to index
      %c0_26 = arith.constant 0 : index
      %c1_27 = arith.constant 1 : index
      %30 = vector.load %arg1[%c0_25, %29, %c0_26, %c1_27] : memref<1x111x16x111xf32, #tpu.memory_space<vmem>>, vector<1x1x16x107xf32>
      %31 = vector.shape_cast %30 : vector<1x1x16x107xf32> to vector<16x107xf32>
      %c1_i32_28 = arith.constant 1 : i32
      %32 = arith.addi %3, %c1_i32_28 : i32
      %c0_29 = arith.constant 0 : index
      %33 = arith.index_cast %32 : i32 to index
      %c0_30 = arith.constant 0 : index
      %c2_31 = arith.constant 2 : index
      %34 = vector.load %arg1[%c0_29, %33, %c0_30, %c2_31] : memref<1x111x16x111xf32, #tpu.memory_space<vmem>>, vector<1x1x16x107xf32>
      %35 = vector.shape_cast %34 : vector<1x1x16x107xf32> to vector<16x107xf32>
      %c1_i32_32 = arith.constant 1 : i32
      %36 = arith.addi %3, %c1_i32_32 : i32
      %c0_33 = arith.constant 0 : index
      %37 = arith.index_cast %36 : i32 to index
      %c0_34 = arith.constant 0 : index
      %c3_35 = arith.constant 3 : index
      %38 = vector.load %arg1[%c0_33, %37, %c0_34, %c3_35] : memref<1x111x16x111xf32, #tpu.memory_space<vmem>>, vector<1x1x16x107xf32>
      %39 = vector.shape_cast %38 : vector<1x1x16x107xf32> to vector<16x107xf32>
      %c1_i32_36 = arith.constant 1 : i32
      %40 = arith.addi %3, %c1_i32_36 : i32
      %c0_37 = arith.constant 0 : index
      %41 = arith.index_cast %40 : i32 to index
      %c0_38 = arith.constant 0 : index
      %c4_39 = arith.constant 4 : index
      %42 = vector.load %arg1[%c0_37, %41, %c0_38, %c4_39] : memref<1x111x16x111xf32, #tpu.memory_space<vmem>>, vector<1x1x16x107xf32>
      %43 = vector.shape_cast %42 : vector<1x1x16x107xf32> to vector<16x107xf32>
      %c2_i32_40 = arith.constant 2 : i32
      %44 = arith.addi %3, %c2_i32_40 : i32
      %c0_41 = arith.constant 0 : index
      %45 = arith.index_cast %44 : i32 to index
      %c0_42 = arith.constant 0 : index
      %c0_43 = arith.constant 0 : index
      %46 = vector.load %arg1[%c0_41, %45, %c0_42, %c0_43] : memref<1x111x16x111xf32, #tpu.memory_space<vmem>>, vector<1x1x16x107xf32>
      %47 = vector.shape_cast %46 : vector<1x1x16x107xf32> to vector<16x107xf32>
      %c2_i32_44 = arith.constant 2 : i32
      %48 = arith.addi %3, %c2_i32_44 : i32
      %c0_45 = arith.constant 0 : index
      %49 = arith.index_cast %48 : i32 to index
      %c0_46 = arith.constant 0 : index
      %c1_47 = arith.constant 1 : index
      %50 = vector.load %arg1[%c0_45, %49, %c0_46, %c1_47] : memref<1x111x16x111xf32, #tpu.memory_space<vmem>>, vector<1x1x16x107xf32>
      %51 = vector.shape_cast %50 : vector<1x1x16x107xf32> to vector<16x107xf32>
      %c2_i32_48 = arith.constant 2 : i32
      %52 = arith.addi %3, %c2_i32_48 : i32
      %c0_49 = arith.constant 0 : index
      %53 = arith.index_cast %52 : i32 to index
      %c0_50 = arith.constant 0 : index
      %c2_51 = arith.constant 2 : index
      %54 = vector.load %arg1[%c0_49, %53, %c0_50, %c2_51] : memref<1x111x16x111xf32, #tpu.memory_space<vmem>>, vector<1x1x16x107xf32>
      %55 = vector.shape_cast %54 : vector<1x1x16x107xf32> to vector<16x107xf32>
      %c2_i32_52 = arith.constant 2 : i32
      %56 = arith.addi %3, %c2_i32_52 : i32
      %c0_53 = arith.constant 0 : index
      %57 = arith.index_cast %56 : i32 to index
      %c0_54 = arith.constant 0 : index
      %c3_55 = arith.constant 3 : index
      %58 = vector.load %arg1[%c0_53, %57, %c0_54, %c3_55] : memref<1x111x16x111xf32, #tpu.memory_space<vmem>>, vector<1x1x16x107xf32>
      %59 = vector.shape_cast %58 : vector<1x1x16x107xf32> to vector<16x107xf32>
      %c2_i32_56 = arith.constant 2 : i32
      %60 = arith.addi %3, %c2_i32_56 : i32
      %c0_57 = arith.constant 0 : index
      %61 = arith.index_cast %60 : i32 to index
      %c0_58 = arith.constant 0 : index
      %c4_59 = arith.constant 4 : index
      %62 = vector.load %arg1[%c0_57, %61, %c0_58, %c4_59] : memref<1x111x16x111xf32, #tpu.memory_space<vmem>>, vector<1x1x16x107xf32>
      %63 = vector.shape_cast %62 : vector<1x1x16x107xf32> to vector<16x107xf32>
      %c3_i32 = arith.constant 3 : i32
      %64 = arith.addi %3, %c3_i32 : i32
      %c0_60 = arith.constant 0 : index
      %65 = arith.index_cast %64 : i32 to index
      %c0_61 = arith.constant 0 : index
      %c0_62 = arith.constant 0 : index
      %66 = vector.load %arg1[%c0_60, %65, %c0_61, %c0_62] : memref<1x111x16x111xf32, #tpu.memory_space<vmem>>, vector<1x1x16x107xf32>
      %67 = vector.shape_cast %66 : vector<1x1x16x107xf32> to vector<16x107xf32>
      %c3_i32_63 = arith.constant 3 : i32
      %68 = arith.addi %3, %c3_i32_63 : i32
      %c0_64 = arith.constant 0 : index
      %69 = arith.index_cast %68 : i32 to index
      %c0_65 = arith.constant 0 : index
      %c1_66 = arith.constant 1 : index
      %70 = vector.load %arg1[%c0_64, %69, %c0_65, %c1_66] : memref<1x111x16x111xf32, #tpu.memory_space<vmem>>, vector<1x1x16x107xf32>
      %71 = vector.shape_cast %70 : vector<1x1x16x107xf32> to vector<16x107xf32>
      %c3_i32_67 = arith.constant 3 : i32
      %72 = arith.addi %3, %c3_i32_67 : i32
      %c0_68 = arith.constant 0 : index
      %73 = arith.index_cast %72 : i32 to index
      %c0_69 = arith.constant 0 : index
      %c2_70 = arith.constant 2 : index
      %74 = vector.load %arg1[%c0_68, %73, %c0_69, %c2_70] : memref<1x111x16x111xf32, #tpu.memory_space<vmem>>, vector<1x1x16x107xf32>
      %75 = vector.shape_cast %74 : vector<1x1x16x107xf32> to vector<16x107xf32>
      %c3_i32_71 = arith.constant 3 : i32
      %76 = arith.addi %3, %c3_i32_71 : i32
      %c0_72 = arith.constant 0 : index
      %77 = arith.index_cast %76 : i32 to index
      %c0_73 = arith.constant 0 : index
      %c3_74 = arith.constant 3 : index
      %78 = vector.load %arg1[%c0_72, %77, %c0_73, %c3_74] : memref<1x111x16x111xf32, #tpu.memory_space<vmem>>, vector<1x1x16x107xf32>
      %79 = vector.shape_cast %78 : vector<1x1x16x107xf32> to vector<16x107xf32>
      %c3_i32_75 = arith.constant 3 : i32
      %80 = arith.addi %3, %c3_i32_75 : i32
      %c0_76 = arith.constant 0 : index
      %81 = arith.index_cast %80 : i32 to index
      %c0_77 = arith.constant 0 : index
      %c4_78 = arith.constant 4 : index
      %82 = vector.load %arg1[%c0_76, %81, %c0_77, %c4_78] : memref<1x111x16x111xf32, #tpu.memory_space<vmem>>, vector<1x1x16x107xf32>
      %83 = vector.shape_cast %82 : vector<1x1x16x107xf32> to vector<16x107xf32>
      %c4_i32 = arith.constant 4 : i32
      %84 = arith.addi %3, %c4_i32 : i32
      %c0_79 = arith.constant 0 : index
      %85 = arith.index_cast %84 : i32 to index
      %c0_80 = arith.constant 0 : index
      %c0_81 = arith.constant 0 : index
      %86 = vector.load %arg1[%c0_79, %85, %c0_80, %c0_81] : memref<1x111x16x111xf32, #tpu.memory_space<vmem>>, vector<1x1x16x107xf32>
      %87 = vector.shape_cast %86 : vector<1x1x16x107xf32> to vector<16x107xf32>
      %c4_i32_82 = arith.constant 4 : i32
      %88 = arith.addi %3, %c4_i32_82 : i32
      %c0_83 = arith.constant 0 : index
      %89 = arith.index_cast %88 : i32 to index
      %c0_84 = arith.constant 0 : index
      %c1_85 = arith.constant 1 : index
      %90 = vector.load %arg1[%c0_83, %89, %c0_84, %c1_85] : memref<1x111x16x111xf32, #tpu.memory_space<vmem>>, vector<1x1x16x107xf32>
      %91 = vector.shape_cast %90 : vector<1x1x16x107xf32> to vector<16x107xf32>
      %c4_i32_86 = arith.constant 4 : i32
      %92 = arith.addi %3, %c4_i32_86 : i32
      %c0_87 = arith.constant 0 : index
      %93 = arith.index_cast %92 : i32 to index
      %c0_88 = arith.constant 0 : index
      %c2_89 = arith.constant 2 : index
      %94 = vector.load %arg1[%c0_87, %93, %c0_88, %c2_89] : memref<1x111x16x111xf32, #tpu.memory_space<vmem>>, vector<1x1x16x107xf32>
      %95 = vector.shape_cast %94 : vector<1x1x16x107xf32> to vector<16x107xf32>
      %c4_i32_90 = arith.constant 4 : i32
      %96 = arith.addi %3, %c4_i32_90 : i32
      %c0_91 = arith.constant 0 : index
      %97 = arith.index_cast %96 : i32 to index
      %c0_92 = arith.constant 0 : index
      %c3_93 = arith.constant 3 : index
      %98 = vector.load %arg1[%c0_91, %97, %c0_92, %c3_93] : memref<1x111x16x111xf32, #tpu.memory_space<vmem>>, vector<1x1x16x107xf32>
      %99 = vector.shape_cast %98 : vector<1x1x16x107xf32> to vector<16x107xf32>
      %c4_i32_94 = arith.constant 4 : i32
      %100 = arith.addi %3, %c4_i32_94 : i32
      %c0_95 = arith.constant 0 : index
      %101 = arith.index_cast %100 : i32 to index
      %c0_96 = arith.constant 0 : index
      %c4_97 = arith.constant 4 : index
      %102 = vector.load %arg1[%c0_95, %101, %c0_96, %c4_97] : memref<1x111x16x111xf32, #tpu.memory_space<vmem>>, vector<1x1x16x107xf32>
      %103 = vector.shape_cast %102 : vector<1x1x16x107xf32> to vector<16x107xf32>
      %104 = tpu.concatenate %7, %11, %15, %19, %23, %27, %31, %35, %39, %43, %47, %51, %55, %59, %63, %67 in 0 : vector<16x107xf32>, vector<16x107xf32>, vector<16x107xf32>, vector<16x107xf32>, vector<16x107xf32>, vector<16x107xf32>, vector<16x107xf32>, vector<16x107xf32>, vector<16x107xf32>, vector<16x107xf32>, vector<16x107xf32>, vector<16x107xf32>, vector<16x107xf32>, vector<16x107xf32>, vector<16x107xf32>, vector<16x107xf32> -> vector<256x107xf32>
      %105 = tpu.concatenate %71, %75, %79, %83, %87, %91, %95, %99, %103 in 0 : vector<16x107xf32>, vector<16x107xf32>, vector<16x107xf32>, vector<16x107xf32>, vector<16x107xf32>, vector<16x107xf32>, vector<16x107xf32>, vector<16x107xf32>, vector<16x107xf32> -> vector<144x107xf32>
      %106 = tpu.concatenate %104, %105 in 0 : vector<256x107xf32>, vector<144x107xf32> -> vector<400x107xf32>
      %cst = arith.constant dense<0.000000e+00> : vector<32x107xf32>
      %107 = tpu.matmul %0, %106, %cst {dimension_numbers = #tpu.dot_dimension_numbers<[1], [0], [0], [1], [0, 0, 1, 1], [], []>} : vector<32x400xf32>, vector<400x107xf32>, vector<32x107xf32> -> vector<32x107xf32>
      %108 = vector.broadcast %1 : vector<32x1xf32> to vector<32x107xf32>
      %109 = arith.addf %107, %108 : vector<32x107xf32>
      %cst_98 = arith.constant 0.000000e+00 : f32
      %110 = vector.broadcast %cst_98 : f32 to vector<32x107xf32>
      %111 = arith.maximumf %109, %110 : vector<32x107xf32>
      %c2_i32_99 = arith.constant 2 : i32
      %112 = arith.muli %c2_i32_99, %arg5 : i32
      %c1_i32_100 = arith.constant 1 : i32
      %113 = arith.addi %112, %c1_i32_100 : i32
      %c0_i32_101 = arith.constant 0 : i32
      %114 = arith.addi %113, %c0_i32_101 : i32
      %c0_102 = arith.constant 0 : index
      %115 = arith.index_cast %114 : i32 to index
      %c0_103 = arith.constant 0 : index
      %c0_104 = arith.constant 0 : index
      %116 = vector.load %arg1[%c0_102, %115, %c0_103, %c0_104] : memref<1x111x16x111xf32, #tpu.memory_space<vmem>>, vector<1x1x16x107xf32>
      %117 = vector.shape_cast %116 : vector<1x1x16x107xf32> to vector<16x107xf32>
      %c0_i32_105 = arith.constant 0 : i32
      %118 = arith.addi %113, %c0_i32_105 : i32
      %c0_106 = arith.constant 0 : index
      %119 = arith.index_cast %118 : i32 to index
      %c0_107 = arith.constant 0 : index
      %c1_108 = arith.constant 1 : index
      %120 = vector.load %arg1[%c0_106, %119, %c0_107, %c1_108] : memref<1x111x16x111xf32, #tpu.memory_space<vmem>>, vector<1x1x16x107xf32>
      %121 = vector.shape_cast %120 : vector<1x1x16x107xf32> to vector<16x107xf32>
      %c0_i32_109 = arith.constant 0 : i32
      %122 = arith.addi %113, %c0_i32_109 : i32
      %c0_110 = arith.constant 0 : index
      %123 = arith.index_cast %122 : i32 to index
      %c0_111 = arith.constant 0 : index
      %c2_112 = arith.constant 2 : index
      %124 = vector.load %arg1[%c0_110, %123, %c0_111, %c2_112] : memref<1x111x16x111xf32, #tpu.memory_space<vmem>>, vector<1x1x16x107xf32>
      %125 = vector.shape_cast %124 : vector<1x1x16x107xf32> to vector<16x107xf32>
      %c0_i32_113 = arith.constant 0 : i32
      %126 = arith.addi %113, %c0_i32_113 : i32
      %c0_114 = arith.constant 0 : index
      %127 = arith.index_cast %126 : i32 to index
      %c0_115 = arith.constant 0 : index
      %c3_116 = arith.constant 3 : index
      %128 = vector.load %arg1[%c0_114, %127, %c0_115, %c3_116] : memref<1x111x16x111xf32, #tpu.memory_space<vmem>>, vector<1x1x16x107xf32>
      %129 = vector.shape_cast %128 : vector<1x1x16x107xf32> to vector<16x107xf32>
      %c0_i32_117 = arith.constant 0 : i32
      %130 = arith.addi %113, %c0_i32_117 : i32
      %c0_118 = arith.constant 0 : index
      %131 = arith.index_cast %130 : i32 to index
      %c0_119 = arith.constant 0 : index
      %c4_120 = arith.constant 4 : index
      %132 = vector.load %arg1[%c0_118, %131, %c0_119, %c4_120] : memref<1x111x16x111xf32, #tpu.memory_space<vmem>>, vector<1x1x16x107xf32>
      %133 = vector.shape_cast %132 : vector<1x1x16x107xf32> to vector<16x107xf32>
      %c1_i32_121 = arith.constant 1 : i32
      %134 = arith.addi %113, %c1_i32_121 : i32
      %c0_122 = arith.constant 0 : index
      %135 = arith.index_cast %134 : i32 to index
      %c0_123 = arith.constant 0 : index
      %c0_124 = arith.constant 0 : index
      %136 = vector.load %arg1[%c0_122, %135, %c0_123, %c0_124] : memref<1x111x16x111xf32, #tpu.memory_space<vmem>>, vector<1x1x16x107xf32>
      %137 = vector.shape_cast %136 : vector<1x1x16x107xf32> to vector<16x107xf32>
      %c1_i32_125 = arith.constant 1 : i32
      %138 = arith.addi %113, %c1_i32_125 : i32
      %c0_126 = arith.constant 0 : index
      %139 = arith.index_cast %138 : i32 to index
      %c0_127 = arith.constant 0 : index
      %c1_128 = arith.constant 1 : index
      %140 = vector.load %arg1[%c0_126, %139, %c0_127, %c1_128] : memref<1x111x16x111xf32, #tpu.memory_space<vmem>>, vector<1x1x16x107xf32>
      %141 = vector.shape_cast %140 : vector<1x1x16x107xf32> to vector<16x107xf32>
      %c1_i32_129 = arith.constant 1 : i32
      %142 = arith.addi %113, %c1_i32_129 : i32
      %c0_130 = arith.constant 0 : index
      %143 = arith.index_cast %142 : i32 to index
      %c0_131 = arith.constant 0 : index
      %c2_132 = arith.constant 2 : index
      %144 = vector.load %arg1[%c0_130, %143, %c0_131, %c2_132] : memref<1x111x16x111xf32, #tpu.memory_space<vmem>>, vector<1x1x16x107xf32>
      %145 = vector.shape_cast %144 : vector<1x1x16x107xf32> to vector<16x107xf32>
      %c1_i32_133 = arith.constant 1 : i32
      %146 = arith.addi %113, %c1_i32_133 : i32
      %c0_134 = arith.constant 0 : index
      %147 = arith.index_cast %146 : i32 to index
      %c0_135 = arith.constant 0 : index
      %c3_136 = arith.constant 3 : index
      %148 = vector.load %arg1[%c0_134, %147, %c0_135, %c3_136] : memref<1x111x16x111xf32, #tpu.memory_space<vmem>>, vector<1x1x16x107xf32>
      %149 = vector.shape_cast %148 : vector<1x1x16x107xf32> to vector<16x107xf32>
      %c1_i32_137 = arith.constant 1 : i32
      %150 = arith.addi %113, %c1_i32_137 : i32
      %c0_138 = arith.constant 0 : index
      %151 = arith.index_cast %150 : i32 to index
      %c0_139 = arith.constant 0 : index
      %c4_140 = arith.constant 4 : index
      %152 = vector.load %arg1[%c0_138, %151, %c0_139, %c4_140] : memref<1x111x16x111xf32, #tpu.memory_space<vmem>>, vector<1x1x16x107xf32>
      %153 = vector.shape_cast %152 : vector<1x1x16x107xf32> to vector<16x107xf32>
      %c2_i32_141 = arith.constant 2 : i32
      %154 = arith.addi %113, %c2_i32_141 : i32
      %c0_142 = arith.constant 0 : index
      %155 = arith.index_cast %154 : i32 to index
      %c0_143 = arith.constant 0 : index
      %c0_144 = arith.constant 0 : index
      %156 = vector.load %arg1[%c0_142, %155, %c0_143, %c0_144] : memref<1x111x16x111xf32, #tpu.memory_space<vmem>>, vector<1x1x16x107xf32>
      %157 = vector.shape_cast %156 : vector<1x1x16x107xf32> to vector<16x107xf32>
      %c2_i32_145 = arith.constant 2 : i32
      %158 = arith.addi %113, %c2_i32_145 : i32
      %c0_146 = arith.constant 0 : index
      %159 = arith.index_cast %158 : i32 to index
      %c0_147 = arith.constant 0 : index
      %c1_148 = arith.constant 1 : index
      %160 = vector.load %arg1[%c0_146, %159, %c0_147, %c1_148] : memref<1x111x16x111xf32, #tpu.memory_space<vmem>>, vector<1x1x16x107xf32>
      %161 = vector.shape_cast %160 : vector<1x1x16x107xf32> to vector<16x107xf32>
      %c2_i32_149 = arith.constant 2 : i32
      %162 = arith.addi %113, %c2_i32_149 : i32
      %c0_150 = arith.constant 0 : index
      %163 = arith.index_cast %162 : i32 to index
      %c0_151 = arith.constant 0 : index
      %c2_152 = arith.constant 2 : index
      %164 = vector.load %arg1[%c0_150, %163, %c0_151, %c2_152] : memref<1x111x16x111xf32, #tpu.memory_space<vmem>>, vector<1x1x16x107xf32>
      %165 = vector.shape_cast %164 : vector<1x1x16x107xf32> to vector<16x107xf32>
      %c2_i32_153 = arith.constant 2 : i32
      %166 = arith.addi %113, %c2_i32_153 : i32
      %c0_154 = arith.constant 0 : index
      %167 = arith.index_cast %166 : i32 to index
      %c0_155 = arith.constant 0 : index
      %c3_156 = arith.constant 3 : index
      %168 = vector.load %arg1[%c0_154, %167, %c0_155, %c3_156] : memref<1x111x16x111xf32, #tpu.memory_space<vmem>>, vector<1x1x16x107xf32>
      %169 = vector.shape_cast %168 : vector<1x1x16x107xf32> to vector<16x107xf32>
      %c2_i32_157 = arith.constant 2 : i32
      %170 = arith.addi %113, %c2_i32_157 : i32
      %c0_158 = arith.constant 0 : index
      %171 = arith.index_cast %170 : i32 to index
      %c0_159 = arith.constant 0 : index
      %c4_160 = arith.constant 4 : index
      %172 = vector.load %arg1[%c0_158, %171, %c0_159, %c4_160] : memref<1x111x16x111xf32, #tpu.memory_space<vmem>>, vector<1x1x16x107xf32>
      %173 = vector.shape_cast %172 : vector<1x1x16x107xf32> to vector<16x107xf32>
      %c3_i32_161 = arith.constant 3 : i32
      %174 = arith.addi %113, %c3_i32_161 : i32
      %c0_162 = arith.constant 0 : index
      %175 = arith.index_cast %174 : i32 to index
      %c0_163 = arith.constant 0 : index
      %c0_164 = arith.constant 0 : index
      %176 = vector.load %arg1[%c0_162, %175, %c0_163, %c0_164] : memref<1x111x16x111xf32, #tpu.memory_space<vmem>>, vector<1x1x16x107xf32>
      %177 = vector.shape_cast %176 : vector<1x1x16x107xf32> to vector<16x107xf32>
      %c3_i32_165 = arith.constant 3 : i32
      %178 = arith.addi %113, %c3_i32_165 : i32
      %c0_166 = arith.constant 0 : index
      %179 = arith.index_cast %178 : i32 to index
      %c0_167 = arith.constant 0 : index
      %c1_168 = arith.constant 1 : index
      %180 = vector.load %arg1[%c0_166, %179, %c0_167, %c1_168] : memref<1x111x16x111xf32, #tpu.memory_space<vmem>>, vector<1x1x16x107xf32>
      %181 = vector.shape_cast %180 : vector<1x1x16x107xf32> to vector<16x107xf32>
      %c3_i32_169 = arith.constant 3 : i32
      %182 = arith.addi %113, %c3_i32_169 : i32
      %c0_170 = arith.constant 0 : index
      %183 = arith.index_cast %182 : i32 to index
      %c0_171 = arith.constant 0 : index
      %c2_172 = arith.constant 2 : index
      %184 = vector.load %arg1[%c0_170, %183, %c0_171, %c2_172] : memref<1x111x16x111xf32, #tpu.memory_space<vmem>>, vector<1x1x16x107xf32>
      %185 = vector.shape_cast %184 : vector<1x1x16x107xf32> to vector<16x107xf32>
      %c3_i32_173 = arith.constant 3 : i32
      %186 = arith.addi %113, %c3_i32_173 : i32
      %c0_174 = arith.constant 0 : index
      %187 = arith.index_cast %186 : i32 to index
      %c0_175 = arith.constant 0 : index
      %c3_176 = arith.constant 3 : index
      %188 = vector.load %arg1[%c0_174, %187, %c0_175, %c3_176] : memref<1x111x16x111xf32, #tpu.memory_space<vmem>>, vector<1x1x16x107xf32>
      %189 = vector.shape_cast %188 : vector<1x1x16x107xf32> to vector<16x107xf32>
      %c3_i32_177 = arith.constant 3 : i32
      %190 = arith.addi %113, %c3_i32_177 : i32
      %c0_178 = arith.constant 0 : index
      %191 = arith.index_cast %190 : i32 to index
      %c0_179 = arith.constant 0 : index
      %c4_180 = arith.constant 4 : index
      %192 = vector.load %arg1[%c0_178, %191, %c0_179, %c4_180] : memref<1x111x16x111xf32, #tpu.memory_space<vmem>>, vector<1x1x16x107xf32>
      %193 = vector.shape_cast %192 : vector<1x1x16x107xf32> to vector<16x107xf32>
      %c4_i32_181 = arith.constant 4 : i32
      %194 = arith.addi %113, %c4_i32_181 : i32
      %c0_182 = arith.constant 0 : index
      %195 = arith.index_cast %194 : i32 to index
      %c0_183 = arith.constant 0 : index
      %c0_184 = arith.constant 0 : index
      %196 = vector.load %arg1[%c0_182, %195, %c0_183, %c0_184] : memref<1x111x16x111xf32, #tpu.memory_space<vmem>>, vector<1x1x16x107xf32>
      %197 = vector.shape_cast %196 : vector<1x1x16x107xf32> to vector<16x107xf32>
      %c4_i32_185 = arith.constant 4 : i32
      %198 = arith.addi %113, %c4_i32_185 : i32
      %c0_186 = arith.constant 0 : index
      %199 = arith.index_cast %198 : i32 to index
      %c0_187 = arith.constant 0 : index
      %c1_188 = arith.constant 1 : index
      %200 = vector.load %arg1[%c0_186, %199, %c0_187, %c1_188] : memref<1x111x16x111xf32, #tpu.memory_space<vmem>>, vector<1x1x16x107xf32>
      %201 = vector.shape_cast %200 : vector<1x1x16x107xf32> to vector<16x107xf32>
      %c4_i32_189 = arith.constant 4 : i32
      %202 = arith.addi %113, %c4_i32_189 : i32
      %c0_190 = arith.constant 0 : index
      %203 = arith.index_cast %202 : i32 to index
      %c0_191 = arith.constant 0 : index
      %c2_192 = arith.constant 2 : index
      %204 = vector.load %arg1[%c0_190, %203, %c0_191, %c2_192] : memref<1x111x16x111xf32, #tpu.memory_space<vmem>>, vector<1x1x16x107xf32>
      %205 = vector.shape_cast %204 : vector<1x1x16x107xf32> to vector<16x107xf32>
      %c4_i32_193 = arith.constant 4 : i32
      %206 = arith.addi %113, %c4_i32_193 : i32
      %c0_194 = arith.constant 0 : index
      %207 = arith.index_cast %206 : i32 to index
      %c0_195 = arith.constant 0 : index
      %c3_196 = arith.constant 3 : index
      %208 = vector.load %arg1[%c0_194, %207, %c0_195, %c3_196] : memref<1x111x16x111xf32, #tpu.memory_space<vmem>>, vector<1x1x16x107xf32>
      %209 = vector.shape_cast %208 : vector<1x1x16x107xf32> to vector<16x107xf32>
      %c4_i32_197 = arith.constant 4 : i32
      %210 = arith.addi %113, %c4_i32_197 : i32
      %c0_198 = arith.constant 0 : index
      %211 = arith.index_cast %210 : i32 to index
      %c0_199 = arith.constant 0 : index
      %c4_200 = arith.constant 4 : index
      %212 = vector.load %arg1[%c0_198, %211, %c0_199, %c4_200] : memref<1x111x16x111xf32, #tpu.memory_space<vmem>>, vector<1x1x16x107xf32>
      %213 = vector.shape_cast %212 : vector<1x1x16x107xf32> to vector<16x107xf32>
      %214 = tpu.concatenate %117, %121, %125, %129, %133, %137, %141, %145, %149, %153, %157, %161, %165, %169, %173, %177 in 0 : vector<16x107xf32>, vector<16x107xf32>, vector<16x107xf32>, vector<16x107xf32>, vector<16x107xf32>, vector<16x107xf32>, vector<16x107xf32>, vector<16x107xf32>, vector<16x107xf32>, vector<16x107xf32>, vector<16x107xf32>, vector<16x107xf32>, vector<16x107xf32>, vector<16x107xf32>, vector<16x107xf32>, vector<16x107xf32> -> vector<256x107xf32>
      %215 = tpu.concatenate %181, %185, %189, %193, %197, %201, %205, %209, %213 in 0 : vector<16x107xf32>, vector<16x107xf32>, vector<16x107xf32>, vector<16x107xf32>, vector<16x107xf32>, vector<16x107xf32>, vector<16x107xf32>, vector<16x107xf32>, vector<16x107xf32> -> vector<144x107xf32>
      %216 = tpu.concatenate %214, %215 in 0 : vector<256x107xf32>, vector<144x107xf32> -> vector<400x107xf32>
      %cst_201 = arith.constant dense<0.000000e+00> : vector<32x107xf32>
      %217 = tpu.matmul %0, %216, %cst_201 {dimension_numbers = #tpu.dot_dimension_numbers<[1], [0], [0], [1], [0, 0, 1, 1], [], []>} : vector<32x400xf32>, vector<400x107xf32>, vector<32x107xf32> -> vector<32x107xf32>
      %218 = vector.broadcast %1 : vector<32x1xf32> to vector<32x107xf32>
      %219 = arith.addf %217, %218 : vector<32x107xf32>
      %cst_202 = arith.constant 0.000000e+00 : f32
      %220 = vector.broadcast %cst_202 : f32 to vector<32x107xf32>
      %221 = arith.maximumf %219, %220 : vector<32x107xf32>
      %222 = arith.maximumf %111, %221 : vector<32x107xf32>
      %c0_203 = arith.constant 0 : index
      %223 = arith.index_cast %arg5 : i32 to index
      %c0_204 = arith.constant 0 : index
      %c0_205 = arith.constant 0 : index
      %224 = vector.load %arg4[%c0_203, %223, %c0_204, %c0_205] : memref<1x53x32x107xf32, #tpu.memory_space<vmem>>, vector<1x1x32x107xf32>
      %225 = vector.shape_cast %224 : vector<1x1x32x107xf32> to vector<32x107xf32>
      %226 = vector.shape_cast %222 : vector<32x107xf32> to vector<1x1x32x107xf32>
      tpu.vector_store %arg4[%c0_203, %223, %c0_204, %c0_205], %226 {strides = array<i32>} : memref<1x53x32x107xf32, #tpu.memory_space<vmem>>, vector<1x1x32x107xf32>,
    }
    %c53_i32_3 = arith.constant 53 : i32
    return
  }
  func.func @transform_0(%arg0: i32) -> (i32, i32, i32, i32) {
    %c0_i32 = arith.constant 0 : i32
    %c0_i32_0 = arith.constant 0 : i32
    %c0_i32_1 = arith.constant 0 : i32
    %c0_i32_2 = arith.constant 0 : i32
    return %arg0, %c0_i32, %c0_i32_0, %c0_i32_1 : i32, i32, i32, i32
  }
  func.func @transform_1(%arg0: i32) -> (i32, i32) {
    %c0_i32 = arith.constant 0 : i32
    %c0_i32_0 = arith.constant 0 : i32
    %c0_i32_1 = arith.constant 0 : i32
    return %c0_i32, %c0_i32_0 : i32, i32
  }
  func.func @transform_2(%arg0: i32) -> (i32, i32) {
    %c0_i32 = arith.constant 0 : i32
    %c0_i32_0 = arith.constant 0 : i32
    %c0_i32_1 = arith.constant 0 : i32
    return %c0_i32, %c0_i32_0 : i32, i32
  }
  func.func @transform_3(%arg0: i32) -> (i32, i32, i32, i32) {
    %c0_i32 = arith.constant 0 : i32
    %c0_i32_0 = arith.constant 0 : i32
    %c0_i32_1 = arith.constant 0 : i32
    %c0_i32_2 = arith.constant 0 : i32
    return %arg0, %c0_i32, %c0_i32_0, %c0_i32_1 : i32, i32, i32, i32
  }
}

module attributes {stable_mosaic.version = 11 : i64} {
  func.func @_fc_head_kernel(%arg0: i32, %arg1: memref<8x8192xbf16, #tpu.memory_space<vmem>>, %arg2: memref<8192x24xbf16, #tpu.memory_space<vmem>>, %arg3: memref<1x24xf32, #tpu.memory_space<vmem>>, %arg4: memref<24x12xf32, #tpu.memory_space<vmem>>, %arg5: memref<1x12xf32, #tpu.memory_space<vmem>>, %arg6: memref<12x2xf32, #tpu.memory_space<vmem>>, %arg7: memref<1x2xf32, #tpu.memory_space<vmem>>, %arg8: memref<8x2xf32, #tpu.memory_space<vmem>>, %arg9: memref<8x24xf32, #tpu.memory_space<vmem>>) attributes {dimension_semantics = [#tpu.dimension_semantics<arbitrary>], iteration_bounds = array<i64: 11>, scalar_prefetch = 0 : i64, scratch_operands = 1 : i64, tpu.core_type = #tpu.core_type<tc>, window_params = [{transform_indices = @transform_0, window_bounds = array<i64: 8, 8192>}, {transform_indices = @transform_1, window_bounds = array<i64: 8192, 24>}, {pipeline_mode = #tpu.pipeline_mode<synchronous>, transform_indices = @transform_2, window_bounds = array<i64: 1, 24>}, {pipeline_mode = #tpu.pipeline_mode<synchronous>, transform_indices = @transform_3, window_bounds = array<i64: 24, 12>}, {pipeline_mode = #tpu.pipeline_mode<synchronous>, transform_indices = @transform_4, window_bounds = array<i64: 1, 12>}, {pipeline_mode = #tpu.pipeline_mode<synchronous>, transform_indices = @transform_5, window_bounds = array<i64: 12, 2>}, {pipeline_mode = #tpu.pipeline_mode<synchronous>, transform_indices = @transform_6, window_bounds = array<i64: 1, 2>}, {pipeline_mode = #tpu.pipeline_mode<synchronous>, transform_indices = @transform_7, window_bounds = array<i64: 8, 2>}]} {
    %c0_i32 = arith.constant 0 : i32
    %0 = arith.cmpi eq, %arg0, %c0_i32 : i32
    %1 = arith.extui %0 : i1 to i32
    %c0_i32_0 = arith.constant 0 : i32
    %2 = arith.cmpi ne, %1, %c0_i32_0 : i32
    scf.if %2 {
      %cst_9 = arith.constant 0.000000e+00 : f32
      %12 = vector.broadcast %cst_9 : f32 to vector<8x24xf32>
      %c0_10 = arith.constant 0 : index
      %c0_11 = arith.constant 0 : index
      %13 = vector.load %arg9[%c0_10, %c0_11] : memref<8x24xf32, #tpu.memory_space<vmem>>, vector<8x24xf32>
      tpu.vector_store %arg9[%c0_10, %c0_11], %12 {strides = array<i32>} : memref<8x24xf32, #tpu.memory_space<vmem>>, vector<8x24xf32>,
    } else {
    }
    %c0 = arith.constant 0 : index
    %c0_1 = arith.constant 0 : index
    %3 = vector.load %arg9[%c0, %c0_1] : memref<8x24xf32, #tpu.memory_space<vmem>>, vector<8x24xf32>
    %c0_2 = arith.constant 0 : index
    %c0_3 = arith.constant 0 : index
    %4 = vector.load %arg1[%c0_2, %c0_3] : memref<8x8192xbf16, #tpu.memory_space<vmem>>, vector<8x8192xbf16>
    %c0_4 = arith.constant 0 : index
    %c0_5 = arith.constant 0 : index
    %5 = vector.load %arg2[%c0_4, %c0_5] : memref<8192x24xbf16, #tpu.memory_space<vmem>>, vector<8192x24xbf16>
    %cst = arith.constant dense<0.000000e+00> : vector<8x24xf32>
    %6 = tpu.matmul %4, %5, %cst {dimension_numbers = #tpu.dot_dimension_numbers<[1], [0], [0], [1], [0, 0, 1, 1], [], []>} : vector<8x8192xbf16>, vector<8192x24xbf16>, vector<8x24xf32> -> vector<8x24xf32>
    %7 = arith.addf %3, %6 : vector<8x24xf32>
    %c0_6 = arith.constant 0 : index
    %c0_7 = arith.constant 0 : index
    %8 = vector.load %arg9[%c0_6, %c0_7] : memref<8x24xf32, #tpu.memory_space<vmem>>, vector<8x24xf32>
    tpu.vector_store %arg9[%c0_6, %c0_7], %7 {strides = array<i32>} : memref<8x24xf32, #tpu.memory_space<vmem>>, vector<8x24xf32>,
    %c10_i32 = arith.constant 10 : i32
    %9 = arith.cmpi eq, %arg0, %c10_i32 : i32
    %10 = arith.extui %9 : i1 to i32
    %c0_i32_8 = arith.constant 0 : i32
    %11 = arith.cmpi ne, %10, %c0_i32_8 : i32
    scf.if %11 {
      %c0_9 = arith.constant 0 : index
      %c0_10 = arith.constant 0 : index
      %12 = vector.load %arg9[%c0_9, %c0_10] : memref<8x24xf32, #tpu.memory_space<vmem>>, vector<8x24xf32>
      %c0_11 = arith.constant 0 : index
      %c0_12 = arith.constant 0 : index
      %13 = vector.load %arg3[%c0_11, %c0_12] : memref<1x24xf32, #tpu.memory_space<vmem>>, vector<1x24xf32>
      %14 = vector.broadcast %13 : vector<1x24xf32> to vector<8x24xf32>
      %15 = arith.addf %12, %14 : vector<8x24xf32>
      %cst_13 = arith.constant 0.000000e+00 : f32
      %16 = vector.broadcast %cst_13 : f32 to vector<8x24xf32>
      %17 = arith.maximumf %15, %16 : vector<8x24xf32>
      %c0_14 = arith.constant 0 : index
      %c0_15 = arith.constant 0 : index
      %18 = vector.load %arg4[%c0_14, %c0_15] : memref<24x12xf32, #tpu.memory_space<vmem>>, vector<24x12xf32>
      %cst_16 = arith.constant dense<0.000000e+00> : vector<8x12xf32>
      %19 = tpu.matmul %17, %18, %cst_16 {dimension_numbers = #tpu.dot_dimension_numbers<[1], [0], [0], [1], [0, 0, 1, 1], [], []>} : vector<8x24xf32>, vector<24x12xf32>, vector<8x12xf32> -> vector<8x12xf32>
      %c0_17 = arith.constant 0 : index
      %c0_18 = arith.constant 0 : index
      %20 = vector.load %arg5[%c0_17, %c0_18] : memref<1x12xf32, #tpu.memory_space<vmem>>, vector<1x12xf32>
      %21 = vector.broadcast %20 : vector<1x12xf32> to vector<8x12xf32>
      %22 = arith.addf %19, %21 : vector<8x12xf32>
      %cst_19 = arith.constant 0.000000e+00 : f32
      %23 = vector.broadcast %cst_19 : f32 to vector<8x12xf32>
      %24 = arith.maximumf %22, %23 : vector<8x12xf32>
      %c0_20 = arith.constant 0 : index
      %c0_21 = arith.constant 0 : index
      %25 = vector.load %arg6[%c0_20, %c0_21] : memref<12x2xf32, #tpu.memory_space<vmem>>, vector<12x2xf32>
      %cst_22 = arith.constant dense<0.000000e+00> : vector<8x2xf32>
      %26 = tpu.matmul %24, %25, %cst_22 {dimension_numbers = #tpu.dot_dimension_numbers<[1], [0], [0], [1], [0, 0, 1, 1], [], []>} : vector<8x12xf32>, vector<12x2xf32>, vector<8x2xf32> -> vector<8x2xf32>
      %c0_23 = arith.constant 0 : index
      %c0_24 = arith.constant 0 : index
      %27 = vector.load %arg7[%c0_23, %c0_24] : memref<1x2xf32, #tpu.memory_space<vmem>>, vector<1x2xf32>
      %28 = vector.broadcast %27 : vector<1x2xf32> to vector<8x2xf32>
      %29 = arith.addf %26, %28 : vector<8x2xf32>
      %c0_25 = arith.constant 0 : index
      %c0_26 = arith.constant 0 : index
      %30 = vector.load %arg8[%c0_25, %c0_26] : memref<8x2xf32, #tpu.memory_space<vmem>>, vector<8x2xf32>
      tpu.vector_store %arg8[%c0_25, %c0_26], %29 {strides = array<i32>} : memref<8x2xf32, #tpu.memory_space<vmem>>, vector<8x2xf32>,
    } else {
    }
    return
  }
  func.func @transform_0(%arg0: i32) -> (i32, i32) {
    %c0_i32 = arith.constant 0 : i32
    %c0_i32_0 = arith.constant 0 : i32
    return %c0_i32, %arg0 : i32, i32
  }
  func.func @transform_1(%arg0: i32) -> (i32, i32) {
    %c0_i32 = arith.constant 0 : i32
    %c0_i32_0 = arith.constant 0 : i32
    return %arg0, %c0_i32 : i32, i32
  }
  func.func @transform_2(%arg0: i32) -> (i32, i32) {
    %c0_i32 = arith.constant 0 : i32
    %c0_i32_0 = arith.constant 0 : i32
    %c0_i32_1 = arith.constant 0 : i32
    return %c0_i32, %c0_i32_0 : i32, i32
  }
  func.func @transform_3(%arg0: i32) -> (i32, i32) {
    %c0_i32 = arith.constant 0 : i32
    %c0_i32_0 = arith.constant 0 : i32
    %c0_i32_1 = arith.constant 0 : i32
    return %c0_i32, %c0_i32_0 : i32, i32
  }
  func.func @transform_4(%arg0: i32) -> (i32, i32) {
    %c0_i32 = arith.constant 0 : i32
    %c0_i32_0 = arith.constant 0 : i32
    %c0_i32_1 = arith.constant 0 : i32
    return %c0_i32, %c0_i32_0 : i32, i32
  }
  func.func @transform_5(%arg0: i32) -> (i32, i32) {
    %c0_i32 = arith.constant 0 : i32
    %c0_i32_0 = arith.constant 0 : i32
    %c0_i32_1 = arith.constant 0 : i32
    return %c0_i32, %c0_i32_0 : i32, i32
  }
  func.func @transform_6(%arg0: i32) -> (i32, i32) {
    %c0_i32 = arith.constant 0 : i32
    %c0_i32_0 = arith.constant 0 : i32
    %c0_i32_1 = arith.constant 0 : i32
    return %c0_i32, %c0_i32_0 : i32, i32
  }
  func.func @transform_7(%arg0: i32) -> (i32, i32) {
    %c0_i32 = arith.constant 0 : i32
    %c0_i32_0 = arith.constant 0 : i32
    %c0_i32_1 = arith.constant 0 : i32
    return %c0_i32, %c0_i32_0 : i32, i32
  }
}

</mosaic_0001>

<llo_original>
// kernel: forward.3
$region0: #{forward.3}
  #allocation0 [shape = 'u32[]', space=smem, size = 0x4, offset = 0x4, fixed_abs, tag = 'smem constant byte address 0x4 - core index']
  #allocation1 [shape = 'u32[144,128]{1,0:T(1,128)}', space=vmem, size = 0x12000, scoped, tag = 'internal scratch']
  %s0 = inlined_call_operand.vmem [shape: f32[2,227,8,227], index: 0, kind: input, shape index: {}]
  %s1 = inlined_call_operand.vmem [shape: f32[12,288], index: 1, kind: input, shape index: {}]
  %s2 = inlined_call_operand.vmem [shape: f32[12,1], index: 2, kind: input, shape index: {}]
  %s3 = inlined_call_operand.vmem [shape: f32[2,111,12,222], index: 3, kind: output, shape index: {}]
  %s4 = sld [smem:[#allocation0]]
  $region52: #{forward.3} parent=0
    _
  %s6 = ssub.s32 1, %s4
  %s7 = scalar_select 0, %s6, %s4
  loop: start=0, step=1, limit=4
  $region2: #{forward.3} parent=0 // loop_pre_header
    _
  $region3: #{forward.3} parent=0 // loop_header
    %s9 = sphi 0, %s13
    %p10 = scmp.ge.s32.totalorder %s9, 4
    %s19 = sphi 0, %s21
    %s22 = sphi 0, %s19
    %s23 = sphi 0, %s22
    %s39 = sphi 0, %s23
    %s43 = sphi 0, %s43
    %s45 = sphi 0, %s43
    %s46 = sphi 0, %s45
    %s60 = sphi 0, %s46
    %s64 = sphi 0, %s64
    %s66 = sphi 0, %s64
    %s67 = sphi 0, %s66
    %s81 = sphi 0, %s67
    %s87 = sphi 0, %s89
    %s90 = sphi 0, %s87
    %s91 = sphi 0, %s90
    %s107 = sphi 0, %s91
  $region4: #{forward.3} parent=0 // loop_header_branch
    %12 = sbr.rel (%p10) target = $region8
  $region5: #{forward.3} parent=0 // loop_body
    %s14 = ssub.s32 %s9, 1
    %s15 = ssub.s32 %s9, 2
    %s16 = sadd.s32 %s9, 1
    %s17 = ssub.s32 %s9, %s16
    %p18 = scmp.eq.s32.totalorder %s17, 0
    %s20 = sadd.s32 %s19, 1
    %s21 = scalar_select %p18, %s19, %s20
    %p24 = pneg %p18
    %p25 = scmp.eq.s32.totalorder %s9, 1
    %p26 = por %p24, %p25
    %p27 = scmp.ne.s32.totalorder %s19, %s22
    %p28 = scmp.eq.s32.totalorder %s9, 0
    %p29 = por %p27, %p28
    %p30 = scmp.ne.s32.totalorder %s19, %s22
    %p31 = scmp.eq.s32.totalorder %s14, 1
    %p32 = por %p30, %p31
    %p33 = scmp.ne.s32.totalorder %s22, %s23
    %p34 = scmp.eq.s32.totalorder %s14, 0
    %p35 = por %p33, %p34
    %p36 = scmp.ne.s32.totalorder %s22, %s23
    %p37 = scmp.eq.s32.totalorder %s15, 1
    %p38 = por %p36, %p37
    %p40 = scmp.ne.s32.totalorder %s23, %s39
    %p41 = scmp.eq.s32.totalorder %s15, 0
    %p42 = por %p40, %p41
    %s44 = sadd.s32 %s43, 1
    %p47 = scmp.eq.s32.totalorder %s9, 1
    %p48 = scmp.ne.s32.totalorder %s43, %s45
    %p49 = scmp.eq.s32.totalorder %s9, 0
    %p50 = por %p48, %p49
    %p51 = scmp.ne.s32.totalorder %s43, %s45
    %p52 = scmp.eq.s32.totalorder %s14, 1
    %p53 = por %p51, %p52
    %p54 = scmp.ne.s32.totalorder %s45, %s46
    %p55 = scmp.eq.s32.totalorder %s14, 0
    %p56 = por %p54, %p55
    %p57 = scmp.ne.s32.totalorder %s45, %s46
    %p58 = scmp.eq.s32.totalorder %s15, 1
    %p59 = por %p57, %p58
    %p61 = scmp.ne.s32.totalorder %s46, %s60
    %p62 = scmp.eq.s32.totalorder %s15, 0
    %p63 = por %p61, %p62
    %s65 = sadd.s32 %s64, 1
    %p68 = scmp.eq.s32.totalorder %s9, 1
    %p69 = scmp.ne.s32.totalorder %s64, %s66
    %p70 = scmp.eq.s32.totalorder %s9, 0
    %p71 = por %p69, %p70
    %p72 = scmp.ne.s32.totalorder %s64, %s66
    %p73 = scmp.eq.s32.totalorder %s14, 1
    %p74 = por %p72, %p73
    %p75 = scmp.ne.s32.totalorder %s66, %s67
    %p76 = scmp.eq.s32.totalorder %s14, 0
    %p77 = por %p75, %p76
    %p78 = scmp.ne.s32.totalorder %s66, %s67
    %p79 = scmp.eq.s32.totalorder %s15, 1
    %p80 = por %p78, %p79
    %p82 = scmp.ne.s32.totalorder %s67, %s81
    %p83 = scmp.eq.s32.totalorder %s15, 0
    %p84 = por %p82, %p83
    %s85 = ssub.s32 %s9, %s16
    %p86 = scmp.eq.s32.totalorder %s85, 0
    %s88 = sadd.s32 %s87, 1
    %s89 = scalar_select %p86, %s87, %s88
    %p92 = pneg %p86
    %p93 = scmp.eq.s32.totalorder %s9, 1
    %p94 = por %p92, %p93
    %p95 = scmp.ne.s32.totalorder %s87, %s90
    %p96 = scmp.eq.s32.totalorder %s9, 0
    %p97 = por %p95, %p96
    %p98 = scmp.ne.s32.totalorder %s87, %s90
    %p99 = scmp.eq.s32.totalorder %s14, 1
    %p100 = por %p98, %p99
    %p101 = scmp.ne.s32.totalorder %s90, %s91
    %p102 = scmp.eq.s32.totalorder %s14, 0
    %p103 = por %p101, %p102
    %p104 = scmp.ne.s32.totalorder %s90, %s91
    %p105 = scmp.eq.s32.totalorder %s15, 1
    %p106 = por %p104, %p105
    %p108 = scmp.ne.s32.totalorder %s91, %s107
    %p109 = scmp.eq.s32.totalorder %s15, 0
    %p110 = por %p108, %p109
    %p111 = scmp.le.s32.totalorder 1, %s9
    %p112 = scmp.lt.s32.totalorder %s9, 3
    %p113 = pnand %p111, %p112
    %p114 = pneg %p113
    // Predicated region
    $region9: #{forward.3} parent=5 // pred_check
      _
    $region10: #{forward.3} parent=5 // pred_check_branch
      %116 = sbr.rel (%p113) target = $region12
    $region11: #{forward.3} parent=5 // pred_region
      %s117 = ssub.s32 %s9, 1
      // Predicated region
      $region13: #{forward.3} parent=11 // pred_check
        %p118 = pneg %p56
      $region14: #{forward.3} parent=11 // pred_check_branch
        %120 = sbr.rel (%p118) target = $region16
      $region15: #{forward.3} parent=11 // pred_region
        _
      $region16: #{forward.3} parent=11 // pred_fallthru
        _
      // Predicated region
      $region17: #{forward.3} parent=11 // pred_check
        %p121 = pneg %p77
      $region18: #{forward.3} parent=11 // pred_check_branch
        %123 = sbr.rel (%p121) target = $region20
      $region19: #{forward.3} parent=11 // pred_region
        _
      $region20: #{forward.3} parent=11 // pred_fallthru
        _
    $region12: #{forward.3} parent=5 // pred_fallthru
      _
    %p124 = scmp.lt.s32.totalorder %s9, 2
    // Predicated region
    $region21: #{forward.3} parent=5 // pred_check
      %p125 = pneg %p124
    $region22: #{forward.3} parent=5 // pred_check_branch
      %127 = sbr.rel (%p125) target = $region24
    $region23: #{forward.3} parent=5 // pred_region
      // Predicated region
      $region25: #{forward.3} parent=23 // pred_check
        %p128 = pneg %p29
      $region26: #{forward.3} parent=23 // pred_check_branch
        %130 = sbr.rel (%p128) target = $region28
      $region27: #{forward.3} parent=23 // pred_region
        %p131 = scmp.lt.s32.totalorder %s9, 1
        %s132 = scalar_select %p131, %s9, 1
        %s133 = smul.addr %s132, 454
        %s134 = smul.addr %s133, 8
        %s135 = scalar_lea.vmem %s0, %s134
      $region28: #{forward.3} parent=23 // pred_fallthru
        _
    $region24: #{forward.3} parent=5 // pred_fallthru
      _
    %p136 = scmp.le.s32.totalorder 1, %s9
    %p137 = scmp.lt.s32.totalorder %s9, 3
    %p138 = pnand %p136, %p137
    %p139 = pneg %p138
    // Predicated region
    $region29: #{forward.3} parent=5 // pred_check
      _
    $region30: #{forward.3} parent=5 // pred_check_branch
      %141 = sbr.rel (%p138) target = $region32
    $region31: #{forward.3} parent=5 // pred_region
      %s142 = ssub.s32 %s9, 1
      %p143 = scmp.lt.s32.totalorder %s14, 1
      %s144 = scalar_select %p143, %s14, 1
      %s145 = smul.addr %s144, 454
      %s146 = smul.addr %s145, 8
      %s147 = scalar_lea.vmem %s0, %s146
      %p148 = pneg %p35
      %p149 = pneg %p32
      %p150 = pneg %p56
      %p151 = pneg %p53
      %p152 = pneg %p77
      %p153 = pneg %p74
      %p154 = pneg %p103
      %p155 = pneg %p100
      %p156 = scmp.lt.s32.totalorder %s14, 1
      %s157 = scalar_select %p156, %s14, 1
      %s158 = smul.addr %s157, 444
      %s159 = smul.addr %s158, 8
      %s160 = scalar_lea.vmem %s3, %s159
      %p161 = scmp.lt.s32.totalorder %s14, 1
      %s162 = scalar_select %p161, %s14, 1
      %s163 = smul.addr %s162, 454
      %s164 = smul.addr %s163, 8
      %s165 = scalar_lea.vmem %s0, %s164
      %p166 = scmp.lt.s32.totalorder %s14, 1
      %s167 = scalar_select %p166, %s14, 1
      %s168 = smul.addr %s167, 444
      %s169 = smul.addr %s168, 8
      %s170 = scalar_lea.vmem %s3, %s169
      %v171 = vld [vmem:[%s1] sm:$0xff]
      %v172 = vld [vmem:[%s1 + $0x8] sm:$0xff]
      %v173 = vld [vmem:[%s1 + $0x10] sm:$0xff]
      %v174 = vld [vmem:[%s1 + $0x18] sm:$0xf]
      %v175 = vld [vmem:[%s1 + $0x20] sm:$0xf]
      %v176 = vld [vmem:[%s1 + $0x28] sm:$0xf]
      %v177 = vld [vmem:[%s2] sm:$0xff]
      %v178 = vld [vmem:[%s2 + $0x8] sm:$0xf]
      loop: start=0, step=1, limit=111
      $region33: #{forward.3} parent=31 // loop_pre_header
        _
      $region34: #{forward.3} parent=31 // loop_header
        %s180 = sphi 0, %s184
        %p181 = scmp.ge.s32.totalorder %s180, 111
      $region35: #{forward.3} parent=31 // loop_header_branch
        %183 = sbr.rel (%p181) target = $region39
      $region36: #{forward.3} parent=31 // loop_body
        %s185 = smul.u32 %s180, 2
        %s186 = smul.u32 %s185, 2
        %s187 = smul.addr %s186, 8
        %s188 = scalar_lea.vmem %s165, %s187
        %v189 = vld [vmem:[%s188] sm:$0xff]
        %v190 = vld [vmem:[%s188 + $0x8] sm:$0xff]
        %s191 = sadd.s32 %s185, 1
        %s192 = smul.u32 %s191, 2
        %s193 = smul.addr %s192, 8
        %s194 = scalar_lea.vmem %s165, %s193
        %v195 = vld [vmem:[%s194] sm:$0xff]
        %v196 = vld [vmem:[%s194 + $0x8] sm:$0xff]
        %s197 = sadd.s32 %s185, 2
        %s198 = smul.u32 %s197, 2
        %s199 = smul.addr %s198, 8
        %s200 = scalar_lea.vmem %s165, %s199
        %v201 = vld [vmem:[%s200] sm:$0xff]
        %v202 = vld [vmem:[%s200 + $0x8] sm:$0xff]
        %s203 = sadd.s32 %s185, 3
        %s204 = smul.u32 %s203, 2
        %s205 = smul.addr %s204, 8
        %s206 = scalar_lea.vmem %s165, %s205
        %v207 = vld [vmem:[%s206] sm:$0xff]
        %v208 = vld [vmem:[%s206 + $0x8] sm:$0xff]
        %s209 = sadd.s32 %s185, 4
        %s210 = smul.u32 %s209, 2
        %s211 = smul.addr %s210, 8
        %s212 = scalar_lea.vmem %s165, %s211
        %v213 = vld [vmem:[%s212] sm:$0xff]
        %v214 = vld [vmem:[%s212 + $0x8] sm:$0xff]
        %s215 = sadd.s32 %s185, 5
        %s216 = smul.u32 %s215, 2
        %s217 = smul.addr %s216, 8
        %s218 = scalar_lea.vmem %s165, %s217
        %v219 = vld [vmem:[%s218] sm:$0xff]
        %v220 = vld [vmem:[%s218 + $0x8] sm:$0xff]
        %223 = vrot.lane.b32.xlu0 %v189, 127
        %v224 = vpop.permute.xlu0 %223
        %225 = vrot.lane.b32.xlu0 %v190, 127
        %v226 = vpop.permute.xlu0 %225
        %vm227 = vcmask 1039360
        %v228 = vsel %vm227, %v224, %v226
        %231 = vrot.lane.b32.xlu0 %v189, 126
        %v232 = vpop.permute.xlu0 %231
        %233 = vrot.lane.b32.xlu0 %v190, 126
        %v234 = vpop.permute.xlu0 %233
        %vm235 = vcmask 1031168
        %v236 = vsel %vm235, %v232, %v234
        %239 = vrot.lane.b32.xlu0 %v189, 125
        %v240 = vpop.permute.xlu0 %239
        %241 = vrot.lane.b32.xlu0 %v190, 125
        %v242 = vpop.permute.xlu0 %241
        %vm243 = vcmask 1022976
        %v244 = vsel %vm243, %v240, %v242
        %247 = vrot.lane.b32.xlu0 %v189, 124
        %v248 = vpop.permute.xlu0 %247
        %249 = vrot.lane.b32.xlu0 %v190, 124
        %v250 = vpop.permute.xlu0 %249
        %vm251 = vcmask 1014784
        %v252 = vsel %vm251, %v248, %v250
        %255 = vrot.lane.b32.xlu0 %v189, 123
        %v256 = vpop.permute.xlu0 %255
        %257 = vrot.lane.b32.xlu0 %v190, 123
        %v258 = vpop.permute.xlu0 %257
        %vm259 = vcmask 1006592
        %v260 = vsel %vm259, %v256, %v258
        %265 = vrot.lane.b32.xlu0 %v195, 127
        %v266 = vpop.permute.xlu0 %265
        %267 = vrot.lane.b32.xlu0 %v196, 127
        %v268 = vpop.permute.xlu0 %267
        %v269 = vsel %vm227, %v266, %v268
        %272 = vrot.lane.b32.xlu0 %v195, 126
        %v273 = vpop.permute.xlu0 %272
        %274 = vrot.lane.b32.xlu0 %v196, 126
        %v275 = vpop.permute.xlu0 %274
        %v276 = vsel %vm235, %v273, %v275
        %279 = vrot.lane.b32.xlu0 %v195, 125
        %v280 = vpop.permute.xlu0 %279
        %281 = vrot.lane.b32.xlu0 %v196, 125
        %v282 = vpop.permute.xlu0 %281
        %v283 = vsel %vm243, %v280, %v282
        %286 = vrot.lane.b32.xlu0 %v195, 124
        %v287 = vpop.permute.xlu0 %286
        %288 = vrot.lane.b32.xlu0 %v196, 124
        %v289 = vpop.permute.xlu0 %288
        %v290 = vsel %vm251, %v287, %v289
        %293 = vrot.lane.b32.xlu0 %v195, 123
        %v294 = vpop.permute.xlu0 %293
        %295 = vrot.lane.b32.xlu0 %v196, 123
        %v296 = vpop.permute.xlu0 %295
        %v297 = vsel %vm259, %v294, %v296
        %302 = vrot.lane.b32.xlu0 %v201, 127
        %v303 = vpop.permute.xlu0 %302
        %304 = vrot.lane.b32.xlu0 %v202, 127
        %v305 = vpop.permute.xlu0 %304
        %v306 = vsel %vm227, %v303, %v305
        %309 = vrot.lane.b32.xlu0 %v201, 126
        %v310 = vpop.permute.xlu0 %309
        %311 = vrot.lane.b32.xlu0 %v202, 126
        %v312 = vpop.permute.xlu0 %311
        %v313 = vsel %vm235, %v310, %v312
        %316 = vrot.lane.b32.xlu0 %v201, 125
        %v317 = vpop.permute.xlu0 %316
        %318 = vrot.lane.b32.xlu0 %v202, 125
        %v319 = vpop.permute.xlu0 %318
        %v320 = vsel %vm243, %v317, %v319
        %325 = vrot.lane.b32.xlu0 %v207, 4
        %v326 = vpop.permute.xlu0 %325
        %327 = vrot.lane.b32.xlu0 %v208, 4
        %v328 = vpop.permute.xlu0 %327
        %vm329 = vcmask 31744
        %v330 = vsel %vm329, %v326, %v328
        %331 = vrot.lane.b32.xlu0 %v207, 3
        %v332 = vpop.permute.xlu0 %331
        %333 = vrot.lane.b32.xlu0 %v208, 3
        %v334 = vpop.permute.xlu0 %333
        %vm335 = vcmask 23552
        %v336 = vsel %vm335, %v332, %v334
        %337 = vrot.lane.b32.xlu0 %v207, 2
        %v338 = vpop.permute.xlu0 %337
        %339 = vrot.lane.b32.xlu0 %v208, 2
        %v340 = vpop.permute.xlu0 %339
        %vm341 = vcmask 15360
        %v342 = vsel %vm341, %v338, %v340
        %343 = vrot.lane.b32.xlu0 %v207, 1
        %v344 = vpop.permute.xlu0 %343
        %345 = vrot.lane.b32.xlu0 %v208, 1
        %v346 = vpop.permute.xlu0 %345
        %vm347 = vcmask 7168
        %v348 = vsel %vm347, %v344, %v346
        %349 = vrot.lane.b32.xlu0 %v207, 127
        %v350 = vpop.permute.xlu0 %349
        %351 = vrot.lane.b32.xlu0 %v208, 127
        %v352 = vpop.permute.xlu0 %351
        %v353 = vsel %vm227, %v350, %v352
        %356 = vrot.lane.b32.xlu0 %v213, 4
        %v357 = vpop.permute.xlu0 %356
        %358 = vrot.lane.b32.xlu0 %v214, 4
        %v359 = vpop.permute.xlu0 %358
        %v360 = vsel %vm329, %v357, %v359
        %361 = vrot.lane.b32.xlu0 %v213, 3
        %v362 = vpop.permute.xlu0 %361
        %363 = vrot.lane.b32.xlu0 %v214, 3
        %v364 = vpop.permute.xlu0 %363
        %v365 = vsel %vm335, %v362, %v364
        %366 = vrot.lane.b32.xlu0 %v213, 2
        %v367 = vpop.permute.xlu0 %366
        %368 = vrot.lane.b32.xlu0 %v214, 2
        %v369 = vpop.permute.xlu0 %368
        %v370 = vsel %vm341, %v367, %v369
        %371 = vrot.lane.b32.xlu0 %v213, 1
        %v372 = vpop.permute.xlu0 %371
        %373 = vrot.lane.b32.xlu0 %v214, 1
        %v374 = vpop.permute.xlu0 %373
        %v375 = vsel %vm347, %v372, %v374
        %376 = vrot.lane.b32.xlu0 %v213, 127
        %v377 = vpop.permute.xlu0 %376
        %378 = vrot.lane.b32.xlu0 %v214, 127
        %v379 = vpop.permute.xlu0 %378
        %v380 = vsel %vm227, %v377, %v379
        %383 = vrot.lane.b32.xlu0 %v219, 4
        %v384 = vpop.permute.xlu0 %383
        %385 = vrot.lane.b32.xlu0 %v220, 4
        %v386 = vpop.permute.xlu0 %385
        %v387 = vsel %vm329, %v384, %v386
        %388 = vrot.lane.b32.xlu0 %v219, 3
        %v389 = vpop.permute.xlu0 %388
        %390 = vrot.lane.b32.xlu0 %v220, 3
        %v391 = vpop.permute.xlu0 %390
        %v392 = vsel %vm335, %v389, %v391
        %393 = vrot.lane.b32.xlu0 %v219, 127
        %v394 = vpop.permute.xlu0 %393
        %395 = vrot.lane.b32.xlu0 %v220, 127
        %v396 = vpop.permute.xlu0 %395
        %v397 = vsel %vm227, %v394, %v396
        %398 = vrot.lane.b32.xlu0 %v219, 126
        %v399 = vpop.permute.xlu0 %398
        %400 = vrot.lane.b32.xlu0 %v220, 126
        %v401 = vpop.permute.xlu0 %400
        %v402 = vsel %vm235, %v399, %v401
        %403 = vrot.lane.b32.xlu0 %v219, 125
        %v404 = vpop.permute.xlu0 %403
        %405 = vrot.lane.b32.xlu0 %v220, 125
        %v406 = vpop.permute.xlu0 %405
        %v407 = vsel %vm243, %v404, %v406
        %408 = vrot.lane.b32.xlu0 %v201, 124
        %v409 = vpop.permute.xlu0 %408
        %410 = vrot.lane.b32.xlu0 %v202, 124
        %v411 = vpop.permute.xlu0 %410
        %412 = vrot.lane.b32.xlu0 %v306, 124
        %v413 = vpop.permute.xlu0 %412
        %414 = vrot.lane.b32.xlu0 %v305, 124
        %v415 = vpop.permute.xlu0 %414
        %416 = vrot.lane.b32.xlu0 %v326, 124
        %v417 = vpop.permute.xlu0 %416
        %418 = vrot.lane.b32.xlu0 %v330, 124
        %v419 = vpop.permute.xlu0 %418
        %420 = vrot.lane.b32.xlu0 %v332, 124
        %v421 = vpop.permute.xlu0 %420
        %422 = vrot.lane.b32.xlu0 %v336, 124
        %v423 = vpop.permute.xlu0 %422
        %424 = vrot.lane.b32.xlu0 %v338, 124
        %v425 = vpop.permute.xlu0 %424
        %426 = vrot.lane.b32.xlu0 %v342, 124
        %v427 = vpop.permute.xlu0 %426
        %428 = vrot.lane.b32.xlu0 %v344, 124
        %v429 = vpop.permute.xlu0 %428
        %430 = vrot.lane.b32.xlu0 %v348, 124
        %v431 = vpop.permute.xlu0 %430
        %432 = vrot.lane.b32.xlu0 %v207, 124
        %v433 = vpop.permute.xlu0 %432
        %434 = vrot.lane.b32.xlu0 %v208, 124
        %v435 = vpop.permute.xlu0 %434
        %436 = vrot.lane.b32.xlu0 %v353, 124
        %v437 = vpop.permute.xlu0 %436
        %438 = vrot.lane.b32.xlu0 %v352, 124
        %v439 = vpop.permute.xlu0 %438
        %440 = vrot.lane.b32.xlu0 %v357, 124
        %v441 = vpop.permute.xlu0 %440
        %442 = vrot.lane.b32.xlu0 %v360, 124
        %v443 = vpop.permute.xlu0 %442
        %444 = vrot.lane.b32.xlu0 %v362, 124
        %v445 = vpop.permute.xlu0 %444
        %446 = vrot.lane.b32.xlu0 %v365, 124
        %v447 = vpop.permute.xlu0 %446
        %448 = vrot.lane.b32.xlu0 %v367, 124
        %v449 = vpop.permute.xlu0 %448
        %450 = vrot.lane.b32.xlu0 %v370, 124
        %v451 = vpop.permute.xlu0 %450
        %452 = vrot.lane.b32.xlu0 %v372, 124
        %v453 = vpop.permute.xlu0 %452
        %454 = vrot.lane.b32.xlu0 %v375, 124
        %v455 = vpop.permute.xlu0 %454
        %456 = vrot.lane.b32.xlu0 %v213, 124
        %v457 = vpop.permute.xlu0 %456
        %458 = vrot.lane.b32.xlu0 %v214, 124
        %v459 = vpop.permute.xlu0 %458
        %460 = vrot.lane.b32.xlu0 %v380, 124
        %v461 = vpop.permute.xlu0 %460
        %462 = vrot.lane.b32.xlu0 %v379, 124
        %v463 = vpop.permute.xlu0 %462
        %464 = vrot.lane.b32.xlu0 %v384, 124
        %v465 = vpop.permute.xlu0 %464
        %466 = vrot.lane.b32.xlu0 %v387, 124
        %v467 = vpop.permute.xlu0 %466
        %468 = vrot.lane.b32.xlu0 %v389, 124
        %v469 = vpop.permute.xlu0 %468
        %470 = vrot.lane.b32.xlu0 %v392, 124
        %v471 = vpop.permute.xlu0 %470
        %v472 = vsel %vm251, %v409, %v411
        %v473 = vsel %vm251, %v413, %v415
        %v474 = vsel %vm251, %v417, %v419
        %v475 = vsel %vm251, %v421, %v423
        %v476 = vsel %vm251, %v425, %v427
        %v477 = vsel %vm251, %v429, %v431
        %v478 = vsel %vm251, %v433, %v435
        %v479 = vsel %vm251, %v437, %v439
        %v480 = vsel %vm251, %v441, %v443
        %v481 = vsel %vm251, %v445, %v447
        %v482 = vsel %vm251, %v449, %v451
        %v483 = vsel %vm251, %v453, %v455
        %v484 = vsel %vm251, %v457, %v459
        %v485 = vsel %vm251, %v461, %v463
        %v486 = vsel %vm251, %v465, %v467
        %v487 = vsel %vm251, %v469, %v471
        %520 = vrot.lane.b32.xlu0 %v397, 126
        %v521 = vpop.permute.xlu0 %520
        %522 = vrot.lane.b32.xlu0 %v396, 126
        %v523 = vpop.permute.xlu0 %522
        %524 = vrot.lane.b32.xlu0 %v402, 126
        %v525 = vpop.permute.xlu0 %524
        %526 = vrot.lane.b32.xlu0 %v401, 126
        %v527 = vpop.permute.xlu0 %526
        %528 = vrot.lane.b32.xlu0 %v407, 126
        %v529 = vpop.permute.xlu0 %528
        %530 = vrot.lane.b32.xlu0 %v406, 126
        %v531 = vpop.permute.xlu0 %530
        %v532 = vsel %vm235, %v521, %v523
        %v533 = vsel %vm235, %v525, %v527
        %v534 = vsel %vm235, %v529, %v531
        %544 = vset.pattern.permute.xlu0 0
        %545 = vperm.xlu0 %544, %v177
        %v546 = vpop.permute.xlu0 %545
        %549 = vset.pattern.permute.xlu0 0
        %550 = vperm.xlu0 %549, %v178
        %v551 = vpop.permute.xlu0 %550
        %vm553 = vcmask 261120
        %v555 = vsel %vm553, %v173, 0
        %v558 = vsel %vm553, %v176, 0
        %560 = vmatprep.subr.mxu0 %v190
        %561 = vmatpush1.msra.mxu0 %v189
        %562 = vmatprep.subr.mxu0 %v226
        %563 = vmatpush1.msra.mxu0 %v228
        %564 = vmatprep.subr.mxu0 %v234
        %565 = vmatpush1.msra.mxu0 %v236
        %566 = vmatprep.subr.mxu0 %v242
        %567 = vmatpush1.msra.mxu0 %v244
        %568 = vmatprep.subr.mxu0 %v250
        %569 = vmatpush1.msra.mxu0 %v252
        %570 = vmatprep.subr.mxu0 %v258
        %571 = vmatpush1.msra.mxu0 %v260
        %572 = vmatprep.subr.mxu0 %v196
        %573 = vmatpush1.msra.mxu0 %v195
        %574 = vmatprep.subr.mxu0 %v268
        %575 = vmatpush1.msra.mxu0 %v269
        %576 = vmatprep.subr.mxu0 %v275
        %577 = vmatpush1.msra.mxu0 %v276
        %578 = vmatprep.subr.mxu0 %v282
        %579 = vmatpush1.msra.mxu0 %v283
        %580 = vmatprep.subr.mxu0 %v289
        %581 = vmatpush1.msra.mxu0 %v290
        %582 = vmatprep.subr.mxu0 %v296
        %583 = vmatpush1.msra.mxu0 %v297
        %584 = vmatprep.subr.mxu0 %v202
        %585 = vmatpush1.msra.mxu0 %v201
        %586 = vmatprep.subr.mxu0 %v305
        %587 = vmatpush1.msra.mxu0 %v306
        %588 = vmatprep.subr.mxu0 %v312
        %589 = vmatpush1.msra.mxu0 %v313
        %590 = vmatprep.subr.mxu0 %v319
        %591 = vmatpush1.msra.mxu0 %v320
        %592 = vmatprep.subr.mxu0 %v411
        %593 = vmatpush1.msra.mxu0 %v472
        %594 = vmatprep.subr.mxu0 %v415
        %595 = vmatpush1.msra.mxu0 %v473
        %596 = vmatprep.subr.mxu0 %v419
        %597 = vmatpush1.msra.mxu0 %v474
        %598 = vmatprep.subr.mxu0 %v423
        %599 = vmatpush1.msra.mxu0 %v475
        %600 = vmatprep.subr.mxu0 %v427
        %601 = vmatpush1.msra.mxu0 %v476
        %602 = vmatprep.subr.mxu0 %v431
        %603 = vmatpush1.msra.mxu0 %v477
        %604 = vmatprep.subr.mxu0 %v435
        %605 = vmatpush1.msra.mxu0 %v478
        %606 = vmatprep.subr.mxu0 %v439
        %607 = vmatpush1.msra.mxu0 %v479
        %608 = vmatprep.subr.mxu0 %v443
        %609 = vmatpush1.msra.mxu0 %v480
        %610 = vmatprep.subr.mxu0 %v447
        %611 = vmatpush1.msra.mxu0 %v481
        %612 = vmatprep.subr.mxu0 %v451
        %613 = vmatpush1.msra.mxu0 %v482
        %614 = vmatprep.subr.mxu0 %v455
        %615 = vmatpush1.msra.mxu0 %v483
        %616 = vmatprep.subr.mxu0 %v459
        %617 = vmatpush1.msra.mxu0 %v484
        %618 = vmatprep.subr.mxu0 %v463
        %619 = vmatpush1.msra.mxu0 %v485
        %620 = vmatprep.subr.mxu0 %v467
        %621 = vmatpush1.msra.mxu0 %v486
        %622 = vmatprep.subr.mxu0 %v471
        %623 = vmatpush1.msra.mxu0 %v487
        %624 = vmatprep.mubr.f32.mxu0 %v172
        %625 = vmatmul.mubr.f32.gmra.mrb[0].mxu0 %v171
        %v626 = vpop.f32.mrb[0].mxu0
        %v627 = vadd.f32 %v546, %v626
        %v628 = vpop.f32.mrb[0].mxu0
        %v629 = vadd.f32 %v546, %v628
        %630 = vmatprep.mubr.f32.mxu0 %v175
        %631 = vmatmul.mubr.f32.gmra.mrb[0].mxu0 %v174
        %v632 = vpop.f32.mrb[0].mxu0
        %v633 = vadd.f32 %v551, %v632
        %v634 = vpop.f32.mrb[0].mxu0
        %v635 = vadd.f32 %v551, %v634
        %636 = vdwg.mxu0
        %637 = vmatprep.subr.mxu0 %v401
        %638 = vmatpush1.msra.mxu0 %v402
        %639 = vmatprep.subr.mxu0 %v523
        %640 = vmatpush1.msra.mxu0 %v532
        %641 = vmatprep.subr.mxu0 %v527
        %642 = vmatpush1.msra.mxu0 %v533
        %643 = vmatprep.subr.mxu0 %v531
        %644 = vmatpush1.msra.mxu0 %v534
        %645 = vmatprep.subr.mxu0 0.0
        %646 = vmatpush1.msra.mxu0 0.0
        %647 = vmatprep.subr.mxu0 0.0
        %648 = vmatpush1.msra.mxu0 0.0
        %649 = vmatprep.subr.mxu0 0.0
        %650 = vmatpush1.msra.mxu0 0.0
        %651 = vmatprep.subr.mxu0 0.0
        %652 = vmatpush1.msra.mxu0 0.0
        %653 = vmatprep.subr.mxu0 0.0
        %654 = vmatpush1.msra.mxu0 0.0
        %655 = vmatprep.subr.mxu0 0.0
        %656 = vmatpush1.msra.mxu0 0.0
        %657 = vmatprep.subr.mxu0 0.0
        %658 = vmatpush1.msra.mxu0 0.0
        %659 = vmatprep.subr.mxu0 0.0
        %660 = vmatpush1.msra.mxu0 0.0
        %661 = vmatprep.subr.mxu0 0.0
        %662 = vmatpush1.msra.mxu0 0.0
        %663 = vmatprep.subr.mxu0 0.0
        %664 = vmatpush1.msra.mxu0 0.0
        %665 = vmatprep.subr.mxu0 0.0
        %666 = vmatpush1.msra.mxu0 0.0
        %667 = vmatprep.subr.mxu0 0.0
        %668 = vmatpush1.msra.mxu0 0.0
        %669 = vmatprep.subr.mxu0 0.0
        %670 = vmatpush1.msra.mxu0 0.0
        %671 = vmatprep.subr.mxu0 0.0
        %672 = vmatpush1.msra.mxu0 0.0
        %673 = vmatprep.subr.mxu0 0.0
        %674 = vmatpush1.msra.mxu0 0.0
        %675 = vmatprep.subr.mxu0 0.0
        %676 = vmatpush1.msra.mxu0 0.0
        %677 = vmatprep.subr.mxu0 0.0
        %678 = vmatpush1.msra.mxu0 0.0
        %679 = vmatprep.subr.mxu0 0.0
        %680 = vmatpush1.msra.mxu0 0.0
        %681 = vmatprep.subr.mxu0 0.0
        %682 = vmatpush1.msra.mxu0 0.0
        %683 = vmatprep.subr.mxu0 0.0
        %684 = vmatpush1.msra.mxu0 0.0
        %685 = vmatprep.subr.mxu0 0.0
        %686 = vmatpush1.msra.mxu0 0.0
        %687 = vmatprep.subr.mxu0 0.0
        %688 = vmatpush1.msra.mxu0 0.0
        %689 = vmatprep.subr.mxu0 0.0
        %690 = vmatpush1.msra.mxu0 0.0
        %691 = vmatprep.subr.mxu0 0.0
        %692 = vmatpush1.msra.mxu0 0.0
        %693 = vmatprep.subr.mxu0 0.0
        %694 = vmatpush1.msra.mxu0 0.0
        %695 = vmatprep.subr.mxu0 0.0
        %696 = vmatpush1.msra.mxu0 0.0
        %697 = vmatprep.subr.mxu0 0.0
        %698 = vmatpush1.msra.mxu0 0.0
        %699 = vmatprep.subr.mxu0 0.0
        %700 = vmatpush1.msra.mxu0 0.0
        %701 = vmatprep.mubr.f32.mxu0 0.0
        %702 = vmatmul.mubr.f32.gmra.mrb[0].mxu0 %v555
        %v703 = vpop.f32.mrb[0].mxu0
        %v704 = vadd.f32 %v627, %v703
        %v705 = vpop.f32.mrb[0].mxu0
        %v706 = vadd.f32 %v629, %v705
        %707 = vmatprep.mubr.f32.mxu0 0.0
        %708 = vmatmul.mubr.f32.gmra.mrb[0].mxu0 %v558
        %v709 = vpop.f32.mrb[0].mxu0
        %v710 = vadd.f32 %v633, %v709
        %v711 = vpop.f32.mrb[0].mxu0
        %v712 = vadd.f32 %v635, %v711
        %713 = vdwg.mxu0
        %v714 = vmax.f32 %v704, 0.0
        %v715 = vmax.f32 %v706, 0.0
        %v716 = vmax.f32 %v710, 0.0
        %v717 = vmax.f32 %v712, 0.0
        %s718 = sadd.s32 %s185, 6
        %s719 = smul.u32 %s718, 2
        %s720 = smul.addr %s719, 8
        %s721 = scalar_lea.vmem %s165, %s720
        %v722 = vld [vmem:[%s721] sm:$0xff]
        %v723 = vld [vmem:[%s721 + $0x8] sm:$0xff]
        %724 = vrot.lane.b32.xlu0 %v201, 123
        %v725 = vpop.permute.xlu0 %724
        %726 = vrot.lane.b32.xlu0 %v202, 123
        %v727 = vpop.permute.xlu0 %726
        %v728 = vsel %vm259, %v725, %v727
        %733 = vrot.lane.b32.xlu0 %v207, 126
        %v734 = vpop.permute.xlu0 %733
        %735 = vrot.lane.b32.xlu0 %v208, 126
        %v736 = vpop.permute.xlu0 %735
        %v737 = vsel %vm235, %v734, %v736
        %740 = vrot.lane.b32.xlu0 %v207, 125
        %v741 = vpop.permute.xlu0 %740
        %742 = vrot.lane.b32.xlu0 %v208, 125
        %v743 = vpop.permute.xlu0 %742
        %v744 = vsel %vm243, %v741, %v743
        %747 = vrot.lane.b32.xlu0 %v219, 2
        %v748 = vpop.permute.xlu0 %747
        %749 = vrot.lane.b32.xlu0 %v220, 2
        %v750 = vpop.permute.xlu0 %749
        %v751 = vsel %vm341, %v748, %v750
        %752 = vrot.lane.b32.xlu0 %v219, 1
        %v753 = vpop.permute.xlu0 %752
        %754 = vrot.lane.b32.xlu0 %v220, 1
        %v755 = vpop.permute.xlu0 %754
        %v756 = vsel %vm347, %v753, %v755
        %759 = vrot.lane.b32.xlu0 %v722, 4
        %v760 = vpop.permute.xlu0 %759
        %761 = vrot.lane.b32.xlu0 %v723, 4
        %v762 = vpop.permute.xlu0 %761
        %v763 = vsel %vm329, %v760, %v762
        %764 = vrot.lane.b32.xlu0 %v722, 3
        %v765 = vpop.permute.xlu0 %764
        %766 = vrot.lane.b32.xlu0 %v723, 3
        %v767 = vpop.permute.xlu0 %766
        %v768 = vsel %vm335, %v765, %v767
        %769 = vrot.lane.b32.xlu0 %v722, 127
        %v770 = vpop.permute.xlu0 %769
        %771 = vrot.lane.b32.xlu0 %v723, 127
        %v772 = vpop.permute.xlu0 %771
        %v773 = vsel %vm227, %v770, %v772
        %774 = vrot.lane.b32.xlu0 %v722, 126
        %v775 = vpop.permute.xlu0 %774
        %776 = vrot.lane.b32.xlu0 %v723, 126
        %v777 = vpop.permute.xlu0 %776
        %v778 = vsel %vm235, %v775, %v777
        %779 = vrot.lane.b32.xlu0 %v722, 125
        %v780 = vpop.permute.xlu0 %779
        %781 = vrot.lane.b32.xlu0 %v723, 125
        %v782 = vpop.permute.xlu0 %781
        %v783 = vsel %vm243, %v780, %v782
        %784 = vrot.lane.b32.xlu0 %v748, 124
        %v785 = vpop.permute.xlu0 %784
        %786 = vrot.lane.b32.xlu0 %v751, 124
        %v787 = vpop.permute.xlu0 %786
        %788 = vrot.lane.b32.xlu0 %v753, 124
        %v789 = vpop.permute.xlu0 %788
        %790 = vrot.lane.b32.xlu0 %v756, 124
        %v791 = vpop.permute.xlu0 %790
        %792 = vrot.lane.b32.xlu0 %v219, 124
        %v793 = vpop.permute.xlu0 %792
        %794 = vrot.lane.b32.xlu0 %v220, 124
        %v795 = vpop.permute.xlu0 %794
        %796 = vrot.lane.b32.xlu0 %v397, 124
        %v797 = vpop.permute.xlu0 %796
        %798 = vrot.lane.b32.xlu0 %v396, 124
        %v799 = vpop.permute.xlu0 %798
        %800 = vrot.lane.b32.xlu0 %v760, 124
        %v801 = vpop.permute.xlu0 %800
        %802 = vrot.lane.b32.xlu0 %v763, 124
        %v803 = vpop.permute.xlu0 %802
        %804 = vrot.lane.b32.xlu0 %v765, 124
        %v805 = vpop.permute.xlu0 %804
        %806 = vrot.lane.b32.xlu0 %v768, 124
        %v807 = vpop.permute.xlu0 %806
        %v808 = vsel %vm251, %v785, %v787
        %v809 = vsel %vm251, %v789, %v791
        %v810 = vsel %vm251, %v793, %v795
        %v811 = vsel %vm251, %v797, %v799
        %v812 = vsel %vm251, %v801, %v803
        %v813 = vsel %vm251, %v805, %v807
        %826 = vrot.lane.b32.xlu0 %v773, 126
        %v827 = vpop.permute.xlu0 %826
        %828 = vrot.lane.b32.xlu0 %v772, 126
        %v829 = vpop.permute.xlu0 %828
        %830 = vrot.lane.b32.xlu0 %v778, 126
        %v831 = vpop.permute.xlu0 %830
        %832 = vrot.lane.b32.xlu0 %v777, 126
        %v833 = vpop.permute.xlu0 %832
        %834 = vrot.lane.b32.xlu0 %v783, 126
        %v835 = vpop.permute.xlu0 %834
        %836 = vrot.lane.b32.xlu0 %v782, 126
        %v837 = vpop.permute.xlu0 %836
        %v838 = vsel %vm235, %v827, %v829
        %v839 = vsel %vm235, %v831, %v833
        %v840 = vsel %vm235, %v835, %v837
        %849 = vmatprep.subr.mxu0 %v196
        %850 = vmatpush1.msra.mxu0 %v195
        %851 = vmatprep.subr.mxu0 %v268
        %852 = vmatpush1.msra.mxu0 %v269
        %853 = vmatprep.subr.mxu0 %v275
        %854 = vmatpush1.msra.mxu0 %v276
        %855 = vmatprep.subr.mxu0 %v282
        %856 = vmatpush1.msra.mxu0 %v283
        %857 = vmatprep.subr.mxu0 %v289
        %858 = vmatpush1.msra.mxu0 %v290
        %859 = vmatprep.subr.mxu0 %v296
        %860 = vmatpush1.msra.mxu0 %v297
        %861 = vmatprep.subr.mxu0 %v202
        %862 = vmatpush1.msra.mxu0 %v201
        %863 = vmatprep.subr.mxu0 %v305
        %864 = vmatpush1.msra.mxu0 %v306
        %865 = vmatprep.subr.mxu0 %v312
        %866 = vmatpush1.msra.mxu0 %v313
        %867 = vmatprep.subr.mxu0 %v319
        %868 = vmatpush1.msra.mxu0 %v320
        %869 = vmatprep.subr.mxu0 %v411
        %870 = vmatpush1.msra.mxu0 %v472
        %871 = vmatprep.subr.mxu0 %v727
        %872 = vmatpush1.msra.mxu0 %v728
        %873 = vmatprep.subr.mxu0 %v208
        %874 = vmatpush1.msra.mxu0 %v207
        %875 = vmatprep.subr.mxu0 %v352
        %876 = vmatpush1.msra.mxu0 %v353
        %877 = vmatprep.subr.mxu0 %v736
        %878 = vmatpush1.msra.mxu0 %v737
        %879 = vmatprep.subr.mxu0 %v743
        %880 = vmatpush1.msra.mxu0 %v744
        %881 = vmatprep.subr.mxu0 %v435
        %882 = vmatpush1.msra.mxu0 %v478
        %883 = vmatprep.subr.mxu0 %v439
        %884 = vmatpush1.msra.mxu0 %v479
        %885 = vmatprep.subr.mxu0 %v443
        %886 = vmatpush1.msra.mxu0 %v480
        %887 = vmatprep.subr.mxu0 %v447
        %888 = vmatpush1.msra.mxu0 %v481
        %889 = vmatprep.subr.mxu0 %v451
        %890 = vmatpush1.msra.mxu0 %v482
        %891 = vmatprep.subr.mxu0 %v455
        %892 = vmatpush1.msra.mxu0 %v483
        %893 = vmatprep.subr.mxu0 %v459
        %894 = vmatpush1.msra.mxu0 %v484
        %895 = vmatprep.subr.mxu0 %v463
        %896 = vmatpush1.msra.mxu0 %v485
        %897 = vmatprep.subr.mxu0 %v467
        %898 = vmatpush1.msra.mxu0 %v486
        %899 = vmatprep.subr.mxu0 %v471
        %900 = vmatpush1.msra.mxu0 %v487
        %901 = vmatprep.subr.mxu0 %v787
        %902 = vmatpush1.msra.mxu0 %v808
        %903 = vmatprep.subr.mxu0 %v791
        %904 = vmatpush1.msra.mxu0 %v809
        %905 = vmatprep.subr.mxu0 %v795
        %906 = vmatpush1.msra.mxu0 %v810
        %907 = vmatprep.subr.mxu0 %v799
        %908 = vmatpush1.msra.mxu0 %v811
        %909 = vmatprep.subr.mxu0 %v803
        %910 = vmatpush1.msra.mxu0 %v812
        %911 = vmatprep.subr.mxu0 %v807
        %912 = vmatpush1.msra.mxu0 %v813
        %913 = vmatprep.mubr.f32.mxu0 %v172
        %914 = vmatmul.mubr.f32.gmra.mrb[0].mxu0 %v171
        %v915 = vpop.f32.mrb[0].mxu0
        %v916 = vadd.f32 %v546, %v915
        %v917 = vpop.f32.mrb[0].mxu0
        %v918 = vadd.f32 %v546, %v917
        %919 = vmatprep.mubr.f32.mxu0 %v175
        %920 = vmatmul.mubr.f32.gmra.mrb[0].mxu0 %v174
        %v921 = vpop.f32.mrb[0].mxu0
        %v922 = vadd.f32 %v551, %v921
        %v923 = vpop.f32.mrb[0].mxu0
        %v924 = vadd.f32 %v551, %v923
        %925 = vdwg.mxu0
        %926 = vmatprep.subr.mxu0 %v777
        %927 = vmatpush1.msra.mxu0 %v778
        %928 = vmatprep.subr.mxu0 %v829
        %929 = vmatpush1.msra.mxu0 %v838
        %930 = vmatprep.subr.mxu0 %v833
        %931 = vmatpush1.msra.mxu0 %v839
        %932 = vmatprep.subr.mxu0 %v837
        %933 = vmatpush1.msra.mxu0 %v840
        %934 = vmatprep.subr.mxu0 0.0
        %935 = vmatpush1.msra.mxu0 0.0
        %936 = vmatprep.subr.mxu0 0.0
        %937 = vmatpush1.msra.mxu0 0.0
        %938 = vmatprep.subr.mxu0 0.0
        %939 = vmatpush1.msra.mxu0 0.0
        %940 = vmatprep.subr.mxu0 0.0
        %941 = vmatpush1.msra.mxu0 0.0
        %942 = vmatprep.subr.mxu0 0.0
        %943 = vmatpush1.msra.mxu0 0.0
        %944 = vmatprep.subr.mxu0 0.0
        %945 = vmatpush1.msra.mxu0 0.0
        %946 = vmatprep.subr.mxu0 0.0
        %947 = vmatpush1.msra.mxu0 0.0
        %948 = vmatprep.subr.mxu0 0.0
        %949 = vmatpush1.msra.mxu0 0.0
        %950 = vmatprep.subr.mxu0 0.0
        %951 = vmatpush1.msra.mxu0 0.0
        %952 = vmatprep.subr.mxu0 0.0
        %953 = vmatpush1.msra.mxu0 0.0
        %954 = vmatprep.subr.mxu0 0.0
        %955 = vmatpush1.msra.mxu0 0.0
        %956 = vmatprep.subr.mxu0 0.0
        %957 = vmatpush1.msra.mxu0 0.0
        %958 = vmatprep.subr.mxu0 0.0
        %959 = vmatpush1.msra.mxu0 0.0
        %960 = vmatprep.subr.mxu0 0.0
        %961 = vmatpush1.msra.mxu0 0.0
        %962 = vmatprep.subr.mxu0 0.0
        %963 = vmatpush1.msra.mxu0 0.0
        %964 = vmatprep.subr.mxu0 0.0
        %965 = vmatpush1.msra.mxu0 0.0
        %966 = vmatprep.subr.mxu0 0.0
        %967 = vmatpush1.msra.mxu0 0.0
        %968 = vmatprep.subr.mxu0 0.0
        %969 = vmatpush1.msra.mxu0 0.0
        %970 = vmatprep.subr.mxu0 0.0
        %971 = vmatpush1.msra.mxu0 0.0
        %972 = vmatprep.subr.mxu0 0.0
        %973 = vmatpush1.msra.mxu0 0.0
        %974 = vmatprep.subr.mxu0 0.0
        %975 = vmatpush1.msra.mxu0 0.0
        %976 = vmatprep.subr.mxu0 0.0
        %977 = vmatpush1.msra.mxu0 0.0
        %978 = vmatprep.subr.mxu0 0.0
        %979 = vmatpush1.msra.mxu0 0.0
        %980 = vmatprep.subr.mxu0 0.0
        %981 = vmatpush1.msra.mxu0 0.0
        %982 = vmatprep.subr.mxu0 0.0
        %983 = vmatpush1.msra.mxu0 0.0
        %984 = vmatprep.subr.mxu0 0.0
        %985 = vmatpush1.msra.mxu0 0.0
        %986 = vmatprep.subr.mxu0 0.0
        %987 = vmatpush1.msra.mxu0 0.0
        %988 = vmatprep.subr.mxu0 0.0
        %989 = vmatpush1.msra.mxu0 0.0
        %990 = vmatprep.mubr.f32.mxu0 0.0
        %991 = vmatmul.mubr.f32.gmra.mrb[0].mxu0 %v555
        %v992 = vpop.f32.mrb[0].mxu0
        %v993 = vadd.f32 %v916, %v992
        %v994 = vpop.f32.mrb[0].mxu0
        %v995 = vadd.f32 %v918, %v994
        %996 = vmatprep.mubr.f32.mxu0 0.0
        %997 = vmatmul.mubr.f32.gmra.mrb[0].mxu0 %v558
        %v998 = vpop.f32.mrb[0].mxu0
        %v999 = vadd.f32 %v922, %v998
        %v1000 = vpop.f32.mrb[0].mxu0
        %v1001 = vadd.f32 %v924, %v1000
        %1002 = vdwg.mxu0
        %v1003 = vmax.f32 %v993, 0.0
        %v1004 = vmax.f32 %v995, 0.0
        %v1005 = vmax.f32 %v999, 0.0
        %v1006 = vmax.f32 %v1001, 0.0
        %v1007 = vmax.f32 %v714, %v1003
        %v1008 = vmax.f32 %v715, %v1004
        %v1009 = vmax.f32 %v716, %v1005
        %v1010 = vmax.f32 %v717, %v1006
        %s1011 = smul.u32 %s180, 4
        %s1012 = smul.addr %s1011, 8
        %s1013 = scalar_lea.vmem %s170, %s1012
        %1014 = vst [vmem:[%s1013] sm:$0xff] %v1007
        %vm1015 = vcmask 769024
        %1016 = vst.msk [vmem:[%s1013 + $0x8] sm:$0xff] %vm1015, %v1008
        %1017 = vst [vmem:[%s1013 + $0x10] sm:$0xf] %v1009
        %vm1018 = vcmask 764928
        %1019 = vst.msk [vmem:[%s1013 + $0x18] sm:$0xf] %vm1018, %v1010
      $region37: #{forward.3} parent=31 // loop_footer
        %s184 = sadd.s32 1, %s180
      $region38: #{forward.3} parent=31 // loop_footer_branch
        %179 = sbr.rel target = $region34
      $region39: #{forward.3} parent=31 // loop_exit
        _
      %p1020 = scmp.lt.s32.totalorder %s14, 1
      %s1021 = scalar_select %p1020, %s14, 1
      %s1022 = smul.addr %s1021, 444
      %s1023 = smul.addr %s1022, 8
      %s1024 = scalar_lea.vmem %s3, %s1023
      // Predicated region
      $region40: #{forward.3} parent=31 // pred_check
        %p1025 = pneg %p100
      $region41: #{forward.3} parent=31 // pred_check_branch
        %1027 = sbr.rel (%p1025) target = $region43
      $region42: #{forward.3} parent=31 // pred_region
        _
      $region43: #{forward.3} parent=31 // pred_fallthru
        _
    $region32: #{forward.3} parent=5 // pred_fallthru
      _
    %p1028 = scmp.le.s32.totalorder 2, %s9
    // Predicated region
    $region44: #{forward.3} parent=5 // pred_check
      %p1029 = pneg %p1028
    $region45: #{forward.3} parent=5 // pred_check_branch
      %1031 = sbr.rel (%p1029) target = $region47
    $region46: #{forward.3} parent=5 // pred_region
      %s1032 = ssub.s32 %s9, 2
      // Predicated region
      $region48: #{forward.3} parent=46 // pred_check
        %p1033 = pneg %p106
      $region49: #{forward.3} parent=46 // pred_check_branch
        %1035 = sbr.rel (%p1033) target = $region51
      $region50: #{forward.3} parent=46 // pred_region
        %p1036 = scmp.lt.s32.totalorder %s15, 1
        %s1037 = scalar_select %p1036, %s15, 1
        %s1038 = smul.addr %s1037, 444
        %s1039 = smul.addr %s1038, 8
        %s1040 = scalar_lea.vmem %s3, %s1039
      $region51: #{forward.3} parent=46 // pred_fallthru
        _
    $region47: #{forward.3} parent=5 // pred_fallthru
      _
  $region6: #{forward.3} parent=0 // loop_footer
    %s13 = sadd.s32 1, %s9
  $region7: #{forward.3} parent=0 // loop_footer_branch
    %8 = sbr.rel target = $region3
  $region8: #{forward.3} parent=0 // loop_exit
    _

// kernel: forward.4
$region0: #{forward.4}
  #allocation0 [shape = 'u32[]', space=smem, size = 0x4, offset = 0x4, fixed_abs, tag = 'smem constant byte address 0x4 - core index']
  #allocation1 [shape = 'u32[144,128]{1,0:T(1,128)}', space=vmem, size = 0x12000, scoped, tag = 'internal scratch']
  %s0 = inlined_call_operand.vmem [shape: f32[2,111,16,111], index: 0, kind: input, shape index: {}]
  %s1 = inlined_call_operand.vmem [shape: f32[32,400], index: 1, kind: input, shape index: {}]
  %s2 = inlined_call_operand.vmem [shape: f32[32,1], index: 2, kind: input, shape index: {}]
  %s3 = inlined_call_operand.vmem [shape: f32[2,53,32,107], index: 3, kind: output, shape index: {}]
  %s4 = sld [smem:[#allocation0]]
  $region52: #{forward.4} parent=0
    _
  %s6 = ssub.s32 1, %s4
  %s7 = scalar_select 0, %s6, %s4
  loop: start=0, step=1, limit=4
  $region2: #{forward.4} parent=0 // loop_pre_header
    _
  $region3: #{forward.4} parent=0 // loop_header
    %s9 = sphi 0, %s13
    %p10 = scmp.ge.s32.totalorder %s9, 4
    %s19 = sphi 0, %s21
    %s22 = sphi 0, %s19
    %s23 = sphi 0, %s22
    %s39 = sphi 0, %s23
    %s43 = sphi 0, %s43
    %s45 = sphi 0, %s43
    %s46 = sphi 0, %s45
    %s60 = sphi 0, %s46
    %s64 = sphi 0, %s64
    %s66 = sphi 0, %s64
    %s67 = sphi 0, %s66
    %s81 = sphi 0, %s67
    %s87 = sphi 0, %s89
    %s90 = sphi 0, %s87
    %s91 = sphi 0, %s90
    %s107 = sphi 0, %s91
  $region4: #{forward.4} parent=0 // loop_header_branch
    %12 = sbr.rel (%p10) target = $region8
  $region5: #{forward.4} parent=0 // loop_body
    %s14 = ssub.s32 %s9, 1
    %s15 = ssub.s32 %s9, 2
    %s16 = sadd.s32 %s9, 1
    %s17 = ssub.s32 %s9, %s16
    %p18 = scmp.eq.s32.totalorder %s17, 0
    %s20 = sadd.s32 %s19, 1
    %s21 = scalar_select %p18, %s19, %s20
    %p24 = pneg %p18
    %p25 = scmp.eq.s32.totalorder %s9, 1
    %p26 = por %p24, %p25
    %p27 = scmp.ne.s32.totalorder %s19, %s22
    %p28 = scmp.eq.s32.totalorder %s9, 0
    %p29 = por %p27, %p28
    %p30 = scmp.ne.s32.totalorder %s19, %s22
    %p31 = scmp.eq.s32.totalorder %s14, 1
    %p32 = por %p30, %p31
    %p33 = scmp.ne.s32.totalorder %s22, %s23
    %p34 = scmp.eq.s32.totalorder %s14, 0
    %p35 = por %p33, %p34
    %p36 = scmp.ne.s32.totalorder %s22, %s23
    %p37 = scmp.eq.s32.totalorder %s15, 1
    %p38 = por %p36, %p37
    %p40 = scmp.ne.s32.totalorder %s23, %s39
    %p41 = scmp.eq.s32.totalorder %s15, 0
    %p42 = por %p40, %p41
    %s44 = sadd.s32 %s43, 1
    %p47 = scmp.eq.s32.totalorder %s9, 1
    %p48 = scmp.ne.s32.totalorder %s43, %s45
    %p49 = scmp.eq.s32.totalorder %s9, 0
    %p50 = por %p48, %p49
    %p51 = scmp.ne.s32.totalorder %s43, %s45
    %p52 = scmp.eq.s32.totalorder %s14, 1
    %p53 = por %p51, %p52
    %p54 = scmp.ne.s32.totalorder %s45, %s46
    %p55 = scmp.eq.s32.totalorder %s14, 0
    %p56 = por %p54, %p55
    %p57 = scmp.ne.s32.totalorder %s45, %s46
    %p58 = scmp.eq.s32.totalorder %s15, 1
    %p59 = por %p57, %p58
    %p61 = scmp.ne.s32.totalorder %s46, %s60
    %p62 = scmp.eq.s32.totalorder %s15, 0
    %p63 = por %p61, %p62
    %s65 = sadd.s32 %s64, 1
    %p68 = scmp.eq.s32.totalorder %s9, 1
    %p69 = scmp.ne.s32.totalorder %s64, %s66
    %p70 = scmp.eq.s32.totalorder %s9, 0
    %p71 = por %p69, %p70
    %p72 = scmp.ne.s32.totalorder %s64, %s66
    %p73 = scmp.eq.s32.totalorder %s14, 1
    %p74 = por %p72, %p73
    %p75 = scmp.ne.s32.totalorder %s66, %s67
    %p76 = scmp.eq.s32.totalorder %s14, 0
    %p77 = por %p75, %p76
    %p78 = scmp.ne.s32.totalorder %s66, %s67
    %p79 = scmp.eq.s32.totalorder %s15, 1
    %p80 = por %p78, %p79
    %p82 = scmp.ne.s32.totalorder %s67, %s81
    %p83 = scmp.eq.s32.totalorder %s15, 0
    %p84 = por %p82, %p83
    %s85 = ssub.s32 %s9, %s16
    %p86 = scmp.eq.s32.totalorder %s85, 0
    %s88 = sadd.s32 %s87, 1
    %s89 = scalar_select %p86, %s87, %s88
    %p92 = pneg %p86
    %p93 = scmp.eq.s32.totalorder %s9, 1
    %p94 = por %p92, %p93
    %p95 = scmp.ne.s32.totalorder %s87, %s90
    %p96 = scmp.eq.s32.totalorder %s9, 0
    %p97 = por %p95, %p96
    %p98 = scmp.ne.s32.totalorder %s87, %s90
    %p99 = scmp.eq.s32.totalorder %s14, 1
    %p100 = por %p98, %p99
    %p101 = scmp.ne.s32.totalorder %s90, %s91
    %p102 = scmp.eq.s32.totalorder %s14, 0
    %p103 = por %p101, %p102
    %p104 = scmp.ne.s32.totalorder %s90, %s91
    %p105 = scmp.eq.s32.totalorder %s15, 1
    %p106 = por %p104, %p105
    %p108 = scmp.ne.s32.totalorder %s91, %s107
    %p109 = scmp.eq.s32.totalorder %s15, 0
    %p110 = por %p108, %p109
    %p111 = scmp.le.s32.totalorder 1, %s9
    %p112 = scmp.lt.s32.totalorder %s9, 3
    %p113 = pnand %p111, %p112
    %p114 = pneg %p113
    // Predicated region
    $region9: #{forward.4} parent=5 // pred_check
      _
    $region10: #{forward.4} parent=5 // pred_check_branch
      %116 = sbr.rel (%p113) target = $region12
    $region11: #{forward.4} parent=5 // pred_region
      %s117 = ssub.s32 %s9, 1
      // Predicated region
      $region13: #{forward.4} parent=11 // pred_check
        %p118 = pneg %p56
      $region14: #{forward.4} parent=11 // pred_check_branch
        %120 = sbr.rel (%p118) target = $region16
      $region15: #{forward.4} parent=11 // pred_region
        _
      $region16: #{forward.4} parent=11 // pred_fallthru
        _
      // Predicated region
      $region17: #{forward.4} parent=11 // pred_check
        %p121 = pneg %p77
      $region18: #{forward.4} parent=11 // pred_check_branch
        %123 = sbr.rel (%p121) target = $region20
      $region19: #{forward.4} parent=11 // pred_region
        _
      $region20: #{forward.4} parent=11 // pred_fallthru
        _
    $region12: #{forward.4} parent=5 // pred_fallthru
      _
    %p124 = scmp.lt.s32.totalorder %s9, 2
    // Predicated region
    $region21: #{forward.4} parent=5 // pred_check
      %p125 = pneg %p124
    $region22: #{forward.4} parent=5 // pred_check_branch
      %127 = sbr.rel (%p125) target = $region24
    $region23: #{forward.4} parent=5 // pred_region
      // Predicated region
      $region25: #{forward.4} parent=23 // pred_check
        %p128 = pneg %p29
      $region26: #{forward.4} parent=23 // pred_check_branch
        %130 = sbr.rel (%p128) target = $region28
      $region27: #{forward.4} parent=23 // pred_region
        %p131 = scmp.lt.s32.totalorder %s9, 1
        %s132 = scalar_select %p131, %s9, 1
        %s133 = smul.addr %s132, 222
        %s134 = smul.addr %s133, 8
        %s135 = scalar_lea.vmem %s0, %s134
      $region28: #{forward.4} parent=23 // pred_fallthru
        _
    $region24: #{forward.4} parent=5 // pred_fallthru
      _
    %p136 = scmp.le.s32.totalorder 1, %s9
    %p137 = scmp.lt.s32.totalorder %s9, 3
    %p138 = pnand %p136, %p137
    %p139 = pneg %p138
    // Predicated region
    $region29: #{forward.4} parent=5 // pred_check
      _
    $region30: #{forward.4} parent=5 // pred_check_branch
      %141 = sbr.rel (%p138) target = $region32
    $region31: #{forward.4} parent=5 // pred_region
      %s142 = ssub.s32 %s9, 1
      %p143 = scmp.lt.s32.totalorder %s14, 1
      %s144 = scalar_select %p143, %s14, 1
      %s145 = smul.addr %s144, 222
      %s146 = smul.addr %s145, 8
      %s147 = scalar_lea.vmem %s0, %s146
      %p148 = pneg %p35
      %p149 = pneg %p32
      %p150 = pneg %p56
      %p151 = pneg %p53
      %p152 = pneg %p77
      %p153 = pneg %p74
      %p154 = pneg %p103
      %p155 = pneg %p100
      %p156 = scmp.lt.s32.totalorder %s14, 1
      %s157 = scalar_select %p156, %s14, 1
      %s158 = smul.addr %s157, 212
      %s159 = smul.addr %s158, 8
      %s160 = scalar_lea.vmem %s3, %s159
      %p161 = scmp.lt.s32.totalorder %s14, 1
      %s162 = scalar_select %p161, %s14, 1
      %s163 = smul.addr %s162, 222
      %s164 = smul.addr %s163, 8
      %s165 = scalar_lea.vmem %s0, %s164
      %p166 = scmp.lt.s32.totalorder %s14, 1
      %s167 = scalar_select %p166, %s14, 1
      %s168 = smul.addr %s167, 212
      %s169 = smul.addr %s168, 8
      %s170 = scalar_lea.vmem %s3, %s169
      %v171 = vld [vmem:[%s1] sm:$0xff]
      %v172 = vld [vmem:[%s1 + $0x8] sm:$0xff]
      %v173 = vld [vmem:[%s1 + $0x10] sm:$0xff]
      %v174 = vld [vmem:[%s1 + $0x18] sm:$0xff]
      %v175 = vld [vmem:[%s1 + $0x20] sm:$0xff]
      %v176 = vld [vmem:[%s1 + $0x28] sm:$0xff]
      %v177 = vld [vmem:[%s1 + $0x30] sm:$0xff]
      %v178 = vld [vmem:[%s1 + $0x38] sm:$0xff]
      %v179 = vld [vmem:[%s1 + $0x40] sm:$0xff]
      %v180 = vld [vmem:[%s1 + $0x48] sm:$0xff]
      %v181 = vld [vmem:[%s1 + $0x50] sm:$0xff]
      %v182 = vld [vmem:[%s1 + $0x58] sm:$0xff]
      %v183 = vld [vmem:[%s1 + $0x60] sm:$0xff]
      %v184 = vld [vmem:[%s1 + $0x68] sm:$0xff]
      %v185 = vld [vmem:[%s1 + $0x70] sm:$0xff]
      %v186 = vld [vmem:[%s1 + $0x78] sm:$0xff]
      %v187 = vld [vmem:[%s2] sm:$0xff]
      %v188 = vld [vmem:[%s2 + $0x8] sm:$0xff]
      %v189 = vld [vmem:[%s2 + $0x10] sm:$0xff]
      %v190 = vld [vmem:[%s2 + $0x18] sm:$0xff]
      loop: start=0, step=1, limit=53
      $region33: #{forward.4} parent=31 // loop_pre_header
        _
      $region34: #{forward.4} parent=31 // loop_header
        %s192 = sphi 0, %s196
        %p193 = scmp.ge.s32.totalorder %s192, 53
      $region35: #{forward.4} parent=31 // loop_header_branch
        %195 = sbr.rel (%p193) target = $region39
      $region36: #{forward.4} parent=31 // loop_body
        %s197 = smul.u32 %s192, 2
        %s198 = smul.u32 %s197, 16
        %s199 = scalar_lea.vmem %s165, %s198
        %v200 = vld [vmem:[%s199] sm:$0xff]
        %v201 = vld [vmem:[%s199 + $0x8] sm:$0xff]
        %s202 = sadd.s32 %s197, 1
        %s203 = smul.u32 %s202, 16
        %s204 = scalar_lea.vmem %s165, %s203
        %v205 = vld [vmem:[%s204] sm:$0xff]
        %v206 = vld [vmem:[%s204 + $0x8] sm:$0xff]
        %s207 = sadd.s32 %s197, 2
        %s208 = smul.u32 %s207, 16
        %s209 = scalar_lea.vmem %s165, %s208
        %v210 = vld [vmem:[%s209] sm:$0xff]
        %v211 = vld [vmem:[%s209 + $0x8] sm:$0xff]
        %s212 = sadd.s32 %s197, 3
        %s213 = smul.u32 %s212, 16
        %s214 = scalar_lea.vmem %s165, %s213
        %v215 = vld [vmem:[%s214] sm:$0xff]
        %v216 = vld [vmem:[%s214 + $0x8] sm:$0xff]
        %s217 = sadd.s32 %s197, 4
        %s218 = smul.u32 %s217, 16
        %s219 = scalar_lea.vmem %s165, %s218
        %v220 = vld [vmem:[%s219] sm:$0xff]
        %v221 = vld [vmem:[%s219 + $0x8] sm:$0xff]
        %224 = vrot.lane.b32.xlu0 %v200, 127
        %v225 = vpop.permute.xlu0 %224
        %226 = vrot.lane.b32.xlu0 %v201, 127
        %v227 = vpop.permute.xlu0 %226
        %230 = vrot.lane.b32.xlu0 %v200, 126
        %v231 = vpop.permute.xlu0 %230
        %232 = vrot.lane.b32.xlu0 %v201, 126
        %v233 = vpop.permute.xlu0 %232
        %236 = vrot.lane.b32.xlu0 %v200, 125
        %v237 = vpop.permute.xlu0 %236
        %238 = vrot.lane.b32.xlu0 %v201, 125
        %v239 = vpop.permute.xlu0 %238
        %242 = vrot.lane.b32.xlu0 %v200, 124
        %v243 = vpop.permute.xlu0 %242
        %244 = vrot.lane.b32.xlu0 %v201, 124
        %v245 = vpop.permute.xlu0 %244
        %250 = vrot.lane.b32.xlu0 %v205, 127
        %v251 = vpop.permute.xlu0 %250
        %252 = vrot.lane.b32.xlu0 %v206, 127
        %v253 = vpop.permute.xlu0 %252
        %256 = vrot.lane.b32.xlu0 %v205, 126
        %v257 = vpop.permute.xlu0 %256
        %258 = vrot.lane.b32.xlu0 %v206, 126
        %v259 = vpop.permute.xlu0 %258
        %262 = vrot.lane.b32.xlu0 %v205, 125
        %v263 = vpop.permute.xlu0 %262
        %264 = vrot.lane.b32.xlu0 %v206, 125
        %v265 = vpop.permute.xlu0 %264
        %268 = vrot.lane.b32.xlu0 %v205, 124
        %v269 = vpop.permute.xlu0 %268
        %270 = vrot.lane.b32.xlu0 %v206, 124
        %v271 = vpop.permute.xlu0 %270
        %276 = vrot.lane.b32.xlu0 %v210, 127
        %v277 = vpop.permute.xlu0 %276
        %278 = vrot.lane.b32.xlu0 %v211, 127
        %v279 = vpop.permute.xlu0 %278
        %282 = vrot.lane.b32.xlu0 %v210, 126
        %v283 = vpop.permute.xlu0 %282
        %284 = vrot.lane.b32.xlu0 %v211, 126
        %v285 = vpop.permute.xlu0 %284
        %288 = vrot.lane.b32.xlu0 %v210, 125
        %v289 = vpop.permute.xlu0 %288
        %290 = vrot.lane.b32.xlu0 %v211, 125
        %v291 = vpop.permute.xlu0 %290
        %294 = vrot.lane.b32.xlu0 %v210, 124
        %v295 = vpop.permute.xlu0 %294
        %296 = vrot.lane.b32.xlu0 %v211, 124
        %v297 = vpop.permute.xlu0 %296
        %302 = vrot.lane.b32.xlu0 %v215, 127
        %v303 = vpop.permute.xlu0 %302
        %304 = vrot.lane.b32.xlu0 %v216, 127
        %v305 = vpop.permute.xlu0 %304
        %306 = vrot.lane.b32.xlu0 %v215, 126
        %v307 = vpop.permute.xlu0 %306
        %308 = vrot.lane.b32.xlu0 %v216, 126
        %v309 = vpop.permute.xlu0 %308
        %310 = vrot.lane.b32.xlu0 %v215, 125
        %v311 = vpop.permute.xlu0 %310
        %312 = vrot.lane.b32.xlu0 %v216, 125
        %v313 = vpop.permute.xlu0 %312
        %316 = vrot.lane.b32.xlu0 %v220, 1
        %v317 = vpop.permute.xlu0 %316
        %318 = vrot.lane.b32.xlu0 %v221, 1
        %v319 = vpop.permute.xlu0 %318
        %320 = vrot.lane.b32.xlu0 %v220, 127
        %v321 = vpop.permute.xlu0 %320
        %322 = vrot.lane.b32.xlu0 %v221, 127
        %v323 = vpop.permute.xlu0 %322
        %324 = vrot.lane.b32.xlu0 %v220, 126
        %v325 = vpop.permute.xlu0 %324
        %326 = vrot.lane.b32.xlu0 %v221, 126
        %v327 = vpop.permute.xlu0 %326
        %328 = vrot.lane.b32.xlu0 %v220, 125
        %v329 = vpop.permute.xlu0 %328
        %330 = vrot.lane.b32.xlu0 %v221, 125
        %v331 = vpop.permute.xlu0 %330
        %332 = vrot.lane.b32.xlu0 %v303, 127
        %v333 = vpop.permute.xlu0 %332
        %334 = vrot.lane.b32.xlu0 %v305, 127
        %v335 = vpop.permute.xlu0 %334
        %336 = vrot.lane.b32.xlu0 %v307, 127
        %v337 = vpop.permute.xlu0 %336
        %338 = vrot.lane.b32.xlu0 %v309, 127
        %v339 = vpop.permute.xlu0 %338
        %340 = vrot.lane.b32.xlu0 %v311, 127
        %v341 = vpop.permute.xlu0 %340
        %342 = vrot.lane.b32.xlu0 %v313, 127
        %v343 = vpop.permute.xlu0 %342
        %344 = vrot.lane.b32.xlu0 %v317, 127
        %v345 = vpop.permute.xlu0 %344
        %346 = vrot.lane.b32.xlu0 %v319, 127
        %v347 = vpop.permute.xlu0 %346
        %348 = vrot.lane.b32.xlu0 %v321, 127
        %v349 = vpop.permute.xlu0 %348
        %350 = vrot.lane.b32.xlu0 %v323, 127
        %v351 = vpop.permute.xlu0 %350
        %352 = vrot.lane.b32.xlu0 %v325, 127
        %v353 = vpop.permute.xlu0 %352
        %354 = vrot.lane.b32.xlu0 %v327, 127
        %v355 = vpop.permute.xlu0 %354
        %356 = vrot.lane.b32.xlu0 %v329, 127
        %v357 = vpop.permute.xlu0 %356
        %358 = vrot.lane.b32.xlu0 %v331, 127
        %v359 = vpop.permute.xlu0 %358
        %379 = vset.pattern.permute.xlu0 0
        %380 = vperm.xlu0 %379, %v187
        %v381 = vpop.permute.xlu0 %380
        %384 = vset.pattern.permute.xlu0 0
        %385 = vperm.xlu0 %384, %v188
        %v386 = vpop.permute.xlu0 %385
        %389 = vset.pattern.permute.xlu0 0
        %390 = vperm.xlu0 %389, %v189
        %v391 = vpop.permute.xlu0 %390
        %394 = vset.pattern.permute.xlu0 0
        %395 = vperm.xlu0 %394, %v190
        %v396 = vpop.permute.xlu0 %395
        %vm398 = vcmask 130048
        %v400 = vsel %vm398, %v174, 0
        %v403 = vsel %vm398, %v178, 0
        %v406 = vsel %vm398, %v182, 0
        %v409 = vsel %vm398, %v186, 0
        %411 = vmatprep.subr.mxu0 0.0
        %412 = vmatpush1.msra.mxu0 %v200
        %413 = vmatprep.subr.mxu0 0.0
        %414 = vmatpush1.msra.mxu0 %v201
        %415 = vmatprep.subr.mxu0 0.0
        %416 = vmatpush1.msra.mxu0 %v225
        %417 = vmatprep.subr.mxu0 0.0
        %418 = vmatpush1.msra.mxu0 %v227
        %419 = vmatprep.subr.mxu0 0.0
        %420 = vmatpush1.msra.mxu0 %v231
        %421 = vmatprep.subr.mxu0 0.0
        %422 = vmatpush1.msra.mxu0 %v233
        %423 = vmatprep.subr.mxu0 0.0
        %424 = vmatpush1.msra.mxu0 %v237
        %425 = vmatprep.subr.mxu0 0.0
        %426 = vmatpush1.msra.mxu0 %v239
        %427 = vmatprep.subr.mxu0 0.0
        %428 = vmatpush1.msra.mxu0 %v243
        %429 = vmatprep.subr.mxu0 0.0
        %430 = vmatpush1.msra.mxu0 %v245
        %431 = vmatprep.subr.mxu0 0.0
        %432 = vmatpush1.msra.mxu0 %v205
        %433 = vmatprep.subr.mxu0 0.0
        %434 = vmatpush1.msra.mxu0 %v206
        %435 = vmatprep.subr.mxu0 0.0
        %436 = vmatpush1.msra.mxu0 %v251
        %437 = vmatprep.subr.mxu0 0.0
        %438 = vmatpush1.msra.mxu0 %v253
        %439 = vmatprep.subr.mxu0 0.0
        %440 = vmatpush1.msra.mxu0 %v257
        %441 = vmatprep.subr.mxu0 0.0
        %442 = vmatpush1.msra.mxu0 %v259
        %443 = vmatprep.subr.mxu0 0.0
        %444 = vmatpush1.msra.mxu0 %v263
        %445 = vmatprep.subr.mxu0 0.0
        %446 = vmatpush1.msra.mxu0 %v265
        %447 = vmatprep.subr.mxu0 0.0
        %448 = vmatpush1.msra.mxu0 %v269
        %449 = vmatprep.subr.mxu0 0.0
        %450 = vmatpush1.msra.mxu0 %v271
        %451 = vmatprep.subr.mxu0 0.0
        %452 = vmatpush1.msra.mxu0 %v210
        %453 = vmatprep.subr.mxu0 0.0
        %454 = vmatpush1.msra.mxu0 %v211
        %455 = vmatprep.subr.mxu0 0.0
        %456 = vmatpush1.msra.mxu0 %v277
        %457 = vmatprep.subr.mxu0 0.0
        %458 = vmatpush1.msra.mxu0 %v279
        %459 = vmatprep.subr.mxu0 0.0
        %460 = vmatpush1.msra.mxu0 %v283
        %461 = vmatprep.subr.mxu0 0.0
        %462 = vmatpush1.msra.mxu0 %v285
        %463 = vmatprep.subr.mxu0 0.0
        %464 = vmatpush1.msra.mxu0 %v289
        %465 = vmatprep.subr.mxu0 0.0
        %466 = vmatpush1.msra.mxu0 %v291
        %467 = vmatprep.subr.mxu0 0.0
        %468 = vmatpush1.msra.mxu0 %v295
        %469 = vmatprep.subr.mxu0 0.0
        %470 = vmatpush1.msra.mxu0 %v297
        %471 = vmatprep.subr.mxu0 0.0
        %472 = vmatpush1.msra.mxu0 %v215
        %473 = vmatprep.subr.mxu0 0.0
        %474 = vmatpush1.msra.mxu0 %v216
        %475 = vmatprep.mubr.f32.mxu0 %v172
        %476 = vmatmul.mubr.f32.gmra.mrb[0].mxu0 %v171
        %v477 = vpop.f32.mrb[0].mxu0
        %v478 = vadd.f32 %v381, %v477
        %v479 = vpop.f32.mrb[0].mxu0
        %480 = vmatprep.mubr.f32.mxu0 %v176
        %481 = vmatmul.mubr.f32.gmra.mrb[0].mxu0 %v175
        %v482 = vpop.f32.mrb[0].mxu0
        %v483 = vadd.f32 %v386, %v482
        %v484 = vpop.f32.mrb[0].mxu0
        %485 = vmatprep.mubr.f32.mxu0 %v180
        %486 = vmatmul.mubr.f32.gmra.mrb[0].mxu0 %v179
        %v487 = vpop.f32.mrb[0].mxu0
        %v488 = vadd.f32 %v391, %v487
        %v489 = vpop.f32.mrb[0].mxu0
        %490 = vmatprep.mubr.f32.mxu0 %v184
        %491 = vmatmul.mubr.f32.gmra.mrb[0].mxu0 %v183
        %v492 = vpop.f32.mrb[0].mxu0
        %v493 = vadd.f32 %v396, %v492
        %v494 = vpop.f32.mrb[0].mxu0
        %495 = vdwg.mxu0
        %496 = vmatprep.subr.mxu0 0.0
        %497 = vmatpush1.msra.mxu0 %v303
        %498 = vmatprep.subr.mxu0 0.0
        %499 = vmatpush1.msra.mxu0 %v305
        %500 = vmatprep.subr.mxu0 0.0
        %501 = vmatpush1.msra.mxu0 %v333
        %502 = vmatprep.subr.mxu0 0.0
        %503 = vmatpush1.msra.mxu0 %v335
        %504 = vmatprep.subr.mxu0 0.0
        %505 = vmatpush1.msra.mxu0 %v337
        %506 = vmatprep.subr.mxu0 0.0
        %507 = vmatpush1.msra.mxu0 %v339
        %508 = vmatprep.subr.mxu0 0.0
        %509 = vmatpush1.msra.mxu0 %v341
        %510 = vmatprep.subr.mxu0 0.0
        %511 = vmatpush1.msra.mxu0 %v343
        %512 = vmatprep.subr.mxu0 0.0
        %513 = vmatpush1.msra.mxu0 %v345
        %514 = vmatprep.subr.mxu0 0.0
        %515 = vmatpush1.msra.mxu0 %v347
        %516 = vmatprep.subr.mxu0 0.0
        %517 = vmatpush1.msra.mxu0 %v321
        %518 = vmatprep.subr.mxu0 0.0
        %519 = vmatpush1.msra.mxu0 %v323
        %520 = vmatprep.subr.mxu0 0.0
        %521 = vmatpush1.msra.mxu0 %v349
        %522 = vmatprep.subr.mxu0 0.0
        %523 = vmatpush1.msra.mxu0 %v351
        %524 = vmatprep.subr.mxu0 0.0
        %525 = vmatpush1.msra.mxu0 %v353
        %526 = vmatprep.subr.mxu0 0.0
        %527 = vmatpush1.msra.mxu0 %v355
        %528 = vmatprep.subr.mxu0 0.0
        %529 = vmatpush1.msra.mxu0 %v357
        %530 = vmatprep.subr.mxu0 0.0
        %531 = vmatpush1.msra.mxu0 %v359
        %532 = vmatprep.subr.mxu0 0.0
        %533 = vmatpush1.msra.mxu0 0.0
        %534 = vmatprep.subr.mxu0 0.0
        %535 = vmatpush1.msra.mxu0 0.0
        %536 = vmatprep.subr.mxu0 0.0
        %537 = vmatpush1.msra.mxu0 0.0
        %538 = vmatprep.subr.mxu0 0.0
        %539 = vmatpush1.msra.mxu0 0.0
        %540 = vmatprep.subr.mxu0 0.0
        %541 = vmatpush1.msra.mxu0 0.0
        %542 = vmatprep.subr.mxu0 0.0
        %543 = vmatpush1.msra.mxu0 0.0
        %544 = vmatprep.subr.mxu0 0.0
        %545 = vmatpush1.msra.mxu0 0.0
        %546 = vmatprep.subr.mxu0 0.0
        %547 = vmatpush1.msra.mxu0 0.0
        %548 = vmatprep.subr.mxu0 0.0
        %549 = vmatpush1.msra.mxu0 0.0
        %550 = vmatprep.subr.mxu0 0.0
        %551 = vmatpush1.msra.mxu0 0.0
        %552 = vmatprep.subr.mxu0 0.0
        %553 = vmatpush1.msra.mxu0 0.0
        %554 = vmatprep.subr.mxu0 0.0
        %555 = vmatpush1.msra.mxu0 0.0
        %556 = vmatprep.subr.mxu0 0.0
        %557 = vmatpush1.msra.mxu0 0.0
        %558 = vmatprep.subr.mxu0 0.0
        %559 = vmatpush1.msra.mxu0 0.0
        %560 = vmatprep.mubr.f32.mxu0 %v400
        %561 = vmatmul.mubr.f32.gmra.mrb[0].mxu0 %v173
        %v562 = vpop.f32.mrb[0].mxu0
        %v563 = vadd.f32 %v478, %v562
        %v564 = vpop.f32.mrb[0].mxu0
        %565 = vmatprep.mubr.f32.mxu0 %v403
        %566 = vmatmul.mubr.f32.gmra.mrb[0].mxu0 %v177
        %v567 = vpop.f32.mrb[0].mxu0
        %v568 = vadd.f32 %v483, %v567
        %v569 = vpop.f32.mrb[0].mxu0
        %570 = vmatprep.mubr.f32.mxu0 %v406
        %571 = vmatmul.mubr.f32.gmra.mrb[0].mxu0 %v181
        %v572 = vpop.f32.mrb[0].mxu0
        %v573 = vadd.f32 %v488, %v572
        %v574 = vpop.f32.mrb[0].mxu0
        %575 = vmatprep.mubr.f32.mxu0 %v409
        %576 = vmatmul.mubr.f32.gmra.mrb[0].mxu0 %v185
        %v577 = vpop.f32.mrb[0].mxu0
        %v578 = vadd.f32 %v493, %v577
        %v579 = vpop.f32.mrb[0].mxu0
        %580 = vdwg.mxu0
        %v581 = vmax.f32 %v563, 0.0
        %v582 = vmax.f32 %v568, 0.0
        %v583 = vmax.f32 %v573, 0.0
        %v584 = vmax.f32 %v578, 0.0
        %s585 = sadd.s32 %s197, 5
        %s586 = smul.u32 %s585, 16
        %s587 = scalar_lea.vmem %s165, %s586
        %v588 = vld [vmem:[%s587] sm:$0xff]
        %v589 = vld [vmem:[%s587 + $0x8] sm:$0xff]
        %594 = vrot.lane.b32.xlu0 %v215, 124
        %v595 = vpop.permute.xlu0 %594
        %596 = vrot.lane.b32.xlu0 %v216, 124
        %v597 = vpop.permute.xlu0 %596
        %602 = vrot.lane.b32.xlu0 %v588, 1
        %v603 = vpop.permute.xlu0 %602
        %604 = vrot.lane.b32.xlu0 %v589, 1
        %v605 = vpop.permute.xlu0 %604
        %606 = vrot.lane.b32.xlu0 %v588, 127
        %v607 = vpop.permute.xlu0 %606
        %608 = vrot.lane.b32.xlu0 %v589, 127
        %v609 = vpop.permute.xlu0 %608
        %610 = vrot.lane.b32.xlu0 %v588, 126
        %v611 = vpop.permute.xlu0 %610
        %612 = vrot.lane.b32.xlu0 %v589, 126
        %v613 = vpop.permute.xlu0 %612
        %614 = vrot.lane.b32.xlu0 %v588, 125
        %v615 = vpop.permute.xlu0 %614
        %616 = vrot.lane.b32.xlu0 %v589, 125
        %v617 = vpop.permute.xlu0 %616
        %618 = vrot.lane.b32.xlu0 %v603, 127
        %v619 = vpop.permute.xlu0 %618
        %620 = vrot.lane.b32.xlu0 %v605, 127
        %v621 = vpop.permute.xlu0 %620
        %622 = vrot.lane.b32.xlu0 %v607, 127
        %v623 = vpop.permute.xlu0 %622
        %624 = vrot.lane.b32.xlu0 %v609, 127
        %v625 = vpop.permute.xlu0 %624
        %626 = vrot.lane.b32.xlu0 %v611, 127
        %v627 = vpop.permute.xlu0 %626
        %628 = vrot.lane.b32.xlu0 %v613, 127
        %v629 = vpop.permute.xlu0 %628
        %630 = vrot.lane.b32.xlu0 %v615, 127
        %v631 = vpop.permute.xlu0 %630
        %632 = vrot.lane.b32.xlu0 %v617, 127
        %v633 = vpop.permute.xlu0 %632
        %644 = vmatprep.subr.mxu0 0.0
        %645 = vmatpush1.msra.mxu0 %v205
        %646 = vmatprep.subr.mxu0 0.0
        %647 = vmatpush1.msra.mxu0 %v206
        %648 = vmatprep.subr.mxu0 0.0
        %649 = vmatpush1.msra.mxu0 %v251
        %650 = vmatprep.subr.mxu0 0.0
        %651 = vmatpush1.msra.mxu0 %v253
        %652 = vmatprep.subr.mxu0 0.0
        %653 = vmatpush1.msra.mxu0 %v257
        %654 = vmatprep.subr.mxu0 0.0
        %655 = vmatpush1.msra.mxu0 %v259
        %656 = vmatprep.subr.mxu0 0.0
        %657 = vmatpush1.msra.mxu0 %v263
        %658 = vmatprep.subr.mxu0 0.0
        %659 = vmatpush1.msra.mxu0 %v265
        %660 = vmatprep.subr.mxu0 0.0
        %661 = vmatpush1.msra.mxu0 %v269
        %662 = vmatprep.subr.mxu0 0.0
        %663 = vmatpush1.msra.mxu0 %v271
        %664 = vmatprep.subr.mxu0 0.0
        %665 = vmatpush1.msra.mxu0 %v210
        %666 = vmatprep.subr.mxu0 0.0
        %667 = vmatpush1.msra.mxu0 %v211
        %668 = vmatprep.subr.mxu0 0.0
        %669 = vmatpush1.msra.mxu0 %v277
        %670 = vmatprep.subr.mxu0 0.0
        %671 = vmatpush1.msra.mxu0 %v279
        %672 = vmatprep.subr.mxu0 0.0
        %673 = vmatpush1.msra.mxu0 %v283
        %674 = vmatprep.subr.mxu0 0.0
        %675 = vmatpush1.msra.mxu0 %v285
        %676 = vmatprep.subr.mxu0 0.0
        %677 = vmatpush1.msra.mxu0 %v289
        %678 = vmatprep.subr.mxu0 0.0
        %679 = vmatpush1.msra.mxu0 %v291
        %680 = vmatprep.subr.mxu0 0.0
        %681 = vmatpush1.msra.mxu0 %v295
        %682 = vmatprep.subr.mxu0 0.0
        %683 = vmatpush1.msra.mxu0 %v297
        %684 = vmatprep.subr.mxu0 0.0
        %685 = vmatpush1.msra.mxu0 %v215
        %686 = vmatprep.subr.mxu0 0.0
        %687 = vmatpush1.msra.mxu0 %v216
        %688 = vmatprep.subr.mxu0 0.0
        %689 = vmatpush1.msra.mxu0 %v303
        %690 = vmatprep.subr.mxu0 0.0
        %691 = vmatpush1.msra.mxu0 %v305
        %692 = vmatprep.subr.mxu0 0.0
        %693 = vmatpush1.msra.mxu0 %v307
        %694 = vmatprep.subr.mxu0 0.0
        %695 = vmatpush1.msra.mxu0 %v309
        %696 = vmatprep.subr.mxu0 0.0
        %697 = vmatpush1.msra.mxu0 %v311
        %698 = vmatprep.subr.mxu0 0.0
        %699 = vmatpush1.msra.mxu0 %v313
        %700 = vmatprep.subr.mxu0 0.0
        %701 = vmatpush1.msra.mxu0 %v595
        %702 = vmatprep.subr.mxu0 0.0
        %703 = vmatpush1.msra.mxu0 %v597
        %704 = vmatprep.subr.mxu0 0.0
        %705 = vmatpush1.msra.mxu0 %v220
        %706 = vmatprep.subr.mxu0 0.0
        %707 = vmatpush1.msra.mxu0 %v221
        %708 = vmatprep.mubr.f32.mxu0 %v172
        %709 = vmatmul.mubr.f32.gmra.mrb[0].mxu0 %v171
        %v710 = vpop.f32.mrb[0].mxu0
        %v711 = vadd.f32 %v381, %v710
        %v712 = vpop.f32.mrb[0].mxu0
        %713 = vmatprep.mubr.f32.mxu0 %v176
        %714 = vmatmul.mubr.f32.gmra.mrb[0].mxu0 %v175
        %v715 = vpop.f32.mrb[0].mxu0
        %v716 = vadd.f32 %v386, %v715
        %v717 = vpop.f32.mrb[0].mxu0
        %718 = vmatprep.mubr.f32.mxu0 %v180
        %719 = vmatmul.mubr.f32.gmra.mrb[0].mxu0 %v179
        %v720 = vpop.f32.mrb[0].mxu0
        %v721 = vadd.f32 %v391, %v720
        %v722 = vpop.f32.mrb[0].mxu0
        %723 = vmatprep.mubr.f32.mxu0 %v184
        %724 = vmatmul.mubr.f32.gmra.mrb[0].mxu0 %v183
        %v725 = vpop.f32.mrb[0].mxu0
        %v726 = vadd.f32 %v396, %v725
        %v727 = vpop.f32.mrb[0].mxu0
        %728 = vdwg.mxu0
        %729 = vmatprep.subr.mxu0 0.0
        %730 = vmatpush1.msra.mxu0 %v321
        %731 = vmatprep.subr.mxu0 0.0
        %732 = vmatpush1.msra.mxu0 %v323
        %733 = vmatprep.subr.mxu0 0.0
        %734 = vmatpush1.msra.mxu0 %v349
        %735 = vmatprep.subr.mxu0 0.0
        %736 = vmatpush1.msra.mxu0 %v351
        %737 = vmatprep.subr.mxu0 0.0
        %738 = vmatpush1.msra.mxu0 %v353
        %739 = vmatprep.subr.mxu0 0.0
        %740 = vmatpush1.msra.mxu0 %v355
        %741 = vmatprep.subr.mxu0 0.0
        %742 = vmatpush1.msra.mxu0 %v357
        %743 = vmatprep.subr.mxu0 0.0
        %744 = vmatpush1.msra.mxu0 %v359
        %745 = vmatprep.subr.mxu0 0.0
        %746 = vmatpush1.msra.mxu0 %v619
        %747 = vmatprep.subr.mxu0 0.0
        %748 = vmatpush1.msra.mxu0 %v621
        %749 = vmatprep.subr.mxu0 0.0
        %750 = vmatpush1.msra.mxu0 %v607
        %751 = vmatprep.subr.mxu0 0.0
        %752 = vmatpush1.msra.mxu0 %v609
        %753 = vmatprep.subr.mxu0 0.0
        %754 = vmatpush1.msra.mxu0 %v623
        %755 = vmatprep.subr.mxu0 0.0
        %756 = vmatpush1.msra.mxu0 %v625
        %757 = vmatprep.subr.mxu0 0.0
        %758 = vmatpush1.msra.mxu0 %v627
        %759 = vmatprep.subr.mxu0 0.0
        %760 = vmatpush1.msra.mxu0 %v629
        %761 = vmatprep.subr.mxu0 0.0
        %762 = vmatpush1.msra.mxu0 %v631
        %763 = vmatprep.subr.mxu0 0.0
        %764 = vmatpush1.msra.mxu0 %v633
        %765 = vmatprep.subr.mxu0 0.0
        %766 = vmatpush1.msra.mxu0 0.0
        %767 = vmatprep.subr.mxu0 0.0
        %768 = vmatpush1.msra.mxu0 0.0
        %769 = vmatprep.subr.mxu0 0.0
        %770 = vmatpush1.msra.mxu0 0.0
        %771 = vmatprep.subr.mxu0 0.0
        %772 = vmatpush1.msra.mxu0 0.0
        %773 = vmatprep.subr.mxu0 0.0
        %774 = vmatpush1.msra.mxu0 0.0
        %775 = vmatprep.subr.mxu0 0.0
        %776 = vmatpush1.msra.mxu0 0.0
        %777 = vmatprep.subr.mxu0 0.0
        %778 = vmatpush1.msra.mxu0 0.0
        %779 = vmatprep.subr.mxu0 0.0
        %780 = vmatpush1.msra.mxu0 0.0
        %781 = vmatprep.subr.mxu0 0.0
        %782 = vmatpush1.msra.mxu0 0.0
        %783 = vmatprep.subr.mxu0 0.0
        %784 = vmatpush1.msra.mxu0 0.0
        %785 = vmatprep.subr.mxu0 0.0
        %786 = vmatpush1.msra.mxu0 0.0
        %787 = vmatprep.subr.mxu0 0.0
        %788 = vmatpush1.msra.mxu0 0.0
        %789 = vmatprep.subr.mxu0 0.0
        %790 = vmatpush1.msra.mxu0 0.0
        %791 = vmatprep.subr.mxu0 0.0
        %792 = vmatpush1.msra.mxu0 0.0
        %793 = vmatprep.mubr.f32.mxu0 %v400
        %794 = vmatmul.mubr.f32.gmra.mrb[0].mxu0 %v173
        %v795 = vpop.f32.mrb[0].mxu0
        %v796 = vadd.f32 %v711, %v795
        %v797 = vpop.f32.mrb[0].mxu0
        %798 = vmatprep.mubr.f32.mxu0 %v403
        %799 = vmatmul.mubr.f32.gmra.mrb[0].mxu0 %v177
        %v800 = vpop.f32.mrb[0].mxu0
        %v801 = vadd.f32 %v716, %v800
        %v802 = vpop.f32.mrb[0].mxu0
        %803 = vmatprep.mubr.f32.mxu0 %v406
        %804 = vmatmul.mubr.f32.gmra.mrb[0].mxu0 %v181
        %v805 = vpop.f32.mrb[0].mxu0
        %v806 = vadd.f32 %v721, %v805
        %v807 = vpop.f32.mrb[0].mxu0
        %808 = vmatprep.mubr.f32.mxu0 %v409
        %809 = vmatmul.mubr.f32.gmra.mrb[0].mxu0 %v185
        %v810 = vpop.f32.mrb[0].mxu0
        %v811 = vadd.f32 %v726, %v810
        %v812 = vpop.f32.mrb[0].mxu0
        %813 = vdwg.mxu0
        %v814 = vmax.f32 %v796, 0.0
        %v815 = vmax.f32 %v801, 0.0
        %v816 = vmax.f32 %v806, 0.0
        %v817 = vmax.f32 %v811, 0.0
        %v818 = vmax.f32 %v581, %v814
        %v819 = vmax.f32 %v582, %v815
        %v820 = vmax.f32 %v583, %v816
        %v821 = vmax.f32 %v584, %v817
        %s822 = smul.u32 %s192, 32
        %s823 = scalar_lea.vmem %s170, %s822
        %vm824 = vcmask 875520
        %825 = vst.msk [vmem:[%s823] sm:$0xff] %vm824, %v818
        %826 = vst.msk [vmem:[%s823 + $0x8] sm:$0xff] %vm824, %v819
        %827 = vst.msk [vmem:[%s823 + $0x10] sm:$0xff] %vm824, %v820
        %828 = vst.msk [vmem:[%s823 + $0x18] sm:$0xff] %vm824, %v821
      $region37: #{forward.4} parent=31 // loop_footer
        %s196 = sadd.s32 1, %s192
      $region38: #{forward.4} parent=31 // loop_footer_branch
        %191 = sbr.rel target = $region34
      $region39: #{forward.4} parent=31 // loop_exit
        _
      %p829 = scmp.lt.s32.totalorder %s14, 1
      %s830 = scalar_select %p829, %s14, 1
      %s831 = smul.addr %s830, 212
      %s832 = smul.addr %s831, 8
      %s833 = scalar_lea.vmem %s3, %s832
      // Predicated region
      $region40: #{forward.4} parent=31 // pred_check
        %p834 = pneg %p100
      $region41: #{forward.4} parent=31 // pred_check_branch
        %836 = sbr.rel (%p834) target = $region43
      $region42: #{forward.4} parent=31 // pred_region
        _
      $region43: #{forward.4} parent=31 // pred_fallthru
        _
    $region32: #{forward.4} parent=5 // pred_fallthru
      _
    %p837 = scmp.le.s32.totalorder 2, %s9
    // Predicated region
    $region44: #{forward.4} parent=5 // pred_check
      %p838 = pneg %p837
    $region45: #{forward.4} parent=5 // pred_check_branch
      %840 = sbr.rel (%p838) target = $region47
    $region46: #{forward.4} parent=5 // pred_region
      %s841 = ssub.s32 %s9, 2
      // Predicated region
      $region48: #{forward.4} parent=46 // pred_check
        %p842 = pneg %p106
      $region49: #{forward.4} parent=46 // pred_check_branch
        %844 = sbr.rel (%p842) target = $region51
      $region50: #{forward.4} parent=46 // pred_region
        %p845 = scmp.lt.s32.totalorder %s15, 1
        %s846 = scalar_select %p845, %s15, 1
        %s847 = smul.addr %s846, 212
        %s848 = smul.addr %s847, 8
        %s849 = scalar_lea.vmem %s3, %s848
      $region51: #{forward.4} parent=46 // pred_fallthru
        _
    $region47: #{forward.4} parent=5 // pred_fallthru
      _
  $region6: #{forward.4} parent=0 // loop_footer
    %s13 = sadd.s32 1, %s9
  $region7: #{forward.4} parent=0 // loop_footer_branch
    %8 = sbr.rel target = $region3
  $region8: #{forward.4} parent=0 // loop_exit
    _

// kernel: forward.5
$region0: #{forward.5}
  #allocation0 [shape = 'u32[]', space=smem, size = 0x4, offset = 0x4, fixed_abs, tag = 'smem constant byte address 0x4 - core index']
  #allocation1 [shape = 'u32[144,128]{1,0:T(1,128)}', space=vmem, size = 0x12000, scoped, tag = 'internal scratch']
  #allocation2 [shape = 'f32[8,24]{1,0:T(8,128)}', space=vmem, size = 0x1000, scoped, tag = 'scratch operand']
  %s0 = inlined_call_operand.vmem [shape: bf16[8,90112], index: 0, kind: input, shape index: {}]
  %s1 = inlined_call_operand.vmem [shape: bf16[90112,24], index: 1, kind: input, shape index: {}]
  %s2 = inlined_call_operand.vmem [shape: f32[1,24], index: 2, kind: input, shape index: {}]
  %s3 = inlined_call_operand.vmem [shape: f32[24,12], index: 3, kind: input, shape index: {}]
  %s4 = inlined_call_operand.vmem [shape: f32[1,12], index: 4, kind: input, shape index: {}]
  %s5 = inlined_call_operand.vmem [shape: f32[12,2], index: 5, kind: input, shape index: {}]
  %s6 = inlined_call_operand.vmem [shape: f32[1,2], index: 6, kind: input, shape index: {}]
  %s7 = inlined_call_operand.vmem [shape: f32[8,2], index: 7, kind: output, shape index: {}]
  %s8 = sld [smem:[#allocation0]]
  $region69: #{forward.5} parent=0
    _
  %s10 = ssub.s32 1, %s8
  %s11 = scalar_select 0, %s10, %s8
  loop: start=0, step=1, limit=13
  $region2: #{forward.5} parent=0 // loop_pre_header
    _
  $region3: #{forward.5} parent=0 // loop_header
    %s13 = sphi 0, %s17
    %p14 = scmp.ge.s32.totalorder %s13, 13
    %s23 = sphi 0, %s25
    %s26 = sphi 0, %s23
    %s27 = sphi 0, %s26
    %s43 = sphi 0, %s27
    %s49 = sphi 0, %s51
    %s52 = sphi 0, %s49
    %s53 = sphi 0, %s52
    %s69 = sphi 0, %s53
    %s73 = sphi 0, %s73
    %s75 = sphi 0, %s73
    %s76 = sphi 0, %s75
    %s90 = sphi 0, %s76
    %s94 = sphi 0, %s94
    %s96 = sphi 0, %s94
    %s97 = sphi 0, %s96
    %s111 = sphi 0, %s97
    %s115 = sphi 0, %s115
    %s117 = sphi 0, %s115
    %s118 = sphi 0, %s117
    %s132 = sphi 0, %s118
    %s136 = sphi 0, %s136
    %s138 = sphi 0, %s136
    %s139 = sphi 0, %s138
    %s153 = sphi 0, %s139
    %s157 = sphi 0, %s157
    %s159 = sphi 0, %s157
    %s160 = sphi 0, %s159
    %s174 = sphi 0, %s160
    %s178 = sphi 0, %s178
    %s180 = sphi 0, %s178
    %s181 = sphi 0, %s180
    %s195 = sphi 0, %s181
  $region4: #{forward.5} parent=0 // loop_header_branch
    %16 = sbr.rel (%p14) target = $region8
  $region5: #{forward.5} parent=0 // loop_body
    %s18 = ssub.s32 %s13, 1
    %s19 = ssub.s32 %s13, 2
    %s20 = sadd.s32 %s13, 1
    %s21 = ssub.s32 %s13, %s20
    %p22 = scmp.eq.s32.totalorder %s21, 0
    %s24 = sadd.s32 %s23, 1
    %s25 = scalar_select %p22, %s23, %s24
    %p28 = pneg %p22
    %p29 = scmp.eq.s32.totalorder %s13, 10
    %p30 = por %p28, %p29
    %p31 = scmp.ne.s32.totalorder %s23, %s26
    %p32 = scmp.eq.s32.totalorder %s13, 0
    %p33 = por %p31, %p32
    %p34 = scmp.ne.s32.totalorder %s23, %s26
    %p35 = scmp.eq.s32.totalorder %s18, 10
    %p36 = por %p34, %p35
    %p37 = scmp.ne.s32.totalorder %s26, %s27
    %p38 = scmp.eq.s32.totalorder %s18, 0
    %p39 = por %p37, %p38
    %p40 = scmp.ne.s32.totalorder %s26, %s27
    %p41 = scmp.eq.s32.totalorder %s19, 10
    %p42 = por %p40, %p41
    %p44 = scmp.ne.s32.totalorder %s27, %s43
    %p45 = scmp.eq.s32.totalorder %s19, 0
    %p46 = por %p44, %p45
    %s47 = ssub.s32 %s13, %s20
    %p48 = scmp.eq.s32.totalorder %s47, 0
    %s50 = sadd.s32 %s49, 1
    %s51 = scalar_select %p48, %s49, %s50
    %p54 = pneg %p48
    %p55 = scmp.eq.s32.totalorder %s13, 10
    %p56 = por %p54, %p55
    %p57 = scmp.ne.s32.totalorder %s49, %s52
    %p58 = scmp.eq.s32.totalorder %s13, 0
    %p59 = por %p57, %p58
    %p60 = scmp.ne.s32.totalorder %s49, %s52
    %p61 = scmp.eq.s32.totalorder %s18, 10
    %p62 = por %p60, %p61
    %p63 = scmp.ne.s32.totalorder %s52, %s53
    %p64 = scmp.eq.s32.totalorder %s18, 0
    %p65 = por %p63, %p64
    %p66 = scmp.ne.s32.totalorder %s52, %s53
    %p67 = scmp.eq.s32.totalorder %s19, 10
    %p68 = por %p66, %p67
    %p70 = scmp.ne.s32.totalorder %s53, %s69
    %p71 = scmp.eq.s32.totalorder %s19, 0
    %p72 = por %p70, %p71
    %s74 = sadd.s32 %s73, 1
    %p77 = scmp.eq.s32.totalorder %s13, 10
    %p78 = scmp.ne.s32.totalorder %s73, %s75
    %p79 = scmp.eq.s32.totalorder %s13, 0
    %p80 = por %p78, %p79
    %p81 = scmp.ne.s32.totalorder %s73, %s75
    %p82 = scmp.eq.s32.totalorder %s18, 10
    %p83 = por %p81, %p82
    %p84 = scmp.ne.s32.totalorder %s75, %s76
    %p85 = scmp.eq.s32.totalorder %s18, 0
    %p86 = por %p84, %p85
    %p87 = scmp.ne.s32.totalorder %s75, %s76
    %p88 = scmp.eq.s32.totalorder %s19, 10
    %p89 = por %p87, %p88
    %p91 = scmp.ne.s32.totalorder %s76, %s90
    %p92 = scmp.eq.s32.totalorder %s19, 0
    %p93 = por %p91, %p92
    %s95 = sadd.s32 %s94, 1
    %p98 = scmp.eq.s32.totalorder %s13, 10
    %p99 = scmp.ne.s32.totalorder %s94, %s96
    %p100 = scmp.eq.s32.totalorder %s13, 0
    %p101 = por %p99, %p100
    %p102 = scmp.ne.s32.totalorder %s94, %s96
    %p103 = scmp.eq.s32.totalorder %s18, 10
    %p104 = por %p102, %p103
    %p105 = scmp.ne.s32.totalorder %s96, %s97
    %p106 = scmp.eq.s32.totalorder %s18, 0
    %p107 = por %p105, %p106
    %p108 = scmp.ne.s32.totalorder %s96, %s97
    %p109 = scmp.eq.s32.totalorder %s19, 10
    %p110 = por %p108, %p109
    %p112 = scmp.ne.s32.totalorder %s97, %s111
    %p113 = scmp.eq.s32.totalorder %s19, 0
    %p114 = por %p112, %p113
    %s116 = sadd.s32 %s115, 1
    %p119 = scmp.eq.s32.totalorder %s13, 10
    %p120 = scmp.ne.s32.totalorder %s115, %s117
    %p121 = scmp.eq.s32.totalorder %s13, 0
    %p122 = por %p120, %p121
    %p123 = scmp.ne.s32.totalorder %s115, %s117
    %p124 = scmp.eq.s32.totalorder %s18, 10
    %p125 = por %p123, %p124
    %p126 = scmp.ne.s32.totalorder %s117, %s118
    %p127 = scmp.eq.s32.totalorder %s18, 0
    %p128 = por %p126, %p127
    %p129 = scmp.ne.s32.totalorder %s117, %s118
    %p130 = scmp.eq.s32.totalorder %s19, 10
    %p131 = por %p129, %p130
    %p133 = scmp.ne.s32.totalorder %s118, %s132
    %p134 = scmp.eq.s32.totalorder %s19, 0
    %p135 = por %p133, %p134
    %s137 = sadd.s32 %s136, 1
    %p140 = scmp.eq.s32.totalorder %s13, 10
    %p141 = scmp.ne.s32.totalorder %s136, %s138
    %p142 = scmp.eq.s32.totalorder %s13, 0
    %p143 = por %p141, %p142
    %p144 = scmp.ne.s32.totalorder %s136, %s138
    %p145 = scmp.eq.s32.totalorder %s18, 10
    %p146 = por %p144, %p145
    %p147 = scmp.ne.s32.totalorder %s138, %s139
    %p148 = scmp.eq.s32.totalorder %s18, 0
    %p149 = por %p147, %p148
    %p150 = scmp.ne.s32.totalorder %s138, %s139
    %p151 = scmp.eq.s32.totalorder %s19, 10
    %p152 = por %p150, %p151
    %p154 = scmp.ne.s32.totalorder %s139, %s153
    %p155 = scmp.eq.s32.totalorder %s19, 0
    %p156 = por %p154, %p155
    %s158 = sadd.s32 %s157, 1
    %p161 = scmp.eq.s32.totalorder %s13, 10
    %p162 = scmp.ne.s32.totalorder %s157, %s159
    %p163 = scmp.eq.s32.totalorder %s13, 0
    %p164 = por %p162, %p163
    %p165 = scmp.ne.s32.totalorder %s157, %s159
    %p166 = scmp.eq.s32.totalorder %s18, 10
    %p167 = por %p165, %p166
    %p168 = scmp.ne.s32.totalorder %s159, %s160
    %p169 = scmp.eq.s32.totalorder %s18, 0
    %p170 = por %p168, %p169
    %p171 = scmp.ne.s32.totalorder %s159, %s160
    %p172 = scmp.eq.s32.totalorder %s19, 10
    %p173 = por %p171, %p172
    %p175 = scmp.ne.s32.totalorder %s160, %s174
    %p176 = scmp.eq.s32.totalorder %s19, 0
    %p177 = por %p175, %p176
    %s179 = sadd.s32 %s178, 1
    %p182 = scmp.eq.s32.totalorder %s13, 10
    %p183 = scmp.ne.s32.totalorder %s178, %s180
    %p184 = scmp.eq.s32.totalorder %s13, 0
    %p185 = por %p183, %p184
    %p186 = scmp.ne.s32.totalorder %s178, %s180
    %p187 = scmp.eq.s32.totalorder %s18, 10
    %p188 = por %p186, %p187
    %p189 = scmp.ne.s32.totalorder %s180, %s181
    %p190 = scmp.eq.s32.totalorder %s18, 0
    %p191 = por %p189, %p190
    %p192 = scmp.ne.s32.totalorder %s180, %s181
    %p193 = scmp.eq.s32.totalorder %s19, 10
    %p194 = por %p192, %p193
    %p196 = scmp.ne.s32.totalorder %s181, %s195
    %p197 = scmp.eq.s32.totalorder %s19, 0
    %p198 = por %p196, %p197
    %p199 = scmp.le.s32.totalorder 1, %s13
    %p200 = scmp.lt.s32.totalorder %s13, 12
    %p201 = pnand %p199, %p200
    %p202 = pneg %p201
    // Predicated region
    $region9: #{forward.5} parent=5 // pred_check
      _
    $region10: #{forward.5} parent=5 // pred_check_branch
      %204 = sbr.rel (%p201) target = $region12
    $region11: #{forward.5} parent=5 // pred_region
      %s205 = ssub.s32 %s13, 1
      // Predicated region
      $region13: #{forward.5} parent=11 // pred_check
        %p206 = pneg %p86
      $region14: #{forward.5} parent=11 // pred_check_branch
        %208 = sbr.rel (%p206) target = $region16
      $region15: #{forward.5} parent=11 // pred_region
        _
      $region16: #{forward.5} parent=11 // pred_fallthru
        _
      // Predicated region
      $region17: #{forward.5} parent=11 // pred_check
        %p209 = pneg %p107
      $region18: #{forward.5} parent=11 // pred_check_branch
        %211 = sbr.rel (%p209) target = $region20
      $region19: #{forward.5} parent=11 // pred_region
        _
      $region20: #{forward.5} parent=11 // pred_fallthru
        _
      // Predicated region
      $region21: #{forward.5} parent=11 // pred_check
        %p212 = pneg %p128
      $region22: #{forward.5} parent=11 // pred_check_branch
        %214 = sbr.rel (%p212) target = $region24
      $region23: #{forward.5} parent=11 // pred_region
        _
      $region24: #{forward.5} parent=11 // pred_fallthru
        _
      // Predicated region
      $region25: #{forward.5} parent=11 // pred_check
        %p215 = pneg %p149
      $region26: #{forward.5} parent=11 // pred_check_branch
        %217 = sbr.rel (%p215) target = $region28
      $region27: #{forward.5} parent=11 // pred_region
        _
      $region28: #{forward.5} parent=11 // pred_fallthru
        _
      // Predicated region
      $region29: #{forward.5} parent=11 // pred_check
        %p218 = pneg %p170
      $region30: #{forward.5} parent=11 // pred_check_branch
        %220 = sbr.rel (%p218) target = $region32
      $region31: #{forward.5} parent=11 // pred_region
        _
      $region32: #{forward.5} parent=11 // pred_fallthru
        _
    $region12: #{forward.5} parent=5 // pred_fallthru
      _
    %p221 = scmp.lt.s32.totalorder %s13, 11
    // Predicated region
    $region33: #{forward.5} parent=5 // pred_check
      %p222 = pneg %p221
    $region34: #{forward.5} parent=5 // pred_check_branch
      %224 = sbr.rel (%p222) target = $region36
    $region35: #{forward.5} parent=5 // pred_region
      // Predicated region
      $region37: #{forward.5} parent=35 // pred_check
        %p225 = pneg %p33
      $region38: #{forward.5} parent=35 // pred_check_branch
        %227 = sbr.rel (%p225) target = $region40
      $region39: #{forward.5} parent=35 // pred_region
        %s228 = smul.u32 64, %s13
        %p229 = scmp.lt.s32.totalorder %s228, 703
        %s230 = scalar_select %p229, %s228, 703
        %s231 = smul.addr %s230, 4
        %s232 = scalar_lea.vmem %s0, %s231
        %s233 = smul.u32 64, %s13
      $region40: #{forward.5} parent=35 // pred_fallthru
        _
      // Predicated region
      $region41: #{forward.5} parent=35 // pred_check
        %p234 = pneg %p59
      $region42: #{forward.5} parent=35 // pred_check_branch
        %236 = sbr.rel (%p234) target = $region44
      $region43: #{forward.5} parent=35 // pred_region
        %s237 = smul.u32 1024, %s13
        %p238 = scmp.lt.s32.totalorder %s237, 11263
        %s239 = scalar_select %p238, %s237, 11263
        %s240 = smul.addr %s239, 4
        %s241 = scalar_lea.vmem %s1, %s240
        %s242 = smul.u32 1024, %s13
      $region44: #{forward.5} parent=35 // pred_fallthru
        _
    $region36: #{forward.5} parent=5 // pred_fallthru
      _
    %p243 = scmp.le.s32.totalorder 1, %s13
    %p244 = scmp.lt.s32.totalorder %s13, 12
    %p245 = pnand %p243, %p244
    %p246 = pneg %p245
    // Predicated region
    $region45: #{forward.5} parent=5 // pred_check
      _
    $region46: #{forward.5} parent=5 // pred_check_branch
      %248 = sbr.rel (%p245) target = $region48
    $region47: #{forward.5} parent=5 // pred_region
      %s249 = ssub.s32 %s13, 1
      %s250 = smul.u32 64, %s18
      %p251 = scmp.lt.s32.totalorder %s250, 703
      %s252 = scalar_select %p251, %s250, 703
      %s253 = smul.addr %s252, 4
      %s254 = scalar_lea.vmem %s0, %s253
      %p255 = pneg %p39
      %p256 = pneg %p36
      %s257 = smul.u32 1024, %s18
      %p258 = scmp.lt.s32.totalorder %s257, 11263
      %s259 = scalar_select %p258, %s257, 11263
      %s260 = smul.addr %s259, 4
      %s261 = scalar_lea.vmem %s1, %s260
      %p262 = pneg %p65
      %p263 = pneg %p62
      %p264 = pneg %p86
      %p265 = pneg %p83
      %p266 = pneg %p107
      %p267 = pneg %p104
      %p268 = pneg %p128
      %p269 = pneg %p125
      %p270 = pneg %p149
      %p271 = pneg %p146
      %p272 = pneg %p170
      %p273 = pneg %p167
      %p274 = pneg %p191
      %p275 = pneg %p188
      %s276 = smul.u32 64, %s18
      %p277 = scmp.lt.s32.totalorder %s276, 703
      %s278 = scalar_select %p277, %s276, 703
      %s279 = smul.addr %s278, 4
      %s280 = scalar_lea.vmem %s0, %s279
      %s281 = smul.u32 64, %s18
      %s282 = smul.u32 1024, %s18
      %p283 = scmp.lt.s32.totalorder %s282, 11263
      %s284 = scalar_select %p283, %s282, 11263
      %s285 = smul.addr %s284, 4
      %s286 = scalar_lea.vmem %s1, %s285
      %s287 = smul.u32 1024, %s18
      %p289 = scmp.eq.s32.totalorder %s18, 0
      // Predicated region
      $region49: #{forward.5} parent=47 // pred_check
        %p290 = pneg %p289
      $region50: #{forward.5} parent=47 // pred_check_branch
        %292 = sbr.rel (%p290) target = $region52
      $region51: #{forward.5} parent=47 // pred_region
        %vm293 = vcmask 195584
        %294 = vst.msk [vmem:[#allocation2] sm:$0xff] %vm293, 0.0
      $region52: #{forward.5} parent=47 // pred_fallthru
        _
      %v295 = vld [vmem:[#allocation2] sm:$0xff]
      %v296 = vld [vmem:[%s280] sm:$0xff]
      %v297 = vld [vmem:[%s280 + $0x8] sm:$0xff]
      %v298 = vld [vmem:[%s280 + $0x10] sm:$0xff]
      %v299 = vld [vmem:[%s280 + $0x18] sm:$0xff]
      %v300 = vld [vmem:[%s280 + $0x20] sm:$0xff]
      %v301 = vld [vmem:[%s280 + $0x28] sm:$0xff]
      %v302 = vld [vmem:[%s280 + $0x30] sm:$0xff]
      %v303 = vld [vmem:[%s280 + $0x38] sm:$0xff]
      %v304 = vld [vmem:[%s280 + $0x40] sm:$0xff]
      %v305 = vld [vmem:[%s280 + $0x48] sm:$0xff]
      %v306 = vld [vmem:[%s280 + $0x50] sm:$0xff]
      %v307 = vld [vmem:[%s280 + $0x58] sm:$0xff]
      %v308 = vld [vmem:[%s280 + $0x60] sm:$0xff]
      %v309 = vld [vmem:[%s280 + $0x68] sm:$0xff]
      %v310 = vld [vmem:[%s280 + $0x70] sm:$0xff]
      %v311 = vld [vmem:[%s280 + $0x78] sm:$0xff]
      %v312 = vld [vmem:[%s280 + $0x80] sm:$0xff]
      %v313 = vld [vmem:[%s280 + $0x88] sm:$0xff]
      %v314 = vld [vmem:[%s280 + $0x90] sm:$0xff]
      %v315 = vld [vmem:[%s280 + $0x98] sm:$0xff]
      %v316 = vld [vmem:[%s280 + $0xa0] sm:$0xff]
      %v317 = vld [vmem:[%s280 + $0xa8] sm:$0xff]
      %v318 = vld [vmem:[%s280 + $0xb0] sm:$0xff]
      %v319 = vld [vmem:[%s280 + $0xb8] sm:$0xff]
      %v320 = vld [vmem:[%s280 + $0xc0] sm:$0xff]
      %v321 = vld [vmem:[%s280 + $0xc8] sm:$0xff]
      %v322 = vld [vmem:[%s280 + $0xd0] sm:$0xff]
      %v323 = vld [vmem:[%s280 + $0xd8] sm:$0xff]
      %v324 = vld [vmem:[%s280 + $0xe0] sm:$0xff]
      %v325 = vld [vmem:[%s280 + $0xe8] sm:$0xff]
      %v326 = vld [vmem:[%s280 + $0xf0] sm:$0xff]
      %v327 = vld [vmem:[%s280 + $0xf8] sm:$0xff]
      %v328 = vld [vmem:[%s286] sm:$0xf]
      %v329 = vld [vmem:[%s286 + $0x4] sm:$0xf]
      %v330 = vld [vmem:[%s286 + $0x8] sm:$0xf]
      %v331 = vld [vmem:[%s286 + $0xc] sm:$0xf]
      %v332 = vld [vmem:[%s286 + $0x10] sm:$0xf]
      %v333 = vld [vmem:[%s286 + $0x14] sm:$0xf]
      %v334 = vld [vmem:[%s286 + $0x18] sm:$0xf]
      %v335 = vld [vmem:[%s286 + $0x1c] sm:$0xf]
      %v336 = vld [vmem:[%s286 + $0x20] sm:$0xf]
      %v337 = vld [vmem:[%s286 + $0x24] sm:$0xf]
      %v338 = vld [vmem:[%s286 + $0x28] sm:$0xf]
      %v339 = vld [vmem:[%s286 + $0x2c] sm:$0xf]
      %v340 = vld [vmem:[%s286 + $0x30] sm:$0xf]
      %v341 = vld [vmem:[%s286 + $0x34] sm:$0xf]
      %v342 = vld [vmem:[%s286 + $0x38] sm:$0xf]
      %v343 = vld [vmem:[%s286 + $0x3c] sm:$0xf]
      %v344 = vld [vmem:[%s286 + $0x40] sm:$0xf]
      %v345 = vld [vmem:[%s286 + $0x44] sm:$0xf]
      %v346 = vld [vmem:[%s286 + $0x48] sm:$0xf]
      %v347 = vld [vmem:[%s286 + $0x4c] sm:$0xf]
      %v348 = vld [vmem:[%s286 + $0x50] sm:$0xf]
      %v349 = vld [vmem:[%s286 + $0x54] sm:$0xf]
      %v350 = vld [vmem:[%s286 + $0x58] sm:$0xf]
      %v351 = vld [vmem:[%s286 + $0x5c] sm:$0xf]
      %v352 = vld [vmem:[%s286 + $0x60] sm:$0xf]
      %v353 = vld [vmem:[%s286 + $0x64] sm:$0xf]
      %v354 = vld [vmem:[%s286 + $0x68] sm:$0xf]
      %v355 = vld [vmem:[%s286 + $0x6c] sm:$0xf]
      %v356 = vld [vmem:[%s286 + $0x70] sm:$0xf]
      %v357 = vld [vmem:[%s286 + $0x74] sm:$0xf]
      %v358 = vld [vmem:[%s286 + $0x78] sm:$0xf]
      %v359 = vld [vmem:[%s286 + $0x7c] sm:$0xf]
      %v360 = vld [vmem:[%s286 + $0x80] sm:$0xf]
      %v361 = vld [vmem:[%s286 + $0x84] sm:$0xf]
      %v362 = vld [vmem:[%s286 + $0x88] sm:$0xf]
      %v363 = vld [vmem:[%s286 + $0x8c] sm:$0xf]
      %v364 = vld [vmem:[%s286 + $0x90] sm:$0xf]
      %v365 = vld [vmem:[%s286 + $0x94] sm:$0xf]
      %v366 = vld [vmem:[%s286 + $0x98] sm:$0xf]
      %v367 = vld [vmem:[%s286 + $0x9c] sm:$0xf]
      %v368 = vld [vmem:[%s286 + $0xa0] sm:$0xf]
      %v369 = vld [vmem:[%s286 + $0xa4] sm:$0xf]
      %v370 = vld [vmem:[%s286 + $0xa8] sm:$0xf]
      %v371 = vld [vmem:[%s286 + $0xac] sm:$0xf]
      %v372 = vld [vmem:[%s286 + $0xb0] sm:$0xf]
      %v373 = vld [vmem:[%s286 + $0xb4] sm:$0xf]
      %v374 = vld [vmem:[%s286 + $0xb8] sm:$0xf]
      %v375 = vld [vmem:[%s286 + $0xbc] sm:$0xf]
      %v376 = vld [vmem:[%s286 + $0xc0] sm:$0xf]
      %v377 = vld [vmem:[%s286 + $0xc4] sm:$0xf]
      %v378 = vld [vmem:[%s286 + $0xc8] sm:$0xf]
      %v379 = vld [vmem:[%s286 + $0xcc] sm:$0xf]
      %v380 = vld [vmem:[%s286 + $0xd0] sm:$0xf]
      %v381 = vld [vmem:[%s286 + $0xd4] sm:$0xf]
      %v382 = vld [vmem:[%s286 + $0xd8] sm:$0xf]
      %v383 = vld [vmem:[%s286 + $0xdc] sm:$0xf]
      %v384 = vld [vmem:[%s286 + $0xe0] sm:$0xf]
      %v385 = vld [vmem:[%s286 + $0xe4] sm:$0xf]
      %v386 = vld [vmem:[%s286 + $0xe8] sm:$0xf]
      %v387 = vld [vmem:[%s286 + $0xec] sm:$0xf]
      %v388 = vld [vmem:[%s286 + $0xf0] sm:$0xf]
      %v389 = vld [vmem:[%s286 + $0xf4] sm:$0xf]
      %v390 = vld [vmem:[%s286 + $0xf8] sm:$0xf]
      %v391 = vld [vmem:[%s286 + $0xfc] sm:$0xf]
      %v392 = vld [vmem:[%s286 + $0x100] sm:$0xf]
      %v393 = vld [vmem:[%s286 + $0x104] sm:$0xf]
      %v394 = vld [vmem:[%s286 + $0x108] sm:$0xf]
      %v395 = vld [vmem:[%s286 + $0x10c] sm:$0xf]
      %v396 = vld [vmem:[%s286 + $0x110] sm:$0xf]
      %v397 = vld [vmem:[%s286 + $0x114] sm:$0xf]
      %v398 = vld [vmem:[%s286 + $0x118] sm:$0xf]
      %v399 = vld [vmem:[%s286 + $0x11c] sm:$0xf]
      %v400 = vld [vmem:[%s286 + $0x120] sm:$0xf]
      %v401 = vld [vmem:[%s286 + $0x124] sm:$0xf]
      %v402 = vld [vmem:[%s286 + $0x128] sm:$0xf]
      %v403 = vld [vmem:[%s286 + $0x12c] sm:$0xf]
      %v404 = vld [vmem:[%s286 + $0x130] sm:$0xf]
      %v405 = vld [vmem:[%s286 + $0x134] sm:$0xf]
      %v406 = vld [vmem:[%s286 + $0x138] sm:$0xf]
      %v407 = vld [vmem:[%s286 + $0x13c] sm:$0xf]
      %v408 = vld [vmem:[%s286 + $0x140] sm:$0xf]
      %v409 = vld [vmem:[%s286 + $0x144] sm:$0xf]
      %v410 = vld [vmem:[%s286 + $0x148] sm:$0xf]
      %v411 = vld [vmem:[%s286 + $0x14c] sm:$0xf]
      %v412 = vld [vmem:[%s286 + $0x150] sm:$0xf]
      %v413 = vld [vmem:[%s286 + $0x154] sm:$0xf]
      %v414 = vld [vmem:[%s286 + $0x158] sm:$0xf]
      %v415 = vld [vmem:[%s286 + $0x15c] sm:$0xf]
      %v416 = vld [vmem:[%s286 + $0x160] sm:$0xf]
      %v417 = vld [vmem:[%s286 + $0x164] sm:$0xf]
      %v418 = vld [vmem:[%s286 + $0x168] sm:$0xf]
      %v419 = vld [vmem:[%s286 + $0x16c] sm:$0xf]
      %v420 = vld [vmem:[%s286 + $0x170] sm:$0xf]
      %v421 = vld [vmem:[%s286 + $0x174] sm:$0xf]
      %v422 = vld [vmem:[%s286 + $0x178] sm:$0xf]
      %v423 = vld [vmem:[%s286 + $0x17c] sm:$0xf]
      %v424 = vld [vmem:[%s286 + $0x180] sm:$0xf]
      %v425 = vld [vmem:[%s286 + $0x184] sm:$0xf]
      %v426 = vld [vmem:[%s286 + $0x188] sm:$0xf]
      %v427 = vld [vmem:[%s286 + $0x18c] sm:$0xf]
      %v428 = vld [vmem:[%s286 + $0x190] sm:$0xf]
      %v429 = vld [vmem:[%s286 + $0x194] sm:$0xf]
      %v430 = vld [vmem:[%s286 + $0x198] sm:$0xf]
      %v431 = vld [vmem:[%s286 + $0x19c] sm:$0xf]
      %v432 = vld [vmem:[%s286 + $0x1a0] sm:$0xf]
      %v433 = vld [vmem:[%s286 + $0x1a4] sm:$0xf]
      %v434 = vld [vmem:[%s286 + $0x1a8] sm:$0xf]
      %v435 = vld [vmem:[%s286 + $0x1ac] sm:$0xf]
      %v436 = vld [vmem:[%s286 + $0x1b0] sm:$0xf]
      %v437 = vld [vmem:[%s286 + $0x1b4] sm:$0xf]
      %v438 = vld [vmem:[%s286 + $0x1b8] sm:$0xf]
      %v439 = vld [vmem:[%s286 + $0x1bc] sm:$0xf]
      %v440 = vld [vmem:[%s286 + $0x1c0] sm:$0xf]
      %v441 = vld [vmem:[%s286 + $0x1c4] sm:$0xf]
      %v442 = vld [vmem:[%s286 + $0x1c8] sm:$0xf]
      %v443 = vld [vmem:[%s286 + $0x1cc] sm:$0xf]
      %v444 = vld [vmem:[%s286 + $0x1d0] sm:$0xf]
      %v445 = vld [vmem:[%s286 + $0x1d4] sm:$0xf]
      %v446 = vld [vmem:[%s286 + $0x1d8] sm:$0xf]
      %v447 = vld [vmem:[%s286 + $0x1dc] sm:$0xf]
      %v448 = vld [vmem:[%s286 + $0x1e0] sm:$0xf]
      %v449 = vld [vmem:[%s286 + $0x1e4] sm:$0xf]
      %v450 = vld [vmem:[%s286 + $0x1e8] sm:$0xf]
      %v451 = vld [vmem:[%s286 + $0x1ec] sm:$0xf]
      %v452 = vld [vmem:[%s286 + $0x1f0] sm:$0xf]
      %v453 = vld [vmem:[%s286 + $0x1f4] sm:$0xf]
      %v454 = vld [vmem:[%s286 + $0x1f8] sm:$0xf]
      %v455 = vld [vmem:[%s286 + $0x1fc] sm:$0xf]
      %v456 = vld [vmem:[%s286 + $0x200] sm:$0xf]
      %v457 = vld [vmem:[%s286 + $0x204] sm:$0xf]
      %v458 = vld [vmem:[%s286 + $0x208] sm:$0xf]
      %v459 = vld [vmem:[%s286 + $0x20c] sm:$0xf]
      %v460 = vld [vmem:[%s286 + $0x210] sm:$0xf]
      %v461 = vld [vmem:[%s286 + $0x214] sm:$0xf]
      %v462 = vld [vmem:[%s286 + $0x218] sm:$0xf]
      %v463 = vld [vmem:[%s286 + $0x21c] sm:$0xf]
      %v464 = vld [vmem:[%s286 + $0x220] sm:$0xf]
      %v465 = vld [vmem:[%s286 + $0x224] sm:$0xf]
      %v466 = vld [vmem:[%s286 + $0x228] sm:$0xf]
      %v467 = vld [vmem:[%s286 + $0x22c] sm:$0xf]
      %v468 = vld [vmem:[%s286 + $0x230] sm:$0xf]
      %v469 = vld [vmem:[%s286 + $0x234] sm:$0xf]
      %v470 = vld [vmem:[%s286 + $0x238] sm:$0xf]
      %v471 = vld [vmem:[%s286 + $0x23c] sm:$0xf]
      %v472 = vld [vmem:[%s286 + $0x240] sm:$0xf]
      %v473 = vld [vmem:[%s286 + $0x244] sm:$0xf]
      %v474 = vld [vmem:[%s286 + $0x248] sm:$0xf]
      %v475 = vld [vmem:[%s286 + $0x24c] sm:$0xf]
      %v476 = vld [vmem:[%s286 + $0x250] sm:$0xf]
      %v477 = vld [vmem:[%s286 + $0x254] sm:$0xf]
      %v478 = vld [vmem:[%s286 + $0x258] sm:$0xf]
      %v479 = vld [vmem:[%s286 + $0x25c] sm:$0xf]
      %v480 = vld [vmem:[%s286 + $0x260] sm:$0xf]
      %v481 = vld [vmem:[%s286 + $0x264] sm:$0xf]
      %v482 = vld [vmem:[%s286 + $0x268] sm:$0xf]
      %v483 = vld [vmem:[%s286 + $0x26c] sm:$0xf]
      %v484 = vld [vmem:[%s286 + $0x270] sm:$0xf]
      %v485 = vld [vmem:[%s286 + $0x274] sm:$0xf]
      %v486 = vld [vmem:[%s286 + $0x278] sm:$0xf]
      %v487 = vld [vmem:[%s286 + $0x27c] sm:$0xf]
      %v488 = vld [vmem:[%s286 + $0x280] sm:$0xf]
      %v489 = vld [vmem:[%s286 + $0x284] sm:$0xf]
      %v490 = vld [vmem:[%s286 + $0x288] sm:$0xf]
      %v491 = vld [vmem:[%s286 + $0x28c] sm:$0xf]
      %v492 = vld [vmem:[%s286 + $0x290] sm:$0xf]
      %v493 = vld [vmem:[%s286 + $0x294] sm:$0xf]
      %v494 = vld [vmem:[%s286 + $0x298] sm:$0xf]
      %v495 = vld [vmem:[%s286 + $0x29c] sm:$0xf]
      %v496 = vld [vmem:[%s286 + $0x2a0] sm:$0xf]
      %v497 = vld [vmem:[%s286 + $0x2a4] sm:$0xf]
      %v498 = vld [vmem:[%s286 + $0x2a8] sm:$0xf]
      %v499 = vld [vmem:[%s286 + $0x2ac] sm:$0xf]
      %v500 = vld [vmem:[%s286 + $0x2b0] sm:$0xf]
      %v501 = vld [vmem:[%s286 + $0x2b4] sm:$0xf]
      %v502 = vld [vmem:[%s286 + $0x2b8] sm:$0xf]
      %v503 = vld [vmem:[%s286 + $0x2bc] sm:$0xf]
      %v504 = vld [vmem:[%s286 + $0x2c0] sm:$0xf]
      %v505 = vld [vmem:[%s286 + $0x2c4] sm:$0xf]
      %v506 = vld [vmem:[%s286 + $0x2c8] sm:$0xf]
      %v507 = vld [vmem:[%s286 + $0x2cc] sm:$0xf]
      %v508 = vld [vmem:[%s286 + $0x2d0] sm:$0xf]
      %v509 = vld [vmem:[%s286 + $0x2d4] sm:$0xf]
      %v510 = vld [vmem:[%s286 + $0x2d8] sm:$0xf]
      %v511 = vld [vmem:[%s286 + $0x2dc] sm:$0xf]
      %v512 = vld [vmem:[%s286 + $0x2e0] sm:$0xf]
      %v513 = vld [vmem:[%s286 + $0x2e4] sm:$0xf]
      %v514 = vld [vmem:[%s286 + $0x2e8] sm:$0xf]
      %v515 = vld [vmem:[%s286 + $0x2ec] sm:$0xf]
      %v516 = vld [vmem:[%s286 + $0x2f0] sm:$0xf]
      %v517 = vld [vmem:[%s286 + $0x2f4] sm:$0xf]
      %v518 = vld [vmem:[%s286 + $0x2f8] sm:$0xf]
      %v519 = vld [vmem:[%s286 + $0x2fc] sm:$0xf]
      %v520 = vld [vmem:[%s286 + $0x300] sm:$0xf]
      %v521 = vld [vmem:[%s286 + $0x304] sm:$0xf]
      %v522 = vld [vmem:[%s286 + $0x308] sm:$0xf]
      %v523 = vld [vmem:[%s286 + $0x30c] sm:$0xf]
      %v524 = vld [vmem:[%s286 + $0x310] sm:$0xf]
      %v525 = vld [vmem:[%s286 + $0x314] sm:$0xf]
      %v526 = vld [vmem:[%s286 + $0x318] sm:$0xf]
      %v527 = vld [vmem:[%s286 + $0x31c] sm:$0xf]
      %v528 = vld [vmem:[%s286 + $0x320] sm:$0xf]
      %v529 = vld [vmem:[%s286 + $0x324] sm:$0xf]
      %v530 = vld [vmem:[%s286 + $0x328] sm:$0xf]
      %v531 = vld [vmem:[%s286 + $0x32c] sm:$0xf]
      %v532 = vld [vmem:[%s286 + $0x330] sm:$0xf]
      %v533 = vld [vmem:[%s286 + $0x334] sm:$0xf]
      %v534 = vld [vmem:[%s286 + $0x338] sm:$0xf]
      %v535 = vld [vmem:[%s286 + $0x33c] sm:$0xf]
      %v536 = vld [vmem:[%s286 + $0x340] sm:$0xf]
      %v537 = vld [vmem:[%s286 + $0x344] sm:$0xf]
      %v538 = vld [vmem:[%s286 + $0x348] sm:$0xf]
      %v539 = vld [vmem:[%s286 + $0x34c] sm:$0xf]
      %v540 = vld [vmem:[%s286 + $0x350] sm:$0xf]
      %v541 = vld [vmem:[%s286 + $0x354] sm:$0xf]
      %v542 = vld [vmem:[%s286 + $0x358] sm:$0xf]
      %v543 = vld [vmem:[%s286 + $0x35c] sm:$0xf]
      %v544 = vld [vmem:[%s286 + $0x360] sm:$0xf]
      %v545 = vld [vmem:[%s286 + $0x364] sm:$0xf]
      %v546 = vld [vmem:[%s286 + $0x368] sm:$0xf]
      %v547 = vld [vmem:[%s286 + $0x36c] sm:$0xf]
      %v548 = vld [vmem:[%s286 + $0x370] sm:$0xf]
      %v549 = vld [vmem:[%s286 + $0x374] sm:$0xf]
      %v550 = vld [vmem:[%s286 + $0x378] sm:$0xf]
      %v551 = vld [vmem:[%s286 + $0x37c] sm:$0xf]
      %v552 = vld [vmem:[%s286 + $0x380] sm:$0xf]
      %v553 = vld [vmem:[%s286 + $0x384] sm:$0xf]
      %v554 = vld [vmem:[%s286 + $0x388] sm:$0xf]
      %v555 = vld [vmem:[%s286 + $0x38c] sm:$0xf]
      %v556 = vld [vmem:[%s286 + $0x390] sm:$0xf]
      %v557 = vld [vmem:[%s286 + $0x394] sm:$0xf]
      %v558 = vld [vmem:[%s286 + $0x398] sm:$0xf]
      %v559 = vld [vmem:[%s286 + $0x39c] sm:$0xf]
      %v560 = vld [vmem:[%s286 + $0x3a0] sm:$0xf]
      %v561 = vld [vmem:[%s286 + $0x3a4] sm:$0xf]
      %v562 = vld [vmem:[%s286 + $0x3a8] sm:$0xf]
      %v563 = vld [vmem:[%s286 + $0x3ac] sm:$0xf]
      %v564 = vld [vmem:[%s286 + $0x3b0] sm:$0xf]
      %v565 = vld [vmem:[%s286 + $0x3b4] sm:$0xf]
      %v566 = vld [vmem:[%s286 + $0x3b8] sm:$0xf]
      %v567 = vld [vmem:[%s286 + $0x3bc] sm:$0xf]
      %v568 = vld [vmem:[%s286 + $0x3c0] sm:$0xf]
      %v569 = vld [vmem:[%s286 + $0x3c4] sm:$0xf]
      %v570 = vld [vmem:[%s286 + $0x3c8] sm:$0xf]
      %v571 = vld [vmem:[%s286 + $0x3cc] sm:$0xf]
      %v572 = vld [vmem:[%s286 + $0x3d0] sm:$0xf]
      %v573 = vld [vmem:[%s286 + $0x3d4] sm:$0xf]
      %v574 = vld [vmem:[%s286 + $0x3d8] sm:$0xf]
      %v575 = vld [vmem:[%s286 + $0x3dc] sm:$0xf]
      %v576 = vld [vmem:[%s286 + $0x3e0] sm:$0xf]
      %v577 = vld [vmem:[%s286 + $0x3e4] sm:$0xf]
      %v578 = vld [vmem:[%s286 + $0x3e8] sm:$0xf]
      %v579 = vld [vmem:[%s286 + $0x3ec] sm:$0xf]
      %v580 = vld [vmem:[%s286 + $0x3f0] sm:$0xf]
      %v581 = vld [vmem:[%s286 + $0x3f4] sm:$0xf]
      %v582 = vld [vmem:[%s286 + $0x3f8] sm:$0xf]
      %v583 = vld [vmem:[%s286 + $0x3fc] sm:$0xf]
      %v584 = vld [vmem:[%s286 + $0x400] sm:$0xf]
      %v585 = vld [vmem:[%s286 + $0x404] sm:$0xf]
      %v586 = vld [vmem:[%s286 + $0x408] sm:$0xf]
      %v587 = vld [vmem:[%s286 + $0x40c] sm:$0xf]
      %v588 = vld [vmem:[%s286 + $0x410] sm:$0xf]
      %v589 = vld [vmem:[%s286 + $0x414] sm:$0xf]
      %v590 = vld [vmem:[%s286 + $0x418] sm:$0xf]
      %v591 = vld [vmem:[%s286 + $0x41c] sm:$0xf]
      %v592 = vld [vmem:[%s286 + $0x420] sm:$0xf]
      %v593 = vld [vmem:[%s286 + $0x424] sm:$0xf]
      %v594 = vld [vmem:[%s286 + $0x428] sm:$0xf]
      %v595 = vld [vmem:[%s286 + $0x42c] sm:$0xf]
      %v596 = vld [vmem:[%s286 + $0x430] sm:$0xf]
      %v597 = vld [vmem:[%s286 + $0x434] sm:$0xf]
      %v598 = vld [vmem:[%s286 + $0x438] sm:$0xf]
      %v599 = vld [vmem:[%s286 + $0x43c] sm:$0xf]
      %v600 = vld [vmem:[%s286 + $0x440] sm:$0xf]
      %v601 = vld [vmem:[%s286 + $0x444] sm:$0xf]
      %v602 = vld [vmem:[%s286 + $0x448] sm:$0xf]
      %v603 = vld [vmem:[%s286 + $0x44c] sm:$0xf]
      %v604 = vld [vmem:[%s286 + $0x450] sm:$0xf]
      %v605 = vld [vmem:[%s286 + $0x454] sm:$0xf]
      %v606 = vld [vmem:[%s286 + $0x458] sm:$0xf]
      %v607 = vld [vmem:[%s286 + $0x45c] sm:$0xf]
      %v608 = vld [vmem:[%s286 + $0x460] sm:$0xf]
      %v609 = vld [vmem:[%s286 + $0x464] sm:$0xf]
      %v610 = vld [vmem:[%s286 + $0x468] sm:$0xf]
      %v611 = vld [vmem:[%s286 + $0x46c] sm:$0xf]
      %v612 = vld [vmem:[%s286 + $0x470] sm:$0xf]
      %v613 = vld [vmem:[%s286 + $0x474] sm:$0xf]
      %v614 = vld [vmem:[%s286 + $0x478] sm:$0xf]
      %v615 = vld [vmem:[%s286 + $0x47c] sm:$0xf]
      %v616 = vld [vmem:[%s286 + $0x480] sm:$0xf]
      %v617 = vld [vmem:[%s286 + $0x484] sm:$0xf]
      %v618 = vld [vmem:[%s286 + $0x488] sm:$0xf]
      %v619 = vld [vmem:[%s286 + $0x48c] sm:$0xf]
      %v620 = vld [vmem:[%s286 + $0x490] sm:$0xf]
      %v621 = vld [vmem:[%s286 + $0x494] sm:$0xf]
      %v622 = vld [vmem:[%s286 + $0x498] sm:$0xf]
      %v623 = vld [vmem:[%s286 + $0x49c] sm:$0xf]
      %v624 = vld [vmem:[%s286 + $0x4a0] sm:$0xf]
      %v625 = vld [vmem:[%s286 + $0x4a4] sm:$0xf]
      %v626 = vld [vmem:[%s286 + $0x4a8] sm:$0xf]
      %v627 = vld [vmem:[%s286 + $0x4ac] sm:$0xf]
      %v628 = vld [vmem:[%s286 + $0x4b0] sm:$0xf]
      %v629 = vld [vmem:[%s286 + $0x4b4] sm:$0xf]
      %v630 = vld [vmem:[%s286 + $0x4b8] sm:$0xf]
      %v631 = vld [vmem:[%s286 + $0x4bc] sm:$0xf]
      %v632 = vld [vmem:[%s286 + $0x4c0] sm:$0xf]
      %v633 = vld [vmem:[%s286 + $0x4c4] sm:$0xf]
      %v634 = vld [vmem:[%s286 + $0x4c8] sm:$0xf]
      %v635 = vld [vmem:[%s286 + $0x4cc] sm:$0xf]
      %v636 = vld [vmem:[%s286 + $0x4d0] sm:$0xf]
      %v637 = vld [vmem:[%s286 + $0x4d4] sm:$0xf]
      %v638 = vld [vmem:[%s286 + $0x4d8] sm:$0xf]
      %v639 = vld [vmem:[%s286 + $0x4dc] sm:$0xf]
      %v640 = vld [vmem:[%s286 + $0x4e0] sm:$0xf]
      %v641 = vld [vmem:[%s286 + $0x4e4] sm:$0xf]
      %v642 = vld [vmem:[%s286 + $0x4e8] sm:$0xf]
      %v643 = vld [vmem:[%s286 + $0x4ec] sm:$0xf]
      %v644 = vld [vmem:[%s286 + $0x4f0] sm:$0xf]
      %v645 = vld [vmem:[%s286 + $0x4f4] sm:$0xf]
      %v646 = vld [vmem:[%s286 + $0x4f8] sm:$0xf]
      %v647 = vld [vmem:[%s286 + $0x4fc] sm:$0xf]
      %v648 = vld [vmem:[%s286 + $0x500] sm:$0xf]
      %v649 = vld [vmem:[%s286 + $0x504] sm:$0xf]
      %v650 = vld [vmem:[%s286 + $0x508] sm:$0xf]
      %v651 = vld [vmem:[%s286 + $0x50c] sm:$0xf]
      %v652 = vld [vmem:[%s286 + $0x510] sm:$0xf]
      %v653 = vld [vmem:[%s286 + $0x514] sm:$0xf]
      %v654 = vld [vmem:[%s286 + $0x518] sm:$0xf]
      %v655 = vld [vmem:[%s286 + $0x51c] sm:$0xf]
      %v656 = vld [vmem:[%s286 + $0x520] sm:$0xf]
      %v657 = vld [vmem:[%s286 + $0x524] sm:$0xf]
      %v658 = vld [vmem:[%s286 + $0x528] sm:$0xf]
      %v659 = vld [vmem:[%s286 + $0x52c] sm:$0xf]
      %v660 = vld [vmem:[%s286 + $0x530] sm:$0xf]
      %v661 = vld [vmem:[%s286 + $0x534] sm:$0xf]
      %v662 = vld [vmem:[%s286 + $0x538] sm:$0xf]
      %v663 = vld [vmem:[%s286 + $0x53c] sm:$0xf]
      %v664 = vld [vmem:[%s286 + $0x540] sm:$0xf]
      %v665 = vld [vmem:[%s286 + $0x544] sm:$0xf]
      %v666 = vld [vmem:[%s286 + $0x548] sm:$0xf]
      %v667 = vld [vmem:[%s286 + $0x54c] sm:$0xf]
      %v668 = vld [vmem:[%s286 + $0x550] sm:$0xf]
      %v669 = vld [vmem:[%s286 + $0x554] sm:$0xf]
      %v670 = vld [vmem:[%s286 + $0x558] sm:$0xf]
      %v671 = vld [vmem:[%s286 + $0x55c] sm:$0xf]
      %v672 = vld [vmem:[%s286 + $0x560] sm:$0xf]
      %v673 = vld [vmem:[%s286 + $0x564] sm:$0xf]
      %v674 = vld [vmem:[%s286 + $0x568] sm:$0xf]
      %v675 = vld [vmem:[%s286 + $0x56c] sm:$0xf]
      %v676 = vld [vmem:[%s286 + $0x570] sm:$0xf]
      %v677 = vld [vmem:[%s286 + $0x574] sm:$0xf]
      %v678 = vld [vmem:[%s286 + $0x578] sm:$0xf]
      %v679 = vld [vmem:[%s286 + $0x57c] sm:$0xf]
      %v680 = vld [vmem:[%s286 + $0x580] sm:$0xf]
      %v681 = vld [vmem:[%s286 + $0x584] sm:$0xf]
      %v682 = vld [vmem:[%s286 + $0x588] sm:$0xf]
      %v683 = vld [vmem:[%s286 + $0x58c] sm:$0xf]
      %v684 = vld [vmem:[%s286 + $0x590] sm:$0xf]
      %v685 = vld [vmem:[%s286 + $0x594] sm:$0xf]
      %v686 = vld [vmem:[%s286 + $0x598] sm:$0xf]
      %v687 = vld [vmem:[%s286 + $0x59c] sm:$0xf]
      %v688 = vld [vmem:[%s286 + $0x5a0] sm:$0xf]
      %v689 = vld [vmem:[%s286 + $0x5a4] sm:$0xf]
      %v690 = vld [vmem:[%s286 + $0x5a8] sm:$0xf]
      %v691 = vld [vmem:[%s286 + $0x5ac] sm:$0xf]
      %v692 = vld [vmem:[%s286 + $0x5b0] sm:$0xf]
      %v693 = vld [vmem:[%s286 + $0x5b4] sm:$0xf]
      %v694 = vld [vmem:[%s286 + $0x5b8] sm:$0xf]
      %v695 = vld [vmem:[%s286 + $0x5bc] sm:$0xf]
      %v696 = vld [vmem:[%s286 + $0x5c0] sm:$0xf]
      %v697 = vld [vmem:[%s286 + $0x5c4] sm:$0xf]
      %v698 = vld [vmem:[%s286 + $0x5c8] sm:$0xf]
      %v699 = vld [vmem:[%s286 + $0x5cc] sm:$0xf]
      %v700 = vld [vmem:[%s286 + $0x5d0] sm:$0xf]
      %v701 = vld [vmem:[%s286 + $0x5d4] sm:$0xf]
      %v702 = vld [vmem:[%s286 + $0x5d8] sm:$0xf]
      %v703 = vld [vmem:[%s286 + $0x5dc] sm:$0xf]
      %v704 = vld [vmem:[%s286 + $0x5e0] sm:$0xf]
      %v705 = vld [vmem:[%s286 + $0x5e4] sm:$0xf]
      %v706 = vld [vmem:[%s286 + $0x5e8] sm:$0xf]
      %v707 = vld [vmem:[%s286 + $0x5ec] sm:$0xf]
      %v708 = vld [vmem:[%s286 + $0x5f0] sm:$0xf]
      %v709 = vld [vmem:[%s286 + $0x5f4] sm:$0xf]
      %v710 = vld [vmem:[%s286 + $0x5f8] sm:$0xf]
      %v711 = vld [vmem:[%s286 + $0x5fc] sm:$0xf]
      %v712 = vld [vmem:[%s286 + $0x600] sm:$0xf]
      %v713 = vld [vmem:[%s286 + $0x604] sm:$0xf]
      %v714 = vld [vmem:[%s286 + $0x608] sm:$0xf]
      %v715 = vld [vmem:[%s286 + $0x60c] sm:$0xf]
      %v716 = vld [vmem:[%s286 + $0x610] sm:$0xf]
      %v717 = vld [vmem:[%s286 + $0x614] sm:$0xf]
      %v718 = vld [vmem:[%s286 + $0x618] sm:$0xf]
      %v719 = vld [vmem:[%s286 + $0x61c] sm:$0xf]
      %v720 = vld [vmem:[%s286 + $0x620] sm:$0xf]
      %v721 = vld [vmem:[%s286 + $0x624] sm:$0xf]
      %v722 = vld [vmem:[%s286 + $0x628] sm:$0xf]
      %v723 = vld [vmem:[%s286 + $0x62c] sm:$0xf]
      %v724 = vld [vmem:[%s286 + $0x630] sm:$0xf]
      %v725 = vld [vmem:[%s286 + $0x634] sm:$0xf]
      %v726 = vld [vmem:[%s286 + $0x638] sm:$0xf]
      %v727 = vld [vmem:[%s286 + $0x63c] sm:$0xf]
      %v728 = vld [vmem:[%s286 + $0x640] sm:$0xf]
      %v729 = vld [vmem:[%s286 + $0x644] sm:$0xf]
      %v730 = vld [vmem:[%s286 + $0x648] sm:$0xf]
      %v731 = vld [vmem:[%s286 + $0x64c] sm:$0xf]
      %v732 = vld [vmem:[%s286 + $0x650] sm:$0xf]
      %v733 = vld [vmem:[%s286 + $0x654] sm:$0xf]
      %v734 = vld [vmem:[%s286 + $0x658] sm:$0xf]
      %v735 = vld [vmem:[%s286 + $0x65c] sm:$0xf]
      %v736 = vld [vmem:[%s286 + $0x660] sm:$0xf]
      %v737 = vld [vmem:[%s286 + $0x664] sm:$0xf]
      %v738 = vld [vmem:[%s286 + $0x668] sm:$0xf]
      %v739 = vld [vmem:[%s286 + $0x66c] sm:$0xf]
      %v740 = vld [vmem:[%s286 + $0x670] sm:$0xf]
      %v741 = vld [vmem:[%s286 + $0x674] sm:$0xf]
      %v742 = vld [vmem:[%s286 + $0x678] sm:$0xf]
      %v743 = vld [vmem:[%s286 + $0x67c] sm:$0xf]
      %v744 = vld [vmem:[%s286 + $0x680] sm:$0xf]
      %v745 = vld [vmem:[%s286 + $0x684] sm:$0xf]
      %v746 = vld [vmem:[%s286 + $0x688] sm:$0xf]
      %v747 = vld [vmem:[%s286 + $0x68c] sm:$0xf]
      %v748 = vld [vmem:[%s286 + $0x690] sm:$0xf]
      %v749 = vld [vmem:[%s286 + $0x694] sm:$0xf]
      %v750 = vld [vmem:[%s286 + $0x698] sm:$0xf]
      %v751 = vld [vmem:[%s286 + $0x69c] sm:$0xf]
      %v752 = vld [vmem:[%s286 + $0x6a0] sm:$0xf]
      %v753 = vld [vmem:[%s286 + $0x6a4] sm:$0xf]
      %v754 = vld [vmem:[%s286 + $0x6a8] sm:$0xf]
      %v755 = vld [vmem:[%s286 + $0x6ac] sm:$0xf]
      %v756 = vld [vmem:[%s286 + $0x6b0] sm:$0xf]
      %v757 = vld [vmem:[%s286 + $0x6b4] sm:$0xf]
      %v758 = vld [vmem:[%s286 + $0x6b8] sm:$0xf]
      %v759 = vld [vmem:[%s286 + $0x6bc] sm:$0xf]
      %v760 = vld [vmem:[%s286 + $0x6c0] sm:$0xf]
      %v761 = vld [vmem:[%s286 + $0x6c4] sm:$0xf]
      %v762 = vld [vmem:[%s286 + $0x6c8] sm:$0xf]
      %v763 = vld [vmem:[%s286 + $0x6cc] sm:$0xf]
      %v764 = vld [vmem:[%s286 + $0x6d0] sm:$0xf]
      %v765 = vld [vmem:[%s286 + $0x6d4] sm:$0xf]
      %v766 = vld [vmem:[%s286 + $0x6d8] sm:$0xf]
      %v767 = vld [vmem:[%s286 + $0x6dc] sm:$0xf]
      %v768 = vld [vmem:[%s286 + $0x6e0] sm:$0xf]
      %v769 = vld [vmem:[%s286 + $0x6e4] sm:$0xf]
      %v770 = vld [vmem:[%s286 + $0x6e8] sm:$0xf]
      %v771 = vld [vmem:[%s286 + $0x6ec] sm:$0xf]
      %v772 = vld [vmem:[%s286 + $0x6f0] sm:$0xf]
      %v773 = vld [vmem:[%s286 + $0x6f4] sm:$0xf]
      %v774 = vld [vmem:[%s286 + $0x6f8] sm:$0xf]
      %v775 = vld [vmem:[%s286 + $0x6fc] sm:$0xf]
      %v776 = vld [vmem:[%s286 + $0x700] sm:$0xf]
      %v777 = vld [vmem:[%s286 + $0x704] sm:$0xf]
      %v778 = vld [vmem:[%s286 + $0x708] sm:$0xf]
      %v779 = vld [vmem:[%s286 + $0x70c] sm:$0xf]
      %v780 = vld [vmem:[%s286 + $0x710] sm:$0xf]
      %v781 = vld [vmem:[%s286 + $0x714] sm:$0xf]
      %v782 = vld [vmem:[%s286 + $0x718] sm:$0xf]
      %v783 = vld [vmem:[%s286 + $0x71c] sm:$0xf]
      %v784 = vld [vmem:[%s286 + $0x720] sm:$0xf]
      %v785 = vld [vmem:[%s286 + $0x724] sm:$0xf]
      %v786 = vld [vmem:[%s286 + $0x728] sm:$0xf]
      %v787 = vld [vmem:[%s286 + $0x72c] sm:$0xf]
      %v788 = vld [vmem:[%s286 + $0x730] sm:$0xf]
      %v789 = vld [vmem:[%s286 + $0x734] sm:$0xf]
      %v790 = vld [vmem:[%s286 + $0x738] sm:$0xf]
      %v791 = vld [vmem:[%s286 + $0x73c] sm:$0xf]
      %v792 = vld [vmem:[%s286 + $0x740] sm:$0xf]
      %v793 = vld [vmem:[%s286 + $0x744] sm:$0xf]
      %v794 = vld [vmem:[%s286 + $0x748] sm:$0xf]
      %v795 = vld [vmem:[%s286 + $0x74c] sm:$0xf]
      %v796 = vld [vmem:[%s286 + $0x750] sm:$0xf]
      %v797 = vld [vmem:[%s286 + $0x754] sm:$0xf]
      %v798 = vld [vmem:[%s286 + $0x758] sm:$0xf]
      %v799 = vld [vmem:[%s286 + $0x75c] sm:$0xf]
      %v800 = vld [vmem:[%s286 + $0x760] sm:$0xf]
      %v801 = vld [vmem:[%s286 + $0x764] sm:$0xf]
      %v802 = vld [vmem:[%s286 + $0x768] sm:$0xf]
      %v803 = vld [vmem:[%s286 + $0x76c] sm:$0xf]
      %v804 = vld [vmem:[%s286 + $0x770] sm:$0xf]
      %v805 = vld [vmem:[%s286 + $0x774] sm:$0xf]
      %v806 = vld [vmem:[%s286 + $0x778] sm:$0xf]
      %v807 = vld [vmem:[%s286 + $0x77c] sm:$0xf]
      %v808 = vld [vmem:[%s286 + $0x780] sm:$0xf]
      %v809 = vld [vmem:[%s286 + $0x784] sm:$0xf]
      %v810 = vld [vmem:[%s286 + $0x788] sm:$0xf]
      %v811 = vld [vmem:[%s286 + $0x78c] sm:$0xf]
      %v812 = vld [vmem:[%s286 + $0x790] sm:$0xf]
      %v813 = vld [vmem:[%s286 + $0x794] sm:$0xf]
      %v814 = vld [vmem:[%s286 + $0x798] sm:$0xf]
      %v815 = vld [vmem:[%s286 + $0x79c] sm:$0xf]
      %v816 = vld [vmem:[%s286 + $0x7a0] sm:$0xf]
      %v817 = vld [vmem:[%s286 + $0x7a4] sm:$0xf]
      %v818 = vld [vmem:[%s286 + $0x7a8] sm:$0xf]
      %v819 = vld [vmem:[%s286 + $0x7ac] sm:$0xf]
      %v820 = vld [vmem:[%s286 + $0x7b0] sm:$0xf]
      %v821 = vld [vmem:[%s286 + $0x7b4] sm:$0xf]
      %v822 = vld [vmem:[%s286 + $0x7b8] sm:$0xf]
      %v823 = vld [vmem:[%s286 + $0x7bc] sm:$0xf]
      %v824 = vld [vmem:[%s286 + $0x7c0] sm:$0xf]
      %v825 = vld [vmem:[%s286 + $0x7c4] sm:$0xf]
      %v826 = vld [vmem:[%s286 + $0x7c8] sm:$0xf]
      %v827 = vld [vmem:[%s286 + $0x7cc] sm:$0xf]
      %v828 = vld [vmem:[%s286 + $0x7d0] sm:$0xf]
      %v829 = vld [vmem:[%s286 + $0x7d4] sm:$0xf]
      %v830 = vld [vmem:[%s286 + $0x7d8] sm:$0xf]
      %v831 = vld [vmem:[%s286 + $0x7dc] sm:$0xf]
      %v832 = vld [vmem:[%s286 + $0x7e0] sm:$0xf]
      %v833 = vld [vmem:[%s286 + $0x7e4] sm:$0xf]
      %v834 = vld [vmem:[%s286 + $0x7e8] sm:$0xf]
      %v835 = vld [vmem:[%s286 + $0x7ec] sm:$0xf]
      %v836 = vld [vmem:[%s286 + $0x7f0] sm:$0xf]
      %v837 = vld [vmem:[%s286 + $0x7f4] sm:$0xf]
      %v838 = vld [vmem:[%s286 + $0x7f8] sm:$0xf]
      %v839 = vld [vmem:[%s286 + $0x7fc] sm:$0xf]
      %v840 = vld [vmem:[%s286 + $0x800] sm:$0xf]
      %v841 = vld [vmem:[%s286 + $0x804] sm:$0xf]
      %v842 = vld [vmem:[%s286 + $0x808] sm:$0xf]
      %v843 = vld [vmem:[%s286 + $0x80c] sm:$0xf]
      %v844 = vld [vmem:[%s286 + $0x810] sm:$0xf]
      %v845 = vld [vmem:[%s286 + $0x814] sm:$0xf]
      %v846 = vld [vmem:[%s286 + $0x818] sm:$0xf]
      %v847 = vld [vmem:[%s286 + $0x81c] sm:$0xf]
      %v848 = vld [vmem:[%s286 + $0x820] sm:$0xf]
      %v849 = vld [vmem:[%s286 + $0x824] sm:$0xf]
      %v850 = vld [vmem:[%s286 + $0x828] sm:$0xf]
      %v851 = vld [vmem:[%s286 + $0x82c] sm:$0xf]
      %v852 = vld [vmem:[%s286 + $0x830] sm:$0xf]
      %v853 = vld [vmem:[%s286 + $0x834] sm:$0xf]
      %v854 = vld [vmem:[%s286 + $0x838] sm:$0xf]
      %v855 = vld [vmem:[%s286 + $0x83c] sm:$0xf]
      %v856 = vld [vmem:[%s286 + $0x840] sm:$0xf]
      %v857 = vld [vmem:[%s286 + $0x844] sm:$0xf]
      %v858 = vld [vmem:[%s286 + $0x848] sm:$0xf]
      %v859 = vld [vmem:[%s286 + $0x84c] sm:$0xf]
      %v860 = vld [vmem:[%s286 + $0x850] sm:$0xf]
      %v861 = vld [vmem:[%s286 + $0x854] sm:$0xf]
      %v862 = vld [vmem:[%s286 + $0x858] sm:$0xf]
      %v863 = vld [vmem:[%s286 + $0x85c] sm:$0xf]
      %v864 = vld [vmem:[%s286 + $0x860] sm:$0xf]
      %v865 = vld [vmem:[%s286 + $0x864] sm:$0xf]
      %v866 = vld [vmem:[%s286 + $0x868] sm:$0xf]
      %v867 = vld [vmem:[%s286 + $0x86c] sm:$0xf]
      %v868 = vld [vmem:[%s286 + $0x870] sm:$0xf]
      %v869 = vld [vmem:[%s286 + $0x874] sm:$0xf]
      %v870 = vld [vmem:[%s286 + $0x878] sm:$0xf]
      %v871 = vld [vmem:[%s286 + $0x87c] sm:$0xf]
      %v872 = vld [vmem:[%s286 + $0x880] sm:$0xf]
      %v873 = vld [vmem:[%s286 + $0x884] sm:$0xf]
      %v874 = vld [vmem:[%s286 + $0x888] sm:$0xf]
      %v875 = vld [vmem:[%s286 + $0x88c] sm:$0xf]
      %v876 = vld [vmem:[%s286 + $0x890] sm:$0xf]
      %v877 = vld [vmem:[%s286 + $0x894] sm:$0xf]
      %v878 = vld [vmem:[%s286 + $0x898] sm:$0xf]
      %v879 = vld [vmem:[%s286 + $0x89c] sm:$0xf]
      %v880 = vld [vmem:[%s286 + $0x8a0] sm:$0xf]
      %v881 = vld [vmem:[%s286 + $0x8a4] sm:$0xf]
      %v882 = vld [vmem:[%s286 + $0x8a8] sm:$0xf]
      %v883 = vld [vmem:[%s286 + $0x8ac] sm:$0xf]
      %v884 = vld [vmem:[%s286 + $0x8b0] sm:$0xf]
      %v885 = vld [vmem:[%s286 + $0x8b4] sm:$0xf]
      %v886 = vld [vmem:[%s286 + $0x8b8] sm:$0xf]
      %v887 = vld [vmem:[%s286 + $0x8bc] sm:$0xf]
      %v888 = vld [vmem:[%s286 + $0x8c0] sm:$0xf]
      %v889 = vld [vmem:[%s286 + $0x8c4] sm:$0xf]
      %v890 = vld [vmem:[%s286 + $0x8c8] sm:$0xf]
      %v891 = vld [vmem:[%s286 + $0x8cc] sm:$0xf]
      %v892 = vld [vmem:[%s286 + $0x8d0] sm:$0xf]
      %v893 = vld [vmem:[%s286 + $0x8d4] sm:$0xf]
      %v894 = vld [vmem:[%s286 + $0x8d8] sm:$0xf]
      %v895 = vld [vmem:[%s286 + $0x8dc] sm:$0xf]
      %v896 = vld [vmem:[%s286 + $0x8e0] sm:$0xf]
      %v897 = vld [vmem:[%s286 + $0x8e4] sm:$0xf]
      %v898 = vld [vmem:[%s286 + $0x8e8] sm:$0xf]
      %v899 = vld [vmem:[%s286 + $0x8ec] sm:$0xf]
      %v900 = vld [vmem:[%s286 + $0x8f0] sm:$0xf]
      %v901 = vld [vmem:[%s286 + $0x8f4] sm:$0xf]
      %v902 = vld [vmem:[%s286 + $0x8f8] sm:$0xf]
      %v903 = vld [vmem:[%s286 + $0x8fc] sm:$0xf]
      %v904 = vld [vmem:[%s286 + $0x900] sm:$0xf]
      %v905 = vld [vmem:[%s286 + $0x904] sm:$0xf]
      %v906 = vld [vmem:[%s286 + $0x908] sm:$0xf]
      %v907 = vld [vmem:[%s286 + $0x90c] sm:$0xf]
      %v908 = vld [vmem:[%s286 + $0x910] sm:$0xf]
      %v909 = vld [vmem:[%s286 + $0x914] sm:$0xf]
      %v910 = vld [vmem:[%s286 + $0x918] sm:$0xf]
      %v911 = vld [vmem:[%s286 + $0x91c] sm:$0xf]
      %v912 = vld [vmem:[%s286 + $0x920] sm:$0xf]
      %v913 = vld [vmem:[%s286 + $0x924] sm:$0xf]
      %v914 = vld [vmem:[%s286 + $0x928] sm:$0xf]
      %v915 = vld [vmem:[%s286 + $0x92c] sm:$0xf]
      %v916 = vld [vmem:[%s286 + $0x930] sm:$0xf]
      %v917 = vld [vmem:[%s286 + $0x934] sm:$0xf]
      %v918 = vld [vmem:[%s286 + $0x938] sm:$0xf]
      %v919 = vld [vmem:[%s286 + $0x93c] sm:$0xf]
      %v920 = vld [vmem:[%s286 + $0x940] sm:$0xf]
      %v921 = vld [vmem:[%s286 + $0x944] sm:$0xf]
      %v922 = vld [vmem:[%s286 + $0x948] sm:$0xf]
      %v923 = vld [vmem:[%s286 + $0x94c] sm:$0xf]
      %v924 = vld [vmem:[%s286 + $0x950] sm:$0xf]
      %v925 = vld [vmem:[%s286 + $0x954] sm:$0xf]
      %v926 = vld [vmem:[%s286 + $0x958] sm:$0xf]
      %v927 = vld [vmem:[%s286 + $0x95c] sm:$0xf]
      %v928 = vld [vmem:[%s286 + $0x960] sm:$0xf]
      %v929 = vld [vmem:[%s286 + $0x964] sm:$0xf]
      %v930 = vld [vmem:[%s286 + $0x968] sm:$0xf]
      %v931 = vld [vmem:[%s286 + $0x96c] sm:$0xf]
      %v932 = vld [vmem:[%s286 + $0x970] sm:$0xf]
      %v933 = vld [vmem:[%s286 + $0x974] sm:$0xf]
      %v934 = vld [vmem:[%s286 + $0x978] sm:$0xf]
      %v935 = vld [vmem:[%s286 + $0x97c] sm:$0xf]
      %v936 = vld [vmem:[%s286 + $0x980] sm:$0xf]
      %v937 = vld [vmem:[%s286 + $0x984] sm:$0xf]
      %v938 = vld [vmem:[%s286 + $0x988] sm:$0xf]
      %v939 = vld [vmem:[%s286 + $0x98c] sm:$0xf]
      %v940 = vld [vmem:[%s286 + $0x990] sm:$0xf]
      %v941 = vld [vmem:[%s286 + $0x994] sm:$0xf]
      %v942 = vld [vmem:[%s286 + $0x998] sm:$0xf]
      %v943 = vld [vmem:[%s286 + $0x99c] sm:$0xf]
      %v944 = vld [vmem:[%s286 + $0x9a0] sm:$0xf]
      %v945 = vld [vmem:[%s286 + $0x9a4] sm:$0xf]
      %v946 = vld [vmem:[%s286 + $0x9a8] sm:$0xf]
      %v947 = vld [vmem:[%s286 + $0x9ac] sm:$0xf]
      %v948 = vld [vmem:[%s286 + $0x9b0] sm:$0xf]
      %v949 = vld [vmem:[%s286 + $0x9b4] sm:$0xf]
      %v950 = vld [vmem:[%s286 + $0x9b8] sm:$0xf]
      %v951 = vld [vmem:[%s286 + $0x9bc] sm:$0xf]
      %v952 = vld [vmem:[%s286 + $0x9c0] sm:$0xf]
      %v953 = vld [vmem:[%s286 + $0x9c4] sm:$0xf]
      %v954 = vld [vmem:[%s286 + $0x9c8] sm:$0xf]
      %v955 = vld [vmem:[%s286 + $0x9cc] sm:$0xf]
      %v956 = vld [vmem:[%s286 + $0x9d0] sm:$0xf]
      %v957 = vld [vmem:[%s286 + $0x9d4] sm:$0xf]
      %v958 = vld [vmem:[%s286 + $0x9d8] sm:$0xf]
      %v959 = vld [vmem:[%s286 + $0x9dc] sm:$0xf]
      %v960 = vld [vmem:[%s286 + $0x9e0] sm:$0xf]
      %v961 = vld [vmem:[%s286 + $0x9e4] sm:$0xf]
      %v962 = vld [vmem:[%s286 + $0x9e8] sm:$0xf]
      %v963 = vld [vmem:[%s286 + $0x9ec] sm:$0xf]
      %v964 = vld [vmem:[%s286 + $0x9f0] sm:$0xf]
      %v965 = vld [vmem:[%s286 + $0x9f4] sm:$0xf]
      %v966 = vld [vmem:[%s286 + $0x9f8] sm:$0xf]
      %v967 = vld [vmem:[%s286 + $0x9fc] sm:$0xf]
      %v968 = vld [vmem:[%s286 + $0xa00] sm:$0xf]
      %v969 = vld [vmem:[%s286 + $0xa04] sm:$0xf]
      %v970 = vld [vmem:[%s286 + $0xa08] sm:$0xf]
      %v971 = vld [vmem:[%s286 + $0xa0c] sm:$0xf]
      %v972 = vld [vmem:[%s286 + $0xa10] sm:$0xf]
      %v973 = vld [vmem:[%s286 + $0xa14] sm:$0xf]
      %v974 = vld [vmem:[%s286 + $0xa18] sm:$0xf]
      %v975 = vld [vmem:[%s286 + $0xa1c] sm:$0xf]
      %v976 = vld [vmem:[%s286 + $0xa20] sm:$0xf]
      %v977 = vld [vmem:[%s286 + $0xa24] sm:$0xf]
      %v978 = vld [vmem:[%s286 + $0xa28] sm:$0xf]
      %v979 = vld [vmem:[%s286 + $0xa2c] sm:$0xf]
      %v980 = vld [vmem:[%s286 + $0xa30] sm:$0xf]
      %v981 = vld [vmem:[%s286 + $0xa34] sm:$0xf]
      %v982 = vld [vmem:[%s286 + $0xa38] sm:$0xf]
      %v983 = vld [vmem:[%s286 + $0xa3c] sm:$0xf]
      %v984 = vld [vmem:[%s286 + $0xa40] sm:$0xf]
      %v985 = vld [vmem:[%s286 + $0xa44] sm:$0xf]
      %v986 = vld [vmem:[%s286 + $0xa48] sm:$0xf]
      %v987 = vld [vmem:[%s286 + $0xa4c] sm:$0xf]
      %v988 = vld [vmem:[%s286 + $0xa50] sm:$0xf]
      %v989 = vld [vmem:[%s286 + $0xa54] sm:$0xf]
      %v990 = vld [vmem:[%s286 + $0xa58] sm:$0xf]
      %v991 = vld [vmem:[%s286 + $0xa5c] sm:$0xf]
      %v992 = vld [vmem:[%s286 + $0xa60] sm:$0xf]
      %v993 = vld [vmem:[%s286 + $0xa64] sm:$0xf]
      %v994 = vld [vmem:[%s286 + $0xa68] sm:$0xf]
      %v995 = vld [vmem:[%s286 + $0xa6c] sm:$0xf]
      %v996 = vld [vmem:[%s286 + $0xa70] sm:$0xf]
      %v997 = vld [vmem:[%s286 + $0xa74] sm:$0xf]
      %v998 = vld [vmem:[%s286 + $0xa78] sm:$0xf]
      %v999 = vld [vmem:[%s286 + $0xa7c] sm:$0xf]
      %v1000 = vld [vmem:[%s286 + $0xa80] sm:$0xf]
      %v1001 = vld [vmem:[%s286 + $0xa84] sm:$0xf]
      %v1002 = vld [vmem:[%s286 + $0xa88] sm:$0xf]
      %v1003 = vld [vmem:[%s286 + $0xa8c] sm:$0xf]
      %v1004 = vld [vmem:[%s286 + $0xa90] sm:$0xf]
      %v1005 = vld [vmem:[%s286 + $0xa94] sm:$0xf]
      %v1006 = vld [vmem:[%s286 + $0xa98] sm:$0xf]
      %v1007 = vld [vmem:[%s286 + $0xa9c] sm:$0xf]
      %v1008 = vld [vmem:[%s286 + $0xaa0] sm:$0xf]
      %v1009 = vld [vmem:[%s286 + $0xaa4] sm:$0xf]
      %v1010 = vld [vmem:[%s286 + $0xaa8] sm:$0xf]
      %v1011 = vld [vmem:[%s286 + $0xaac] sm:$0xf]
      %v1012 = vld [vmem:[%s286 + $0xab0] sm:$0xf]
      %v1013 = vld [vmem:[%s286 + $0xab4] sm:$0xf]
      %v1014 = vld [vmem:[%s286 + $0xab8] sm:$0xf]
      %v1015 = vld [vmem:[%s286 + $0xabc] sm:$0xf]
      %v1016 = vld [vmem:[%s286 + $0xac0] sm:$0xf]
      %v1017 = vld [vmem:[%s286 + $0xac4] sm:$0xf]
      %v1018 = vld [vmem:[%s286 + $0xac8] sm:$0xf]
      %v1019 = vld [vmem:[%s286 + $0xacc] sm:$0xf]
      %v1020 = vld [vmem:[%s286 + $0xad0] sm:$0xf]
      %v1021 = vld [vmem:[%s286 + $0xad4] sm:$0xf]
      %v1022 = vld [vmem:[%s286 + $0xad8] sm:$0xf]
      %v1023 = vld [vmem:[%s286 + $0xadc] sm:$0xf]
      %v1024 = vld [vmem:[%s286 + $0xae0] sm:$0xf]
      %v1025 = vld [vmem:[%s286 + $0xae4] sm:$0xf]
      %v1026 = vld [vmem:[%s286 + $0xae8] sm:$0xf]
      %v1027 = vld [vmem:[%s286 + $0xaec] sm:$0xf]
      %v1028 = vld [vmem:[%s286 + $0xaf0] sm:$0xf]
      %v1029 = vld [vmem:[%s286 + $0xaf4] sm:$0xf]
      %v1030 = vld [vmem:[%s286 + $0xaf8] sm:$0xf]
      %v1031 = vld [vmem:[%s286 + $0xafc] sm:$0xf]
      %v1032 = vld [vmem:[%s286 + $0xb00] sm:$0xf]
      %v1033 = vld [vmem:[%s286 + $0xb04] sm:$0xf]
      %v1034 = vld [vmem:[%s286 + $0xb08] sm:$0xf]
      %v1035 = vld [vmem:[%s286 + $0xb0c] sm:$0xf]
      %v1036 = vld [vmem:[%s286 + $0xb10] sm:$0xf]
      %v1037 = vld [vmem:[%s286 + $0xb14] sm:$0xf]
      %v1038 = vld [vmem:[%s286 + $0xb18] sm:$0xf]
      %v1039 = vld [vmem:[%s286 + $0xb1c] sm:$0xf]
      %v1040 = vld [vmem:[%s286 + $0xb20] sm:$0xf]
      %v1041 = vld [vmem:[%s286 + $0xb24] sm:$0xf]
      %v1042 = vld [vmem:[%s286 + $0xb28] sm:$0xf]
      %v1043 = vld [vmem:[%s286 + $0xb2c] sm:$0xf]
      %v1044 = vld [vmem:[%s286 + $0xb30] sm:$0xf]
      %v1045 = vld [vmem:[%s286 + $0xb34] sm:$0xf]
      %v1046 = vld [vmem:[%s286 + $0xb38] sm:$0xf]
      %v1047 = vld [vmem:[%s286 + $0xb3c] sm:$0xf]
      %v1048 = vld [vmem:[%s286 + $0xb40] sm:$0xf]
      %v1049 = vld [vmem:[%s286 + $0xb44] sm:$0xf]
      %v1050 = vld [vmem:[%s286 + $0xb48] sm:$0xf]
      %v1051 = vld [vmem:[%s286 + $0xb4c] sm:$0xf]
      %v1052 = vld [vmem:[%s286 + $0xb50] sm:$0xf]
      %v1053 = vld [vmem:[%s286 + $0xb54] sm:$0xf]
      %v1054 = vld [vmem:[%s286 + $0xb58] sm:$0xf]
      %v1055 = vld [vmem:[%s286 + $0xb5c] sm:$0xf]
      %v1056 = vld [vmem:[%s286 + $0xb60] sm:$0xf]
      %v1057 = vld [vmem:[%s286 + $0xb64] sm:$0xf]
      %v1058 = vld [vmem:[%s286 + $0xb68] sm:$0xf]
      %v1059 = vld [vmem:[%s286 + $0xb6c] sm:$0xf]
      %v1060 = vld [vmem:[%s286 + $0xb70] sm:$0xf]
      %v1061 = vld [vmem:[%s286 + $0xb74] sm:$0xf]
      %v1062 = vld [vmem:[%s286 + $0xb78] sm:$0xf]
      %v1063 = vld [vmem:[%s286 + $0xb7c] sm:$0xf]
      %v1064 = vld [vmem:[%s286 + $0xb80] sm:$0xf]
      %v1065 = vld [vmem:[%s286 + $0xb84] sm:$0xf]
      %v1066 = vld [vmem:[%s286 + $0xb88] sm:$0xf]
      %v1067 = vld [vmem:[%s286 + $0xb8c] sm:$0xf]
      %v1068 = vld [vmem:[%s286 + $0xb90] sm:$0xf]
      %v1069 = vld [vmem:[%s286 + $0xb94] sm:$0xf]
      %v1070 = vld [vmem:[%s286 + $0xb98] sm:$0xf]
      %v1071 = vld [vmem:[%s286 + $0xb9c] sm:$0xf]
      %v1072 = vld [vmem:[%s286 + $0xba0] sm:$0xf]
      %v1073 = vld [vmem:[%s286 + $0xba4] sm:$0xf]
      %v1074 = vld [vmem:[%s286 + $0xba8] sm:$0xf]
      %v1075 = vld [vmem:[%s286 + $0xbac] sm:$0xf]
      %v1076 = vld [vmem:[%s286 + $0xbb0] sm:$0xf]
      %v1077 = vld [vmem:[%s286 + $0xbb4] sm:$0xf]
      %v1078 = vld [vmem:[%s286 + $0xbb8] sm:$0xf]
      %v1079 = vld [vmem:[%s286 + $0xbbc] sm:$0xf]
      %v1080 = vld [vmem:[%s286 + $0xbc0] sm:$0xf]
      %v1081 = vld [vmem:[%s286 + $0xbc4] sm:$0xf]
      %v1082 = vld [vmem:[%s286 + $0xbc8] sm:$0xf]
      %v1083 = vld [vmem:[%s286 + $0xbcc] sm:$0xf]
      %v1084 = vld [vmem:[%s286 + $0xbd0] sm:$0xf]
      %v1085 = vld [vmem:[%s286 + $0xbd4] sm:$0xf]
      %v1086 = vld [vmem:[%s286 + $0xbd8] sm:$0xf]
      %v1087 = vld [vmem:[%s286 + $0xbdc] sm:$0xf]
      %v1088 = vld [vmem:[%s286 + $0xbe0] sm:$0xf]
      %v1089 = vld [vmem:[%s286 + $0xbe4] sm:$0xf]
      %v1090 = vld [vmem:[%s286 + $0xbe8] sm:$0xf]
      %v1091 = vld [vmem:[%s286 + $0xbec] sm:$0xf]
      %v1092 = vld [vmem:[%s286 + $0xbf0] sm:$0xf]
      %v1093 = vld [vmem:[%s286 + $0xbf4] sm:$0xf]
      %v1094 = vld [vmem:[%s286 + $0xbf8] sm:$0xf]
      %v1095 = vld [vmem:[%s286 + $0xbfc] sm:$0xf]
      %v1096 = vld [vmem:[%s286 + $0xc00] sm:$0xf]
      %v1097 = vld [vmem:[%s286 + $0xc04] sm:$0xf]
      %v1098 = vld [vmem:[%s286 + $0xc08] sm:$0xf]
      %v1099 = vld [vmem:[%s286 + $0xc0c] sm:$0xf]
      %v1100 = vld [vmem:[%s286 + $0xc10] sm:$0xf]
      %v1101 = vld [vmem:[%s286 + $0xc14] sm:$0xf]
      %v1102 = vld [vmem:[%s286 + $0xc18] sm:$0xf]
      %v1103 = vld [vmem:[%s286 + $0xc1c] sm:$0xf]
      %v1104 = vld [vmem:[%s286 + $0xc20] sm:$0xf]
      %v1105 = vld [vmem:[%s286 + $0xc24] sm:$0xf]
      %v1106 = vld [vmem:[%s286 + $0xc28] sm:$0xf]
      %v1107 = vld [vmem:[%s286 + $0xc2c] sm:$0xf]
      %v1108 = vld [vmem:[%s286 + $0xc30] sm:$0xf]
      %v1109 = vld [vmem:[%s286 + $0xc34] sm:$0xf]
      %v1110 = vld [vmem:[%s286 + $0xc38] sm:$0xf]
      %v1111 = vld [vmem:[%s286 + $0xc3c] sm:$0xf]
      %v1112 = vld [vmem:[%s286 + $0xc40] sm:$0xf]
      %v1113 = vld [vmem:[%s286 + $0xc44] sm:$0xf]
      %v1114 = vld [vmem:[%s286 + $0xc48] sm:$0xf]
      %v1115 = vld [vmem:[%s286 + $0xc4c] sm:$0xf]
      %v1116 = vld [vmem:[%s286 + $0xc50] sm:$0xf]
      %v1117 = vld [vmem:[%s286 + $0xc54] sm:$0xf]
      %v1118 = vld [vmem:[%s286 + $0xc58] sm:$0xf]
      %v1119 = vld [vmem:[%s286 + $0xc5c] sm:$0xf]
      %v1120 = vld [vmem:[%s286 + $0xc60] sm:$0xf]
      %v1121 = vld [vmem:[%s286 + $0xc64] sm:$0xf]
      %v1122 = vld [vmem:[%s286 + $0xc68] sm:$0xf]
      %v1123 = vld [vmem:[%s286 + $0xc6c] sm:$0xf]
      %v1124 = vld [vmem:[%s286 + $0xc70] sm:$0xf]
      %v1125 = vld [vmem:[%s286 + $0xc74] sm:$0xf]
      %v1126 = vld [vmem:[%s286 + $0xc78] sm:$0xf]
      %v1127 = vld [vmem:[%s286 + $0xc7c] sm:$0xf]
      %v1128 = vld [vmem:[%s286 + $0xc80] sm:$0xf]
      %v1129 = vld [vmem:[%s286 + $0xc84] sm:$0xf]
      %v1130 = vld [vmem:[%s286 + $0xc88] sm:$0xf]
      %v1131 = vld [vmem:[%s286 + $0xc8c] sm:$0xf]
      %v1132 = vld [vmem:[%s286 + $0xc90] sm:$0xf]
      %v1133 = vld [vmem:[%s286 + $0xc94] sm:$0xf]
      %v1134 = vld [vmem:[%s286 + $0xc98] sm:$0xf]
      %v1135 = vld [vmem:[%s286 + $0xc9c] sm:$0xf]
      %v1136 = vld [vmem:[%s286 + $0xca0] sm:$0xf]
      %v1137 = vld [vmem:[%s286 + $0xca4] sm:$0xf]
      %v1138 = vld [vmem:[%s286 + $0xca8] sm:$0xf]
      %v1139 = vld [vmem:[%s286 + $0xcac] sm:$0xf]
      %v1140 = vld [vmem:[%s286 + $0xcb0] sm:$0xf]
      %v1141 = vld [vmem:[%s286 + $0xcb4] sm:$0xf]
      %v1142 = vld [vmem:[%s286 + $0xcb8] sm:$0xf]
      %v1143 = vld [vmem:[%s286 + $0xcbc] sm:$0xf]
      %v1144 = vld [vmem:[%s286 + $0xcc0] sm:$0xf]
      %v1145 = vld [vmem:[%s286 + $0xcc4] sm:$0xf]
      %v1146 = vld [vmem:[%s286 + $0xcc8] sm:$0xf]
      %v1147 = vld [vmem:[%s286 + $0xccc] sm:$0xf]
      %v1148 = vld [vmem:[%s286 + $0xcd0] sm:$0xf]
      %v1149 = vld [vmem:[%s286 + $0xcd4] sm:$0xf]
      %v1150 = vld [vmem:[%s286 + $0xcd8] sm:$0xf]
      %v1151 = vld [vmem:[%s286 + $0xcdc] sm:$0xf]
      %v1152 = vld [vmem:[%s286 + $0xce0] sm:$0xf]
      %v1153 = vld [vmem:[%s286 + $0xce4] sm:$0xf]
      %v1154 = vld [vmem:[%s286 + $0xce8] sm:$0xf]
      %v1155 = vld [vmem:[%s286 + $0xcec] sm:$0xf]
      %v1156 = vld [vmem:[%s286 + $0xcf0] sm:$0xf]
      %v1157 = vld [vmem:[%s286 + $0xcf4] sm:$0xf]
      %v1158 = vld [vmem:[%s286 + $0xcf8] sm:$0xf]
      %v1159 = vld [vmem:[%s286 + $0xcfc] sm:$0xf]
      %v1160 = vld [vmem:[%s286 + $0xd00] sm:$0xf]
      %v1161 = vld [vmem:[%s286 + $0xd04] sm:$0xf]
      %v1162 = vld [vmem:[%s286 + $0xd08] sm:$0xf]
      %v1163 = vld [vmem:[%s286 + $0xd0c] sm:$0xf]
      %v1164 = vld [vmem:[%s286 + $0xd10] sm:$0xf]
      %v1165 = vld [vmem:[%s286 + $0xd14] sm:$0xf]
      %v1166 = vld [vmem:[%s286 + $0xd18] sm:$0xf]
      %v1167 = vld [vmem:[%s286 + $0xd1c] sm:$0xf]
      %v1168 = vld [vmem:[%s286 + $0xd20] sm:$0xf]
      %v1169 = vld [vmem:[%s286 + $0xd24] sm:$0xf]
      %v1170 = vld [vmem:[%s286 + $0xd28] sm:$0xf]
      %v1171 = vld [vmem:[%s286 + $0xd2c] sm:$0xf]
      %v1172 = vld [vmem:[%s286 + $0xd30] sm:$0xf]
      %v1173 = vld [vmem:[%s286 + $0xd34] sm:$0xf]
      %v1174 = vld [vmem:[%s286 + $0xd38] sm:$0xf]
      %v1175 = vld [vmem:[%s286 + $0xd3c] sm:$0xf]
      %v1176 = vld [vmem:[%s286 + $0xd40] sm:$0xf]
      %v1177 = vld [vmem:[%s286 + $0xd44] sm:$0xf]
      %v1178 = vld [vmem:[%s286 + $0xd48] sm:$0xf]
      %v1179 = vld [vmem:[%s286 + $0xd4c] sm:$0xf]
      %v1180 = vld [vmem:[%s286 + $0xd50] sm:$0xf]
      %v1181 = vld [vmem:[%s286 + $0xd54] sm:$0xf]
      %v1182 = vld [vmem:[%s286 + $0xd58] sm:$0xf]
      %v1183 = vld [vmem:[%s286 + $0xd5c] sm:$0xf]
      %v1184 = vld [vmem:[%s286 + $0xd60] sm:$0xf]
      %v1185 = vld [vmem:[%s286 + $0xd64] sm:$0xf]
      %v1186 = vld [vmem:[%s286 + $0xd68] sm:$0xf]
      %v1187 = vld [vmem:[%s286 + $0xd6c] sm:$0xf]
      %v1188 = vld [vmem:[%s286 + $0xd70] sm:$0xf]
      %v1189 = vld [vmem:[%s286 + $0xd74] sm:$0xf]
      %v1190 = vld [vmem:[%s286 + $0xd78] sm:$0xf]
      %v1191 = vld [vmem:[%s286 + $0xd7c] sm:$0xf]
      %v1192 = vld [vmem:[%s286 + $0xd80] sm:$0xf]
      %v1193 = vld [vmem:[%s286 + $0xd84] sm:$0xf]
      %v1194 = vld [vmem:[%s286 + $0xd88] sm:$0xf]
      %v1195 = vld [vmem:[%s286 + $0xd8c] sm:$0xf]
      %v1196 = vld [vmem:[%s286 + $0xd90] sm:$0xf]
      %v1197 = vld [vmem:[%s286 + $0xd94] sm:$0xf]
      %v1198 = vld [vmem:[%s286 + $0xd98] sm:$0xf]
      %v1199 = vld [vmem:[%s286 + $0xd9c] sm:$0xf]
      %v1200 = vld [vmem:[%s286 + $0xda0] sm:$0xf]
      %v1201 = vld [vmem:[%s286 + $0xda4] sm:$0xf]
      %v1202 = vld [vmem:[%s286 + $0xda8] sm:$0xf]
      %v1203 = vld [vmem:[%s286 + $0xdac] sm:$0xf]
      %v1204 = vld [vmem:[%s286 + $0xdb0] sm:$0xf]
      %v1205 = vld [vmem:[%s286 + $0xdb4] sm:$0xf]
      %v1206 = vld [vmem:[%s286 + $0xdb8] sm:$0xf]
      %v1207 = vld [vmem:[%s286 + $0xdbc] sm:$0xf]
      %v1208 = vld [vmem:[%s286 + $0xdc0] sm:$0xf]
      %v1209 = vld [vmem:[%s286 + $0xdc4] sm:$0xf]
      %v1210 = vld [vmem:[%s286 + $0xdc8] sm:$0xf]
      %v1211 = vld [vmem:[%s286 + $0xdcc] sm:$0xf]
      %v1212 = vld [vmem:[%s286 + $0xdd0] sm:$0xf]
      %v1213 = vld [vmem:[%s286 + $0xdd4] sm:$0xf]
      %v1214 = vld [vmem:[%s286 + $0xdd8] sm:$0xf]
      %v1215 = vld [vmem:[%s286 + $0xddc] sm:$0xf]
      %v1216 = vld [vmem:[%s286 + $0xde0] sm:$0xf]
      %v1217 = vld [vmem:[%s286 + $0xde4] sm:$0xf]
      %v1218 = vld [vmem:[%s286 + $0xde8] sm:$0xf]
      %v1219 = vld [vmem:[%s286 + $0xdec] sm:$0xf]
      %v1220 = vld [vmem:[%s286 + $0xdf0] sm:$0xf]
      %v1221 = vld [vmem:[%s286 + $0xdf4] sm:$0xf]
      %v1222 = vld [vmem:[%s286 + $0xdf8] sm:$0xf]
      %v1223 = vld [vmem:[%s286 + $0xdfc] sm:$0xf]
      %v1224 = vld [vmem:[%s286 + $0xe00] sm:$0xf]
      %v1225 = vld [vmem:[%s286 + $0xe04] sm:$0xf]
      %v1226 = vld [vmem:[%s286 + $0xe08] sm:$0xf]
      %v1227 = vld [vmem:[%s286 + $0xe0c] sm:$0xf]
      %v1228 = vld [vmem:[%s286 + $0xe10] sm:$0xf]
      %v1229 = vld [vmem:[%s286 + $0xe14] sm:$0xf]
      %v1230 = vld [vmem:[%s286 + $0xe18] sm:$0xf]
      %v1231 = vld [vmem:[%s286 + $0xe1c] sm:$0xf]
      %v1232 = vld [vmem:[%s286 + $0xe20] sm:$0xf]
      %v1233 = vld [vmem:[%s286 + $0xe24] sm:$0xf]
      %v1234 = vld [vmem:[%s286 + $0xe28] sm:$0xf]
      %v1235 = vld [vmem:[%s286 + $0xe2c] sm:$0xf]
      %v1236 = vld [vmem:[%s286 + $0xe30] sm:$0xf]
      %v1237 = vld [vmem:[%s286 + $0xe34] sm:$0xf]
      %v1238 = vld [vmem:[%s286 + $0xe38] sm:$0xf]
      %v1239 = vld [vmem:[%s286 + $0xe3c] sm:$0xf]
      %v1240 = vld [vmem:[%s286 + $0xe40] sm:$0xf]
      %v1241 = vld [vmem:[%s286 + $0xe44] sm:$0xf]
      %v1242 = vld [vmem:[%s286 + $0xe48] sm:$0xf]
      %v1243 = vld [vmem:[%s286 + $0xe4c] sm:$0xf]
      %v1244 = vld [vmem:[%s286 + $0xe50] sm:$0xf]
      %v1245 = vld [vmem:[%s286 + $0xe54] sm:$0xf]
      %v1246 = vld [vmem:[%s286 + $0xe58] sm:$0xf]
      %v1247 = vld [vmem:[%s286 + $0xe5c] sm:$0xf]
      %v1248 = vld [vmem:[%s286 + $0xe60] sm:$0xf]
      %v1249 = vld [vmem:[%s286 + $0xe64] sm:$0xf]
      %v1250 = vld [vmem:[%s286 + $0xe68] sm:$0xf]
      %v1251 = vld [vmem:[%s286 + $0xe6c] sm:$0xf]
      %v1252 = vld [vmem:[%s286 + $0xe70] sm:$0xf]
      %v1253 = vld [vmem:[%s286 + $0xe74] sm:$0xf]
      %v1254 = vld [vmem:[%s286 + $0xe78] sm:$0xf]
      %v1255 = vld [vmem:[%s286 + $0xe7c] sm:$0xf]
      %v1256 = vld [vmem:[%s286 + $0xe80] sm:$0xf]
      %v1257 = vld [vmem:[%s286 + $0xe84] sm:$0xf]
      %v1258 = vld [vmem:[%s286 + $0xe88] sm:$0xf]
      %v1259 = vld [vmem:[%s286 + $0xe8c] sm:$0xf]
      %v1260 = vld [vmem:[%s286 + $0xe90] sm:$0xf]
      %v1261 = vld [vmem:[%s286 + $0xe94] sm:$0xf]
      %v1262 = vld [vmem:[%s286 + $0xe98] sm:$0xf]
      %v1263 = vld [vmem:[%s286 + $0xe9c] sm:$0xf]
      %v1264 = vld [vmem:[%s286 + $0xea0] sm:$0xf]
      %v1265 = vld [vmem:[%s286 + $0xea4] sm:$0xf]
      %v1266 = vld [vmem:[%s286 + $0xea8] sm:$0xf]
      %v1267 = vld [vmem:[%s286 + $0xeac] sm:$0xf]
      %v1268 = vld [vmem:[%s286 + $0xeb0] sm:$0xf]
      %v1269 = vld [vmem:[%s286 + $0xeb4] sm:$0xf]
      %v1270 = vld [vmem:[%s286 + $0xeb8] sm:$0xf]
      %v1271 = vld [vmem:[%s286 + $0xebc] sm:$0xf]
      %v1272 = vld [vmem:[%s286 + $0xec0] sm:$0xf]
      %v1273 = vld [vmem:[%s286 + $0xec4] sm:$0xf]
      %v1274 = vld [vmem:[%s286 + $0xec8] sm:$0xf]
      %v1275 = vld [vmem:[%s286 + $0xecc] sm:$0xf]
      %v1276 = vld [vmem:[%s286 + $0xed0] sm:$0xf]
      %v1277 = vld [vmem:[%s286 + $0xed4] sm:$0xf]
      %v1278 = vld [vmem:[%s286 + $0xed8] sm:$0xf]
      %v1279 = vld [vmem:[%s286 + $0xedc] sm:$0xf]
      %v1280 = vld [vmem:[%s286 + $0xee0] sm:$0xf]
      %v1281 = vld [vmem:[%s286 + $0xee4] sm:$0xf]
      %v1282 = vld [vmem:[%s286 + $0xee8] sm:$0xf]
      %v1283 = vld [vmem:[%s286 + $0xeec] sm:$0xf]
      %v1284 = vld [vmem:[%s286 + $0xef0] sm:$0xf]
      %v1285 = vld [vmem:[%s286 + $0xef4] sm:$0xf]
      %v1286 = vld [vmem:[%s286 + $0xef8] sm:$0xf]
      %v1287 = vld [vmem:[%s286 + $0xefc] sm:$0xf]
      %v1288 = vld [vmem:[%s286 + $0xf00] sm:$0xf]
      %v1289 = vld [vmem:[%s286 + $0xf04] sm:$0xf]
      %v1290 = vld [vmem:[%s286 + $0xf08] sm:$0xf]
      %v1291 = vld [vmem:[%s286 + $0xf0c] sm:$0xf]
      %v1292 = vld [vmem:[%s286 + $0xf10] sm:$0xf]
      %v1293 = vld [vmem:[%s286 + $0xf14] sm:$0xf]
      %v1294 = vld [vmem:[%s286 + $0xf18] sm:$0xf]
      %v1295 = vld [vmem:[%s286 + $0xf1c] sm:$0xf]
      %v1296 = vld [vmem:[%s286 + $0xf20] sm:$0xf]
      %v1297 = vld [vmem:[%s286 + $0xf24] sm:$0xf]
      %v1298 = vld [vmem:[%s286 + $0xf28] sm:$0xf]
      %v1299 = vld [vmem:[%s286 + $0xf2c] sm:$0xf]
      %v1300 = vld [vmem:[%s286 + $0xf30] sm:$0xf]
      %v1301 = vld [vmem:[%s286 + $0xf34] sm:$0xf]
      %v1302 = vld [vmem:[%s286 + $0xf38] sm:$0xf]
      %v1303 = vld [vmem:[%s286 + $0xf3c] sm:$0xf]
      %v1304 = vld [vmem:[%s286 + $0xf40] sm:$0xf]
      %v1305 = vld [vmem:[%s286 + $0xf44] sm:$0xf]
      %v1306 = vld [vmem:[%s286 + $0xf48] sm:$0xf]
      %v1307 = vld [vmem:[%s286 + $0xf4c] sm:$0xf]
      %v1308 = vld [vmem:[%s286 + $0xf50] sm:$0xf]
      %v1309 = vld [vmem:[%s286 + $0xf54] sm:$0xf]
      %v1310 = vld [vmem:[%s286 + $0xf58] sm:$0xf]
      %v1311 = vld [vmem:[%s286 + $0xf5c] sm:$0xf]
      %v1312 = vld [vmem:[%s286 + $0xf60] sm:$0xf]
      %v1313 = vld [vmem:[%s286 + $0xf64] sm:$0xf]
      %v1314 = vld [vmem:[%s286 + $0xf68] sm:$0xf]
      %v1315 = vld [vmem:[%s286 + $0xf6c] sm:$0xf]
      %v1316 = vld [vmem:[%s286 + $0xf70] sm:$0xf]
      %v1317 = vld [vmem:[%s286 + $0xf74] sm:$0xf]
      %v1318 = vld [vmem:[%s286 + $0xf78] sm:$0xf]
      %v1319 = vld [vmem:[%s286 + $0xf7c] sm:$0xf]
      %v1320 = vld [vmem:[%s286 + $0xf80] sm:$0xf]
      %v1321 = vld [vmem:[%s286 + $0xf84] sm:$0xf]
      %v1322 = vld [vmem:[%s286 + $0xf88] sm:$0xf]
      %v1323 = vld [vmem:[%s286 + $0xf8c] sm:$0xf]
      %v1324 = vld [vmem:[%s286 + $0xf90] sm:$0xf]
      %v1325 = vld [vmem:[%s286 + $0xf94] sm:$0xf]
      %v1326 = vld [vmem:[%s286 + $0xf98] sm:$0xf]
      %v1327 = vld [vmem:[%s286 + $0xf9c] sm:$0xf]
      %v1328 = vld [vmem:[%s286 + $0xfa0] sm:$0xf]
      %v1329 = vld [vmem:[%s286 + $0xfa4] sm:$0xf]
      %v1330 = vld [vmem:[%s286 + $0xfa8] sm:$0xf]
      %v1331 = vld [vmem:[%s286 + $0xfac] sm:$0xf]
      %v1332 = vld [vmem:[%s286 + $0xfb0] sm:$0xf]
      %v1333 = vld [vmem:[%s286 + $0xfb4] sm:$0xf]
      %v1334 = vld [vmem:[%s286 + $0xfb8] sm:$0xf]
      %v1335 = vld [vmem:[%s286 + $0xfbc] sm:$0xf]
      %v1336 = vld [vmem:[%s286 + $0xfc0] sm:$0xf]
      %v1337 = vld [vmem:[%s286 + $0xfc4] sm:$0xf]
      %v1338 = vld [vmem:[%s286 + $0xfc8] sm:$0xf]
      %v1339 = vld [vmem:[%s286 + $0xfcc] sm:$0xf]
      %v1340 = vld [vmem:[%s286 + $0xfd0] sm:$0xf]
      %v1341 = vld [vmem:[%s286 + $0xfd4] sm:$0xf]
      %v1342 = vld [vmem:[%s286 + $0xfd8] sm:$0xf]
      %v1343 = vld [vmem:[%s286 + $0xfdc] sm:$0xf]
      %v1344 = vld [vmem:[%s286 + $0xfe0] sm:$0xf]
      %v1345 = vld [vmem:[%s286 + $0xfe4] sm:$0xf]
      %v1346 = vld [vmem:[%s286 + $0xfe8] sm:$0xf]
      %v1347 = vld [vmem:[%s286 + $0xfec] sm:$0xf]
      %v1348 = vld [vmem:[%s286 + $0xff0] sm:$0xf]
      %v1349 = vld [vmem:[%s286 + $0xff4] sm:$0xf]
      %v1350 = vld [vmem:[%s286 + $0xff8] sm:$0xf]
      %v1351 = vld [vmem:[%s286 + $0xffc] sm:$0xf]
      %v1384 = vunpack.c.l.b16 %v296
      %v1385 = vunpack.c.h.b16 %v296
      %v1386 = vunpack.c.l.b16 %v297
      %v1387 = vunpack.c.h.b16 %v297
      %v1388 = vunpack.c.l.b16 %v298
      %v1389 = vunpack.c.h.b16 %v298
      %v1390 = vunpack.c.l.b16 %v299
      %v1391 = vunpack.c.h.b16 %v299
      %v1392 = vunpack.c.l.b16 %v300
      %v1393 = vunpack.c.h.b16 %v300
      %v1394 = vunpack.c.l.b16 %v301
      %v1395 = vunpack.c.h.b16 %v301
      %v1396 = vunpack.c.l.b16 %v302
      %v1397 = vunpack.c.h.b16 %v302
      %v1398 = vunpack.c.l.b16 %v303
      %v1399 = vunpack.c.h.b16 %v303
      %v1400 = vunpack.c.l.b16 %v304
      %v1401 = vunpack.c.h.b16 %v304
      %v1402 = vunpack.c.l.b16 %v305
      %v1403 = vunpack.c.h.b16 %v305
      %v1404 = vunpack.c.l.b16 %v306
      %v1405 = vunpack.c.h.b16 %v306
      %v1406 = vunpack.c.l.b16 %v307
      %v1407 = vunpack.c.h.b16 %v307
      %v1408 = vunpack.c.l.b16 %v308
      %v1409 = vunpack.c.h.b16 %v308
      %v1410 = vunpack.c.l.b16 %v309
      %v1411 = vunpack.c.h.b16 %v309
      %v1412 = vunpack.c.l.b16 %v310
      %v1413 = vunpack.c.h.b16 %v310
      %v1414 = vunpack.c.l.b16 %v311
      %v1415 = vunpack.c.h.b16 %v311
      %v1416 = vunpack.c.l.b16 %v312
      %v1417 = vunpack.c.h.b16 %v312
      %v1418 = vunpack.c.l.b16 %v313
      %v1419 = vunpack.c.h.b16 %v313
      %v1420 = vunpack.c.l.b16 %v314
      %v1421 = vunpack.c.h.b16 %v314
      %v1422 = vunpack.c.l.b16 %v315
      %v1423 = vunpack.c.h.b16 %v315
      %v1424 = vunpack.c.l.b16 %v316
      %v1425 = vunpack.c.h.b16 %v316
      %v1426 = vunpack.c.l.b16 %v317
      %v1427 = vunpack.c.h.b16 %v317
      %v1428 = vunpack.c.l.b16 %v318
      %v1429 = vunpack.c.h.b16 %v318
      %v1430 = vunpack.c.l.b16 %v319
      %v1431 = vunpack.c.h.b16 %v319
      %v1432 = vunpack.c.l.b16 %v320
      %v1433 = vunpack.c.h.b16 %v320
      %v1434 = vunpack.c.l.b16 %v321
      %v1435 = vunpack.c.h.b16 %v321
      %v1436 = vunpack.c.l.b16 %v322
      %v1437 = vunpack.c.h.b16 %v322
      %v1438 = vunpack.c.l.b16 %v323
      %v1439 = vunpack.c.h.b16 %v323
      %v1440 = vunpack.c.l.b16 %v324
      %v1441 = vunpack.c.h.b16 %v324
      %v1442 = vunpack.c.l.b16 %v325
      %v1443 = vunpack.c.h.b16 %v325
      %v1444 = vunpack.c.l.b16 %v326
      %v1445 = vunpack.c.h.b16 %v326
      %v1446 = vunpack.c.l.b16 %v327
      %v1447 = vunpack.c.h.b16 %v327
      %v1448 = vpack.c.b16 %v1384, %v1384
      %v1449 = vpack.c.b16 %v1385, %v1385
      %v1450 = vpack.c.b16 %v1386, %v1386
      %v1451 = vpack.c.b16 %v1387, %v1387
      %v1452 = vpack.c.b16 %v1388, %v1388
      %v1453 = vpack.c.b16 %v1389, %v1389
      %v1454 = vpack.c.b16 %v1390, %v1390
      %v1455 = vpack.c.b16 %v1391, %v1391
      %v1456 = vpack.c.b16 %v1392, %v1392
      %v1457 = vpack.c.b16 %v1393, %v1393
      %v1458 = vpack.c.b16 %v1394, %v1394
      %v1459 = vpack.c.b16 %v1395, %v1395
      %v1460 = vpack.c.b16 %v1396, %v1396
      %v1461 = vpack.c.b16 %v1397, %v1397
      %v1462 = vpack.c.b16 %v1398, %v1398
      %v1463 = vpack.c.b16 %v1399, %v1399
      %v1464 = vpack.c.b16 %v1400, %v1400
      %v1465 = vpack.c.b16 %v1401, %v1401
      %v1466 = vpack.c.b16 %v1402, %v1402
      %v1467 = vpack.c.b16 %v1403, %v1403
      %v1468 = vpack.c.b16 %v1404, %v1404
      %v1469 = vpack.c.b16 %v1405, %v1405
      %v1470 = vpack.c.b16 %v1406, %v1406
      %v1471 = vpack.c.b16 %v1407, %v1407
      %v1472 = vpack.c.b16 %v1408, %v1408
      %v1473 = vpack.c.b16 %v1409, %v1409
      %v1474 = vpack.c.b16 %v1410, %v1410
      %v1475 = vpack.c.b16 %v1411, %v1411
      %v1476 = vpack.c.b16 %v1412, %v1412
      %v1477 = vpack.c.b16 %v1413, %v1413
      %v1478 = vpack.c.b16 %v1414, %v1414
      %v1479 = vpack.c.b16 %v1415, %v1415
      %v1480 = vpack.c.b16 %v1416, %v1416
      %v1481 = vpack.c.b16 %v1417, %v1417
      %v1482 = vpack.c.b16 %v1418, %v1418
      %v1483 = vpack.c.b16 %v1419, %v1419
      %v1484 = vpack.c.b16 %v1420, %v1420
      %v1485 = vpack.c.b16 %v1421, %v1421
      %v1486 = vpack.c.b16 %v1422, %v1422
      %v1487 = vpack.c.b16 %v1423, %v1423
      %v1488 = vpack.c.b16 %v1424, %v1424
      %v1489 = vpack.c.b16 %v1425, %v1425
      %v1490 = vpack.c.b16 %v1426, %v1426
      %v1491 = vpack.c.b16 %v1427, %v1427
      %v1492 = vpack.c.b16 %v1428, %v1428
      %v1493 = vpack.c.b16 %v1429, %v1429
      %v1494 = vpack.c.b16 %v1430, %v1430
      %v1495 = vpack.c.b16 %v1431, %v1431
      %v1496 = vpack.c.b16 %v1432, %v1432
      %v1497 = vpack.c.b16 %v1433, %v1433
      %v1498 = vpack.c.b16 %v1434, %v1434
      %v1499 = vpack.c.b16 %v1435, %v1435
      %v1500 = vpack.c.b16 %v1436, %v1436
      %v1501 = vpack.c.b16 %v1437, %v1437
      %v1502 = vpack.c.b16 %v1438, %v1438
      %v1503 = vpack.c.b16 %v1439, %v1439
      %v1504 = vpack.c.b16 %v1440, %v1440
      %v1505 = vpack.c.b16 %v1441, %v1441
      %v1506 = vpack.c.b16 %v1442, %v1442
      %v1507 = vpack.c.b16 %v1443, %v1443
      %v1508 = vpack.c.b16 %v1444, %v1444
      %v1509 = vpack.c.b16 %v1445, %v1445
      %v1510 = vpack.c.b16 %v1446, %v1446
      %v1511 = vpack.c.b16 %v1447, %v1447
      %v2600 = vunpack.c.l.b16 %v328
      %v2601 = vunpack.c.l.b16 %v329
      %v2602 = vunpack.c.l.b16 %v330
      %v2603 = vunpack.c.l.b16 %v331
      %v2604 = vunpack.c.l.b16 %v332
      %v2605 = vunpack.c.l.b16 %v333
      %v2606 = vunpack.c.l.b16 %v334
      %v2607 = vunpack.c.l.b16 %v335
      %v2608 = vunpack.c.l.b16 %v336
      %v2609 = vunpack.c.l.b16 %v337
      %v2610 = vunpack.c.l.b16 %v338
      %v2611 = vunpack.c.l.b16 %v339
      %v2612 = vunpack.c.l.b16 %v340
      %v2613 = vunpack.c.l.b16 %v341
      %v2614 = vunpack.c.l.b16 %v342
      %v2615 = vunpack.c.l.b16 %v343
      %v2616 = vunpack.c.l.b16 %v344
      %v2617 = vunpack.c.l.b16 %v345
      %v2618 = vunpack.c.l.b16 %v346
      %v2619 = vunpack.c.l.b16 %v347
      %v2620 = vunpack.c.l.b16 %v348
      %v2621 = vunpack.c.l.b16 %v349
      %v2622 = vunpack.c.l.b16 %v350
      %v2623 = vunpack.c.l.b16 %v351
      %v2624 = vunpack.c.l.b16 %v352
      %v2625 = vunpack.c.l.b16 %v353
      %v2626 = vunpack.c.l.b16 %v354
      %v2627 = vunpack.c.l.b16 %v355
      %v2628 = vunpack.c.l.b16 %v356
      %v2629 = vunpack.c.l.b16 %v357
      %v2630 = vunpack.c.l.b16 %v358
      %v2631 = vunpack.c.l.b16 %v359
      %v2632 = vunpack.c.l.b16 %v360
      %v2633 = vunpack.c.l.b16 %v361
      %v2634 = vunpack.c.l.b16 %v362
      %v2635 = vunpack.c.l.b16 %v363
      %v2636 = vunpack.c.l.b16 %v364
      %v2637 = vunpack.c.l.b16 %v365
      %v2638 = vunpack.c.l.b16 %v366
      %v2639 = vunpack.c.l.b16 %v367
      %v2640 = vunpack.c.l.b16 %v368
      %v2641 = vunpack.c.l.b16 %v369
      %v2642 = vunpack.c.l.b16 %v370
      %v2643 = vunpack.c.l.b16 %v371
      %v2644 = vunpack.c.l.b16 %v372
      %v2645 = vunpack.c.l.b16 %v373
      %v2646 = vunpack.c.l.b16 %v374
      %v2647 = vunpack.c.l.b16 %v375
      %v2648 = vunpack.c.l.b16 %v376
      %v2649 = vunpack.c.l.b16 %v377
      %v2650 = vunpack.c.l.b16 %v378
      %v2651 = vunpack.c.l.b16 %v379
      %v2652 = vunpack.c.l.b16 %v380
      %v2653 = vunpack.c.l.b16 %v381
      %v2654 = vunpack.c.l.b16 %v382
      %v2655 = vunpack.c.l.b16 %v383
      %v2656 = vunpack.c.l.b16 %v384
      %v2657 = vunpack.c.l.b16 %v385
      %v2658 = vunpack.c.l.b16 %v386
      %v2659 = vunpack.c.l.b16 %v387
      %v2660 = vunpack.c.l.b16 %v388
      %v2661 = vunpack.c.l.b16 %v389
      %v2662 = vunpack.c.l.b16 %v390
      %v2663 = vunpack.c.l.b16 %v391
      %v2664 = vunpack.c.l.b16 %v392
      %v2665 = vunpack.c.l.b16 %v393
      %v2666 = vunpack.c.l.b16 %v394
      %v2667 = vunpack.c.l.b16 %v395
      %v2668 = vunpack.c.l.b16 %v396
      %v2669 = vunpack.c.l.b16 %v397
      %v2670 = vunpack.c.l.b16 %v398
      %v2671 = vunpack.c.l.b16 %v399
      %v2672 = vunpack.c.l.b16 %v400
      %v2673 = vunpack.c.l.b16 %v401
      %v2674 = vunpack.c.l.b16 %v402
      %v2675 = vunpack.c.l.b16 %v403
      %v2676 = vunpack.c.l.b16 %v404
      %v2677 = vunpack.c.l.b16 %v405
      %v2678 = vunpack.c.l.b16 %v406
      %v2679 = vunpack.c.l.b16 %v407
      %v2680 = vunpack.c.l.b16 %v408
      %v2681 = vunpack.c.l.b16 %v409
      %v2682 = vunpack.c.l.b16 %v410
      %v2683 = vunpack.c.l.b16 %v411
      %v2684 = vunpack.c.l.b16 %v412
      %v2685 = vunpack.c.l.b16 %v413
      %v2686 = vunpack.c.l.b16 %v414
      %v2687 = vunpack.c.l.b16 %v415
      %v2688 = vunpack.c.l.b16 %v416
      %v2689 = vunpack.c.l.b16 %v417
      %v2690 = vunpack.c.l.b16 %v418
      %v2691 = vunpack.c.l.b16 %v419
      %v2692 = vunpack.c.l.b16 %v420
      %v2693 = vunpack.c.l.b16 %v421
      %v2694 = vunpack.c.l.b16 %v422
      %v2695 = vunpack.c.l.b16 %v423
      %v2696 = vunpack.c.l.b16 %v424
      %v2697 = vunpack.c.l.b16 %v425
      %v2698 = vunpack.c.l.b16 %v426
      %v2699 = vunpack.c.l.b16 %v427
      %v2700 = vunpack.c.l.b16 %v428
      %v2701 = vunpack.c.l.b16 %v429
      %v2702 = vunpack.c.l.b16 %v430
      %v2703 = vunpack.c.l.b16 %v431
      %v2704 = vunpack.c.l.b16 %v432
      %v2705 = vunpack.c.l.b16 %v433
      %v2706 = vunpack.c.l.b16 %v434
      %v2707 = vunpack.c.l.b16 %v435
      %v2708 = vunpack.c.l.b16 %v436
      %v2709 = vunpack.c.l.b16 %v437
      %v2710 = vunpack.c.l.b16 %v438
      %v2711 = vunpack.c.l.b16 %v439
      %v2712 = vunpack.c.l.b16 %v440
      %v2713 = vunpack.c.l.b16 %v441
      %v2714 = vunpack.c.l.b16 %v442
      %v2715 = vunpack.c.l.b16 %v443
      %v2716 = vunpack.c.l.b16 %v444
      %v2717 = vunpack.c.l.b16 %v445
      %v2718 = vunpack.c.l.b16 %v446
      %v2719 = vunpack.c.l.b16 %v447
      %v2720 = vunpack.c.l.b16 %v448
      %v2721 = vunpack.c.l.b16 %v449
      %v2722 = vunpack.c.l.b16 %v450
      %v2723 = vunpack.c.l.b16 %v451
      %v2724 = vunpack.c.l.b16 %v452
      %v2725 = vunpack.c.l.b16 %v453
      %v2726 = vunpack.c.l.b16 %v454
      %v2727 = vunpack.c.l.b16 %v455
      %v2728 = vunpack.c.l.b16 %v456
      %v2729 = vunpack.c.l.b16 %v457
      %v2730 = vunpack.c.l.b16 %v458
      %v2731 = vunpack.c.l.b16 %v459
      %v2732 = vunpack.c.l.b16 %v460
      %v2733 = vunpack.c.l.b16 %v461
      %v2734 = vunpack.c.l.b16 %v462
      %v2735 = vunpack.c.l.b16 %v463
      %v2736 = vunpack.c.l.b16 %v464
      %v2737 = vunpack.c.l.b16 %v465
      %v2738 = vunpack.c.l.b16 %v466
      %v2739 = vunpack.c.l.b16 %v467
      %v2740 = vunpack.c.l.b16 %v468
      %v2741 = vunpack.c.l.b16 %v469
      %v2742 = vunpack.c.l.b16 %v470
      %v2743 = vunpack.c.l.b16 %v471
      %v2744 = vunpack.c.l.b16 %v472
      %v2745 = vunpack.c.l.b16 %v473
      %v2746 = vunpack.c.l.b16 %v474
      %v2747 = vunpack.c.l.b16 %v475
      %v2748 = vunpack.c.l.b16 %v476
      %v2749 = vunpack.c.l.b16 %v477
      %v2750 = vunpack.c.l.b16 %v478
      %v2751 = vunpack.c.l.b16 %v479
      %v2752 = vunpack.c.l.b16 %v480
      %v2753 = vunpack.c.l.b16 %v481
      %v2754 = vunpack.c.l.b16 %v482
      %v2755 = vunpack.c.l.b16 %v483
      %v2756 = vunpack.c.l.b16 %v484
      %v2757 = vunpack.c.l.b16 %v485
      %v2758 = vunpack.c.l.b16 %v486
      %v2759 = vunpack.c.l.b16 %v487
      %v2760 = vunpack.c.l.b16 %v488
      %v2761 = vunpack.c.l.b16 %v489
      %v2762 = vunpack.c.l.b16 %v490
      %v2763 = vunpack.c.l.b16 %v491
      %v2764 = vunpack.c.l.b16 %v492
      %v2765 = vunpack.c.l.b16 %v493
      %v2766 = vunpack.c.l.b16 %v494
      %v2767 = vunpack.c.l.b16 %v495
      %v2768 = vunpack.c.l.b16 %v496
      %v2769 = vunpack.c.l.b16 %v497
      %v2770 = vunpack.c.l.b16 %v498
      %v2771 = vunpack.c.l.b16 %v499
      %v2772 = vunpack.c.l.b16 %v500
      %v2773 = vunpack.c.l.b16 %v501
      %v2774 = vunpack.c.l.b16 %v502
      %v2775 = vunpack.c.l.b16 %v503
      %v2776 = vunpack.c.l.b16 %v504
      %v2777 = vunpack.c.l.b16 %v505
      %v2778 = vunpack.c.l.b16 %v506
      %v2779 = vunpack.c.l.b16 %v507
      %v2780 = vunpack.c.l.b16 %v508
      %v2781 = vunpack.c.l.b16 %v509
      %v2782 = vunpack.c.l.b16 %v510
      %v2783 = vunpack.c.l.b16 %v511
      %v2784 = vunpack.c.l.b16 %v512
      %v2785 = vunpack.c.l.b16 %v513
      %v2786 = vunpack.c.l.b16 %v514
      %v2787 = vunpack.c.l.b16 %v515
      %v2788 = vunpack.c.l.b16 %v516
      %v2789 = vunpack.c.l.b16 %v517
      %v2790 = vunpack.c.l.b16 %v518
      %v2791 = vunpack.c.l.b16 %v519
      %v2792 = vunpack.c.l.b16 %v520
      %v2793 = vunpack.c.l.b16 %v521
      %v2794 = vunpack.c.l.b16 %v522
      %v2795 = vunpack.c.l.b16 %v523
      %v2796 = vunpack.c.l.b16 %v524
      %v2797 = vunpack.c.l.b16 %v525
      %v2798 = vunpack.c.l.b16 %v526
      %v2799 = vunpack.c.l.b16 %v527
      %v2800 = vunpack.c.l.b16 %v528
      %v2801 = vunpack.c.l.b16 %v529
      %v2802 = vunpack.c.l.b16 %v530
      %v2803 = vunpack.c.l.b16 %v531
      %v2804 = vunpack.c.l.b16 %v532
      %v2805 = vunpack.c.l.b16 %v533
      %v2806 = vunpack.c.l.b16 %v534
      %v2807 = vunpack.c.l.b16 %v535
      %v2808 = vunpack.c.l.b16 %v536
      %v2809 = vunpack.c.l.b16 %v537
      %v2810 = vunpack.c.l.b16 %v538
      %v2811 = vunpack.c.l.b16 %v539
      %v2812 = vunpack.c.l.b16 %v540
      %v2813 = vunpack.c.l.b16 %v541
      %v2814 = vunpack.c.l.b16 %v542
      %v2815 = vunpack.c.l.b16 %v543
      %v2816 = vunpack.c.l.b16 %v544
      %v2817 = vunpack.c.l.b16 %v545
      %v2818 = vunpack.c.l.b16 %v546
      %v2819 = vunpack.c.l.b16 %v547
      %v2820 = vunpack.c.l.b16 %v548
      %v2821 = vunpack.c.l.b16 %v549
      %v2822 = vunpack.c.l.b16 %v550
      %v2823 = vunpack.c.l.b16 %v551
      %v2824 = vunpack.c.l.b16 %v552
      %v2825 = vunpack.c.l.b16 %v553
      %v2826 = vunpack.c.l.b16 %v554
      %v2827 = vunpack.c.l.b16 %v555
      %v2828 = vunpack.c.l.b16 %v556
      %v2829 = vunpack.c.l.b16 %v557
      %v2830 = vunpack.c.l.b16 %v558
      %v2831 = vunpack.c.l.b16 %v559
      %v2832 = vunpack.c.l.b16 %v560
      %v2833 = vunpack.c.l.b16 %v561
      %v2834 = vunpack.c.l.b16 %v562
      %v2835 = vunpack.c.l.b16 %v563
      %v2836 = vunpack.c.l.b16 %v564
      %v2837 = vunpack.c.l.b16 %v565
      %v2838 = vunpack.c.l.b16 %v566
      %v2839 = vunpack.c.l.b16 %v567
      %v2840 = vunpack.c.l.b16 %v568
      %v2841 = vunpack.c.l.b16 %v569
      %v2842 = vunpack.c.l.b16 %v570
      %v2843 = vunpack.c.l.b16 %v571
      %v2844 = vunpack.c.l.b16 %v572
      %v2845 = vunpack.c.l.b16 %v573
      %v2846 = vunpack.c.l.b16 %v574
      %v2847 = vunpack.c.l.b16 %v575
      %v2848 = vunpack.c.l.b16 %v576
      %v2849 = vunpack.c.l.b16 %v577
      %v2850 = vunpack.c.l.b16 %v578
      %v2851 = vunpack.c.l.b16 %v579
      %v2852 = vunpack.c.l.b16 %v580
      %v2853 = vunpack.c.l.b16 %v581
      %v2854 = vunpack.c.l.b16 %v582
      %v2855 = vunpack.c.l.b16 %v583
      %v2856 = vunpack.c.l.b16 %v584
      %v2857 = vunpack.c.l.b16 %v585
      %v2858 = vunpack.c.l.b16 %v586
      %v2859 = vunpack.c.l.b16 %v587
      %v2860 = vunpack.c.l.b16 %v588
      %v2861 = vunpack.c.l.b16 %v589
      %v2862 = vunpack.c.l.b16 %v590
      %v2863 = vunpack.c.l.b16 %v591
      %v2864 = vunpack.c.l.b16 %v592
      %v2865 = vunpack.c.l.b16 %v593
      %v2866 = vunpack.c.l.b16 %v594
      %v2867 = vunpack.c.l.b16 %v595
      %v2868 = vunpack.c.l.b16 %v596
      %v2869 = vunpack.c.l.b16 %v597
      %v2870 = vunpack.c.l.b16 %v598
      %v2871 = vunpack.c.l.b16 %v599
      %v2872 = vunpack.c.l.b16 %v600
      %v2873 = vunpack.c.l.b16 %v601
      %v2874 = vunpack.c.l.b16 %v602
      %v2875 = vunpack.c.l.b16 %v603
      %v2876 = vunpack.c.l.b16 %v604
      %v2877 = vunpack.c.l.b16 %v605
      %v2878 = vunpack.c.l.b16 %v606
      %v2879 = vunpack.c.l.b16 %v607
      %v2880 = vunpack.c.l.b16 %v608
      %v2881 = vunpack.c.l.b16 %v609
      %v2882 = vunpack.c.l.b16 %v610
      %v2883 = vunpack.c.l.b16 %v611
      %v2884 = vunpack.c.l.b16 %v612
      %v2885 = vunpack.c.l.b16 %v613
      %v2886 = vunpack.c.l.b16 %v614
      %v2887 = vunpack.c.l.b16 %v615
      %v2888 = vunpack.c.l.b16 %v616
      %v2889 = vunpack.c.l.b16 %v617
      %v2890 = vunpack.c.l.b16 %v618
      %v2891 = vunpack.c.l.b16 %v619
      %v2892 = vunpack.c.l.b16 %v620
      %v2893 = vunpack.c.l.b16 %v621
      %v2894 = vunpack.c.l.b16 %v622
      %v2895 = vunpack.c.l.b16 %v623
      %v2896 = vunpack.c.l.b16 %v624
      %v2897 = vunpack.c.l.b16 %v625
      %v2898 = vunpack.c.l.b16 %v626
      %v2899 = vunpack.c.l.b16 %v627
      %v2900 = vunpack.c.l.b16 %v628
      %v2901 = vunpack.c.l.b16 %v629
      %v2902 = vunpack.c.l.b16 %v630
      %v2903 = vunpack.c.l.b16 %v631
      %v2904 = vunpack.c.l.b16 %v632
      %v2905 = vunpack.c.l.b16 %v633
      %v2906 = vunpack.c.l.b16 %v634
      %v2907 = vunpack.c.l.b16 %v635
      %v2908 = vunpack.c.l.b16 %v636
      %v2909 = vunpack.c.l.b16 %v637
      %v2910 = vunpack.c.l.b16 %v638
      %v2911 = vunpack.c.l.b16 %v639
      %v2912 = vunpack.c.l.b16 %v640
      %v2913 = vunpack.c.l.b16 %v641
      %v2914 = vunpack.c.l.b16 %v642
      %v2915 = vunpack.c.l.b16 %v643
      %v2916 = vunpack.c.l.b16 %v644
      %v2917 = vunpack.c.l.b16 %v645
      %v2918 = vunpack.c.l.b16 %v646
      %v2919 = vunpack.c.l.b16 %v647
      %v2920 = vunpack.c.l.b16 %v648
      %v2921 = vunpack.c.l.b16 %v649
      %v2922 = vunpack.c.l.b16 %v650
      %v2923 = vunpack.c.l.b16 %v651
      %v2924 = vunpack.c.l.b16 %v652
      %v2925 = vunpack.c.l.b16 %v653
      %v2926 = vunpack.c.l.b16 %v654
      %v2927 = vunpack.c.l.b16 %v655
      %v2928 = vunpack.c.l.b16 %v656
      %v2929 = vunpack.c.l.b16 %v657
      %v2930 = vunpack.c.l.b16 %v658
      %v2931 = vunpack.c.l.b16 %v659
      %v2932 = vunpack.c.l.b16 %v660
      %v2933 = vunpack.c.l.b16 %v661
      %v2934 = vunpack.c.l.b16 %v662
      %v2935 = vunpack.c.l.b16 %v663
      %v2936 = vunpack.c.l.b16 %v664
      %v2937 = vunpack.c.l.b16 %v665
      %v2938 = vunpack.c.l.b16 %v666
      %v2939 = vunpack.c.l.b16 %v667
      %v2940 = vunpack.c.l.b16 %v668
      %v2941 = vunpack.c.l.b16 %v669
      %v2942 = vunpack.c.l.b16 %v670
      %v2943 = vunpack.c.l.b16 %v671
      %v2944 = vunpack.c.l.b16 %v672
      %v2945 = vunpack.c.l.b16 %v673
      %v2946 = vunpack.c.l.b16 %v674
      %v2947 = vunpack.c.l.b16 %v675
      %v2948 = vunpack.c.l.b16 %v676
      %v2949 = vunpack.c.l.b16 %v677
      %v2950 = vunpack.c.l.b16 %v678
      %v2951 = vunpack.c.l.b16 %v679
      %v2952 = vunpack.c.l.b16 %v680
      %v2953 = vunpack.c.l.b16 %v681
      %v2954 = vunpack.c.l.b16 %v682
      %v2955 = vunpack.c.l.b16 %v683
      %v2956 = vunpack.c.l.b16 %v684
      %v2957 = vunpack.c.l.b16 %v685
      %v2958 = vunpack.c.l.b16 %v686
      %v2959 = vunpack.c.l.b16 %v687
      %v2960 = vunpack.c.l.b16 %v688
      %v2961 = vunpack.c.l.b16 %v689
      %v2962 = vunpack.c.l.b16 %v690
      %v2963 = vunpack.c.l.b16 %v691
      %v2964 = vunpack.c.l.b16 %v692
      %v2965 = vunpack.c.l.b16 %v693
      %v2966 = vunpack.c.l.b16 %v694
      %v2967 = vunpack.c.l.b16 %v695
      %v2968 = vunpack.c.l.b16 %v696
      %v2969 = vunpack.c.l.b16 %v697
      %v2970 = vunpack.c.l.b16 %v698
      %v2971 = vunpack.c.l.b16 %v699
      %v2972 = vunpack.c.l.b16 %v700
      %v2973 = vunpack.c.l.b16 %v701
      %v2974 = vunpack.c.l.b16 %v702
      %v2975 = vunpack.c.l.b16 %v703
      %v2976 = vunpack.c.l.b16 %v704
      %v2977 = vunpack.c.l.b16 %v705
      %v2978 = vunpack.c.l.b16 %v706
      %v2979 = vunpack.c.l.b16 %v707
      %v2980 = vunpack.c.l.b16 %v708
      %v2981 = vunpack.c.l.b16 %v709
      %v2982 = vunpack.c.l.b16 %v710
      %v2983 = vunpack.c.l.b16 %v711
      %v2984 = vunpack.c.l.b16 %v712
      %v2985 = vunpack.c.l.b16 %v713
      %v2986 = vunpack.c.l.b16 %v714
      %v2987 = vunpack.c.l.b16 %v715
      %v2988 = vunpack.c.l.b16 %v716
      %v2989 = vunpack.c.l.b16 %v717
      %v2990 = vunpack.c.l.b16 %v718
      %v2991 = vunpack.c.l.b16 %v719
      %v2992 = vunpack.c.l.b16 %v720
      %v2993 = vunpack.c.l.b16 %v721
      %v2994 = vunpack.c.l.b16 %v722
      %v2995 = vunpack.c.l.b16 %v723
      %v2996 = vunpack.c.l.b16 %v724
      %v2997 = vunpack.c.l.b16 %v725
      %v2998 = vunpack.c.l.b16 %v726
      %v2999 = vunpack.c.l.b16 %v727
      %v3000 = vunpack.c.l.b16 %v728
      %v3001 = vunpack.c.l.b16 %v729
      %v3002 = vunpack.c.l.b16 %v730
      %v3003 = vunpack.c.l.b16 %v731
      %v3004 = vunpack.c.l.b16 %v732
      %v3005 = vunpack.c.l.b16 %v733
      %v3006 = vunpack.c.l.b16 %v734
      %v3007 = vunpack.c.l.b16 %v735
      %v3008 = vunpack.c.l.b16 %v736
      %v3009 = vunpack.c.l.b16 %v737
      %v3010 = vunpack.c.l.b16 %v738
      %v3011 = vunpack.c.l.b16 %v739
      %v3012 = vunpack.c.l.b16 %v740
      %v3013 = vunpack.c.l.b16 %v741
      %v3014 = vunpack.c.l.b16 %v742
      %v3015 = vunpack.c.l.b16 %v743
      %v3016 = vunpack.c.l.b16 %v744
      %v3017 = vunpack.c.l.b16 %v745
      %v3018 = vunpack.c.l.b16 %v746
      %v3019 = vunpack.c.l.b16 %v747
      %v3020 = vunpack.c.l.b16 %v748
      %v3021 = vunpack.c.l.b16 %v749
      %v3022 = vunpack.c.l.b16 %v750
      %v3023 = vunpack.c.l.b16 %v751
      %v3024 = vunpack.c.l.b16 %v752
      %v3025 = vunpack.c.l.b16 %v753
      %v3026 = vunpack.c.l.b16 %v754
      %v3027 = vunpack.c.l.b16 %v755
      %v3028 = vunpack.c.l.b16 %v756
      %v3029 = vunpack.c.l.b16 %v757
      %v3030 = vunpack.c.l.b16 %v758
      %v3031 = vunpack.c.l.b16 %v759
      %v3032 = vunpack.c.l.b16 %v760
      %v3033 = vunpack.c.l.b16 %v761
      %v3034 = vunpack.c.l.b16 %v762
      %v3035 = vunpack.c.l.b16 %v763
      %v3036 = vunpack.c.l.b16 %v764
      %v3037 = vunpack.c.l.b16 %v765
      %v3038 = vunpack.c.l.b16 %v766
      %v3039 = vunpack.c.l.b16 %v767
      %v3040 = vunpack.c.l.b16 %v768
      %v3041 = vunpack.c.l.b16 %v769
      %v3042 = vunpack.c.l.b16 %v770
      %v3043 = vunpack.c.l.b16 %v771
      %v3044 = vunpack.c.l.b16 %v772
      %v3045 = vunpack.c.l.b16 %v773
      %v3046 = vunpack.c.l.b16 %v774
      %v3047 = vunpack.c.l.b16 %v775
      %v3048 = vunpack.c.l.b16 %v776
      %v3049 = vunpack.c.l.b16 %v777
      %v3050 = vunpack.c.l.b16 %v778
      %v3051 = vunpack.c.l.b16 %v779
      %v3052 = vunpack.c.l.b16 %v780
      %v3053 = vunpack.c.l.b16 %v781
      %v3054 = vunpack.c.l.b16 %v782
      %v3055 = vunpack.c.l.b16 %v783
      %v3056 = vunpack.c.l.b16 %v784
      %v3057 = vunpack.c.l.b16 %v785
      %v3058 = vunpack.c.l.b16 %v786
      %v3059 = vunpack.c.l.b16 %v787
      %v3060 = vunpack.c.l.b16 %v788
      %v3061 = vunpack.c.l.b16 %v789
      %v3062 = vunpack.c.l.b16 %v790
      %v3063 = vunpack.c.l.b16 %v791
      %v3064 = vunpack.c.l.b16 %v792
      %v3065 = vunpack.c.l.b16 %v793
      %v3066 = vunpack.c.l.b16 %v794
      %v3067 = vunpack.c.l.b16 %v795
      %v3068 = vunpack.c.l.b16 %v796
      %v3069 = vunpack.c.l.b16 %v797
      %v3070 = vunpack.c.l.b16 %v798
      %v3071 = vunpack.c.l.b16 %v799
      %v3072 = vunpack.c.l.b16 %v800
      %v3073 = vunpack.c.l.b16 %v801
      %v3074 = vunpack.c.l.b16 %v802
      %v3075 = vunpack.c.l.b16 %v803
      %v3076 = vunpack.c.l.b16 %v804
      %v3077 = vunpack.c.l.b16 %v805
      %v3078 = vunpack.c.l.b16 %v806
      %v3079 = vunpack.c.l.b16 %v807
      %v3080 = vunpack.c.l.b16 %v808
      %v3081 = vunpack.c.l.b16 %v809
      %v3082 = vunpack.c.l.b16 %v810
      %v3083 = vunpack.c.l.b16 %v811
      %v3084 = vunpack.c.l.b16 %v812
      %v3085 = vunpack.c.l.b16 %v813
      %v3086 = vunpack.c.l.b16 %v814
      %v3087 = vunpack.c.l.b16 %v815
      %v3088 = vunpack.c.l.b16 %v816
      %v3089 = vunpack.c.l.b16 %v817
      %v3090 = vunpack.c.l.b16 %v818
      %v3091 = vunpack.c.l.b16 %v819
      %v3092 = vunpack.c.l.b16 %v820
      %v3093 = vunpack.c.l.b16 %v821
      %v3094 = vunpack.c.l.b16 %v822
      %v3095 = vunpack.c.l.b16 %v823
      %v3096 = vunpack.c.l.b16 %v824
      %v3097 = vunpack.c.l.b16 %v825
      %v3098 = vunpack.c.l.b16 %v826
      %v3099 = vunpack.c.l.b16 %v827
      %v3100 = vunpack.c.l.b16 %v828
      %v3101 = vunpack.c.l.b16 %v829
      %v3102 = vunpack.c.l.b16 %v830
      %v3103 = vunpack.c.l.b16 %v831
      %v3104 = vunpack.c.l.b16 %v832
      %v3105 = vunpack.c.l.b16 %v833
      %v3106 = vunpack.c.l.b16 %v834
      %v3107 = vunpack.c.l.b16 %v835
      %v3108 = vunpack.c.l.b16 %v836
      %v3109 = vunpack.c.l.b16 %v837
      %v3110 = vunpack.c.l.b16 %v838
      %v3111 = vunpack.c.l.b16 %v839
      %v3112 = vunpack.c.l.b16 %v840
      %v3113 = vunpack.c.l.b16 %v841
      %v3114 = vunpack.c.l.b16 %v842
      %v3115 = vunpack.c.l.b16 %v843
      %v3116 = vunpack.c.l.b16 %v844
      %v3117 = vunpack.c.l.b16 %v845
      %v3118 = vunpack.c.l.b16 %v846
      %v3119 = vunpack.c.l.b16 %v847
      %v3120 = vunpack.c.l.b16 %v848
      %v3121 = vunpack.c.l.b16 %v849
      %v3122 = vunpack.c.l.b16 %v850
      %v3123 = vunpack.c.l.b16 %v851
      %v3124 = vunpack.c.l.b16 %v852
      %v3125 = vunpack.c.l.b16 %v853
      %v3126 = vunpack.c.l.b16 %v854
      %v3127 = vunpack.c.l.b16 %v855
      %v3128 = vunpack.c.l.b16 %v856
      %v3129 = vunpack.c.l.b16 %v857
      %v3130 = vunpack.c.l.b16 %v858
      %v3131 = vunpack.c.l.b16 %v859
      %v3132 = vunpack.c.l.b16 %v860
      %v3133 = vunpack.c.l.b16 %v861
      %v3134 = vunpack.c.l.b16 %v862
      %v3135 = vunpack.c.l.b16 %v863
      %v3136 = vunpack.c.l.b16 %v864
      %v3137 = vunpack.c.l.b16 %v865
      %v3138 = vunpack.c.l.b16 %v866
      %v3139 = vunpack.c.l.b16 %v867
      %v3140 = vunpack.c.l.b16 %v868
      %v3141 = vunpack.c.l.b16 %v869
      %v3142 = vunpack.c.l.b16 %v870
      %v3143 = vunpack.c.l.b16 %v871
      %v3144 = vunpack.c.l.b16 %v872
      %v3145 = vunpack.c.l.b16 %v873
      %v3146 = vunpack.c.l.b16 %v874
      %v3147 = vunpack.c.l.b16 %v875
      %v3148 = vunpack.c.l.b16 %v876
      %v3149 = vunpack.c.l.b16 %v877
      %v3150 = vunpack.c.l.b16 %v878
      %v3151 = vunpack.c.l.b16 %v879
      %v3152 = vunpack.c.l.b16 %v880
      %v3153 = vunpack.c.l.b16 %v881
      %v3154 = vunpack.c.l.b16 %v882
      %v3155 = vunpack.c.l.b16 %v883
      %v3156 = vunpack.c.l.b16 %v884
      %v3157 = vunpack.c.l.b16 %v885
      %v3158 = vunpack.c.l.b16 %v886
      %v3159 = vunpack.c.l.b16 %v887
      %v3160 = vunpack.c.l.b16 %v888
      %v3161 = vunpack.c.l.b16 %v889
      %v3162 = vunpack.c.l.b16 %v890
      %v3163 = vunpack.c.l.b16 %v891
      %v3164 = vunpack.c.l.b16 %v892
      %v3165 = vunpack.c.l.b16 %v893
      %v3166 = vunpack.c.l.b16 %v894
      %v3167 = vunpack.c.l.b16 %v895
      %v3168 = vunpack.c.l.b16 %v896
      %v3169 = vunpack.c.l.b16 %v897
      %v3170 = vunpack.c.l.b16 %v898
      %v3171 = vunpack.c.l.b16 %v899
      %v3172 = vunpack.c.l.b16 %v900
      %v3173 = vunpack.c.l.b16 %v901
      %v3174 = vunpack.c.l.b16 %v902
      %v3175 = vunpack.c.l.b16 %v903
      %v3176 = vunpack.c.l.b16 %v904
      %v3177 = vunpack.c.l.b16 %v905
      %v3178 = vunpack.c.l.b16 %v906
      %v3179 = vunpack.c.l.b16 %v907
      %v3180 = vunpack.c.l.b16 %v908
      %v3181 = vunpack.c.l.b16 %v909
      %v3182 = vunpack.c.l.b16 %v910
      %v3183 = vunpack.c.l.b16 %v911
      %v3184 = vunpack.c.l.b16 %v912
      %v3185 = vunpack.c.l.b16 %v913
      %v3186 = vunpack.c.l.b16 %v914
      %v3187 = vunpack.c.l.b16 %v915
      %v3188 = vunpack.c.l.b16 %v916
      %v3189 = vunpack.c.l.b16 %v917
      %v3190 = vunpack.c.l.b16 %v918
      %v3191 = vunpack.c.l.b16 %v919
      %v3192 = vunpack.c.l.b16 %v920
      %v3193 = vunpack.c.l.b16 %v921
      %v3194 = vunpack.c.l.b16 %v922
      %v3195 = vunpack.c.l.b16 %v923
      %v3196 = vunpack.c.l.b16 %v924
      %v3197 = vunpack.c.l.b16 %v925
      %v3198 = vunpack.c.l.b16 %v926
      %v3199 = vunpack.c.l.b16 %v927
      %v3200 = vunpack.c.l.b16 %v928
      %v3201 = vunpack.c.l.b16 %v929
      %v3202 = vunpack.c.l.b16 %v930
      %v3203 = vunpack.c.l.b16 %v931
      %v3204 = vunpack.c.l.b16 %v932
      %v3205 = vunpack.c.l.b16 %v933
      %v3206 = vunpack.c.l.b16 %v934
      %v3207 = vunpack.c.l.b16 %v935
      %v3208 = vunpack.c.l.b16 %v936
      %v3209 = vunpack.c.l.b16 %v937
      %v3210 = vunpack.c.l.b16 %v938
      %v3211 = vunpack.c.l.b16 %v939
      %v3212 = vunpack.c.l.b16 %v940
      %v3213 = vunpack.c.l.b16 %v941
      %v3214 = vunpack.c.l.b16 %v942
      %v3215 = vunpack.c.l.b16 %v943
      %v3216 = vunpack.c.l.b16 %v944
      %v3217 = vunpack.c.l.b16 %v945
      %v3218 = vunpack.c.l.b16 %v946
      %v3219 = vunpack.c.l.b16 %v947
      %v3220 = vunpack.c.l.b16 %v948
      %v3221 = vunpack.c.l.b16 %v949
      %v3222 = vunpack.c.l.b16 %v950
      %v3223 = vunpack.c.l.b16 %v951
      %v3224 = vunpack.c.l.b16 %v952
      %v3225 = vunpack.c.l.b16 %v953
      %v3226 = vunpack.c.l.b16 %v954
      %v3227 = vunpack.c.l.b16 %v955
      %v3228 = vunpack.c.l.b16 %v956
      %v3229 = vunpack.c.l.b16 %v957
      %v3230 = vunpack.c.l.b16 %v958
      %v3231 = vunpack.c.l.b16 %v959
      %v3232 = vunpack.c.l.b16 %v960
      %v3233 = vunpack.c.l.b16 %v961
      %v3234 = vunpack.c.l.b16 %v962
      %v3235 = vunpack.c.l.b16 %v963
      %v3236 = vunpack.c.l.b16 %v964
      %v3237 = vunpack.c.l.b16 %v965
      %v3238 = vunpack.c.l.b16 %v966
      %v3239 = vunpack.c.l.b16 %v967
      %v3240 = vunpack.c.l.b16 %v968
      %v3241 = vunpack.c.l.b16 %v969
      %v3242 = vunpack.c.l.b16 %v970
      %v3243 = vunpack.c.l.b16 %v971
      %v3244 = vunpack.c.l.b16 %v972
      %v3245 = vunpack.c.l.b16 %v973
      %v3246 = vunpack.c.l.b16 %v974
      %v3247 = vunpack.c.l.b16 %v975
      %v3248 = vunpack.c.l.b16 %v976
      %v3249 = vunpack.c.l.b16 %v977
      %v3250 = vunpack.c.l.b16 %v978
      %v3251 = vunpack.c.l.b16 %v979
      %v3252 = vunpack.c.l.b16 %v980
      %v3253 = vunpack.c.l.b16 %v981
      %v3254 = vunpack.c.l.b16 %v982
      %v3255 = vunpack.c.l.b16 %v983
      %v3256 = vunpack.c.l.b16 %v984
      %v3257 = vunpack.c.l.b16 %v985
      %v3258 = vunpack.c.l.b16 %v986
      %v3259 = vunpack.c.l.b16 %v987
      %v3260 = vunpack.c.l.b16 %v988
      %v3261 = vunpack.c.l.b16 %v989
      %v3262 = vunpack.c.l.b16 %v990
      %v3263 = vunpack.c.l.b16 %v991
      %v3264 = vunpack.c.l.b16 %v992
      %v3265 = vunpack.c.l.b16 %v993
      %v3266 = vunpack.c.l.b16 %v994
      %v3267 = vunpack.c.l.b16 %v995
      %v3268 = vunpack.c.l.b16 %v996
      %v3269 = vunpack.c.l.b16 %v997
      %v3270 = vunpack.c.l.b16 %v998
      %v3271 = vunpack.c.l.b16 %v999
      %v3272 = vunpack.c.l.b16 %v1000
      %v3273 = vunpack.c.l.b16 %v1001
      %v3274 = vunpack.c.l.b16 %v1002
      %v3275 = vunpack.c.l.b16 %v1003
      %v3276 = vunpack.c.l.b16 %v1004
      %v3277 = vunpack.c.l.b16 %v1005
      %v3278 = vunpack.c.l.b16 %v1006
      %v3279 = vunpack.c.l.b16 %v1007
      %v3280 = vunpack.c.l.b16 %v1008
      %v3281 = vunpack.c.l.b16 %v1009
      %v3282 = vunpack.c.l.b16 %v1010
      %v3283 = vunpack.c.l.b16 %v1011
      %v3284 = vunpack.c.l.b16 %v1012
      %v3285 = vunpack.c.l.b16 %v1013
      %v3286 = vunpack.c.l.b16 %v1014
      %v3287 = vunpack.c.l.b16 %v1015
      %v3288 = vunpack.c.l.b16 %v1016
      %v3289 = vunpack.c.l.b16 %v1017
      %v3290 = vunpack.c.l.b16 %v1018
      %v3291 = vunpack.c.l.b16 %v1019
      %v3292 = vunpack.c.l.b16 %v1020
      %v3293 = vunpack.c.l.b16 %v1021
      %v3294 = vunpack.c.l.b16 %v1022
      %v3295 = vunpack.c.l.b16 %v1023
      %v3296 = vunpack.c.l.b16 %v1024
      %v3297 = vunpack.c.l.b16 %v1025
      %v3298 = vunpack.c.l.b16 %v1026
      %v3299 = vunpack.c.l.b16 %v1027
      %v3300 = vunpack.c.l.b16 %v1028
      %v3301 = vunpack.c.l.b16 %v1029
      %v3302 = vunpack.c.l.b16 %v1030
      %v3303 = vunpack.c.l.b16 %v1031
      %v3304 = vunpack.c.l.b16 %v1032
      %v3305 = vunpack.c.l.b16 %v1033
      %v3306 = vunpack.c.l.b16 %v1034
      %v3307 = vunpack.c.l.b16 %v1035
      %v3308 = vunpack.c.l.b16 %v1036
      %v3309 = vunpack.c.l.b16 %v1037
      %v3310 = vunpack.c.l.b16 %v1038
      %v3311 = vunpack.c.l.b16 %v1039
      %v3312 = vunpack.c.l.b16 %v1040
      %v3313 = vunpack.c.l.b16 %v1041
      %v3314 = vunpack.c.l.b16 %v1042
      %v3315 = vunpack.c.l.b16 %v1043
      %v3316 = vunpack.c.l.b16 %v1044
      %v3317 = vunpack.c.l.b16 %v1045
      %v3318 = vunpack.c.l.b16 %v1046
      %v3319 = vunpack.c.l.b16 %v1047
      %v3320 = vunpack.c.l.b16 %v1048
      %v3321 = vunpack.c.l.b16 %v1049
      %v3322 = vunpack.c.l.b16 %v1050
      %v3323 = vunpack.c.l.b16 %v1051
      %v3324 = vunpack.c.l.b16 %v1052
      %v3325 = vunpack.c.l.b16 %v1053
      %v3326 = vunpack.c.l.b16 %v1054
      %v3327 = vunpack.c.l.b16 %v1055
      %v3328 = vunpack.c.l.b16 %v1056
      %v3329 = vunpack.c.l.b16 %v1057
      %v3330 = vunpack.c.l.b16 %v1058
      %v3331 = vunpack.c.l.b16 %v1059
      %v3332 = vunpack.c.l.b16 %v1060
      %v3333 = vunpack.c.l.b16 %v1061
      %v3334 = vunpack.c.l.b16 %v1062
      %v3335 = vunpack.c.l.b16 %v1063
      %v3336 = vunpack.c.l.b16 %v1064
      %v3337 = vunpack.c.l.b16 %v1065
      %v3338 = vunpack.c.l.b16 %v1066
      %v3339 = vunpack.c.l.b16 %v1067
      %v3340 = vunpack.c.l.b16 %v1068
      %v3341 = vunpack.c.l.b16 %v1069
      %v3342 = vunpack.c.l.b16 %v1070
      %v3343 = vunpack.c.l.b16 %v1071
      %v3344 = vunpack.c.l.b16 %v1072
      %v3345 = vunpack.c.l.b16 %v1073
      %v3346 = vunpack.c.l.b16 %v1074
      %v3347 = vunpack.c.l.b16 %v1075
      %v3348 = vunpack.c.l.b16 %v1076
      %v3349 = vunpack.c.l.b16 %v1077
      %v3350 = vunpack.c.l.b16 %v1078
      %v3351 = vunpack.c.l.b16 %v1079
      %v3352 = vunpack.c.l.b16 %v1080
      %v3353 = vunpack.c.l.b16 %v1081
      %v3354 = vunpack.c.l.b16 %v1082
      %v3355 = vunpack.c.l.b16 %v1083
      %v3356 = vunpack.c.l.b16 %v1084
      %v3357 = vunpack.c.l.b16 %v1085
      %v3358 = vunpack.c.l.b16 %v1086
      %v3359 = vunpack.c.l.b16 %v1087
      %v3360 = vunpack.c.l.b16 %v1088
      %v3361 = vunpack.c.l.b16 %v1089
      %v3362 = vunpack.c.l.b16 %v1090
      %v3363 = vunpack.c.l.b16 %v1091
      %v3364 = vunpack.c.l.b16 %v1092
      %v3365 = vunpack.c.l.b16 %v1093
      %v3366 = vunpack.c.l.b16 %v1094
      %v3367 = vunpack.c.l.b16 %v1095
      %v3368 = vunpack.c.l.b16 %v1096
      %v3369 = vunpack.c.l.b16 %v1097
      %v3370 = vunpack.c.l.b16 %v1098
      %v3371 = vunpack.c.l.b16 %v1099
      %v3372 = vunpack.c.l.b16 %v1100
      %v3373 = vunpack.c.l.b16 %v1101
      %v3374 = vunpack.c.l.b16 %v1102
      %v3375 = vunpack.c.l.b16 %v1103
      %v3376 = vunpack.c.l.b16 %v1104
      %v3377 = vunpack.c.l.b16 %v1105
      %v3378 = vunpack.c.l.b16 %v1106
      %v3379 = vunpack.c.l.b16 %v1107
      %v3380 = vunpack.c.l.b16 %v1108
      %v3381 = vunpack.c.l.b16 %v1109
      %v3382 = vunpack.c.l.b16 %v1110
      %v3383 = vunpack.c.l.b16 %v1111
      %v3384 = vunpack.c.l.b16 %v1112
      %v3385 = vunpack.c.l.b16 %v1113
      %v3386 = vunpack.c.l.b16 %v1114
      %v3387 = vunpack.c.l.b16 %v1115
      %v3388 = vunpack.c.l.b16 %v1116
      %v3389 = vunpack.c.l.b16 %v1117
      %v3390 = vunpack.c.l.b16 %v1118
      %v3391 = vunpack.c.l.b16 %v1119
      %v3392 = vunpack.c.l.b16 %v1120
      %v3393 = vunpack.c.l.b16 %v1121
      %v3394 = vunpack.c.l.b16 %v1122
      %v3395 = vunpack.c.l.b16 %v1123
      %v3396 = vunpack.c.l.b16 %v1124
      %v3397 = vunpack.c.l.b16 %v1125
      %v3398 = vunpack.c.l.b16 %v1126
      %v3399 = vunpack.c.l.b16 %v1127
      %v3400 = vunpack.c.l.b16 %v1128
      %v3401 = vunpack.c.l.b16 %v1129
      %v3402 = vunpack.c.l.b16 %v1130
      %v3403 = vunpack.c.l.b16 %v1131
      %v3404 = vunpack.c.l.b16 %v1132
      %v3405 = vunpack.c.l.b16 %v1133
      %v3406 = vunpack.c.l.b16 %v1134
      %v3407 = vunpack.c.l.b16 %v1135
      %v3408 = vunpack.c.l.b16 %v1136
      %v3409 = vunpack.c.l.b16 %v1137
      %v3410 = vunpack.c.l.b16 %v1138
      %v3411 = vunpack.c.l.b16 %v1139
      %v3412 = vunpack.c.l.b16 %v1140
      %v3413 = vunpack.c.l.b16 %v1141
      %v3414 = vunpack.c.l.b16 %v1142
      %v3415 = vunpack.c.l.b16 %v1143
      %v3416 = vunpack.c.l.b16 %v1144
      %v3417 = vunpack.c.l.b16 %v1145
      %v3418 = vunpack.c.l.b16 %v1146
      %v3419 = vunpack.c.l.b16 %v1147
      %v3420 = vunpack.c.l.b16 %v1148
      %v3421 = vunpack.c.l.b16 %v1149
      %v3422 = vunpack.c.l.b16 %v1150
      %v3423 = vunpack.c.l.b16 %v1151
      %v3424 = vunpack.c.l.b16 %v1152
      %v3425 = vunpack.c.l.b16 %v1153
      %v3426 = vunpack.c.l.b16 %v1154
      %v3427 = vunpack.c.l.b16 %v1155
      %v3428 = vunpack.c.l.b16 %v1156
      %v3429 = vunpack.c.l.b16 %v1157
      %v3430 = vunpack.c.l.b16 %v1158
      %v3431 = vunpack.c.l.b16 %v1159
      %v3432 = vunpack.c.l.b16 %v1160
      %v3433 = vunpack.c.l.b16 %v1161
      %v3434 = vunpack.c.l.b16 %v1162
      %v3435 = vunpack.c.l.b16 %v1163
      %v3436 = vunpack.c.l.b16 %v1164
      %v3437 = vunpack.c.l.b16 %v1165
      %v3438 = vunpack.c.l.b16 %v1166
      %v3439 = vunpack.c.l.b16 %v1167
      %v3440 = vunpack.c.l.b16 %v1168
      %v3441 = vunpack.c.l.b16 %v1169
      %v3442 = vunpack.c.l.b16 %v1170
      %v3443 = vunpack.c.l.b16 %v1171
      %v3444 = vunpack.c.l.b16 %v1172
      %v3445 = vunpack.c.l.b16 %v1173
      %v3446 = vunpack.c.l.b16 %v1174
      %v3447 = vunpack.c.l.b16 %v1175
      %v3448 = vunpack.c.l.b16 %v1176
      %v3449 = vunpack.c.l.b16 %v1177
      %v3450 = vunpack.c.l.b16 %v1178
      %v3451 = vunpack.c.l.b16 %v1179
      %v3452 = vunpack.c.l.b16 %v1180
      %v3453 = vunpack.c.l.b16 %v1181
      %v3454 = vunpack.c.l.b16 %v1182
      %v3455 = vunpack.c.l.b16 %v1183
      %v3456 = vunpack.c.l.b16 %v1184
      %v3457 = vunpack.c.l.b16 %v1185
      %v3458 = vunpack.c.l.b16 %v1186
      %v3459 = vunpack.c.l.b16 %v1187
      %v3460 = vunpack.c.l.b16 %v1188
      %v3461 = vunpack.c.l.b16 %v1189
      %v3462 = vunpack.c.l.b16 %v1190
      %v3463 = vunpack.c.l.b16 %v1191
      %v3464 = vunpack.c.l.b16 %v1192
      %v3465 = vunpack.c.l.b16 %v1193
      %v3466 = vunpack.c.l.b16 %v1194
      %v3467 = vunpack.c.l.b16 %v1195
      %v3468 = vunpack.c.l.b16 %v1196
      %v3469 = vunpack.c.l.b16 %v1197
      %v3470 = vunpack.c.l.b16 %v1198
      %v3471 = vunpack.c.l.b16 %v1199
      %v3472 = vunpack.c.l.b16 %v1200
      %v3473 = vunpack.c.l.b16 %v1201
      %v3474 = vunpack.c.l.b16 %v1202
      %v3475 = vunpack.c.l.b16 %v1203
      %v3476 = vunpack.c.l.b16 %v1204
      %v3477 = vunpack.c.l.b16 %v1205
      %v3478 = vunpack.c.l.b16 %v1206
      %v3479 = vunpack.c.l.b16 %v1207
      %v3480 = vunpack.c.l.b16 %v1208
      %v3481 = vunpack.c.l.b16 %v1209
      %v3482 = vunpack.c.l.b16 %v1210
      %v3483 = vunpack.c.l.b16 %v1211
      %v3484 = vunpack.c.l.b16 %v1212
      %v3485 = vunpack.c.l.b16 %v1213
      %v3486 = vunpack.c.l.b16 %v1214
      %v3487 = vunpack.c.l.b16 %v1215
      %v3488 = vunpack.c.l.b16 %v1216
      %v3489 = vunpack.c.l.b16 %v1217
      %v3490 = vunpack.c.l.b16 %v1218
      %v3491 = vunpack.c.l.b16 %v1219
      %v3492 = vunpack.c.l.b16 %v1220
      %v3493 = vunpack.c.l.b16 %v1221
      %v3494 = vunpack.c.l.b16 %v1222
      %v3495 = vunpack.c.l.b16 %v1223
      %v3496 = vunpack.c.l.b16 %v1224
      %v3497 = vunpack.c.l.b16 %v1225
      %v3498 = vunpack.c.l.b16 %v1226
      %v3499 = vunpack.c.l.b16 %v1227
      %v3500 = vunpack.c.l.b16 %v1228
      %v3501 = vunpack.c.l.b16 %v1229
      %v3502 = vunpack.c.l.b16 %v1230
      %v3503 = vunpack.c.l.b16 %v1231
      %v3504 = vunpack.c.l.b16 %v1232
      %v3505 = vunpack.c.l.b16 %v1233
      %v3506 = vunpack.c.l.b16 %v1234
      %v3507 = vunpack.c.l.b16 %v1235
      %v3508 = vunpack.c.l.b16 %v1236
      %v3509 = vunpack.c.l.b16 %v1237
      %v3510 = vunpack.c.l.b16 %v1238
      %v3511 = vunpack.c.l.b16 %v1239
      %v3512 = vunpack.c.l.b16 %v1240
      %v3513 = vunpack.c.l.b16 %v1241
      %v3514 = vunpack.c.l.b16 %v1242
      %v3515 = vunpack.c.l.b16 %v1243
      %v3516 = vunpack.c.l.b16 %v1244
      %v3517 = vunpack.c.l.b16 %v1245
      %v3518 = vunpack.c.l.b16 %v1246
      %v3519 = vunpack.c.l.b16 %v1247
      %v3520 = vunpack.c.l.b16 %v1248
      %v3521 = vunpack.c.l.b16 %v1249
      %v3522 = vunpack.c.l.b16 %v1250
      %v3523 = vunpack.c.l.b16 %v1251
      %v3524 = vunpack.c.l.b16 %v1252
      %v3525 = vunpack.c.l.b16 %v1253
      %v3526 = vunpack.c.l.b16 %v1254
      %v3527 = vunpack.c.l.b16 %v1255
      %v3528 = vunpack.c.l.b16 %v1256
      %v3529 = vunpack.c.l.b16 %v1257
      %v3530 = vunpack.c.l.b16 %v1258
      %v3531 = vunpack.c.l.b16 %v1259
      %v3532 = vunpack.c.l.b16 %v1260
      %v3533 = vunpack.c.l.b16 %v1261
      %v3534 = vunpack.c.l.b16 %v1262
      %v3535 = vunpack.c.l.b16 %v1263
      %v3536 = vunpack.c.l.b16 %v1264
      %v3537 = vunpack.c.l.b16 %v1265
      %v3538 = vunpack.c.l.b16 %v1266
      %v3539 = vunpack.c.l.b16 %v1267
      %v3540 = vunpack.c.l.b16 %v1268
      %v3541 = vunpack.c.l.b16 %v1269
      %v3542 = vunpack.c.l.b16 %v1270
      %v3543 = vunpack.c.l.b16 %v1271
      %v3544 = vunpack.c.l.b16 %v1272
      %v3545 = vunpack.c.l.b16 %v1273
      %v3546 = vunpack.c.l.b16 %v1274
      %v3547 = vunpack.c.l.b16 %v1275
      %v3548 = vunpack.c.l.b16 %v1276
      %v3549 = vunpack.c.l.b16 %v1277
      %v3550 = vunpack.c.l.b16 %v1278
      %v3551 = vunpack.c.l.b16 %v1279
      %v3552 = vunpack.c.l.b16 %v1280
      %v3553 = vunpack.c.l.b16 %v1281
      %v3554 = vunpack.c.l.b16 %v1282
      %v3555 = vunpack.c.l.b16 %v1283
      %v3556 = vunpack.c.l.b16 %v1284
      %v3557 = vunpack.c.l.b16 %v1285
      %v3558 = vunpack.c.l.b16 %v1286
      %v3559 = vunpack.c.l.b16 %v1287
      %v3560 = vunpack.c.l.b16 %v1288
      %v3561 = vunpack.c.l.b16 %v1289
      %v3562 = vunpack.c.l.b16 %v1290
      %v3563 = vunpack.c.l.b16 %v1291
      %v3564 = vunpack.c.l.b16 %v1292
      %v3565 = vunpack.c.l.b16 %v1293
      %v3566 = vunpack.c.l.b16 %v1294
      %v3567 = vunpack.c.l.b16 %v1295
      %v3568 = vunpack.c.l.b16 %v1296
      %v3569 = vunpack.c.l.b16 %v1297
      %v3570 = vunpack.c.l.b16 %v1298
      %v3571 = vunpack.c.l.b16 %v1299
      %v3572 = vunpack.c.l.b16 %v1300
      %v3573 = vunpack.c.l.b16 %v1301
      %v3574 = vunpack.c.l.b16 %v1302
      %v3575 = vunpack.c.l.b16 %v1303
      %v3576 = vunpack.c.l.b16 %v1304
      %v3577 = vunpack.c.l.b16 %v1305
      %v3578 = vunpack.c.l.b16 %v1306
      %v3579 = vunpack.c.l.b16 %v1307
      %v3580 = vunpack.c.l.b16 %v1308
      %v3581 = vunpack.c.l.b16 %v1309
      %v3582 = vunpack.c.l.b16 %v1310
      %v3583 = vunpack.c.l.b16 %v1311
      %v3584 = vunpack.c.l.b16 %v1312
      %v3585 = vunpack.c.l.b16 %v1313
      %v3586 = vunpack.c.l.b16 %v1314
      %v3587 = vunpack.c.l.b16 %v1315
      %v3588 = vunpack.c.l.b16 %v1316
      %v3589 = vunpack.c.l.b16 %v1317
      %v3590 = vunpack.c.l.b16 %v1318
      %v3591 = vunpack.c.l.b16 %v1319
      %v3592 = vunpack.c.l.b16 %v1320
      %v3593 = vunpack.c.l.b16 %v1321
      %v3594 = vunpack.c.l.b16 %v1322
      %v3595 = vunpack.c.l.b16 %v1323
      %v3596 = vunpack.c.l.b16 %v1324
      %v3597 = vunpack.c.l.b16 %v1325
      %v3598 = vunpack.c.l.b16 %v1326
      %v3599 = vunpack.c.l.b16 %v1327
      %v3600 = vunpack.c.l.b16 %v1328
      %v3601 = vunpack.c.l.b16 %v1329
      %v3602 = vunpack.c.l.b16 %v1330
      %v3603 = vunpack.c.l.b16 %v1331
      %v3604 = vunpack.c.l.b16 %v1332
      %v3605 = vunpack.c.l.b16 %v1333
      %v3606 = vunpack.c.l.b16 %v1334
      %v3607 = vunpack.c.l.b16 %v1335
      %v3608 = vunpack.c.l.b16 %v1336
      %v3609 = vunpack.c.l.b16 %v1337
      %v3610 = vunpack.c.l.b16 %v1338
      %v3611 = vunpack.c.l.b16 %v1339
      %v3612 = vunpack.c.l.b16 %v1340
      %v3613 = vunpack.c.l.b16 %v1341
      %v3614 = vunpack.c.l.b16 %v1342
      %v3615 = vunpack.c.l.b16 %v1343
      %v3616 = vunpack.c.l.b16 %v1344
      %v3617 = vunpack.c.l.b16 %v1345
      %v3618 = vunpack.c.l.b16 %v1346
      %v3619 = vunpack.c.l.b16 %v1347
      %v3620 = vunpack.c.l.b16 %v1348
      %v3621 = vunpack.c.l.b16 %v1349
      %v3622 = vunpack.c.l.b16 %v1350
      %v3623 = vunpack.c.l.b16 %v1351
      %v3624 = vpack.c.b16 %v2601, %v2600
      %v3625 = vpack.c.b16 %v2603, %v2602
      %v3626 = vpack.c.b16 %v2605, %v2604
      %v3627 = vpack.c.b16 %v2607, %v2606
      %v3628 = vpack.c.b16 %v2609, %v2608
      %v3629 = vpack.c.b16 %v2611, %v2610
      %v3630 = vpack.c.b16 %v2613, %v2612
      %v3631 = vpack.c.b16 %v2615, %v2614
      %v3632 = vpack.c.b16 %v2617, %v2616
      %v3633 = vpack.c.b16 %v2619, %v2618
      %v3634 = vpack.c.b16 %v2621, %v2620
      %v3635 = vpack.c.b16 %v2623, %v2622
      %v3636 = vpack.c.b16 %v2625, %v2624
      %v3637 = vpack.c.b16 %v2627, %v2626
      %v3638 = vpack.c.b16 %v2629, %v2628
      %v3639 = vpack.c.b16 %v2631, %v2630
      %v3640 = vpack.c.b16 %v2633, %v2632
      %v3641 = vpack.c.b16 %v2635, %v2634
      %v3642 = vpack.c.b16 %v2637, %v2636
      %v3643 = vpack.c.b16 %v2639, %v2638
      %v3644 = vpack.c.b16 %v2641, %v2640
      %v3645 = vpack.c.b16 %v2643, %v2642
      %v3646 = vpack.c.b16 %v2645, %v2644
      %v3647 = vpack.c.b16 %v2647, %v2646
      %v3648 = vpack.c.b16 %v2649, %v2648
      %v3649 = vpack.c.b16 %v2651, %v2650
      %v3650 = vpack.c.b16 %v2653, %v2652
      %v3651 = vpack.c.b16 %v2655, %v2654
      %v3652 = vpack.c.b16 %v2657, %v2656
      %v3653 = vpack.c.b16 %v2659, %v2658
      %v3654 = vpack.c.b16 %v2661, %v2660
      %v3655 = vpack.c.b16 %v2663, %v2662
      %v3656 = vpack.c.b16 %v2665, %v2664
      %v3657 = vpack.c.b16 %v2667, %v2666
      %v3658 = vpack.c.b16 %v2669, %v2668
      %v3659 = vpack.c.b16 %v2671, %v2670
      %v3660 = vpack.c.b16 %v2673, %v2672
      %v3661 = vpack.c.b16 %v2675, %v2674
      %v3662 = vpack.c.b16 %v2677, %v2676
      %v3663 = vpack.c.b16 %v2679, %v2678
      %v3664 = vpack.c.b16 %v2681, %v2680
      %v3665 = vpack.c.b16 %v2683, %v2682
      %v3666 = vpack.c.b16 %v2685, %v2684
      %v3667 = vpack.c.b16 %v2687, %v2686
      %v3668 = vpack.c.b16 %v2689, %v2688
      %v3669 = vpack.c.b16 %v2691, %v2690
      %v3670 = vpack.c.b16 %v2693, %v2692
      %v3671 = vpack.c.b16 %v2695, %v2694
      %v3672 = vpack.c.b16 %v2697, %v2696
      %v3673 = vpack.c.b16 %v2699, %v2698
      %v3674 = vpack.c.b16 %v2701, %v2700
      %v3675 = vpack.c.b16 %v2703, %v2702
      %v3676 = vpack.c.b16 %v2705, %v2704
      %v3677 = vpack.c.b16 %v2707, %v2706
      %v3678 = vpack.c.b16 %v2709, %v2708
      %v3679 = vpack.c.b16 %v2711, %v2710
      %v3680 = vpack.c.b16 %v2713, %v2712
      %v3681 = vpack.c.b16 %v2715, %v2714
      %v3682 = vpack.c.b16 %v2717, %v2716
      %v3683 = vpack.c.b16 %v2719, %v2718
      %v3684 = vpack.c.b16 %v2721, %v2720
      %v3685 = vpack.c.b16 %v2723, %v2722
      %v3686 = vpack.c.b16 %v2725, %v2724
      %v3687 = vpack.c.b16 %v2727, %v2726
      %v3688 = vpack.c.b16 %v2729, %v2728
      %v3689 = vpack.c.b16 %v2731, %v2730
      %v3690 = vpack.c.b16 %v2733, %v2732
      %v3691 = vpack.c.b16 %v2735, %v2734
      %v3692 = vpack.c.b16 %v2737, %v2736
      %v3693 = vpack.c.b16 %v2739, %v2738
      %v3694 = vpack.c.b16 %v2741, %v2740
      %v3695 = vpack.c.b16 %v2743, %v2742
      %v3696 = vpack.c.b16 %v2745, %v2744
      %v3697 = vpack.c.b16 %v2747, %v2746
      %v3698 = vpack.c.b16 %v2749, %v2748
      %v3699 = vpack.c.b16 %v2751, %v2750
      %v3700 = vpack.c.b16 %v2753, %v2752
      %v3701 = vpack.c.b16 %v2755, %v2754
      %v3702 = vpack.c.b16 %v2757, %v2756
      %v3703 = vpack.c.b16 %v2759, %v2758
      %v3704 = vpack.c.b16 %v2761, %v2760
      %v3705 = vpack.c.b16 %v2763, %v2762
      %v3706 = vpack.c.b16 %v2765, %v2764
      %v3707 = vpack.c.b16 %v2767, %v2766
      %v3708 = vpack.c.b16 %v2769, %v2768
      %v3709 = vpack.c.b16 %v2771, %v2770
      %v3710 = vpack.c.b16 %v2773, %v2772
      %v3711 = vpack.c.b16 %v2775, %v2774
      %v3712 = vpack.c.b16 %v2777, %v2776
      %v3713 = vpack.c.b16 %v2779, %v2778
      %v3714 = vpack.c.b16 %v2781, %v2780
      %v3715 = vpack.c.b16 %v2783, %v2782
      %v3716 = vpack.c.b16 %v2785, %v2784
      %v3717 = vpack.c.b16 %v2787, %v2786
      %v3718 = vpack.c.b16 %v2789, %v2788
      %v3719 = vpack.c.b16 %v2791, %v2790
      %v3720 = vpack.c.b16 %v2793, %v2792
      %v3721 = vpack.c.b16 %v2795, %v2794
      %v3722 = vpack.c.b16 %v2797, %v2796
      %v3723 = vpack.c.b16 %v2799, %v2798
      %v3724 = vpack.c.b16 %v2801, %v2800
      %v3725 = vpack.c.b16 %v2803, %v2802
      %v3726 = vpack.c.b16 %v2805, %v2804
      %v3727 = vpack.c.b16 %v2807, %v2806
      %v3728 = vpack.c.b16 %v2809, %v2808
      %v3729 = vpack.c.b16 %v2811, %v2810
      %v3730 = vpack.c.b16 %v2813, %v2812
      %v3731 = vpack.c.b16 %v2815, %v2814
      %v3732 = vpack.c.b16 %v2817, %v2816
      %v3733 = vpack.c.b16 %v2819, %v2818
      %v3734 = vpack.c.b16 %v2821, %v2820
      %v3735 = vpack.c.b16 %v2823, %v2822
      %v3736 = vpack.c.b16 %v2825, %v2824
      %v3737 = vpack.c.b16 %v2827, %v2826
      %v3738 = vpack.c.b16 %v2829, %v2828
      %v3739 = vpack.c.b16 %v2831, %v2830
      %v3740 = vpack.c.b16 %v2833, %v2832
      %v3741 = vpack.c.b16 %v2835, %v2834
      %v3742 = vpack.c.b16 %v2837, %v2836
      %v3743 = vpack.c.b16 %v2839, %v2838
      %v3744 = vpack.c.b16 %v2841, %v2840
      %v3745 = vpack.c.b16 %v2843, %v2842
      %v3746 = vpack.c.b16 %v2845, %v2844
      %v3747 = vpack.c.b16 %v2847, %v2846
      %v3748 = vpack.c.b16 %v2849, %v2848
      %v3749 = vpack.c.b16 %v2851, %v2850
      %v3750 = vpack.c.b16 %v2853, %v2852
      %v3751 = vpack.c.b16 %v2855, %v2854
      %v3752 = vpack.c.b16 %v2857, %v2856
      %v3753 = vpack.c.b16 %v2859, %v2858
      %v3754 = vpack.c.b16 %v2861, %v2860
      %v3755 = vpack.c.b16 %v2863, %v2862
      %v3756 = vpack.c.b16 %v2865, %v2864
      %v3757 = vpack.c.b16 %v2867, %v2866
      %v3758 = vpack.c.b16 %v2869, %v2868
      %v3759 = vpack.c.b16 %v2871, %v2870
      %v3760 = vpack.c.b16 %v2873, %v2872
      %v3761 = vpack.c.b16 %v2875, %v2874
      %v3762 = vpack.c.b16 %v2877, %v2876
      %v3763 = vpack.c.b16 %v2879, %v2878
      %v3764 = vpack.c.b16 %v2881, %v2880
      %v3765 = vpack.c.b16 %v2883, %v2882
      %v3766 = vpack.c.b16 %v2885, %v2884
      %v3767 = vpack.c.b16 %v2887, %v2886
      %v3768 = vpack.c.b16 %v2889, %v2888
      %v3769 = vpack.c.b16 %v2891, %v2890
      %v3770 = vpack.c.b16 %v2893, %v2892
      %v3771 = vpack.c.b16 %v2895, %v2894
      %v3772 = vpack.c.b16 %v2897, %v2896
      %v3773 = vpack.c.b16 %v2899, %v2898
      %v3774 = vpack.c.b16 %v2901, %v2900
      %v3775 = vpack.c.b16 %v2903, %v2902
      %v3776 = vpack.c.b16 %v2905, %v2904
      %v3777 = vpack.c.b16 %v2907, %v2906
      %v3778 = vpack.c.b16 %v2909, %v2908
      %v3779 = vpack.c.b16 %v2911, %v2910
      %v3780 = vpack.c.b16 %v2913, %v2912
      %v3781 = vpack.c.b16 %v2915, %v2914
      %v3782 = vpack.c.b16 %v2917, %v2916
      %v3783 = vpack.c.b16 %v2919, %v2918
      %v3784 = vpack.c.b16 %v2921, %v2920
      %v3785 = vpack.c.b16 %v2923, %v2922
      %v3786 = vpack.c.b16 %v2925, %v2924
      %v3787 = vpack.c.b16 %v2927, %v2926
      %v3788 = vpack.c.b16 %v2929, %v2928
      %v3789 = vpack.c.b16 %v2931, %v2930
      %v3790 = vpack.c.b16 %v2933, %v2932
      %v3791 = vpack.c.b16 %v2935, %v2934
      %v3792 = vpack.c.b16 %v2937, %v2936
      %v3793 = vpack.c.b16 %v2939, %v2938
      %v3794 = vpack.c.b16 %v2941, %v2940
      %v3795 = vpack.c.b16 %v2943, %v2942
      %v3796 = vpack.c.b16 %v2945, %v2944
      %v3797 = vpack.c.b16 %v2947, %v2946
      %v3798 = vpack.c.b16 %v2949, %v2948
      %v3799 = vpack.c.b16 %v2951, %v2950
      %v3800 = vpack.c.b16 %v2953, %v2952
      %v3801 = vpack.c.b16 %v2955, %v2954
      %v3802 = vpack.c.b16 %v2957, %v2956
      %v3803 = vpack.c.b16 %v2959, %v2958
      %v3804 = vpack.c.b16 %v2961, %v2960
      %v3805 = vpack.c.b16 %v2963, %v2962
      %v3806 = vpack.c.b16 %v2965, %v2964
      %v3807 = vpack.c.b16 %v2967, %v2966
      %v3808 = vpack.c.b16 %v2969, %v2968
      %v3809 = vpack.c.b16 %v2971, %v2970
      %v3810 = vpack.c.b16 %v2973, %v2972
      %v3811 = vpack.c.b16 %v2975, %v2974
      %v3812 = vpack.c.b16 %v2977, %v2976
      %v3813 = vpack.c.b16 %v2979, %v2978
      %v3814 = vpack.c.b16 %v2981, %v2980
      %v3815 = vpack.c.b16 %v2983, %v2982
      %v3816 = vpack.c.b16 %v2985, %v2984
      %v3817 = vpack.c.b16 %v2987, %v2986
      %v3818 = vpack.c.b16 %v2989, %v2988
      %v3819 = vpack.c.b16 %v2991, %v2990
      %v3820 = vpack.c.b16 %v2993, %v2992
      %v3821 = vpack.c.b16 %v2995, %v2994
      %v3822 = vpack.c.b16 %v2997, %v2996
      %v3823 = vpack.c.b16 %v2999, %v2998
      %v3824 = vpack.c.b16 %v3001, %v3000
      %v3825 = vpack.c.b16 %v3003, %v3002
      %v3826 = vpack.c.b16 %v3005, %v3004
      %v3827 = vpack.c.b16 %v3007, %v3006
      %v3828 = vpack.c.b16 %v3009, %v3008
      %v3829 = vpack.c.b16 %v3011, %v3010
      %v3830 = vpack.c.b16 %v3013, %v3012
      %v3831 = vpack.c.b16 %v3015, %v3014
      %v3832 = vpack.c.b16 %v3017, %v3016
      %v3833 = vpack.c.b16 %v3019, %v3018
      %v3834 = vpack.c.b16 %v3021, %v3020
      %v3835 = vpack.c.b16 %v3023, %v3022
      %v3836 = vpack.c.b16 %v3025, %v3024
      %v3837 = vpack.c.b16 %v3027, %v3026
      %v3838 = vpack.c.b16 %v3029, %v3028
      %v3839 = vpack.c.b16 %v3031, %v3030
      %v3840 = vpack.c.b16 %v3033, %v3032
      %v3841 = vpack.c.b16 %v3035, %v3034
      %v3842 = vpack.c.b16 %v3037, %v3036
      %v3843 = vpack.c.b16 %v3039, %v3038
      %v3844 = vpack.c.b16 %v3041, %v3040
      %v3845 = vpack.c.b16 %v3043, %v3042
      %v3846 = vpack.c.b16 %v3045, %v3044
      %v3847 = vpack.c.b16 %v3047, %v3046
      %v3848 = vpack.c.b16 %v3049, %v3048
      %v3849 = vpack.c.b16 %v3051, %v3050
      %v3850 = vpack.c.b16 %v3053, %v3052
      %v3851 = vpack.c.b16 %v3055, %v3054
      %v3852 = vpack.c.b16 %v3057, %v3056
      %v3853 = vpack.c.b16 %v3059, %v3058
      %v3854 = vpack.c.b16 %v3061, %v3060
      %v3855 = vpack.c.b16 %v3063, %v3062
      %v3856 = vpack.c.b16 %v3065, %v3064
      %v3857 = vpack.c.b16 %v3067, %v3066
      %v3858 = vpack.c.b16 %v3069, %v3068
      %v3859 = vpack.c.b16 %v3071, %v3070
      %v3860 = vpack.c.b16 %v3073, %v3072
      %v3861 = vpack.c.b16 %v3075, %v3074
      %v3862 = vpack.c.b16 %v3077, %v3076
      %v3863 = vpack.c.b16 %v3079, %v3078
      %v3864 = vpack.c.b16 %v3081, %v3080
      %v3865 = vpack.c.b16 %v3083, %v3082
      %v3866 = vpack.c.b16 %v3085, %v3084
      %v3867 = vpack.c.b16 %v3087, %v3086
      %v3868 = vpack.c.b16 %v3089, %v3088
      %v3869 = vpack.c.b16 %v3091, %v3090
      %v3870 = vpack.c.b16 %v3093, %v3092
      %v3871 = vpack.c.b16 %v3095, %v3094
      %v3872 = vpack.c.b16 %v3097, %v3096
      %v3873 = vpack.c.b16 %v3099, %v3098
      %v3874 = vpack.c.b16 %v3101, %v3100
      %v3875 = vpack.c.b16 %v3103, %v3102
      %v3876 = vpack.c.b16 %v3105, %v3104
      %v3877 = vpack.c.b16 %v3107, %v3106
      %v3878 = vpack.c.b16 %v3109, %v3108
      %v3879 = vpack.c.b16 %v3111, %v3110
      %v3880 = vpack.c.b16 %v3113, %v3112
      %v3881 = vpack.c.b16 %v3115, %v3114
      %v3882 = vpack.c.b16 %v3117, %v3116
      %v3883 = vpack.c.b16 %v3119, %v3118
      %v3884 = vpack.c.b16 %v3121, %v3120
      %v3885 = vpack.c.b16 %v3123, %v3122
      %v3886 = vpack.c.b16 %v3125, %v3124
      %v3887 = vpack.c.b16 %v3127, %v3126
      %v3888 = vpack.c.b16 %v3129, %v3128
      %v3889 = vpack.c.b16 %v3131, %v3130
      %v3890 = vpack.c.b16 %v3133, %v3132
      %v3891 = vpack.c.b16 %v3135, %v3134
      %v3892 = vpack.c.b16 %v3137, %v3136
      %v3893 = vpack.c.b16 %v3139, %v3138
      %v3894 = vpack.c.b16 %v3141, %v3140
      %v3895 = vpack.c.b16 %v3143, %v3142
      %v3896 = vpack.c.b16 %v3145, %v3144
      %v3897 = vpack.c.b16 %v3147, %v3146
      %v3898 = vpack.c.b16 %v3149, %v3148
      %v3899 = vpack.c.b16 %v3151, %v3150
      %v3900 = vpack.c.b16 %v3153, %v3152
      %v3901 = vpack.c.b16 %v3155, %v3154
      %v3902 = vpack.c.b16 %v3157, %v3156
      %v3903 = vpack.c.b16 %v3159, %v3158
      %v3904 = vpack.c.b16 %v3161, %v3160
      %v3905 = vpack.c.b16 %v3163, %v3162
      %v3906 = vpack.c.b16 %v3165, %v3164
      %v3907 = vpack.c.b16 %v3167, %v3166
      %v3908 = vpack.c.b16 %v3169, %v3168
      %v3909 = vpack.c.b16 %v3171, %v3170
      %v3910 = vpack.c.b16 %v3173, %v3172
      %v3911 = vpack.c.b16 %v3175, %v3174
      %v3912 = vpack.c.b16 %v3177, %v3176
      %v3913 = vpack.c.b16 %v3179, %v3178
      %v3914 = vpack.c.b16 %v3181, %v3180
      %v3915 = vpack.c.b16 %v3183, %v3182
      %v3916 = vpack.c.b16 %v3185, %v3184
      %v3917 = vpack.c.b16 %v3187, %v3186
      %v3918 = vpack.c.b16 %v3189, %v3188
      %v3919 = vpack.c.b16 %v3191, %v3190
      %v3920 = vpack.c.b16 %v3193, %v3192
      %v3921 = vpack.c.b16 %v3195, %v3194
      %v3922 = vpack.c.b16 %v3197, %v3196
      %v3923 = vpack.c.b16 %v3199, %v3198
      %v3924 = vpack.c.b16 %v3201, %v3200
      %v3925 = vpack.c.b16 %v3203, %v3202
      %v3926 = vpack.c.b16 %v3205, %v3204
      %v3927 = vpack.c.b16 %v3207, %v3206
      %v3928 = vpack.c.b16 %v3209, %v3208
      %v3929 = vpack.c.b16 %v3211, %v3210
      %v3930 = vpack.c.b16 %v3213, %v3212
      %v3931 = vpack.c.b16 %v3215, %v3214
      %v3932 = vpack.c.b16 %v3217, %v3216
      %v3933 = vpack.c.b16 %v3219, %v3218
      %v3934 = vpack.c.b16 %v3221, %v3220
      %v3935 = vpack.c.b16 %v3223, %v3222
      %v3936 = vpack.c.b16 %v3225, %v3224
      %v3937 = vpack.c.b16 %v3227, %v3226
      %v3938 = vpack.c.b16 %v3229, %v3228
      %v3939 = vpack.c.b16 %v3231, %v3230
      %v3940 = vpack.c.b16 %v3233, %v3232
      %v3941 = vpack.c.b16 %v3235, %v3234
      %v3942 = vpack.c.b16 %v3237, %v3236
      %v3943 = vpack.c.b16 %v3239, %v3238
      %v3944 = vpack.c.b16 %v3241, %v3240
      %v3945 = vpack.c.b16 %v3243, %v3242
      %v3946 = vpack.c.b16 %v3245, %v3244
      %v3947 = vpack.c.b16 %v3247, %v3246
      %v3948 = vpack.c.b16 %v3249, %v3248
      %v3949 = vpack.c.b16 %v3251, %v3250
      %v3950 = vpack.c.b16 %v3253, %v3252
      %v3951 = vpack.c.b16 %v3255, %v3254
      %v3952 = vpack.c.b16 %v3257, %v3256
      %v3953 = vpack.c.b16 %v3259, %v3258
      %v3954 = vpack.c.b16 %v3261, %v3260
      %v3955 = vpack.c.b16 %v3263, %v3262
      %v3956 = vpack.c.b16 %v3265, %v3264
      %v3957 = vpack.c.b16 %v3267, %v3266
      %v3958 = vpack.c.b16 %v3269, %v3268
      %v3959 = vpack.c.b16 %v3271, %v3270
      %v3960 = vpack.c.b16 %v3273, %v3272
      %v3961 = vpack.c.b16 %v3275, %v3274
      %v3962 = vpack.c.b16 %v3277, %v3276
      %v3963 = vpack.c.b16 %v3279, %v3278
      %v3964 = vpack.c.b16 %v3281, %v3280
      %v3965 = vpack.c.b16 %v3283, %v3282
      %v3966 = vpack.c.b16 %v3285, %v3284
      %v3967 = vpack.c.b16 %v3287, %v3286
      %v3968 = vpack.c.b16 %v3289, %v3288
      %v3969 = vpack.c.b16 %v3291, %v3290
      %v3970 = vpack.c.b16 %v3293, %v3292
      %v3971 = vpack.c.b16 %v3295, %v3294
      %v3972 = vpack.c.b16 %v3297, %v3296
      %v3973 = vpack.c.b16 %v3299, %v3298
      %v3974 = vpack.c.b16 %v3301, %v3300
      %v3975 = vpack.c.b16 %v3303, %v3302
      %v3976 = vpack.c.b16 %v3305, %v3304
      %v3977 = vpack.c.b16 %v3307, %v3306
      %v3978 = vpack.c.b16 %v3309, %v3308
      %v3979 = vpack.c.b16 %v3311, %v3310
      %v3980 = vpack.c.b16 %v3313, %v3312
      %v3981 = vpack.c.b16 %v3315, %v3314
      %v3982 = vpack.c.b16 %v3317, %v3316
      %v3983 = vpack.c.b16 %v3319, %v3318
      %v3984 = vpack.c.b16 %v3321, %v3320
      %v3985 = vpack.c.b16 %v3323, %v3322
      %v3986 = vpack.c.b16 %v3325, %v3324
      %v3987 = vpack.c.b16 %v3327, %v3326
      %v3988 = vpack.c.b16 %v3329, %v3328
      %v3989 = vpack.c.b16 %v3331, %v3330
      %v3990 = vpack.c.b16 %v3333, %v3332
      %v3991 = vpack.c.b16 %v3335, %v3334
      %v3992 = vpack.c.b16 %v3337, %v3336
      %v3993 = vpack.c.b16 %v3339, %v3338
      %v3994 = vpack.c.b16 %v3341, %v3340
      %v3995 = vpack.c.b16 %v3343, %v3342
      %v3996 = vpack.c.b16 %v3345, %v3344
      %v3997 = vpack.c.b16 %v3347, %v3346
      %v3998 = vpack.c.b16 %v3349, %v3348
      %v3999 = vpack.c.b16 %v3351, %v3350
      %v4000 = vpack.c.b16 %v3353, %v3352
      %v4001 = vpack.c.b16 %v3355, %v3354
      %v4002 = vpack.c.b16 %v3357, %v3356
      %v4003 = vpack.c.b16 %v3359, %v3358
      %v4004 = vpack.c.b16 %v3361, %v3360
      %v4005 = vpack.c.b16 %v3363, %v3362
      %v4006 = vpack.c.b16 %v3365, %v3364
      %v4007 = vpack.c.b16 %v3367, %v3366
      %v4008 = vpack.c.b16 %v3369, %v3368
      %v4009 = vpack.c.b16 %v3371, %v3370
      %v4010 = vpack.c.b16 %v3373, %v3372
      %v4011 = vpack.c.b16 %v3375, %v3374
      %v4012 = vpack.c.b16 %v3377, %v3376
      %v4013 = vpack.c.b16 %v3379, %v3378
      %v4014 = vpack.c.b16 %v3381, %v3380
      %v4015 = vpack.c.b16 %v3383, %v3382
      %v4016 = vpack.c.b16 %v3385, %v3384
      %v4017 = vpack.c.b16 %v3387, %v3386
      %v4018 = vpack.c.b16 %v3389, %v3388
      %v4019 = vpack.c.b16 %v3391, %v3390
      %v4020 = vpack.c.b16 %v3393, %v3392
      %v4021 = vpack.c.b16 %v3395, %v3394
      %v4022 = vpack.c.b16 %v3397, %v3396
      %v4023 = vpack.c.b16 %v3399, %v3398
      %v4024 = vpack.c.b16 %v3401, %v3400
      %v4025 = vpack.c.b16 %v3403, %v3402
      %v4026 = vpack.c.b16 %v3405, %v3404
      %v4027 = vpack.c.b16 %v3407, %v3406
      %v4028 = vpack.c.b16 %v3409, %v3408
      %v4029 = vpack.c.b16 %v3411, %v3410
      %v4030 = vpack.c.b16 %v3413, %v3412
      %v4031 = vpack.c.b16 %v3415, %v3414
      %v4032 = vpack.c.b16 %v3417, %v3416
      %v4033 = vpack.c.b16 %v3419, %v3418
      %v4034 = vpack.c.b16 %v3421, %v3420
      %v4035 = vpack.c.b16 %v3423, %v3422
      %v4036 = vpack.c.b16 %v3425, %v3424
      %v4037 = vpack.c.b16 %v3427, %v3426
      %v4038 = vpack.c.b16 %v3429, %v3428
      %v4039 = vpack.c.b16 %v3431, %v3430
      %v4040 = vpack.c.b16 %v3433, %v3432
      %v4041 = vpack.c.b16 %v3435, %v3434
      %v4042 = vpack.c.b16 %v3437, %v3436
      %v4043 = vpack.c.b16 %v3439, %v3438
      %v4044 = vpack.c.b16 %v3441, %v3440
      %v4045 = vpack.c.b16 %v3443, %v3442
      %v4046 = vpack.c.b16 %v3445, %v3444
      %v4047 = vpack.c.b16 %v3447, %v3446
      %v4048 = vpack.c.b16 %v3449, %v3448
      %v4049 = vpack.c.b16 %v3451, %v3450
      %v4050 = vpack.c.b16 %v3453, %v3452
      %v4051 = vpack.c.b16 %v3455, %v3454
      %v4052 = vpack.c.b16 %v3457, %v3456
      %v4053 = vpack.c.b16 %v3459, %v3458
      %v4054 = vpack.c.b16 %v3461, %v3460
      %v4055 = vpack.c.b16 %v3463, %v3462
      %v4056 = vpack.c.b16 %v3465, %v3464
      %v4057 = vpack.c.b16 %v3467, %v3466
      %v4058 = vpack.c.b16 %v3469, %v3468
      %v4059 = vpack.c.b16 %v3471, %v3470
      %v4060 = vpack.c.b16 %v3473, %v3472
      %v4061 = vpack.c.b16 %v3475, %v3474
      %v4062 = vpack.c.b16 %v3477, %v3476
      %v4063 = vpack.c.b16 %v3479, %v3478
      %v4064 = vpack.c.b16 %v3481, %v3480
      %v4065 = vpack.c.b16 %v3483, %v3482
      %v4066 = vpack.c.b16 %v3485, %v3484
      %v4067 = vpack.c.b16 %v3487, %v3486
      %v4068 = vpack.c.b16 %v3489, %v3488
      %v4069 = vpack.c.b16 %v3491, %v3490
      %v4070 = vpack.c.b16 %v3493, %v3492
      %v4071 = vpack.c.b16 %v3495, %v3494
      %v4072 = vpack.c.b16 %v3497, %v3496
      %v4073 = vpack.c.b16 %v3499, %v3498
      %v4074 = vpack.c.b16 %v3501, %v3500
      %v4075 = vpack.c.b16 %v3503, %v3502
      %v4076 = vpack.c.b16 %v3505, %v3504
      %v4077 = vpack.c.b16 %v3507, %v3506
      %v4078 = vpack.c.b16 %v3509, %v3508
      %v4079 = vpack.c.b16 %v3511, %v3510
      %v4080 = vpack.c.b16 %v3513, %v3512
      %v4081 = vpack.c.b16 %v3515, %v3514
      %v4082 = vpack.c.b16 %v3517, %v3516
      %v4083 = vpack.c.b16 %v3519, %v3518
      %v4084 = vpack.c.b16 %v3521, %v3520
      %v4085 = vpack.c.b16 %v3523, %v3522
      %v4086 = vpack.c.b16 %v3525, %v3524
      %v4087 = vpack.c.b16 %v3527, %v3526
      %v4088 = vpack.c.b16 %v3529, %v3528
      %v4089 = vpack.c.b16 %v3531, %v3530
      %v4090 = vpack.c.b16 %v3533, %v3532
      %v4091 = vpack.c.b16 %v3535, %v3534
      %v4092 = vpack.c.b16 %v3537, %v3536
      %v4093 = vpack.c.b16 %v3539, %v3538
      %v4094 = vpack.c.b16 %v3541, %v3540
      %v4095 = vpack.c.b16 %v3543, %v3542
      %v4096 = vpack.c.b16 %v3545, %v3544
      %v4097 = vpack.c.b16 %v3547, %v3546
      %v4098 = vpack.c.b16 %v3549, %v3548
      %v4099 = vpack.c.b16 %v3551, %v3550
      %v4100 = vpack.c.b16 %v3553, %v3552
      %v4101 = vpack.c.b16 %v3555, %v3554
      %v4102 = vpack.c.b16 %v3557, %v3556
      %v4103 = vpack.c.b16 %v3559, %v3558
      %v4104 = vpack.c.b16 %v3561, %v3560
      %v4105 = vpack.c.b16 %v3563, %v3562
      %v4106 = vpack.c.b16 %v3565, %v3564
      %v4107 = vpack.c.b16 %v3567, %v3566
      %v4108 = vpack.c.b16 %v3569, %v3568
      %v4109 = vpack.c.b16 %v3571, %v3570
      %v4110 = vpack.c.b16 %v3573, %v3572
      %v4111 = vpack.c.b16 %v3575, %v3574
      %v4112 = vpack.c.b16 %v3577, %v3576
      %v4113 = vpack.c.b16 %v3579, %v3578
      %v4114 = vpack.c.b16 %v3581, %v3580
      %v4115 = vpack.c.b16 %v3583, %v3582
      %v4116 = vpack.c.b16 %v3585, %v3584
      %v4117 = vpack.c.b16 %v3587, %v3586
      %v4118 = vpack.c.b16 %v3589, %v3588
      %v4119 = vpack.c.b16 %v3591, %v3590
      %v4120 = vpack.c.b16 %v3593, %v3592
      %v4121 = vpack.c.b16 %v3595, %v3594
      %v4122 = vpack.c.b16 %v3597, %v3596
      %v4123 = vpack.c.b16 %v3599, %v3598
      %v4124 = vpack.c.b16 %v3601, %v3600
      %v4125 = vpack.c.b16 %v3603, %v3602
      %v4126 = vpack.c.b16 %v3605, %v3604
      %v4127 = vpack.c.b16 %v3607, %v3606
      %v4128 = vpack.c.b16 %v3609, %v3608
      %v4129 = vpack.c.b16 %v3611, %v3610
      %v4130 = vpack.c.b16 %v3613, %v3612
      %v4131 = vpack.c.b16 %v3615, %v3614
      %v4132 = vpack.c.b16 %v3617, %v3616
      %v4133 = vpack.c.b16 %v3619, %v3618
      %v4134 = vpack.c.b16 %v3621, %v3620
      %v4135 = vpack.c.b16 %v3623, %v3622
      %4648 = vmatprep.subr.bf16.mxu0 0
      %4649 = vmatpush1.bf16.msra.mxu0 %v3624
      %4650 = vmatprep.subr.bf16.mxu0 0
      %4651 = vmatpush1.bf16.msra.mxu0 %v3625
      %4652 = vmatprep.subr.bf16.mxu0 0
      %4653 = vmatpush1.bf16.msra.mxu0 %v3626
      %4654 = vmatprep.subr.bf16.mxu0 0
      %4655 = vmatpush1.bf16.msra.mxu0 %v3627
      %4656 = vmatprep.subr.bf16.mxu0 0
      %4657 = vmatpush1.bf16.msra.mxu0 %v3628
      %4658 = vmatprep.subr.bf16.mxu0 0
      %4659 = vmatpush1.bf16.msra.mxu0 %v3629
      %4660 = vmatprep.subr.bf16.mxu0 0
      %4661 = vmatpush1.bf16.msra.mxu0 %v3630
      %4662 = vmatprep.subr.bf16.mxu0 0
      %4663 = vmatpush1.bf16.msra.mxu0 %v3631
      %4664 = vmatprep.subr.bf16.mxu0 0
      %4665 = vmatpush1.bf16.msra.mxu0 %v3632
      %4666 = vmatprep.subr.bf16.mxu0 0
      %4667 = vmatpush1.bf16.msra.mxu0 %v3633
      %4668 = vmatprep.subr.bf16.mxu0 0
      %4669 = vmatpush1.bf16.msra.mxu0 %v3634
      %4670 = vmatprep.subr.bf16.mxu0 0
      %4671 = vmatpush1.bf16.msra.mxu0 %v3635
      %4672 = vmatprep.subr.bf16.mxu0 0
      %4673 = vmatpush1.bf16.msra.mxu0 %v3636
      %4674 = vmatprep.subr.bf16.mxu0 0
      %4675 = vmatpush1.bf16.msra.mxu0 %v3637
      %4676 = vmatprep.subr.bf16.mxu0 0
      %4677 = vmatpush1.bf16.msra.mxu0 %v3638
      %4678 = vmatprep.subr.bf16.mxu0 0
      %4679 = vmatpush1.bf16.msra.mxu0 %v3639
      %4680 = vmatprep.mubr.bf16.mxu0 %v1449
      %4681 = vmatmul.mubr.bf16.gmra.mrb[0].mxu0 %v1448
      %v4682 = vpop.f32.mrb[0].mxu0
      %v4683 = vadd.f32 0.0, %v4682
      %v4684 = vpop.f32.mrb[0].mxu0
      %v4685 = vpop.f32.mrb[0].mxu0
      %v4686 = vpop.f32.mrb[0].mxu0
      %4687 = vdwg.mxu0
      %4688 = vmatprep.subr.bf16.mxu0 0
      %4689 = vmatpush1.bf16.msra.mxu0 %v3640
      %4690 = vmatprep.subr.bf16.mxu0 0
      %4691 = vmatpush1.bf16.msra.mxu0 %v3641
      %4692 = vmatprep.subr.bf16.mxu0 0
      %4693 = vmatpush1.bf16.msra.mxu0 %v3642
      %4694 = vmatprep.subr.bf16.mxu0 0
      %4695 = vmatpush1.bf16.msra.mxu0 %v3643
      %4696 = vmatprep.subr.bf16.mxu0 0
      %4697 = vmatpush1.bf16.msra.mxu0 %v3644
      %4698 = vmatprep.subr.bf16.mxu0 0
      %4699 = vmatpush1.bf16.msra.mxu0 %v3645
      %4700 = vmatprep.subr.bf16.mxu0 0
      %4701 = vmatpush1.bf16.msra.mxu0 %v3646
      %4702 = vmatprep.subr.bf16.mxu0 0
      %4703 = vmatpush1.bf16.msra.mxu0 %v3647
      %4704 = vmatprep.subr.bf16.mxu0 0
      %4705 = vmatpush1.bf16.msra.mxu0 %v3648
      %4706 = vmatprep.subr.bf16.mxu0 0
      %4707 = vmatpush1.bf16.msra.mxu0 %v3649
      %4708 = vmatprep.subr.bf16.mxu0 0
      %4709 = vmatpush1.bf16.msra.mxu0 %v3650
      %4710 = vmatprep.subr.bf16.mxu0 0
      %4711 = vmatpush1.bf16.msra.mxu0 %v3651
      %4712 = vmatprep.subr.bf16.mxu0 0
      %4713 = vmatpush1.bf16.msra.mxu0 %v3652
      %4714 = vmatprep.subr.bf16.mxu0 0
      %4715 = vmatpush1.bf16.msra.mxu0 %v3653
      %4716 = vmatprep.subr.bf16.mxu0 0
      %4717 = vmatpush1.bf16.msra.mxu0 %v3654
      %4718 = vmatprep.subr.bf16.mxu0 0
      %4719 = vmatpush1.bf16.msra.mxu0 %v3655
      %4720 = vmatprep.mubr.bf16.mxu0 %v1451
      %4721 = vmatmul.mubr.bf16.gmra.mrb[0].mxu0 %v1450
      %v4722 = vpop.f32.mrb[0].mxu0
      %v4723 = vadd.f32 %v4683, %v4722
      %v4724 = vpop.f32.mrb[0].mxu0
      %v4725 = vpop.f32.mrb[0].mxu0
      %v4726 = vpop.f32.mrb[0].mxu0
      %4727 = vdwg.mxu0
      %4728 = vmatprep.subr.bf16.mxu0 0
      %4729 = vmatpush1.bf16.msra.mxu0 %v3656
      %4730 = vmatprep.subr.bf16.mxu0 0
      %4731 = vmatpush1.bf16.msra.mxu0 %v3657
      %4732 = vmatprep.subr.bf16.mxu0 0
      %4733 = vmatpush1.bf16.msra.mxu0 %v3658
      %4734 = vmatprep.subr.bf16.mxu0 0
      %4735 = vmatpush1.bf16.msra.mxu0 %v3659
      %4736 = vmatprep.subr.bf16.mxu0 0
      %4737 = vmatpush1.bf16.msra.mxu0 %v3660
      %4738 = vmatprep.subr.bf16.mxu0 0
      %4739 = vmatpush1.bf16.msra.mxu0 %v3661
      %4740 = vmatprep.subr.bf16.mxu0 0
      %4741 = vmatpush1.bf16.msra.mxu0 %v3662
      %4742 = vmatprep.subr.bf16.mxu0 0
      %4743 = vmatpush1.bf16.msra.mxu0 %v3663
      %4744 = vmatprep.subr.bf16.mxu0 0
      %4745 = vmatpush1.bf16.msra.mxu0 %v3664
      %4746 = vmatprep.subr.bf16.mxu0 0
      %4747 = vmatpush1.bf16.msra.mxu0 %v3665
      %4748 = vmatprep.subr.bf16.mxu0 0
      %4749 = vmatpush1.bf16.msra.mxu0 %v3666
      %4750 = vmatprep.subr.bf16.mxu0 0
      %4751 = vmatpush1.bf16.msra.mxu0 %v3667
      %4752 = vmatprep.subr.bf16.mxu0 0
      %4753 = vmatpush1.bf16.msra.mxu0 %v3668
      %4754 = vmatprep.subr.bf16.mxu0 0
      %4755 = vmatpush1.bf16.msra.mxu0 %v3669
      %4756 = vmatprep.subr.bf16.mxu0 0
      %4757 = vmatpush1.bf16.msra.mxu0 %v3670
      %4758 = vmatprep.subr.bf16.mxu0 0
      %4759 = vmatpush1.bf16.msra.mxu0 %v3671
      %4760 = vmatprep.mubr.bf16.mxu0 %v1453
      %4761 = vmatmul.mubr.bf16.gmra.mrb[0].mxu0 %v1452
      %v4762 = vpop.f32.mrb[0].mxu0
      %v4763 = vadd.f32 %v4723, %v4762
      %v4764 = vpop.f32.mrb[0].mxu0
      %v4765 = vpop.f32.mrb[0].mxu0
      %v4766 = vpop.f32.mrb[0].mxu0
      %4767 = vdwg.mxu0
      %4768 = vmatprep.subr.bf16.mxu0 0
      %4769 = vmatpush1.bf16.msra.mxu0 %v3672
      %4770 = vmatprep.subr.bf16.mxu0 0
      %4771 = vmatpush1.bf16.msra.mxu0 %v3673
      %4772 = vmatprep.subr.bf16.mxu0 0
      %4773 = vmatpush1.bf16.msra.mxu0 %v3674
      %4774 = vmatprep.subr.bf16.mxu0 0
      %4775 = vmatpush1.bf16.msra.mxu0 %v3675
      %4776 = vmatprep.subr.bf16.mxu0 0
      %4777 = vmatpush1.bf16.msra.mxu0 %v3676
      %4778 = vmatprep.subr.bf16.mxu0 0
      %4779 = vmatpush1.bf16.msra.mxu0 %v3677
      %4780 = vmatprep.subr.bf16.mxu0 0
      %4781 = vmatpush1.bf16.msra.mxu0 %v3678
      %4782 = vmatprep.subr.bf16.mxu0 0
      %4783 = vmatpush1.bf16.msra.mxu0 %v3679
      %4784 = vmatprep.subr.bf16.mxu0 0
      %4785 = vmatpush1.bf16.msra.mxu0 %v3680
      %4786 = vmatprep.subr.bf16.mxu0 0
      %4787 = vmatpush1.bf16.msra.mxu0 %v3681
      %4788 = vmatprep.subr.bf16.mxu0 0
      %4789 = vmatpush1.bf16.msra.mxu0 %v3682
      %4790 = vmatprep.subr.bf16.mxu0 0
      %4791 = vmatpush1.bf16.msra.mxu0 %v3683
      %4792 = vmatprep.subr.bf16.mxu0 0
      %4793 = vmatpush1.bf16.msra.mxu0 %v3684
      %4794 = vmatprep.subr.bf16.mxu0 0
      %4795 = vmatpush1.bf16.msra.mxu0 %v3685
      %4796 = vmatprep.subr.bf16.mxu0 0
      %4797 = vmatpush1.bf16.msra.mxu0 %v3686
      %4798 = vmatprep.subr.bf16.mxu0 0
      %4799 = vmatpush1.bf16.msra.mxu0 %v3687
      %4800 = vmatprep.mubr.bf16.mxu0 %v1455
      %4801 = vmatmul.mubr.bf16.gmra.mrb[0].mxu0 %v1454
      %v4802 = vpop.f32.mrb[0].mxu0
      %v4803 = vadd.f32 %v4763, %v4802
      %v4804 = vpop.f32.mrb[0].mxu0
      %v4805 = vpop.f32.mrb[0].mxu0
      %v4806 = vpop.f32.mrb[0].mxu0
      %4807 = vdwg.mxu0
      %4808 = vmatprep.subr.bf16.mxu0 0
      %4809 = vmatpush1.bf16.msra.mxu0 %v3688
      %4810 = vmatprep.subr.bf16.mxu0 0
      %4811 = vmatpush1.bf16.msra.mxu0 %v3689
      %4812 = vmatprep.subr.bf16.mxu0 0
      %4813 = vmatpush1.bf16.msra.mxu0 %v3690
      %4814 = vmatprep.subr.bf16.mxu0 0
      %4815 = vmatpush1.bf16.msra.mxu0 %v3691
      %4816 = vmatprep.subr.bf16.mxu0 0
      %4817 = vmatpush1.bf16.msra.mxu0 %v3692
      %4818 = vmatprep.subr.bf16.mxu0 0
      %4819 = vmatpush1.bf16.msra.mxu0 %v3693
      %4820 = vmatprep.subr.bf16.mxu0 0
      %4821 = vmatpush1.bf16.msra.mxu0 %v3694
      %4822 = vmatprep.subr.bf16.mxu0 0
      %4823 = vmatpush1.bf16.msra.mxu0 %v3695
      %4824 = vmatprep.subr.bf16.mxu0 0
      %4825 = vmatpush1.bf16.msra.mxu0 %v3696
      %4826 = vmatprep.subr.bf16.mxu0 0
      %4827 = vmatpush1.bf16.msra.mxu0 %v3697
      %4828 = vmatprep.subr.bf16.mxu0 0
      %4829 = vmatpush1.bf16.msra.mxu0 %v3698
      %4830 = vmatprep.subr.bf16.mxu0 0
      %4831 = vmatpush1.bf16.msra.mxu0 %v3699
      %4832 = vmatprep.subr.bf16.mxu0 0
      %4833 = vmatpush1.bf16.msra.mxu0 %v3700
      %4834 = vmatprep.subr.bf16.mxu0 0
      %4835 = vmatpush1.bf16.msra.mxu0 %v3701
      %4836 = vmatprep.subr.bf16.mxu0 0
      %4837 = vmatpush1.bf16.msra.mxu0 %v3702
      %4838 = vmatprep.subr.bf16.mxu0 0
      %4839 = vmatpush1.bf16.msra.mxu0 %v3703
      %4840 = vmatprep.mubr.bf16.mxu0 %v1457
      %4841 = vmatmul.mubr.bf16.gmra.mrb[0].mxu0 %v1456
      %v4842 = vpop.f32.mrb[0].mxu0
      %v4843 = vadd.f32 %v4803, %v4842
      %v4844 = vpop.f32.mrb[0].mxu0
      %v4845 = vpop.f32.mrb[0].mxu0
      %v4846 = vpop.f32.mrb[0].mxu0
      %4847 = vdwg.mxu0
      %4848 = vmatprep.subr.bf16.mxu0 0
      %4849 = vmatpush1.bf16.msra.mxu0 %v3704
      %4850 = vmatprep.subr.bf16.mxu0 0
      %4851 = vmatpush1.bf16.msra.mxu0 %v3705
      %4852 = vmatprep.subr.bf16.mxu0 0
      %4853 = vmatpush1.bf16.msra.mxu0 %v3706
      %4854 = vmatprep.subr.bf16.mxu0 0
      %4855 = vmatpush1.bf16.msra.mxu0 %v3707
      %4856 = vmatprep.subr.bf16.mxu0 0
      %4857 = vmatpush1.bf16.msra.mxu0 %v3708
      %4858 = vmatprep.subr.bf16.mxu0 0
      %4859 = vmatpush1.bf16.msra.mxu0 %v3709
      %4860 = vmatprep.subr.bf16.mxu0 0
      %4861 = vmatpush1.bf16.msra.mxu0 %v3710
      %4862 = vmatprep.subr.bf16.mxu0 0
      %4863 = vmatpush1.bf16.msra.mxu0 %v3711
      %4864 = vmatprep.subr.bf16.mxu0 0
      %4865 = vmatpush1.bf16.msra.mxu0 %v3712
      %4866 = vmatprep.subr.bf16.mxu0 0
      %4867 = vmatpush1.bf16.msra.mxu0 %v3713
      %4868 = vmatprep.subr.bf16.mxu0 0
      %4869 = vmatpush1.bf16.msra.mxu0 %v3714
      %4870 = vmatprep.subr.bf16.mxu0 0
      %4871 = vmatpush1.bf16.msra.mxu0 %v3715
      %4872 = vmatprep.subr.bf16.mxu0 0
      %4873 = vmatpush1.bf16.msra.mxu0 %v3716
      %4874 = vmatprep.subr.bf16.mxu0 0
      %4875 = vmatpush1.bf16.msra.mxu0 %v3717
      %4876 = vmatprep.subr.bf16.mxu0 0
      %4877 = vmatpush1.bf16.msra.mxu0 %v3718
      %4878 = vmatprep.subr.bf16.mxu0 0
      %4879 = vmatpush1.bf16.msra.mxu0 %v3719
      %4880 = vmatprep.mubr.bf16.mxu0 %v1459
      %4881 = vmatmul.mubr.bf16.gmra.mrb[0].mxu0 %v1458
      %v4882 = vpop.f32.mrb[0].mxu0
      %v4883 = vadd.f32 %v4843, %v4882
      %v4884 = vpop.f32.mrb[0].mxu0
      %v4885 = vpop.f32.mrb[0].mxu0
      %v4886 = vpop.f32.mrb[0].mxu0
      %4887 = vdwg.mxu0
      %4888 = vmatprep.subr.bf16.mxu0 0
      %4889 = vmatpush1.bf16.msra.mxu0 %v3720
      %4890 = vmatprep.subr.bf16.mxu0 0
      %4891 = vmatpush1.bf16.msra.mxu0 %v3721
      %4892 = vmatprep.subr.bf16.mxu0 0
      %4893 = vmatpush1.bf16.msra.mxu0 %v3722
      %4894 = vmatprep.subr.bf16.mxu0 0
      %4895 = vmatpush1.bf16.msra.mxu0 %v3723
      %4896 = vmatprep.subr.bf16.mxu0 0
      %4897 = vmatpush1.bf16.msra.mxu0 %v3724
      %4898 = vmatprep.subr.bf16.mxu0 0
      %4899 = vmatpush1.bf16.msra.mxu0 %v3725
      %4900 = vmatprep.subr.bf16.mxu0 0
      %4901 = vmatpush1.bf16.msra.mxu0 %v3726
      %4902 = vmatprep.subr.bf16.mxu0 0
      %4903 = vmatpush1.bf16.msra.mxu0 %v3727
      %4904 = vmatprep.subr.bf16.mxu0 0
      %4905 = vmatpush1.bf16.msra.mxu0 %v3728
      %4906 = vmatprep.subr.bf16.mxu0 0
      %4907 = vmatpush1.bf16.msra.mxu0 %v3729
      %4908 = vmatprep.subr.bf16.mxu0 0
      %4909 = vmatpush1.bf16.msra.mxu0 %v3730
      %4910 = vmatprep.subr.bf16.mxu0 0
      %4911 = vmatpush1.bf16.msra.mxu0 %v3731
      %4912 = vmatprep.subr.bf16.mxu0 0
      %4913 = vmatpush1.bf16.msra.mxu0 %v3732
      %4914 = vmatprep.subr.bf16.mxu0 0
      %4915 = vmatpush1.bf16.msra.mxu0 %v3733
      %4916 = vmatprep.subr.bf16.mxu0 0
      %4917 = vmatpush1.bf16.msra.mxu0 %v3734
      %4918 = vmatprep.subr.bf16.mxu0 0
      %4919 = vmatpush1.bf16.msra.mxu0 %v3735
      %4920 = vmatprep.mubr.bf16.mxu0 %v1461
      %4921 = vmatmul.mubr.bf16.gmra.mrb[0].mxu0 %v1460
      %v4922 = vpop.f32.mrb[0].mxu0
      %v4923 = vadd.f32 %v4883, %v4922
      %v4924 = vpop.f32.mrb[0].mxu0
      %v4925 = vpop.f32.mrb[0].mxu0
      %v4926 = vpop.f32.mrb[0].mxu0
      %4927 = vdwg.mxu0
      %4928 = vmatprep.subr.bf16.mxu0 0
      %4929 = vmatpush1.bf16.msra.mxu0 %v3736
      %4930 = vmatprep.subr.bf16.mxu0 0
      %4931 = vmatpush1.bf16.msra.mxu0 %v3737
      %4932 = vmatprep.subr.bf16.mxu0 0
      %4933 = vmatpush1.bf16.msra.mxu0 %v3738
      %4934 = vmatprep.subr.bf16.mxu0 0
      %4935 = vmatpush1.bf16.msra.mxu0 %v3739
      %4936 = vmatprep.subr.bf16.mxu0 0
      %4937 = vmatpush1.bf16.msra.mxu0 %v3740
      %4938 = vmatprep.subr.bf16.mxu0 0
      %4939 = vmatpush1.bf16.msra.mxu0 %v3741
      %4940 = vmatprep.subr.bf16.mxu0 0
      %4941 = vmatpush1.bf16.msra.mxu0 %v3742
      %4942 = vmatprep.subr.bf16.mxu0 0
      %4943 = vmatpush1.bf16.msra.mxu0 %v3743
      %4944 = vmatprep.subr.bf16.mxu0 0
      %4945 = vmatpush1.bf16.msra.mxu0 %v3744
      %4946 = vmatprep.subr.bf16.mxu0 0
      %4947 = vmatpush1.bf16.msra.mxu0 %v3745
      %4948 = vmatprep.subr.bf16.mxu0 0
      %4949 = vmatpush1.bf16.msra.mxu0 %v3746
      %4950 = vmatprep.subr.bf16.mxu0 0
      %4951 = vmatpush1.bf16.msra.mxu0 %v3747
      %4952 = vmatprep.subr.bf16.mxu0 0
      %4953 = vmatpush1.bf16.msra.mxu0 %v3748
      %4954 = vmatprep.subr.bf16.mxu0 0
      %4955 = vmatpush1.bf16.msra.mxu0 %v3749
      %4956 = vmatprep.subr.bf16.mxu0 0
      %4957 = vmatpush1.bf16.msra.mxu0 %v3750
      %4958 = vmatprep.subr.bf16.mxu0 0
      %4959 = vmatpush1.bf16.msra.mxu0 %v3751
      %4960 = vmatprep.mubr.bf16.mxu0 %v1463
      %4961 = vmatmul.mubr.bf16.gmra.mrb[0].mxu0 %v1462
      %v4962 = vpop.f32.mrb[0].mxu0
      %v4963 = vadd.f32 %v4923, %v4962
      %v4964 = vpop.f32.mrb[0].mxu0
      %v4965 = vpop.f32.mrb[0].mxu0
      %v4966 = vpop.f32.mrb[0].mxu0
      %4967 = vdwg.mxu0
      %4968 = vmatprep.subr.bf16.mxu0 0
      %4969 = vmatpush1.bf16.msra.mxu0 %v3752
      %4970 = vmatprep.subr.bf16.mxu0 0
      %4971 = vmatpush1.bf16.msra.mxu0 %v3753
      %4972 = vmatprep.subr.bf16.mxu0 0
      %4973 = vmatpush1.bf16.msra.mxu0 %v3754
      %4974 = vmatprep.subr.bf16.mxu0 0
      %4975 = vmatpush1.bf16.msra.mxu0 %v3755
      %4976 = vmatprep.subr.bf16.mxu0 0
      %4977 = vmatpush1.bf16.msra.mxu0 %v3756
      %4978 = vmatprep.subr.bf16.mxu0 0
      %4979 = vmatpush1.bf16.msra.mxu0 %v3757
      %4980 = vmatprep.subr.bf16.mxu0 0
      %4981 = vmatpush1.bf16.msra.mxu0 %v3758
      %4982 = vmatprep.subr.bf16.mxu0 0
      %4983 = vmatpush1.bf16.msra.mxu0 %v3759
      %4984 = vmatprep.subr.bf16.mxu0 0
      %4985 = vmatpush1.bf16.msra.mxu0 %v3760
      %4986 = vmatprep.subr.bf16.mxu0 0
      %4987 = vmatpush1.bf16.msra.mxu0 %v3761
      %4988 = vmatprep.subr.bf16.mxu0 0
      %4989 = vmatpush1.bf16.msra.mxu0 %v3762
      %4990 = vmatprep.subr.bf16.mxu0 0
      %4991 = vmatpush1.bf16.msra.mxu0 %v3763
      %4992 = vmatprep.subr.bf16.mxu0 0
      %4993 = vmatpush1.bf16.msra.mxu0 %v3764
      %4994 = vmatprep.subr.bf16.mxu0 0
      %4995 = vmatpush1.bf16.msra.mxu0 %v3765
      %4996 = vmatprep.subr.bf16.mxu0 0
      %4997 = vmatpush1.bf16.msra.mxu0 %v3766
      %4998 = vmatprep.subr.bf16.mxu0 0
      %4999 = vmatpush1.bf16.msra.mxu0 %v3767
      %5000 = vmatprep.mubr.bf16.mxu0 %v1465
      %5001 = vmatmul.mubr.bf16.gmra.mrb[0].mxu0 %v1464
      %v5002 = vpop.f32.mrb[0].mxu0
      %v5003 = vadd.f32 %v4963, %v5002
      %v5004 = vpop.f32.mrb[0].mxu0
      %v5005 = vpop.f32.mrb[0].mxu0
      %v5006 = vpop.f32.mrb[0].mxu0
      %5007 = vdwg.mxu0
      %5008 = vmatprep.subr.bf16.mxu0 0
      %5009 = vmatpush1.bf16.msra.mxu0 %v3768
      %5010 = vmatprep.subr.bf16.mxu0 0
      %5011 = vmatpush1.bf16.msra.mxu0 %v3769
      %5012 = vmatprep.subr.bf16.mxu0 0
      %5013 = vmatpush1.bf16.msra.mxu0 %v3770
      %5014 = vmatprep.subr.bf16.mxu0 0
      %5015 = vmatpush1.bf16.msra.mxu0 %v3771
      %5016 = vmatprep.subr.bf16.mxu0 0
      %5017 = vmatpush1.bf16.msra.mxu0 %v3772
      %5018 = vmatprep.subr.bf16.mxu0 0
      %5019 = vmatpush1.bf16.msra.mxu0 %v3773
      %5020 = vmatprep.subr.bf16.mxu0 0
      %5021 = vmatpush1.bf16.msra.mxu0 %v3774
      %5022 = vmatprep.subr.bf16.mxu0 0
      %5023 = vmatpush1.bf16.msra.mxu0 %v3775
      %5024 = vmatprep.subr.bf16.mxu0 0
      %5025 = vmatpush1.bf16.msra.mxu0 %v3776
      %5026 = vmatprep.subr.bf16.mxu0 0
      %5027 = vmatpush1.bf16.msra.mxu0 %v3777
      %5028 = vmatprep.subr.bf16.mxu0 0
      %5029 = vmatpush1.bf16.msra.mxu0 %v3778
      %5030 = vmatprep.subr.bf16.mxu0 0
      %5031 = vmatpush1.bf16.msra.mxu0 %v3779
      %5032 = vmatprep.subr.bf16.mxu0 0
      %5033 = vmatpush1.bf16.msra.mxu0 %v3780
      %5034 = vmatprep.subr.bf16.mxu0 0
      %5035 = vmatpush1.bf16.msra.mxu0 %v3781
      %5036 = vmatprep.subr.bf16.mxu0 0
      %5037 = vmatpush1.bf16.msra.mxu0 %v3782
      %5038 = vmatprep.subr.bf16.mxu0 0
      %5039 = vmatpush1.bf16.msra.mxu0 %v3783
      %5040 = vmatprep.mubr.bf16.mxu0 %v1467
      %5041 = vmatmul.mubr.bf16.gmra.mrb[0].mxu0 %v1466
      %v5042 = vpop.f32.mrb[0].mxu0
      %v5043 = vadd.f32 %v5003, %v5042
      %v5044 = vpop.f32.mrb[0].mxu0
      %v5045 = vpop.f32.mrb[0].mxu0
      %v5046 = vpop.f32.mrb[0].mxu0
      %5047 = vdwg.mxu0
      %5048 = vmatprep.subr.bf16.mxu0 0
      %5049 = vmatpush1.bf16.msra.mxu0 %v3784
      %5050 = vmatprep.subr.bf16.mxu0 0
      %5051 = vmatpush1.bf16.msra.mxu0 %v3785
      %5052 = vmatprep.subr.bf16.mxu0 0
      %5053 = vmatpush1.bf16.msra.mxu0 %v3786
      %5054 = vmatprep.subr.bf16.mxu0 0
      %5055 = vmatpush1.bf16.msra.mxu0 %v3787
      %5056 = vmatprep.subr.bf16.mxu0 0
      %5057 = vmatpush1.bf16.msra.mxu0 %v3788
      %5058 = vmatprep.subr.bf16.mxu0 0
      %5059 = vmatpush1.bf16.msra.mxu0 %v3789
      %5060 = vmatprep.subr.bf16.mxu0 0
      %5061 = vmatpush1.bf16.msra.mxu0 %v3790
      %5062 = vmatprep.subr.bf16.mxu0 0
      %5063 = vmatpush1.bf16.msra.mxu0 %v3791
      %5064 = vmatprep.subr.bf16.mxu0 0
      %5065 = vmatpush1.bf16.msra.mxu0 %v3792
      %5066 = vmatprep.subr.bf16.mxu0 0
      %5067 = vmatpush1.bf16.msra.mxu0 %v3793
      %5068 = vmatprep.subr.bf16.mxu0 0
      %5069 = vmatpush1.bf16.msra.mxu0 %v3794
      %5070 = vmatprep.subr.bf16.mxu0 0
      %5071 = vmatpush1.bf16.msra.mxu0 %v3795
      %5072 = vmatprep.subr.bf16.mxu0 0
      %5073 = vmatpush1.bf16.msra.mxu0 %v3796
      %5074 = vmatprep.subr.bf16.mxu0 0
      %5075 = vmatpush1.bf16.msra.mxu0 %v3797
      %5076 = vmatprep.subr.bf16.mxu0 0
      %5077 = vmatpush1.bf16.msra.mxu0 %v3798
      %5078 = vmatprep.subr.bf16.mxu0 0
      %5079 = vmatpush1.bf16.msra.mxu0 %v3799
      %5080 = vmatprep.mubr.bf16.mxu0 %v1469
      %5081 = vmatmul.mubr.bf16.gmra.mrb[0].mxu0 %v1468
      %v5082 = vpop.f32.mrb[0].mxu0
      %v5083 = vadd.f32 %v5043, %v5082
      %v5084 = vpop.f32.mrb[0].mxu0
      %v5085 = vpop.f32.mrb[0].mxu0
      %v5086 = vpop.f32.mrb[0].mxu0
      %5087 = vdwg.mxu0
      %5088 = vmatprep.subr.bf16.mxu0 0
      %5089 = vmatpush1.bf16.msra.mxu0 %v3800
      %5090 = vmatprep.subr.bf16.mxu0 0
      %5091 = vmatpush1.bf16.msra.mxu0 %v3801
      %5092 = vmatprep.subr.bf16.mxu0 0
      %5093 = vmatpush1.bf16.msra.mxu0 %v3802
      %5094 = vmatprep.subr.bf16.mxu0 0
      %5095 = vmatpush1.bf16.msra.mxu0 %v3803
      %5096 = vmatprep.subr.bf16.mxu0 0
      %5097 = vmatpush1.bf16.msra.mxu0 %v3804
      %5098 = vmatprep.subr.bf16.mxu0 0
      %5099 = vmatpush1.bf16.msra.mxu0 %v3805
      %5100 = vmatprep.subr.bf16.mxu0 0
      %5101 = vmatpush1.bf16.msra.mxu0 %v3806
      %5102 = vmatprep.subr.bf16.mxu0 0
      %5103 = vmatpush1.bf16.msra.mxu0 %v3807
      %5104 = vmatprep.subr.bf16.mxu0 0
      %5105 = vmatpush1.bf16.msra.mxu0 %v3808
      %5106 = vmatprep.subr.bf16.mxu0 0
      %5107 = vmatpush1.bf16.msra.mxu0 %v3809
      %5108 = vmatprep.subr.bf16.mxu0 0
      %5109 = vmatpush1.bf16.msra.mxu0 %v3810
      %5110 = vmatprep.subr.bf16.mxu0 0
      %5111 = vmatpush1.bf16.msra.mxu0 %v3811
      %5112 = vmatprep.subr.bf16.mxu0 0
      %5113 = vmatpush1.bf16.msra.mxu0 %v3812
      %5114 = vmatprep.subr.bf16.mxu0 0
      %5115 = vmatpush1.bf16.msra.mxu0 %v3813
      %5116 = vmatprep.subr.bf16.mxu0 0
      %5117 = vmatpush1.bf16.msra.mxu0 %v3814
      %5118 = vmatprep.subr.bf16.mxu0 0
      %5119 = vmatpush1.bf16.msra.mxu0 %v3815
      %5120 = vmatprep.mubr.bf16.mxu0 %v1471
      %5121 = vmatmul.mubr.bf16.gmra.mrb[0].mxu0 %v1470
      %v5122 = vpop.f32.mrb[0].mxu0
      %v5123 = vadd.f32 %v5083, %v5122
      %v5124 = vpop.f32.mrb[0].mxu0
      %v5125 = vpop.f32.mrb[0].mxu0
      %v5126 = vpop.f32.mrb[0].mxu0
      %5127 = vdwg.mxu0
      %5128 = vmatprep.subr.bf16.mxu0 0
      %5129 = vmatpush1.bf16.msra.mxu0 %v3816
      %5130 = vmatprep.subr.bf16.mxu0 0
      %5131 = vmatpush1.bf16.msra.mxu0 %v3817
      %5132 = vmatprep.subr.bf16.mxu0 0
      %5133 = vmatpush1.bf16.msra.mxu0 %v3818
      %5134 = vmatprep.subr.bf16.mxu0 0
      %5135 = vmatpush1.bf16.msra.mxu0 %v3819
      %5136 = vmatprep.subr.bf16.mxu0 0
      %5137 = vmatpush1.bf16.msra.mxu0 %v3820
      %5138 = vmatprep.subr.bf16.mxu0 0
      %5139 = vmatpush1.bf16.msra.mxu0 %v3821
      %5140 = vmatprep.subr.bf16.mxu0 0
      %5141 = vmatpush1.bf16.msra.mxu0 %v3822
      %5142 = vmatprep.subr.bf16.mxu0 0
      %5143 = vmatpush1.bf16.msra.mxu0 %v3823
      %5144 = vmatprep.subr.bf16.mxu0 0
      %5145 = vmatpush1.bf16.msra.mxu0 %v3824
      %5146 = vmatprep.subr.bf16.mxu0 0
      %5147 = vmatpush1.bf16.msra.mxu0 %v3825
      %5148 = vmatprep.subr.bf16.mxu0 0
      %5149 = vmatpush1.bf16.msra.mxu0 %v3826
      %5150 = vmatprep.subr.bf16.mxu0 0
      %5151 = vmatpush1.bf16.msra.mxu0 %v3827
      %5152 = vmatprep.subr.bf16.mxu0 0
      %5153 = vmatpush1.bf16.msra.mxu0 %v3828
      %5154 = vmatprep.subr.bf16.mxu0 0
      %5155 = vmatpush1.bf16.msra.mxu0 %v3829
      %5156 = vmatprep.subr.bf16.mxu0 0
      %5157 = vmatpush1.bf16.msra.mxu0 %v3830
      %5158 = vmatprep.subr.bf16.mxu0 0
      %5159 = vmatpush1.bf16.msra.mxu0 %v3831
      %5160 = vmatprep.mubr.bf16.mxu0 %v1473
      %5161 = vmatmul.mubr.bf16.gmra.mrb[0].mxu0 %v1472
      %v5162 = vpop.f32.mrb[0].mxu0
      %v5163 = vadd.f32 %v5123, %v5162
      %v5164 = vpop.f32.mrb[0].mxu0
      %v5165 = vpop.f32.mrb[0].mxu0
      %v5166 = vpop.f32.mrb[0].mxu0
      %5167 = vdwg.mxu0
      %5168 = vmatprep.subr.bf16.mxu0 0
      %5169 = vmatpush1.bf16.msra.mxu0 %v3832
      %5170 = vmatprep.subr.bf16.mxu0 0
      %5171 = vmatpush1.bf16.msra.mxu0 %v3833
      %5172 = vmatprep.subr.bf16.mxu0 0
      %5173 = vmatpush1.bf16.msra.mxu0 %v3834
      %5174 = vmatprep.subr.bf16.mxu0 0
      %5175 = vmatpush1.bf16.msra.mxu0 %v3835
      %5176 = vmatprep.subr.bf16.mxu0 0
      %5177 = vmatpush1.bf16.msra.mxu0 %v3836
      %5178 = vmatprep.subr.bf16.mxu0 0
      %5179 = vmatpush1.bf16.msra.mxu0 %v3837
      %5180 = vmatprep.subr.bf16.mxu0 0
      %5181 = vmatpush1.bf16.msra.mxu0 %v3838
      %5182 = vmatprep.subr.bf16.mxu0 0
      %5183 = vmatpush1.bf16.msra.mxu0 %v3839
      %5184 = vmatprep.subr.bf16.mxu0 0
      %5185 = vmatpush1.bf16.msra.mxu0 %v3840
      %5186 = vmatprep.subr.bf16.mxu0 0
      %5187 = vmatpush1.bf16.msra.mxu0 %v3841
      %5188 = vmatprep.subr.bf16.mxu0 0
      %5189 = vmatpush1.bf16.msra.mxu0 %v3842
      %5190 = vmatprep.subr.bf16.mxu0 0
      %5191 = vmatpush1.bf16.msra.mxu0 %v3843
      %5192 = vmatprep.subr.bf16.mxu0 0
      %5193 = vmatpush1.bf16.msra.mxu0 %v3844
      %5194 = vmatprep.subr.bf16.mxu0 0
      %5195 = vmatpush1.bf16.msra.mxu0 %v3845
      %5196 = vmatprep.subr.bf16.mxu0 0
      %5197 = vmatpush1.bf16.msra.mxu0 %v3846
      %5198 = vmatprep.subr.bf16.mxu0 0
      %5199 = vmatpush1.bf16.msra.mxu0 %v3847
      %5200 = vmatprep.mubr.bf16.mxu0 %v1475
      %5201 = vmatmul.mubr.bf16.gmra.mrb[0].mxu0 %v1474
      %v5202 = vpop.f32.mrb[0].mxu0
      %v5203 = vadd.f32 %v5163, %v5202
      %v5204 = vpop.f32.mrb[0].mxu0
      %v5205 = vpop.f32.mrb[0].mxu0
      %v5206 = vpop.f32.mrb[0].mxu0
      %5207 = vdwg.mxu0
      %5208 = vmatprep.subr.bf16.mxu0 0
      %5209 = vmatpush1.bf16.msra.mxu0 %v3848
      %5210 = vmatprep.subr.bf16.mxu0 0
      %5211 = vmatpush1.bf16.msra.mxu0 %v3849
      %5212 = vmatprep.subr.bf16.mxu0 0
      %5213 = vmatpush1.bf16.msra.mxu0 %v3850
      %5214 = vmatprep.subr.bf16.mxu0 0
      %5215 = vmatpush1.bf16.msra.mxu0 %v3851
      %5216 = vmatprep.subr.bf16.mxu0 0
      %5217 = vmatpush1.bf16.msra.mxu0 %v3852
      %5218 = vmatprep.subr.bf16.mxu0 0
      %5219 = vmatpush1.bf16.msra.mxu0 %v3853
      %5220 = vmatprep.subr.bf16.mxu0 0
      %5221 = vmatpush1.bf16.msra.mxu0 %v3854
      %5222 = vmatprep.subr.bf16.mxu0 0
      %5223 = vmatpush1.bf16.msra.mxu0 %v3855
      %5224 = vmatprep.subr.bf16.mxu0 0
      %5225 = vmatpush1.bf16.msra.mxu0 %v3856
      %5226 = vmatprep.subr.bf16.mxu0 0
      %5227 = vmatpush1.bf16.msra.mxu0 %v3857
      %5228 = vmatprep.subr.bf16.mxu0 0
      %5229 = vmatpush1.bf16.msra.mxu0 %v3858
      %5230 = vmatprep.subr.bf16.mxu0 0
      %5231 = vmatpush1.bf16.msra.mxu0 %v3859
      %5232 = vmatprep.subr.bf16.mxu0 0
      %5233 = vmatpush1.bf16.msra.mxu0 %v3860
      %5234 = vmatprep.subr.bf16.mxu0 0
      %5235 = vmatpush1.bf16.msra.mxu0 %v3861
      %5236 = vmatprep.subr.bf16.mxu0 0
      %5237 = vmatpush1.bf16.msra.mxu0 %v3862
      %5238 = vmatprep.subr.bf16.mxu0 0
      %5239 = vmatpush1.bf16.msra.mxu0 %v3863
      %5240 = vmatprep.mubr.bf16.mxu0 %v1477
      %5241 = vmatmul.mubr.bf16.gmra.mrb[0].mxu0 %v1476
      %v5242 = vpop.f32.mrb[0].mxu0
      %v5243 = vadd.f32 %v5203, %v5242
      %v5244 = vpop.f32.mrb[0].mxu0
      %v5245 = vpop.f32.mrb[0].mxu0
      %v5246 = vpop.f32.mrb[0].mxu0
      %5247 = vdwg.mxu0
      %5248 = vmatprep.subr.bf16.mxu0 0
      %5249 = vmatpush1.bf16.msra.mxu0 %v3864
      %5250 = vmatprep.subr.bf16.mxu0 0
      %5251 = vmatpush1.bf16.msra.mxu0 %v3865
      %5252 = vmatprep.subr.bf16.mxu0 0
      %5253 = vmatpush1.bf16.msra.mxu0 %v3866
      %5254 = vmatprep.subr.bf16.mxu0 0
      %5255 = vmatpush1.bf16.msra.mxu0 %v3867
      %5256 = vmatprep.subr.bf16.mxu0 0
      %5257 = vmatpush1.bf16.msra.mxu0 %v3868
      %5258 = vmatprep.subr.bf16.mxu0 0
      %5259 = vmatpush1.bf16.msra.mxu0 %v3869
      %5260 = vmatprep.subr.bf16.mxu0 0
      %5261 = vmatpush1.bf16.msra.mxu0 %v3870
      %5262 = vmatprep.subr.bf16.mxu0 0
      %5263 = vmatpush1.bf16.msra.mxu0 %v3871
      %5264 = vmatprep.subr.bf16.mxu0 0
      %5265 = vmatpush1.bf16.msra.mxu0 %v3872
      %5266 = vmatprep.subr.bf16.mxu0 0
      %5267 = vmatpush1.bf16.msra.mxu0 %v3873
      %5268 = vmatprep.subr.bf16.mxu0 0
      %5269 = vmatpush1.bf16.msra.mxu0 %v3874
      %5270 = vmatprep.subr.bf16.mxu0 0
      %5271 = vmatpush1.bf16.msra.mxu0 %v3875
      %5272 = vmatprep.subr.bf16.mxu0 0
      %5273 = vmatpush1.bf16.msra.mxu0 %v3876
      %5274 = vmatprep.subr.bf16.mxu0 0
      %5275 = vmatpush1.bf16.msra.mxu0 %v3877
      %5276 = vmatprep.subr.bf16.mxu0 0
      %5277 = vmatpush1.bf16.msra.mxu0 %v3878
      %5278 = vmatprep.subr.bf16.mxu0 0
      %5279 = vmatpush1.bf16.msra.mxu0 %v3879
      %5280 = vmatprep.mubr.bf16.mxu0 %v1479
      %5281 = vmatmul.mubr.bf16.gmra.mrb[0].mxu0 %v1478
      %v5282 = vpop.f32.mrb[0].mxu0
      %v5283 = vadd.f32 %v5243, %v5282
      %v5284 = vpop.f32.mrb[0].mxu0
      %v5285 = vpop.f32.mrb[0].mxu0
      %v5286 = vpop.f32.mrb[0].mxu0
      %5287 = vdwg.mxu0
      %5288 = vmatprep.subr.bf16.mxu0 0
      %5289 = vmatpush1.bf16.msra.mxu0 %v3880
      %5290 = vmatprep.subr.bf16.mxu0 0
      %5291 = vmatpush1.bf16.msra.mxu0 %v3881
      %5292 = vmatprep.subr.bf16.mxu0 0
      %5293 = vmatpush1.bf16.msra.mxu0 %v3882
      %5294 = vmatprep.subr.bf16.mxu0 0
      %5295 = vmatpush1.bf16.msra.mxu0 %v3883
      %5296 = vmatprep.subr.bf16.mxu0 0
      %5297 = vmatpush1.bf16.msra.mxu0 %v3884
      %5298 = vmatprep.subr.bf16.mxu0 0
      %5299 = vmatpush1.bf16.msra.mxu0 %v3885
      %5300 = vmatprep.subr.bf16.mxu0 0
      %5301 = vmatpush1.bf16.msra.mxu0 %v3886
      %5302 = vmatprep.subr.bf16.mxu0 0
      %5303 = vmatpush1.bf16.msra.mxu0 %v3887
      %5304 = vmatprep.subr.bf16.mxu0 0
      %5305 = vmatpush1.bf16.msra.mxu0 %v3888
      %5306 = vmatprep.subr.bf16.mxu0 0
      %5307 = vmatpush1.bf16.msra.mxu0 %v3889
      %5308 = vmatprep.subr.bf16.mxu0 0
      %5309 = vmatpush1.bf16.msra.mxu0 %v3890
      %5310 = vmatprep.subr.bf16.mxu0 0
      %5311 = vmatpush1.bf16.msra.mxu0 %v3891
      %5312 = vmatprep.subr.bf16.mxu0 0
      %5313 = vmatpush1.bf16.msra.mxu0 %v3892
      %5314 = vmatprep.subr.bf16.mxu0 0
      %5315 = vmatpush1.bf16.msra.mxu0 %v3893
      %5316 = vmatprep.subr.bf16.mxu0 0
      %5317 = vmatpush1.bf16.msra.mxu0 %v3894
      %5318 = vmatprep.subr.bf16.mxu0 0
      %5319 = vmatpush1.bf16.msra.mxu0 %v3895
      %5320 = vmatprep.mubr.bf16.mxu0 %v1481
      %5321 = vmatmul.mubr.bf16.gmra.mrb[0].mxu0 %v1480
      %v5322 = vpop.f32.mrb[0].mxu0
      %v5323 = vadd.f32 %v5283, %v5322
      %v5324 = vpop.f32.mrb[0].mxu0
      %v5325 = vpop.f32.mrb[0].mxu0
      %v5326 = vpop.f32.mrb[0].mxu0
      %5327 = vdwg.mxu0
      %5328 = vmatprep.subr.bf16.mxu0 0
      %5329 = vmatpush1.bf16.msra.mxu0 %v3896
      %5330 = vmatprep.subr.bf16.mxu0 0
      %5331 = vmatpush1.bf16.msra.mxu0 %v3897
      %5332 = vmatprep.subr.bf16.mxu0 0
      %5333 = vmatpush1.bf16.msra.mxu0 %v3898
      %5334 = vmatprep.subr.bf16.mxu0 0
      %5335 = vmatpush1.bf16.msra.mxu0 %v3899
      %5336 = vmatprep.subr.bf16.mxu0 0
      %5337 = vmatpush1.bf16.msra.mxu0 %v3900
      %5338 = vmatprep.subr.bf16.mxu0 0
      %5339 = vmatpush1.bf16.msra.mxu0 %v3901
      %5340 = vmatprep.subr.bf16.mxu0 0
      %5341 = vmatpush1.bf16.msra.mxu0 %v3902
      %5342 = vmatprep.subr.bf16.mxu0 0
      %5343 = vmatpush1.bf16.msra.mxu0 %v3903
      %5344 = vmatprep.subr.bf16.mxu0 0
      %5345 = vmatpush1.bf16.msra.mxu0 %v3904
      %5346 = vmatprep.subr.bf16.mxu0 0
      %5347 = vmatpush1.bf16.msra.mxu0 %v3905
      %5348 = vmatprep.subr.bf16.mxu0 0
      %5349 = vmatpush1.bf16.msra.mxu0 %v3906
      %5350 = vmatprep.subr.bf16.mxu0 0
      %5351 = vmatpush1.bf16.msra.mxu0 %v3907
      %5352 = vmatprep.subr.bf16.mxu0 0
      %5353 = vmatpush1.bf16.msra.mxu0 %v3908
      %5354 = vmatprep.subr.bf16.mxu0 0
      %5355 = vmatpush1.bf16.msra.mxu0 %v3909
      %5356 = vmatprep.subr.bf16.mxu0 0
      %5357 = vmatpush1.bf16.msra.mxu0 %v3910
      %5358 = vmatprep.subr.bf16.mxu0 0
      %5359 = vmatpush1.bf16.msra.mxu0 %v3911
      %5360 = vmatprep.mubr.bf16.mxu0 %v1483
      %5361 = vmatmul.mubr.bf16.gmra.mrb[0].mxu0 %v1482
      %v5362 = vpop.f32.mrb[0].mxu0
      %v5363 = vadd.f32 %v5323, %v5362
      %v5364 = vpop.f32.mrb[0].mxu0
      %v5365 = vpop.f32.mrb[0].mxu0
      %v5366 = vpop.f32.mrb[0].mxu0
      %5367 = vdwg.mxu0
      %5368 = vmatprep.subr.bf16.mxu0 0
      %5369 = vmatpush1.bf16.msra.mxu0 %v3912
      %5370 = vmatprep.subr.bf16.mxu0 0
      %5371 = vmatpush1.bf16.msra.mxu0 %v3913
      %5372 = vmatprep.subr.bf16.mxu0 0
      %5373 = vmatpush1.bf16.msra.mxu0 %v3914
      %5374 = vmatprep.subr.bf16.mxu0 0
      %5375 = vmatpush1.bf16.msra.mxu0 %v3915
      %5376 = vmatprep.subr.bf16.mxu0 0
      %5377 = vmatpush1.bf16.msra.mxu0 %v3916
      %5378 = vmatprep.subr.bf16.mxu0 0
      %5379 = vmatpush1.bf16.msra.mxu0 %v3917
      %5380 = vmatprep.subr.bf16.mxu0 0
      %5381 = vmatpush1.bf16.msra.mxu0 %v3918
      %5382 = vmatprep.subr.bf16.mxu0 0
      %5383 = vmatpush1.bf16.msra.mxu0 %v3919
      %5384 = vmatprep.subr.bf16.mxu0 0
      %5385 = vmatpush1.bf16.msra.mxu0 %v3920
      %5386 = vmatprep.subr.bf16.mxu0 0
      %5387 = vmatpush1.bf16.msra.mxu0 %v3921
      %5388 = vmatprep.subr.bf16.mxu0 0
      %5389 = vmatpush1.bf16.msra.mxu0 %v3922
      %5390 = vmatprep.subr.bf16.mxu0 0
      %5391 = vmatpush1.bf16.msra.mxu0 %v3923
      %5392 = vmatprep.subr.bf16.mxu0 0
      %5393 = vmatpush1.bf16.msra.mxu0 %v3924
      %5394 = vmatprep.subr.bf16.mxu0 0
      %5395 = vmatpush1.bf16.msra.mxu0 %v3925
      %5396 = vmatprep.subr.bf16.mxu0 0
      %5397 = vmatpush1.bf16.msra.mxu0 %v3926
      %5398 = vmatprep.subr.bf16.mxu0 0
      %5399 = vmatpush1.bf16.msra.mxu0 %v3927
      %5400 = vmatprep.mubr.bf16.mxu0 %v1485
      %5401 = vmatmul.mubr.bf16.gmra.mrb[0].mxu0 %v1484
      %v5402 = vpop.f32.mrb[0].mxu0
      %v5403 = vadd.f32 %v5363, %v5402
      %v5404 = vpop.f32.mrb[0].mxu0
      %v5405 = vpop.f32.mrb[0].mxu0
      %v5406 = vpop.f32.mrb[0].mxu0
      %5407 = vdwg.mxu0
      %5408 = vmatprep.subr.bf16.mxu0 0
      %5409 = vmatpush1.bf16.msra.mxu0 %v3928
      %5410 = vmatprep.subr.bf16.mxu0 0
      %5411 = vmatpush1.bf16.msra.mxu0 %v3929
      %5412 = vmatprep.subr.bf16.mxu0 0
      %5413 = vmatpush1.bf16.msra.mxu0 %v3930
      %5414 = vmatprep.subr.bf16.mxu0 0
      %5415 = vmatpush1.bf16.msra.mxu0 %v3931
      %5416 = vmatprep.subr.bf16.mxu0 0
      %5417 = vmatpush1.bf16.msra.mxu0 %v3932
      %5418 = vmatprep.subr.bf16.mxu0 0
      %5419 = vmatpush1.bf16.msra.mxu0 %v3933
      %5420 = vmatprep.subr.bf16.mxu0 0
      %5421 = vmatpush1.bf16.msra.mxu0 %v3934
      %5422 = vmatprep.subr.bf16.mxu0 0
      %5423 = vmatpush1.bf16.msra.mxu0 %v3935
      %5424 = vmatprep.subr.bf16.mxu0 0
      %5425 = vmatpush1.bf16.msra.mxu0 %v3936
      %5426 = vmatprep.subr.bf16.mxu0 0
      %5427 = vmatpush1.bf16.msra.mxu0 %v3937
      %5428 = vmatprep.subr.bf16.mxu0 0
      %5429 = vmatpush1.bf16.msra.mxu0 %v3938
      %5430 = vmatprep.subr.bf16.mxu0 0
      %5431 = vmatpush1.bf16.msra.mxu0 %v3939
      %5432 = vmatprep.subr.bf16.mxu0 0
      %5433 = vmatpush1.bf16.msra.mxu0 %v3940
      %5434 = vmatprep.subr.bf16.mxu0 0
      %5435 = vmatpush1.bf16.msra.mxu0 %v3941
      %5436 = vmatprep.subr.bf16.mxu0 0
      %5437 = vmatpush1.bf16.msra.mxu0 %v3942
      %5438 = vmatprep.subr.bf16.mxu0 0
      %5439 = vmatpush1.bf16.msra.mxu0 %v3943
      %5440 = vmatprep.mubr.bf16.mxu0 %v1487
      %5441 = vmatmul.mubr.bf16.gmra.mrb[0].mxu0 %v1486
      %v5442 = vpop.f32.mrb[0].mxu0
      %v5443 = vadd.f32 %v5403, %v5442
      %v5444 = vpop.f32.mrb[0].mxu0
      %v5445 = vpop.f32.mrb[0].mxu0
      %v5446 = vpop.f32.mrb[0].mxu0
      %5447 = vdwg.mxu0
      %5448 = vmatprep.subr.bf16.mxu0 0
      %5449 = vmatpush1.bf16.msra.mxu0 %v3944
      %5450 = vmatprep.subr.bf16.mxu0 0
      %5451 = vmatpush1.bf16.msra.mxu0 %v3945
      %5452 = vmatprep.subr.bf16.mxu0 0
      %5453 = vmatpush1.bf16.msra.mxu0 %v3946
      %5454 = vmatprep.subr.bf16.mxu0 0
      %5455 = vmatpush1.bf16.msra.mxu0 %v3947
      %5456 = vmatprep.subr.bf16.mxu0 0
      %5457 = vmatpush1.bf16.msra.mxu0 %v3948
      %5458 = vmatprep.subr.bf16.mxu0 0
      %5459 = vmatpush1.bf16.msra.mxu0 %v3949
      %5460 = vmatprep.subr.bf16.mxu0 0
      %5461 = vmatpush1.bf16.msra.mxu0 %v3950
      %5462 = vmatprep.subr.bf16.mxu0 0
      %5463 = vmatpush1.bf16.msra.mxu0 %v3951
      %5464 = vmatprep.subr.bf16.mxu0 0
      %5465 = vmatpush1.bf16.msra.mxu0 %v3952
      %5466 = vmatprep.subr.bf16.mxu0 0
      %5467 = vmatpush1.bf16.msra.mxu0 %v3953
      %5468 = vmatprep.subr.bf16.mxu0 0
      %5469 = vmatpush1.bf16.msra.mxu0 %v3954
      %5470 = vmatprep.subr.bf16.mxu0 0
      %5471 = vmatpush1.bf16.msra.mxu0 %v3955
      %5472 = vmatprep.subr.bf16.mxu0 0
      %5473 = vmatpush1.bf16.msra.mxu0 %v3956
      %5474 = vmatprep.subr.bf16.mxu0 0
      %5475 = vmatpush1.bf16.msra.mxu0 %v3957
      %5476 = vmatprep.subr.bf16.mxu0 0
      %5477 = vmatpush1.bf16.msra.mxu0 %v3958
      %5478 = vmatprep.subr.bf16.mxu0 0
      %5479 = vmatpush1.bf16.msra.mxu0 %v3959
      %5480 = vmatprep.mubr.bf16.mxu0 %v1489
      %5481 = vmatmul.mubr.bf16.gmra.mrb[0].mxu0 %v1488
      %v5482 = vpop.f32.mrb[0].mxu0
      %v5483 = vadd.f32 %v5443, %v5482
      %v5484 = vpop.f32.mrb[0].mxu0
      %v5485 = vpop.f32.mrb[0].mxu0
      %v5486 = vpop.f32.mrb[0].mxu0
      %5487 = vdwg.mxu0
      %5488 = vmatprep.subr.bf16.mxu0 0
      %5489 = vmatpush1.bf16.msra.mxu0 %v3960
      %5490 = vmatprep.subr.bf16.mxu0 0
      %5491 = vmatpush1.bf16.msra.mxu0 %v3961
      %5492 = vmatprep.subr.bf16.mxu0 0
      %5493 = vmatpush1.bf16.msra.mxu0 %v3962
      %5494 = vmatprep.subr.bf16.mxu0 0
      %5495 = vmatpush1.bf16.msra.mxu0 %v3963
      %5496 = vmatprep.subr.bf16.mxu0 0
      %5497 = vmatpush1.bf16.msra.mxu0 %v3964
      %5498 = vmatprep.subr.bf16.mxu0 0
      %5499 = vmatpush1.bf16.msra.mxu0 %v3965
      %5500 = vmatprep.subr.bf16.mxu0 0
      %5501 = vmatpush1.bf16.msra.mxu0 %v3966
      %5502 = vmatprep.subr.bf16.mxu0 0
      %5503 = vmatpush1.bf16.msra.mxu0 %v3967
      %5504 = vmatprep.subr.bf16.mxu0 0
      %5505 = vmatpush1.bf16.msra.mxu0 %v3968
      %5506 = vmatprep.subr.bf16.mxu0 0
      %5507 = vmatpush1.bf16.msra.mxu0 %v3969
      %5508 = vmatprep.subr.bf16.mxu0 0
      %5509 = vmatpush1.bf16.msra.mxu0 %v3970
      %5510 = vmatprep.subr.bf16.mxu0 0
      %5511 = vmatpush1.bf16.msra.mxu0 %v3971
      %5512 = vmatprep.subr.bf16.mxu0 0
      %5513 = vmatpush1.bf16.msra.mxu0 %v3972
      %5514 = vmatprep.subr.bf16.mxu0 0
      %5515 = vmatpush1.bf16.msra.mxu0 %v3973
      %5516 = vmatprep.subr.bf16.mxu0 0
      %5517 = vmatpush1.bf16.msra.mxu0 %v3974
      %5518 = vmatprep.subr.bf16.mxu0 0
      %5519 = vmatpush1.bf16.msra.mxu0 %v3975
      %5520 = vmatprep.mubr.bf16.mxu0 %v1491
      %5521 = vmatmul.mubr.bf16.gmra.mrb[0].mxu0 %v1490
      %v5522 = vpop.f32.mrb[0].mxu0
      %v5523 = vadd.f32 %v5483, %v5522
      %v5524 = vpop.f32.mrb[0].mxu0
      %v5525 = vpop.f32.mrb[0].mxu0
      %v5526 = vpop.f32.mrb[0].mxu0
      %5527 = vdwg.mxu0
      %5528 = vmatprep.subr.bf16.mxu0 0
      %5529 = vmatpush1.bf16.msra.mxu0 %v3976
      %5530 = vmatprep.subr.bf16.mxu0 0
      %5531 = vmatpush1.bf16.msra.mxu0 %v3977
      %5532 = vmatprep.subr.bf16.mxu0 0
      %5533 = vmatpush1.bf16.msra.mxu0 %v3978
      %5534 = vmatprep.subr.bf16.mxu0 0
      %5535 = vmatpush1.bf16.msra.mxu0 %v3979
      %5536 = vmatprep.subr.bf16.mxu0 0
      %5537 = vmatpush1.bf16.msra.mxu0 %v3980
      %5538 = vmatprep.subr.bf16.mxu0 0
      %5539 = vmatpush1.bf16.msra.mxu0 %v3981
      %5540 = vmatprep.subr.bf16.mxu0 0
      %5541 = vmatpush1.bf16.msra.mxu0 %v3982
      %5542 = vmatprep.subr.bf16.mxu0 0
      %5543 = vmatpush1.bf16.msra.mxu0 %v3983
      %5544 = vmatprep.subr.bf16.mxu0 0
      %5545 = vmatpush1.bf16.msra.mxu0 %v3984
      %5546 = vmatprep.subr.bf16.mxu0 0
      %5547 = vmatpush1.bf16.msra.mxu0 %v3985
      %5548 = vmatprep.subr.bf16.mxu0 0
      %5549 = vmatpush1.bf16.msra.mxu0 %v3986
      %5550 = vmatprep.subr.bf16.mxu0 0
      %5551 = vmatpush1.bf16.msra.mxu0 %v3987
      %5552 = vmatprep.subr.bf16.mxu0 0
      %5553 = vmatpush1.bf16.msra.mxu0 %v3988
      %5554 = vmatprep.subr.bf16.mxu0 0
      %5555 = vmatpush1.bf16.msra.mxu0 %v3989
      %5556 = vmatprep.subr.bf16.mxu0 0
      %5557 = vmatpush1.bf16.msra.mxu0 %v3990
      %5558 = vmatprep.subr.bf16.mxu0 0
      %5559 = vmatpush1.bf16.msra.mxu0 %v3991
      %5560 = vmatprep.mubr.bf16.mxu0 %v1493
      %5561 = vmatmul.mubr.bf16.gmra.mrb[0].mxu0 %v1492
      %v5562 = vpop.f32.mrb[0].mxu0
      %v5563 = vadd.f32 %v5523, %v5562
      %v5564 = vpop.f32.mrb[0].mxu0
      %v5565 = vpop.f32.mrb[0].mxu0
      %v5566 = vpop.f32.mrb[0].mxu0
      %5567 = vdwg.mxu0
      %5568 = vmatprep.subr.bf16.mxu0 0
      %5569 = vmatpush1.bf16.msra.mxu0 %v3992
      %5570 = vmatprep.subr.bf16.mxu0 0
      %5571 = vmatpush1.bf16.msra.mxu0 %v3993
      %5572 = vmatprep.subr.bf16.mxu0 0
      %5573 = vmatpush1.bf16.msra.mxu0 %v3994
      %5574 = vmatprep.subr.bf16.mxu0 0
      %5575 = vmatpush1.bf16.msra.mxu0 %v3995
      %5576 = vmatprep.subr.bf16.mxu0 0
      %5577 = vmatpush1.bf16.msra.mxu0 %v3996
      %5578 = vmatprep.subr.bf16.mxu0 0
      %5579 = vmatpush1.bf16.msra.mxu0 %v3997
      %5580 = vmatprep.subr.bf16.mxu0 0
      %5581 = vmatpush1.bf16.msra.mxu0 %v3998
      %5582 = vmatprep.subr.bf16.mxu0 0
      %5583 = vmatpush1.bf16.msra.mxu0 %v3999
      %5584 = vmatprep.subr.bf16.mxu0 0
      %5585 = vmatpush1.bf16.msra.mxu0 %v4000
      %5586 = vmatprep.subr.bf16.mxu0 0
      %5587 = vmatpush1.bf16.msra.mxu0 %v4001
      %5588 = vmatprep.subr.bf16.mxu0 0
      %5589 = vmatpush1.bf16.msra.mxu0 %v4002
      %5590 = vmatprep.subr.bf16.mxu0 0
      %5591 = vmatpush1.bf16.msra.mxu0 %v4003
      %5592 = vmatprep.subr.bf16.mxu0 0
      %5593 = vmatpush1.bf16.msra.mxu0 %v4004
      %5594 = vmatprep.subr.bf16.mxu0 0
      %5595 = vmatpush1.bf16.msra.mxu0 %v4005
      %5596 = vmatprep.subr.bf16.mxu0 0
      %5597 = vmatpush1.bf16.msra.mxu0 %v4006
      %5598 = vmatprep.subr.bf16.mxu0 0
      %5599 = vmatpush1.bf16.msra.mxu0 %v4007
      %5600 = vmatprep.mubr.bf16.mxu0 %v1495
      %5601 = vmatmul.mubr.bf16.gmra.mrb[0].mxu0 %v1494
      %v5602 = vpop.f32.mrb[0].mxu0
      %v5603 = vadd.f32 %v5563, %v5602
      %v5604 = vpop.f32.mrb[0].mxu0
      %v5605 = vpop.f32.mrb[0].mxu0
      %v5606 = vpop.f32.mrb[0].mxu0
      %5607 = vdwg.mxu0
      %5608 = vmatprep.subr.bf16.mxu0 0
      %5609 = vmatpush1.bf16.msra.mxu0 %v4008
      %5610 = vmatprep.subr.bf16.mxu0 0
      %5611 = vmatpush1.bf16.msra.mxu0 %v4009
      %5612 = vmatprep.subr.bf16.mxu0 0
      %5613 = vmatpush1.bf16.msra.mxu0 %v4010
      %5614 = vmatprep.subr.bf16.mxu0 0
      %5615 = vmatpush1.bf16.msra.mxu0 %v4011
      %5616 = vmatprep.subr.bf16.mxu0 0
      %5617 = vmatpush1.bf16.msra.mxu0 %v4012
      %5618 = vmatprep.subr.bf16.mxu0 0
      %5619 = vmatpush1.bf16.msra.mxu0 %v4013
      %5620 = vmatprep.subr.bf16.mxu0 0
      %5621 = vmatpush1.bf16.msra.mxu0 %v4014
      %5622 = vmatprep.subr.bf16.mxu0 0
      %5623 = vmatpush1.bf16.msra.mxu0 %v4015
      %5624 = vmatprep.subr.bf16.mxu0 0
      %5625 = vmatpush1.bf16.msra.mxu0 %v4016
      %5626 = vmatprep.subr.bf16.mxu0 0
      %5627 = vmatpush1.bf16.msra.mxu0 %v4017
      %5628 = vmatprep.subr.bf16.mxu0 0
      %5629 = vmatpush1.bf16.msra.mxu0 %v4018
      %5630 = vmatprep.subr.bf16.mxu0 0
      %5631 = vmatpush1.bf16.msra.mxu0 %v4019
      %5632 = vmatprep.subr.bf16.mxu0 0
      %5633 = vmatpush1.bf16.msra.mxu0 %v4020
      %5634 = vmatprep.subr.bf16.mxu0 0
      %5635 = vmatpush1.bf16.msra.mxu0 %v4021
      %5636 = vmatprep.subr.bf16.mxu0 0
      %5637 = vmatpush1.bf16.msra.mxu0 %v4022
      %5638 = vmatprep.subr.bf16.mxu0 0
      %5639 = vmatpush1.bf16.msra.mxu0 %v4023
      %5640 = vmatprep.mubr.bf16.mxu0 %v1497
      %5641 = vmatmul.mubr.bf16.gmra.mrb[0].mxu0 %v1496
      %v5642 = vpop.f32.mrb[0].mxu0
      %v5643 = vadd.f32 %v5603, %v5642
      %v5644 = vpop.f32.mrb[0].mxu0
      %v5645 = vpop.f32.mrb[0].mxu0
      %v5646 = vpop.f32.mrb[0].mxu0
      %5647 = vdwg.mxu0
      %5648 = vmatprep.subr.bf16.mxu0 0
      %5649 = vmatpush1.bf16.msra.mxu0 %v4024
      %5650 = vmatprep.subr.bf16.mxu0 0
      %5651 = vmatpush1.bf16.msra.mxu0 %v4025
      %5652 = vmatprep.subr.bf16.mxu0 0
      %5653 = vmatpush1.bf16.msra.mxu0 %v4026
      %5654 = vmatprep.subr.bf16.mxu0 0
      %5655 = vmatpush1.bf16.msra.mxu0 %v4027
      %5656 = vmatprep.subr.bf16.mxu0 0
      %5657 = vmatpush1.bf16.msra.mxu0 %v4028
      %5658 = vmatprep.subr.bf16.mxu0 0
      %5659 = vmatpush1.bf16.msra.mxu0 %v4029
      %5660 = vmatprep.subr.bf16.mxu0 0
      %5661 = vmatpush1.bf16.msra.mxu0 %v4030
      %5662 = vmatprep.subr.bf16.mxu0 0
      %5663 = vmatpush1.bf16.msra.mxu0 %v4031
      %5664 = vmatprep.subr.bf16.mxu0 0
      %5665 = vmatpush1.bf16.msra.mxu0 %v4032
      %5666 = vmatprep.subr.bf16.mxu0 0
      %5667 = vmatpush1.bf16.msra.mxu0 %v4033
      %5668 = vmatprep.subr.bf16.mxu0 0
      %5669 = vmatpush1.bf16.msra.mxu0 %v4034
      %5670 = vmatprep.subr.bf16.mxu0 0
      %5671 = vmatpush1.bf16.msra.mxu0 %v4035
      %5672 = vmatprep.subr.bf16.mxu0 0
      %5673 = vmatpush1.bf16.msra.mxu0 %v4036
      %5674 = vmatprep.subr.bf16.mxu0 0
      %5675 = vmatpush1.bf16.msra.mxu0 %v4037
      %5676 = vmatprep.subr.bf16.mxu0 0
      %5677 = vmatpush1.bf16.msra.mxu0 %v4038
      %5678 = vmatprep.subr.bf16.mxu0 0
      %5679 = vmatpush1.bf16.msra.mxu0 %v4039
      %5680 = vmatprep.mubr.bf16.mxu0 %v1499
      %5681 = vmatmul.mubr.bf16.gmra.mrb[0].mxu0 %v1498
      %v5682 = vpop.f32.mrb[0].mxu0
      %v5683 = vadd.f32 %v5643, %v5682
      %v5684 = vpop.f32.mrb[0].mxu0
      %v5685 = vpop.f32.mrb[0].mxu0
      %v5686 = vpop.f32.mrb[0].mxu0
      %5687 = vdwg.mxu0
      %5688 = vmatprep.subr.bf16.mxu0 0
      %5689 = vmatpush1.bf16.msra.mxu0 %v4040
      %5690 = vmatprep.subr.bf16.mxu0 0
      %5691 = vmatpush1.bf16.msra.mxu0 %v4041
      %5692 = vmatprep.subr.bf16.mxu0 0
      %5693 = vmatpush1.bf16.msra.mxu0 %v4042
      %5694 = vmatprep.subr.bf16.mxu0 0
      %5695 = vmatpush1.bf16.msra.mxu0 %v4043
      %5696 = vmatprep.subr.bf16.mxu0 0
      %5697 = vmatpush1.bf16.msra.mxu0 %v4044
      %5698 = vmatprep.subr.bf16.mxu0 0
      %5699 = vmatpush1.bf16.msra.mxu0 %v4045
      %5700 = vmatprep.subr.bf16.mxu0 0
      %5701 = vmatpush1.bf16.msra.mxu0 %v4046
      %5702 = vmatprep.subr.bf16.mxu0 0
      %5703 = vmatpush1.bf16.msra.mxu0 %v4047
      %5704 = vmatprep.subr.bf16.mxu0 0
      %5705 = vmatpush1.bf16.msra.mxu0 %v4048
      %5706 = vmatprep.subr.bf16.mxu0 0
      %5707 = vmatpush1.bf16.msra.mxu0 %v4049
      %5708 = vmatprep.subr.bf16.mxu0 0
      %5709 = vmatpush1.bf16.msra.mxu0 %v4050
      %5710 = vmatprep.subr.bf16.mxu0 0
      %5711 = vmatpush1.bf16.msra.mxu0 %v4051
      %5712 = vmatprep.subr.bf16.mxu0 0
      %5713 = vmatpush1.bf16.msra.mxu0 %v4052
      %5714 = vmatprep.subr.bf16.mxu0 0
      %5715 = vmatpush1.bf16.msra.mxu0 %v4053
      %5716 = vmatprep.subr.bf16.mxu0 0
      %5717 = vmatpush1.bf16.msra.mxu0 %v4054
      %5718 = vmatprep.subr.bf16.mxu0 0
      %5719 = vmatpush1.bf16.msra.mxu0 %v4055
      %5720 = vmatprep.mubr.bf16.mxu0 %v1501
      %5721 = vmatmul.mubr.bf16.gmra.mrb[0].mxu0 %v1500
      %v5722 = vpop.f32.mrb[0].mxu0
      %v5723 = vadd.f32 %v5683, %v5722
      %v5724 = vpop.f32.mrb[0].mxu0
      %v5725 = vpop.f32.mrb[0].mxu0
      %v5726 = vpop.f32.mrb[0].mxu0
      %5727 = vdwg.mxu0
      %5728 = vmatprep.subr.bf16.mxu0 0
      %5729 = vmatpush1.bf16.msra.mxu0 %v4056
      %5730 = vmatprep.subr.bf16.mxu0 0
      %5731 = vmatpush1.bf16.msra.mxu0 %v4057
      %5732 = vmatprep.subr.bf16.mxu0 0
      %5733 = vmatpush1.bf16.msra.mxu0 %v4058
      %5734 = vmatprep.subr.bf16.mxu0 0
      %5735 = vmatpush1.bf16.msra.mxu0 %v4059
      %5736 = vmatprep.subr.bf16.mxu0 0
      %5737 = vmatpush1.bf16.msra.mxu0 %v4060
      %5738 = vmatprep.subr.bf16.mxu0 0
      %5739 = vmatpush1.bf16.msra.mxu0 %v4061
      %5740 = vmatprep.subr.bf16.mxu0 0
      %5741 = vmatpush1.bf16.msra.mxu0 %v4062
      %5742 = vmatprep.subr.bf16.mxu0 0
      %5743 = vmatpush1.bf16.msra.mxu0 %v4063
      %5744 = vmatprep.subr.bf16.mxu0 0
      %5745 = vmatpush1.bf16.msra.mxu0 %v4064
      %5746 = vmatprep.subr.bf16.mxu0 0
      %5747 = vmatpush1.bf16.msra.mxu0 %v4065
      %5748 = vmatprep.subr.bf16.mxu0 0
      %5749 = vmatpush1.bf16.msra.mxu0 %v4066
      %5750 = vmatprep.subr.bf16.mxu0 0
      %5751 = vmatpush1.bf16.msra.mxu0 %v4067
      %5752 = vmatprep.subr.bf16.mxu0 0
      %5753 = vmatpush1.bf16.msra.mxu0 %v4068
      %5754 = vmatprep.subr.bf16.mxu0 0
      %5755 = vmatpush1.bf16.msra.mxu0 %v4069
      %5756 = vmatprep.subr.bf16.mxu0 0
      %5757 = vmatpush1.bf16.msra.mxu0 %v4070
      %5758 = vmatprep.subr.bf16.mxu0 0
      %5759 = vmatpush1.bf16.msra.mxu0 %v4071
      %5760 = vmatprep.mubr.bf16.mxu0 %v1503
      %5761 = vmatmul.mubr.bf16.gmra.mrb[0].mxu0 %v1502
      %v5762 = vpop.f32.mrb[0].mxu0
      %v5763 = vadd.f32 %v5723, %v5762
      %v5764 = vpop.f32.mrb[0].mxu0
      %v5765 = vpop.f32.mrb[0].mxu0
      %v5766 = vpop.f32.mrb[0].mxu0
      %5767 = vdwg.mxu0
      %5768 = vmatprep.subr.bf16.mxu0 0
      %5769 = vmatpush1.bf16.msra.mxu0 %v4072
      %5770 = vmatprep.subr.bf16.mxu0 0
      %5771 = vmatpush1.bf16.msra.mxu0 %v4073
      %5772 = vmatprep.subr.bf16.mxu0 0
      %5773 = vmatpush1.bf16.msra.mxu0 %v4074
      %5774 = vmatprep.subr.bf16.mxu0 0
      %5775 = vmatpush1.bf16.msra.mxu0 %v4075
      %5776 = vmatprep.subr.bf16.mxu0 0
      %5777 = vmatpush1.bf16.msra.mxu0 %v4076
      %5778 = vmatprep.subr.bf16.mxu0 0
      %5779 = vmatpush1.bf16.msra.mxu0 %v4077
      %5780 = vmatprep.subr.bf16.mxu0 0
      %5781 = vmatpush1.bf16.msra.mxu0 %v4078
      %5782 = vmatprep.subr.bf16.mxu0 0
      %5783 = vmatpush1.bf16.msra.mxu0 %v4079
      %5784 = vmatprep.subr.bf16.mxu0 0
      %5785 = vmatpush1.bf16.msra.mxu0 %v4080
      %5786 = vmatprep.subr.bf16.mxu0 0
      %5787 = vmatpush1.bf16.msra.mxu0 %v4081
      %5788 = vmatprep.subr.bf16.mxu0 0
      %5789 = vmatpush1.bf16.msra.mxu0 %v4082
      %5790 = vmatprep.subr.bf16.mxu0 0
      %5791 = vmatpush1.bf16.msra.mxu0 %v4083
      %5792 = vmatprep.subr.bf16.mxu0 0
      %5793 = vmatpush1.bf16.msra.mxu0 %v4084
      %5794 = vmatprep.subr.bf16.mxu0 0
      %5795 = vmatpush1.bf16.msra.mxu0 %v4085
      %5796 = vmatprep.subr.bf16.mxu0 0
      %5797 = vmatpush1.bf16.msra.mxu0 %v4086
      %5798 = vmatprep.subr.bf16.mxu0 0
      %5799 = vmatpush1.bf16.msra.mxu0 %v4087
      %5800 = vmatprep.mubr.bf16.mxu0 %v1505
      %5801 = vmatmul.mubr.bf16.gmra.mrb[0].mxu0 %v1504
      %v5802 = vpop.f32.mrb[0].mxu0
      %v5803 = vadd.f32 %v5763, %v5802
      %v5804 = vpop.f32.mrb[0].mxu0
      %v5805 = vpop.f32.mrb[0].mxu0
      %v5806 = vpop.f32.mrb[0].mxu0
      %5807 = vdwg.mxu0
      %5808 = vmatprep.subr.bf16.mxu0 0
      %5809 = vmatpush1.bf16.msra.mxu0 %v4088
      %5810 = vmatprep.subr.bf16.mxu0 0
      %5811 = vmatpush1.bf16.msra.mxu0 %v4089
      %5812 = vmatprep.subr.bf16.mxu0 0
      %5813 = vmatpush1.bf16.msra.mxu0 %v4090
      %5814 = vmatprep.subr.bf16.mxu0 0
      %5815 = vmatpush1.bf16.msra.mxu0 %v4091
      %5816 = vmatprep.subr.bf16.mxu0 0
      %5817 = vmatpush1.bf16.msra.mxu0 %v4092
      %5818 = vmatprep.subr.bf16.mxu0 0
      %5819 = vmatpush1.bf16.msra.mxu0 %v4093
      %5820 = vmatprep.subr.bf16.mxu0 0
      %5821 = vmatpush1.bf16.msra.mxu0 %v4094
      %5822 = vmatprep.subr.bf16.mxu0 0
      %5823 = vmatpush1.bf16.msra.mxu0 %v4095
      %5824 = vmatprep.subr.bf16.mxu0 0
      %5825 = vmatpush1.bf16.msra.mxu0 %v4096
      %5826 = vmatprep.subr.bf16.mxu0 0
      %5827 = vmatpush1.bf16.msra.mxu0 %v4097
      %5828 = vmatprep.subr.bf16.mxu0 0
      %5829 = vmatpush1.bf16.msra.mxu0 %v4098
      %5830 = vmatprep.subr.bf16.mxu0 0
      %5831 = vmatpush1.bf16.msra.mxu0 %v4099
      %5832 = vmatprep.subr.bf16.mxu0 0
      %5833 = vmatpush1.bf16.msra.mxu0 %v4100
      %5834 = vmatprep.subr.bf16.mxu0 0
      %5835 = vmatpush1.bf16.msra.mxu0 %v4101
      %5836 = vmatprep.subr.bf16.mxu0 0
      %5837 = vmatpush1.bf16.msra.mxu0 %v4102
      %5838 = vmatprep.subr.bf16.mxu0 0
      %5839 = vmatpush1.bf16.msra.mxu0 %v4103
      %5840 = vmatprep.mubr.bf16.mxu0 %v1507
      %5841 = vmatmul.mubr.bf16.gmra.mrb[0].mxu0 %v1506
      %v5842 = vpop.f32.mrb[0].mxu0
      %v5843 = vadd.f32 %v5803, %v5842
      %v5844 = vpop.f32.mrb[0].mxu0
      %v5845 = vpop.f32.mrb[0].mxu0
      %v5846 = vpop.f32.mrb[0].mxu0
      %5847 = vdwg.mxu0
      %5848 = vmatprep.subr.bf16.mxu0 0
      %5849 = vmatpush1.bf16.msra.mxu0 %v4104
      %5850 = vmatprep.subr.bf16.mxu0 0
      %5851 = vmatpush1.bf16.msra.mxu0 %v4105
      %5852 = vmatprep.subr.bf16.mxu0 0
      %5853 = vmatpush1.bf16.msra.mxu0 %v4106
      %5854 = vmatprep.subr.bf16.mxu0 0
      %5855 = vmatpush1.bf16.msra.mxu0 %v4107
      %5856 = vmatprep.subr.bf16.mxu0 0
      %5857 = vmatpush1.bf16.msra.mxu0 %v4108
      %5858 = vmatprep.subr.bf16.mxu0 0
      %5859 = vmatpush1.bf16.msra.mxu0 %v4109
      %5860 = vmatprep.subr.bf16.mxu0 0
      %5861 = vmatpush1.bf16.msra.mxu0 %v4110
      %5862 = vmatprep.subr.bf16.mxu0 0
      %5863 = vmatpush1.bf16.msra.mxu0 %v4111
      %5864 = vmatprep.subr.bf16.mxu0 0
      %5865 = vmatpush1.bf16.msra.mxu0 %v4112
      %5866 = vmatprep.subr.bf16.mxu0 0
      %5867 = vmatpush1.bf16.msra.mxu0 %v4113
      %5868 = vmatprep.subr.bf16.mxu0 0
      %5869 = vmatpush1.bf16.msra.mxu0 %v4114
      %5870 = vmatprep.subr.bf16.mxu0 0
      %5871 = vmatpush1.bf16.msra.mxu0 %v4115
      %5872 = vmatprep.subr.bf16.mxu0 0
      %5873 = vmatpush1.bf16.msra.mxu0 %v4116
      %5874 = vmatprep.subr.bf16.mxu0 0
      %5875 = vmatpush1.bf16.msra.mxu0 %v4117
      %5876 = vmatprep.subr.bf16.mxu0 0
      %5877 = vmatpush1.bf16.msra.mxu0 %v4118
      %5878 = vmatprep.subr.bf16.mxu0 0
      %5879 = vmatpush1.bf16.msra.mxu0 %v4119
      %5880 = vmatprep.mubr.bf16.mxu0 %v1509
      %5881 = vmatmul.mubr.bf16.gmra.mrb[0].mxu0 %v1508
      %v5882 = vpop.f32.mrb[0].mxu0
      %v5883 = vadd.f32 %v5843, %v5882
      %v5884 = vpop.f32.mrb[0].mxu0
      %v5885 = vpop.f32.mrb[0].mxu0
      %v5886 = vpop.f32.mrb[0].mxu0
      %5887 = vdwg.mxu0
      %5888 = vmatprep.subr.bf16.mxu0 0
      %5889 = vmatpush1.bf16.msra.mxu0 %v4120
      %5890 = vmatprep.subr.bf16.mxu0 0
      %5891 = vmatpush1.bf16.msra.mxu0 %v4121
      %5892 = vmatprep.subr.bf16.mxu0 0
      %5893 = vmatpush1.bf16.msra.mxu0 %v4122
      %5894 = vmatprep.subr.bf16.mxu0 0
      %5895 = vmatpush1.bf16.msra.mxu0 %v4123
      %5896 = vmatprep.subr.bf16.mxu0 0
      %5897 = vmatpush1.bf16.msra.mxu0 %v4124
      %5898 = vmatprep.subr.bf16.mxu0 0
      %5899 = vmatpush1.bf16.msra.mxu0 %v4125
      %5900 = vmatprep.subr.bf16.mxu0 0
      %5901 = vmatpush1.bf16.msra.mxu0 %v4126
      %5902 = vmatprep.subr.bf16.mxu0 0
      %5903 = vmatpush1.bf16.msra.mxu0 %v4127
      %5904 = vmatprep.subr.bf16.mxu0 0
      %5905 = vmatpush1.bf16.msra.mxu0 %v4128
      %5906 = vmatprep.subr.bf16.mxu0 0
      %5907 = vmatpush1.bf16.msra.mxu0 %v4129
      %5908 = vmatprep.subr.bf16.mxu0 0
      %5909 = vmatpush1.bf16.msra.mxu0 %v4130
      %5910 = vmatprep.subr.bf16.mxu0 0
      %5911 = vmatpush1.bf16.msra.mxu0 %v4131
      %5912 = vmatprep.subr.bf16.mxu0 0
      %5913 = vmatpush1.bf16.msra.mxu0 %v4132
      %5914 = vmatprep.subr.bf16.mxu0 0
      %5915 = vmatpush1.bf16.msra.mxu0 %v4133
      %5916 = vmatprep.subr.bf16.mxu0 0
      %5917 = vmatpush1.bf16.msra.mxu0 %v4134
      %5918 = vmatprep.subr.bf16.mxu0 0
      %5919 = vmatpush1.bf16.msra.mxu0 %v4135
      %5920 = vmatprep.mubr.bf16.mxu0 %v1511
      %5921 = vmatmul.mubr.bf16.gmra.mrb[0].mxu0 %v1510
      %v5922 = vpop.f32.mrb[0].mxu0
      %v5923 = vadd.f32 %v5883, %v5922
      %v5924 = vpop.f32.mrb[0].mxu0
      %v5925 = vpop.f32.mrb[0].mxu0
      %v5926 = vpop.f32.mrb[0].mxu0
      %5927 = vdwg.mxu0
      %v5928 = vadd.f32 %v295, %v5923
      %vm5929 = vcmask 195584
      %5930 = vst.msk [vmem:[#allocation2] sm:$0xff] %vm5929, %v5928
      %p5931 = scmp.eq.s32.totalorder %s18, 10
      // Predicated region
      $region53: #{forward.5} parent=47 // pred_check
        %p5932 = pneg %p5931
      $region54: #{forward.5} parent=47 // pred_check_branch
        %5934 = sbr.rel (%p5932) target = $region56
      $region55: #{forward.5} parent=47 // pred_region
        %v5935 = vld [vmem:[#allocation2] sm:$0xff]
        %v5936 = vld [vmem:[%s2] sm:$0x1]
        %v5938 = vlaneseq
        %v5939 = vshrl.u32 %v5938, 7
        %v5940 = vsub.s32 0, %v5939
        %v5941 = vrot.slane %v5936, %v5940
        %v5943 = vadd.f32 %v5935, %v5941
        %v5944 = vmax.f32 %v5943, 0.0
        %v5945 = vld [vmem:[%s3] sm:$0xff]
        %v5946 = vld [vmem:[%s3 + $0x8] sm:$0xff]
        %v5947 = vld [vmem:[%s3 + $0x10] sm:$0xff]
        %v5948 = vld [vmem:[%s4] sm:$0x1]
        %v5950 = vlaneseq
        %v5951 = vshrl.u32 %v5950, 7
        %v5952 = vsub.s32 0, %v5951
        %v5953 = vrot.slane %v5948, %v5952
        %v5956 = vsel %vm5929, %v5944, 0
        %5958 = vmatprep.subr.mxu0 0.0
        %5959 = vmatpush1.msra.mxu0 %v5945
        %5960 = vmatprep.subr.mxu0 0.0
        %5961 = vmatpush1.msra.mxu0 %v5946
        %5962 = vmatprep.subr.mxu0 0.0
        %5963 = vmatpush1.msra.mxu0 %v5947
        %5964 = vmatprep.subr.mxu0 0.0
        %5965 = vmatpush1.msra.mxu0 0.0
        %5966 = vmatprep.subr.mxu0 0.0
        %5967 = vmatpush1.msra.mxu0 0.0
        %5968 = vmatprep.subr.mxu0 0.0
        %5969 = vmatpush1.msra.mxu0 0.0
        %5970 = vmatprep.subr.mxu0 0.0
        %5971 = vmatpush1.msra.mxu0 0.0
        %5972 = vmatprep.subr.mxu0 0.0
        %5973 = vmatpush1.msra.mxu0 0.0
        %5974 = vmatprep.subr.mxu0 0.0
        %5975 = vmatpush1.msra.mxu0 0.0
        %5976 = vmatprep.subr.mxu0 0.0
        %5977 = vmatpush1.msra.mxu0 0.0
        %5978 = vmatprep.subr.mxu0 0.0
        %5979 = vmatpush1.msra.mxu0 0.0
        %5980 = vmatprep.subr.mxu0 0.0
        %5981 = vmatpush1.msra.mxu0 0.0
        %5982 = vmatprep.subr.mxu0 0.0
        %5983 = vmatpush1.msra.mxu0 0.0
        %5984 = vmatprep.subr.mxu0 0.0
        %5985 = vmatpush1.msra.mxu0 0.0
        %5986 = vmatprep.subr.mxu0 0.0
        %5987 = vmatpush1.msra.mxu0 0.0
        %5988 = vmatprep.subr.mxu0 0.0
        %5989 = vmatpush1.msra.mxu0 0.0
        %5990 = vmatprep.subr.mxu0 0.0
        %5991 = vmatpush1.msra.mxu0 0.0
        %5992 = vmatprep.subr.mxu0 0.0
        %5993 = vmatpush1.msra.mxu0 0.0
        %5994 = vmatprep.subr.mxu0 0.0
        %5995 = vmatpush1.msra.mxu0 0.0
        %5996 = vmatprep.subr.mxu0 0.0
        %5997 = vmatpush1.msra.mxu0 0.0
        %5998 = vmatprep.subr.mxu0 0.0
        %5999 = vmatpush1.msra.mxu0 0.0
        %6000 = vmatprep.subr.mxu0 0.0
        %6001 = vmatpush1.msra.mxu0 0.0
        %6002 = vmatprep.subr.mxu0 0.0
        %6003 = vmatpush1.msra.mxu0 0.0
        %6004 = vmatprep.subr.mxu0 0.0
        %6005 = vmatpush1.msra.mxu0 0.0
        %6006 = vmatprep.subr.mxu0 0.0
        %6007 = vmatpush1.msra.mxu0 0.0
        %6008 = vmatprep.subr.mxu0 0.0
        %6009 = vmatpush1.msra.mxu0 0.0
        %6010 = vmatprep.subr.mxu0 0.0
        %6011 = vmatpush1.msra.mxu0 0.0
        %6012 = vmatprep.subr.mxu0 0.0
        %6013 = vmatpush1.msra.mxu0 0.0
        %6014 = vmatprep.subr.mxu0 0.0
        %6015 = vmatpush1.msra.mxu0 0.0
        %6016 = vmatprep.subr.mxu0 0.0
        %6017 = vmatpush1.msra.mxu0 0.0
        %6018 = vmatprep.subr.mxu0 0.0
        %6019 = vmatpush1.msra.mxu0 0.0
        %6020 = vmatprep.subr.mxu0 0.0
        %6021 = vmatpush1.msra.mxu0 0.0
        %6022 = vmatprep.mubr.f32.mxu0 0.0
        %6023 = vmatmul.mubr.f32.gmra.mrb[0].mxu0 %v5956
        %v6024 = vpop.f32.mrb[0].mxu0
        %v6025 = vadd.f32 %v5953, %v6024
        %v6026 = vpop.f32.mrb[0].mxu0
        %6027 = vdwg.mxu0
        %v6028 = vmax.f32 %v6025, 0.0
        %v6029 = vld [vmem:[%s5] sm:$0xff]
        %v6030 = vld [vmem:[%s5 + $0x8] sm:$0xf]
        %v6031 = vld [vmem:[%s6] sm:$0x1]
        %v6033 = vlaneseq
        %v6034 = vshrl.u32 %v6033, 7
        %v6035 = vsub.s32 0, %v6034
        %v6036 = vrot.slane %v6031, %v6035
        %vm6038 = vcmask 97280
        %v6040 = vsel %vm6038, %v6028, 0
        %vm6042 = vcmask 1043456
        %v6044 = vsel %vm6042, %v6030, 0
        %6046 = vmatprep.subr.mxu0 0.0
        %6047 = vmatpush1.msra.mxu0 %v6029
        %6048 = vmatprep.subr.mxu0 0.0
        %6049 = vmatpush1.msra.mxu0 %v6044
        %6050 = vmatprep.subr.mxu0 0.0
        %6051 = vmatpush1.msra.mxu0 0.0
        %6052 = vmatprep.subr.mxu0 0.0
        %6053 = vmatpush1.msra.mxu0 0.0
        %6054 = vmatprep.subr.mxu0 0.0
        %6055 = vmatpush1.msra.mxu0 0.0
        %6056 = vmatprep.subr.mxu0 0.0
        %6057 = vmatpush1.msra.mxu0 0.0
        %6058 = vmatprep.subr.mxu0 0.0
        %6059 = vmatpush1.msra.mxu0 0.0
        %6060 = vmatprep.subr.mxu0 0.0
        %6061 = vmatpush1.msra.mxu0 0.0
        %6062 = vmatprep.subr.mxu0 0.0
        %6063 = vmatpush1.msra.mxu0 0.0
        %6064 = vmatprep.subr.mxu0 0.0
        %6065 = vmatpush1.msra.mxu0 0.0
        %6066 = vmatprep.subr.mxu0 0.0
        %6067 = vmatpush1.msra.mxu0 0.0
        %6068 = vmatprep.subr.mxu0 0.0
        %6069 = vmatpush1.msra.mxu0 0.0
        %6070 = vmatprep.subr.mxu0 0.0
        %6071 = vmatpush1.msra.mxu0 0.0
        %6072 = vmatprep.subr.mxu0 0.0
        %6073 = vmatpush1.msra.mxu0 0.0
        %6074 = vmatprep.subr.mxu0 0.0
        %6075 = vmatpush1.msra.mxu0 0.0
        %6076 = vmatprep.subr.mxu0 0.0
        %6077 = vmatpush1.msra.mxu0 0.0
        %6078 = vmatprep.subr.mxu0 0.0
        %6079 = vmatpush1.msra.mxu0 0.0
        %6080 = vmatprep.subr.mxu0 0.0
        %6081 = vmatpush1.msra.mxu0 0.0
        %6082 = vmatprep.subr.mxu0 0.0
        %6083 = vmatpush1.msra.mxu0 0.0
        %6084 = vmatprep.subr.mxu0 0.0
        %6085 = vmatpush1.msra.mxu0 0.0
        %6086 = vmatprep.subr.mxu0 0.0
        %6087 = vmatpush1.msra.mxu0 0.0
        %6088 = vmatprep.subr.mxu0 0.0
        %6089 = vmatpush1.msra.mxu0 0.0
        %6090 = vmatprep.subr.mxu0 0.0
        %6091 = vmatpush1.msra.mxu0 0.0
        %6092 = vmatprep.subr.mxu0 0.0
        %6093 = vmatpush1.msra.mxu0 0.0
        %6094 = vmatprep.subr.mxu0 0.0
        %6095 = vmatpush1.msra.mxu0 0.0
        %6096 = vmatprep.subr.mxu0 0.0
        %6097 = vmatpush1.msra.mxu0 0.0
        %6098 = vmatprep.subr.mxu0 0.0
        %6099 = vmatpush1.msra.mxu0 0.0
        %6100 = vmatprep.subr.mxu0 0.0
        %6101 = vmatpush1.msra.mxu0 0.0
        %6102 = vmatprep.subr.mxu0 0.0
        %6103 = vmatpush1.msra.mxu0 0.0
        %6104 = vmatprep.subr.mxu0 0.0
        %6105 = vmatpush1.msra.mxu0 0.0
        %6106 = vmatprep.subr.mxu0 0.0
        %6107 = vmatpush1.msra.mxu0 0.0
        %6108 = vmatprep.subr.mxu0 0.0
        %6109 = vmatpush1.msra.mxu0 0.0
        %6110 = vmatprep.mubr.f32.mxu0 0.0
        %6111 = vmatmul.mubr.f32.gmra.mrb[0].mxu0 %v6040
        %v6112 = vpop.f32.mrb[0].mxu0
        %v6113 = vadd.f32 %v6036, %v6112
        %v6114 = vpop.f32.mrb[0].mxu0
        %6115 = vdwg.mxu0
        %vm6116 = vcmask 15360
        %6117 = vst.msk [vmem:[%s7] sm:$0xff] %vm6116, %v6113
      $region56: #{forward.5} parent=47 // pred_fallthru
        _
      // Predicated region
      $region57: #{forward.5} parent=47 // pred_check
        %p6118 = pneg %p188
      $region58: #{forward.5} parent=47 // pred_check_branch
        %6120 = sbr.rel (%p6118) target = $region60
      $region59: #{forward.5} parent=47 // pred_region
        _
      $region60: #{forward.5} parent=47 // pred_fallthru
        _
      // Predicated region
      $region61: #{forward.5} parent=47 // pred_check
        %p6121 = pneg %p188
      $region62: #{forward.5} parent=47 // pred_check_branch
        %6123 = sbr.rel (%p6121) target = $region64
      $region63: #{forward.5} parent=47 // pred_region
        _
      $region64: #{forward.5} parent=47 // pred_fallthru
        _
    $region48: #{forward.5} parent=5 // pred_fallthru
      _
    %p6124 = scmp.le.s32.totalorder 2, %s13
    // Predicated region
    $region65: #{forward.5} parent=5 // pred_check
      %p6125 = pneg %p6124
    $region66: #{forward.5} parent=5 // pred_check_branch
      %6127 = sbr.rel (%p6125) target = $region68
    $region67: #{forward.5} parent=5 // pred_region
      %s6128 = ssub.s32 %s13, 2
    $region68: #{forward.5} parent=5 // pred_fallthru
      _
  $region6: #{forward.5} parent=0 // loop_footer
    %s17 = sadd.s32 1, %s13
  $region7: #{forward.5} parent=0 // loop_footer_branch
    %12 = sbr.rel target = $region3
  $region8: #{forward.5} parent=0 // loop_exit
    _

</llo_original>
